<compile_context>
chip_gen: v7x
topology: tpu7x:2x2x1
jax: 0.10.0
libtpu: 0.0.40
codegen_flags: <defaults>
</compile_context>

<pallas_src>
import jax
import jax.numpy as jnp
from jax.experimental import pallas as pl


# ------------------------------ spec helpers ----------------------------------

def _full_spec(shape):
    """Whole-array VMEM block for a grid=(1,) pallas_call."""
    nd = len(shape)
    return pl.BlockSpec(shape, lambda i, _nd=nd: (0,) * _nd)


def _call(kernel, args, out_shapes):
    """Single-invocation pallas_call with whole-array blocks."""
    single = not isinstance(out_shapes, (tuple, list))
    outs = (out_shapes,) if single else tuple(out_shapes)
    res = pl.pallas_call(
        kernel,
        out_shape=tuple(outs),
        grid=(1,),
        in_specs=[_full_spec(a.shape) for a in args],
        out_specs=tuple(_full_spec(o.shape) for o in outs),
    )(*args)
    return res[0] if single else res


# ----------------------------- Pallas kernels ---------------------------------

def _encoder_kernel(adj_ref, feat_ref, noise_ref,
                    w1_ref, b1_ref, w2_ref, b2_ref, wg_ref,
                    wml1_ref, bml1_ref, wm2_ref, bm2_ref, wl2_ref, bl2_ref,
                    out_ref):
    """Whole GraphEncoder forward, batch folded into the block."""
    B, N, _ = adj_ref.shape
    Dn = feat_ref.shape[-1]
    Z = noise_ref.shape[-1]
    L, H, _ = wg_ref.shape
    Dh = wm2_ref.shape[0]            # 128 (mean half of the fused fc1 output)
    bf, f32 = jnp.bfloat16, jnp.float32

    adj = adj_ref[...].astype(bf)                               # (B, N, N)
    x = feat_ref[...].reshape(B * N, Dn)                        # batch-folded

    # node_fc1 -> tanh -> node_fc2 -> tanh  (bf16 matmuls, f32 accumulate)
    h = jnp.tanh(jnp.dot(x.astype(bf), w1_ref[...].astype(bf),
                         preferred_element_type=f32) + b1_ref[...])
    h = jnp.tanh(jnp.dot(h.astype(bf), w2_ref[...].astype(bf),
                         preferred_element_type=f32) + b2_ref[...])  # (B*N, H)

    # fused [mean|logstd] fc1 as accumulated partial matmuls over the hidden
    # stack (no lane concatenation of all_hidden).
    acc = jnp.dot(h.astype(bf), wml1_ref[0].astype(bf),
                  preferred_element_type=f32)                   # (B*N, 2*Dh)
    hid = h
    for l in range(L):                                          # graph convs
        xw = jnp.dot(hid.astype(bf), wg_ref[l].astype(bf),
                     preferred_element_type=f32)                # (B*N, H)
        hid = jnp.tanh(
            jnp.einsum('bnm,bmh->bnh', adj, xw.reshape(B, N, H).astype(bf),
                       preferred_element_type=f32)).reshape(B * N, H)
        acc = acc + jnp.dot(hid.astype(bf), wml1_ref[l + 1].astype(bf),
                            preferred_element_type=f32)
    hml = jnp.tanh(acc + bml1_ref[...])                         # (B*N, 2*Dh)

    # two plain fc2 matmuls (split at lane 128 is tile aligned)
    mean = jnp.dot(hml[:, :Dh].astype(bf), wm2_ref[...].astype(bf),
                   preferred_element_type=f32) + bm2_ref[...]
    logstd = jnp.dot(hml[:, Dh:].astype(bf), wl2_ref[...].astype(bf),
                     preferred_element_type=f32) + bl2_ref[...]
    latent = noise_ref[...].reshape(B * N, Z) * jnp.exp(logstd) + mean

    # single lane-denser output slab: [latent | mean | logstd]
    out_ref[...] = jnp.concatenate([latent, mean, logstd],
                                   axis=-1).astype(out_ref.dtype)


def _cluster_pool_kernel(adj_ref, lat_ref, gum_ref,
                         w1_ref, b1_ref, w2_ref, b2_ref, wg_ref, wa_ref,
                         slat_ref, sadj_ref):
    """GraphCluster + hard gumbel-softmax + pooling + both normalisations."""
    B, N, _ = adj_ref.shape
    Z = lat_ref.shape[-1]
    K = wa_ref.shape[-1]
    L, H, _ = wg_ref.shape
    bf, f32 = jnp.bfloat16, jnp.float32

    adj = adj_ref[...].astype(bf)                               # (B, N, N)
    lat = lat_ref[...]                                          # (B, N, Z) f32
    x = lat.reshape(B * N, Z)

    h = jnp.tanh(jnp.dot(x.astype(bf), w1_ref[...].astype(bf),
                         preferred_element_type=f32) + b1_ref[...])
    h = jnp.tanh(jnp.dot(h.astype(bf), w2_ref[...].astype(bf),
                         preferred_element_type=f32) + b2_ref[...])  # (B*N, H)
    for l in range(L):
        xw = jnp.dot(h.astype(bf), wg_ref[l].astype(bf),
                     preferred_element_type=f32)
        h = jnp.tanh(
            jnp.einsum('bnm,bmh->bnh', adj, xw.reshape(B, N, H).astype(bf),
                       preferred_element_type=f32)).reshape(B * N, H)
    xw = jnp.dot(h.astype(bf), wa_ref[...].astype(bf),
                 preferred_element_type=f32)
    # GraphConvSparse default activation is tanh (matches reference).
    score = jnp.tanh(
        jnp.einsum('bnm,bmk->bnk', adj, xw.reshape(B, N, K).astype(bf),
                   preferred_element_type=f32))                 # (B, N, K)

    # F.gumbel_softmax(tau=1, hard=True): the forward value of the
    # straight-through estimator is exactly one_hot(argmax(score + g)) since
    # softmax is monotone -> softmax itself is skipped for the forward pass.
    zg = score + gum_ref[...]
    mx = jnp.max(zg, axis=-1, keepdims=True)
    iota = jax.lax.broadcasted_iota(jnp.int32, zg.shape, 2)
    idx = jnp.min(jnp.where(zg >= mx, iota, K), axis=-1, keepdims=True)
    assign = (iota == idx).astype(f32)                          # (B, N, K) one-hot

    # pooling (no concat temp): A^T @ latent and A^T @ adj @ A
    slat = jnp.einsum('bnk,bnz->bkz', assign, lat,
                      preferred_element_type=f32)               # (B, K, Z)
    a_bf = assign.astype(bf)
    tmp = jnp.einsum('bnk,bnm->bkm', a_bf, adj,
                     preferred_element_type=f32)                # (B, K, N)
    sadj = jnp.einsum('bkm,bmj->bkj', tmp.astype(bf), a_bf,
                      preferred_element_type=f32)               # (B, K, K)

    # F.normalize(shrinked_latent, dim=1): L2 over the cluster axis, eps=1e-12
    nrm = jnp.sqrt(jnp.sum(slat * slat, axis=1, keepdims=True))
    slat = slat / jnp.maximum(nrm, 1e-12)
    # matches reference: shrinked_adj / sum over ALL elements (incl. batch);
    # the whole batch is in the block so this fuses here.
    sadj = sadj / jnp.sum(sadj)

    slat_ref[...] = slat.astype(slat_ref.dtype)
    sadj_ref[...] = sadj.astype(sadj_ref.dtype)


def _decoder_node_kernel(lat_ref, dw1_ref, db1_ref, dw2_ref, db2_ref,
                         dw3_ref, db3_ref, nw1_ref, nb1_ref, nw2_ref, nb2_ref,
                         pred_ref, node_ref):
    """MLP_Decoder (+ fused outer sigmoid) and the node_fc head, one latent read."""
    B, N, Z = lat_ref.shape
    bf, f32 = jnp.bfloat16, jnp.float32
    lat = lat_ref[...]

    # decoder path: per-graph flattened latent
    xg = lat.reshape(B, N * Z)
    h = jax.nn.sigmoid(jnp.dot(xg.astype(bf), dw1_ref[...].astype(bf),
                               preferred_element_type=f32) + db1_ref[...])
    h = jax.nn.sigmoid(jnp.dot(h.astype(bf), dw2_ref[...].astype(bf),
                               preferred_element_type=f32) + db2_ref[...])
    pred = jax.nn.sigmoid(jnp.dot(h.astype(bf), dw3_ref[...].astype(bf),
                                  preferred_element_type=f32) + db3_ref[...])
    pred_ref[...] = pred.astype(pred_ref.dtype)                 # (B, N*N) lane-dense

    # node head: per-node latent
    xn = lat.reshape(B * N, Z)
    hn = jnp.tanh(jnp.dot(xn.astype(bf), nw1_ref[...].astype(bf),
                          preferred_element_type=f32) + nb1_ref[...])
    node = jnp.dot(hn.astype(bf), nw2_ref[...].astype(bf),
                   preferred_element_type=f32) + nb2_ref[...]
    node_ref[...] = node.astype(node_ref.dtype)                 # (B*N, node_dim)


# ------------------------------- module wrappers -------------------------------

def graph_encoder_forward(p, adj, node_feat, noise):
    B, N, _ = adj.shape
    z = noise.shape[-1]
    (w1, b1), (w2, b2) = p["node_fc1"], p["node_fc2"]
    wg = p["base_w"]
    (wml1, bml1) = p["ml_fc1"]
    (wm2, bm2), (wl2, bl2) = p["mean_fc2"], p["logstd_fc2"]
    args = (adj, node_feat, noise, w1, b1, w2, b2, wg,
            wml1, bml1, wm2, bm2, wl2, bl2)
    out = _call(_encoder_kernel, args,
                jax.ShapeDtypeStruct((B * N, 3 * z), jnp.float32))
    out = out.reshape(B, N, 3 * z)
    return out[..., :z], out[..., z:2 * z], out[..., 2 * z:]


def cluster_pool_forward(p, adj, latent, gumbel_noise):
    B, N, _ = adj.shape
    Z = latent.shape[-1]
    K = p["assign_w"].shape[-1]
    (w1, b1), (w2, b2) = p["fc1"], p["fc2"]
    args = (adj, latent, gumbel_noise, w1, b1, w2, b2, p["base_w"], p["assign_w"])
    slat, sadj = _call(_cluster_pool_kernel, args,
                       (jax.ShapeDtypeStruct((B, K, Z), jnp.float32),
                        jax.ShapeDtypeStruct((B, K, K), jnp.float32)))
    return slat, sadj


def decoder_node_forward(dec_p, node_fc1, node_fc2, latent):
    B, N, Z = latent.shape
    node_dim = node_fc2[0].shape[-1]
    (dw1, db1), (dw2, db2), (dw3, db3) = dec_p["fc1"], dec_p["fc2"], dec_p["fc3"]
    (nw1, nb1), (nw2, nb2) = node_fc1, node_fc2
    args = (latent, dw1, db1, dw2, db2, dw3, db3, nw1, nb1, nw2, nb2)
    pred, node = _call(_decoder_node_kernel, args,
                       (jax.ShapeDtypeStruct((B, N * N), jnp.float32),
                        jax.ShapeDtypeStruct((B * N, node_dim), jnp.float32)))
    return pred.reshape(B, N, N), node.reshape(B, N, node_dim)


# --------------------------- parameter initialization --------------------------

def glorot(key, din, dout):
    r = jnp.sqrt(6.0 / (din + dout))
    return jax.random.uniform(key, (din, dout), jnp.float32, -r, r)


def linear_params(key, din, dout):
    k1, k2 = jax.random.split(key)
    r = 1.0 / jnp.sqrt(float(din))
    w = jax.random.uniform(k1, (din, dout), jnp.float32, -r, r)
    b = jax.random.uniform(k2, (1, dout), jnp.float32, -r, r)
    return (w, b)


def init_graph_encoder(key, num_layers, node_dim, hidden_dim, z_dim):
    keys = jax.random.split(key, num_layers + 6)
    p = {}
    p["node_fc1"] = linear_params(keys[0], node_dim, 128)
    p["node_fc2"] = linear_params(keys[1], 128, hidden_dim)
    p["base_w"] = jnp.stack([glorot(keys[2 + i], hidden_dim, hidden_dim)
                             for i in range(num_layers)])       # (L, H, H)
    cat = (num_layers + 1) * hidden_dim
    mw1, mb1 = linear_params(keys[2 + num_layers], cat, 128)
    lw1, lb1 = linear_params(keys[3 + num_layers], cat, 128)
    # stacked-by-hidden layout (L+1, H, 256): the kernel accumulates partial
    # matmuls instead of lane-concatenating all_hidden.  Row blocks of the
    # original (cat, 128) weight are contiguous, so the reshape is exact.
    mw1 = mw1.reshape(num_layers + 1, hidden_dim, 128)
    lw1 = lw1.reshape(num_layers + 1, hidden_dim, 128)
    p["ml_fc1"] = (jnp.concatenate([mw1, lw1], axis=-1),
                   jnp.concatenate([mb1, lb1], axis=-1))        # (L+1,H,256),(1,256)
    p["mean_fc2"] = linear_params(keys[4 + num_layers], 128, z_dim)
    p["logstd_fc2"] = linear_params(keys[5 + num_layers], 128, z_dim)
    return p


def init_graph_cluster(key, num_layers, input_dim, hidden_dim, z_dim):
    keys = jax.random.split(key, num_layers + 3)
    p = {}
    p["fc1"] = linear_params(keys[0], input_dim, 128)
    p["fc2"] = linear_params(keys[1], 128, hidden_dim)
    p["base_w"] = jnp.stack([glorot(keys[2 + i], hidden_dim, hidden_dim)
                             for i in range(num_layers)])
    p["assign_w"] = glorot(keys[2 + num_layers], hidden_dim, z_dim)
    return p


def init_mlp_decoder(key, num_atoms, zdim):
    k = jax.random.split(key, 3)
    return {
        "fc1": linear_params(k[0], num_atoms * zdim, 256),
        "fc2": linear_params(k[1], 256, 256),
        "fc3": linear_params(k[2], 256, num_atoms * num_atoms),
    }


def init_mgvae(key, max_size, clusters, num_layers, node_dim, hidden_dim, z_dim):
    keys = jax.random.split(key, 4 + 2 * max(len(clusters), 1))
    p = {"clusters": list(clusters), "max_size": max_size, "z_dim": z_dim}
    p["base_encoder"] = init_graph_encoder(keys[0], num_layers, node_dim,
                                           hidden_dim, z_dim)
    p["base_decoder"] = init_mlp_decoder(keys[1], max_size, z_dim)
    p["node_fc1"] = linear_params(keys[2], z_dim, 128)
    p["node_fc2"] = linear_params(keys[3], 128, node_dim)
    p["cluster_learner"] = []
    p["global_encoder"] = []
    i = 4
    for l in range(len(clusters)):
        p["cluster_learner"].append(
            init_graph_cluster(keys[i], 2, z_dim, hidden_dim, clusters[l]))
        p["global_encoder"].append(
            init_graph_encoder(keys[i + 1], 2, z_dim, hidden_dim, z_dim))
        # TODO(synk): SnDecoder (global_decoder) definition is not provided in
        # the source module, so its parameters/forward are omitted.
        i += 2
    return p


# --------------------------------- forward -------------------------------------

def mgvae_forward(p, adj, node_feat, key):
    clusters = p["clusters"]
    z_dim = p["z_dim"]
    B, N = adj.shape[0], adj.shape[1]

    keys = jax.random.split(key, 1 + 2 * max(len(clusters), 1))
    outputs = []

    noise = jax.random.normal(keys[0], (B, N, z_dim), jnp.float32)
    base_latent, base_mean, base_logstd = graph_encoder_forward(
        p["base_encoder"], adj, node_feat, noise)

    # decoder (incl. the outer torch.sigmoid) + node head fused, one latent read
    base_predict, node_predict = decoder_node_forward(
        p["base_decoder"], p["node_fc1"], p["node_fc2"], base_latent)

    outputs.append([base_latent, base_mean, base_logstd, base_predict, adj])

    l = len(clusters) - 1
    ki = 1
    while l >= 0:
        prev_adj = outputs[-1][4]
        prev_latent = outputs[-1][0]
        prev_n = prev_adj.shape[1]
        K = clusters[l]

        gum = jax.random.gumbel(keys[ki], (B, prev_n, K), jnp.float32)
        ki += 1
        # cluster learner + hard gumbel-softmax + pooling + normalisations
        shrinked_latent, shrinked_adj = cluster_pool_forward(
            p["cluster_learner"][l], prev_adj, prev_latent, gum)

        noise_l = jax.random.normal(keys[ki], (B, K, z_dim), jnp.float32)
        ki += 1
        next_latent, next_mean, next_logstd = graph_encoder_forward(
            p["global_encoder"][l], shrinked_adj, shrinked_latent, noise_l)

        # TODO(synk): SnDecoder source is not provided; next_predict omitted.
        next_predict = None
        outputs.append([next_latent, next_mean, next_logstd, next_predict,
                        shrinked_adj])
        l -= 1

    return outputs, node_predict


# ----------------------------------- main ---------------------------------------

if __name__ == "__main__":
    B, N = 2, 16
    node_dim = 4
    hidden_dim = 32
    z_dim = 32
    num_layers = 3
    clusters = [2, 4]   # clusters[l] = number of super-nodes at level l

    key = jax.random.PRNGKey(0)
    k_param, k_adj, k_feat, k_fwd = jax.random.split(key, 4)

    params = init_mgvae(k_param, N, clusters, num_layers, node_dim,
                        hidden_dim, z_dim)

    a = jax.random.uniform(k_adj, (B, N, N), jnp.float32)
    adj = ((a + jnp.swapaxes(a, 1, 2)) > 1.0).astype(jnp.float32)
    node_feat = jax.random.normal(k_feat, (B, N, node_dim), jnp.float32)

    fwd = jax.jit(lambda a_, x_, k_: mgvae_forward(params, a_, x_, k_))
    outputs, node_predict = fwd(adj, node_feat, k_fwd)

    jax.block_until_ready(node_predict)
    for out in outputs:
        for t in out:
            if t is not None:
                jax.block_until_ready(t)

    print("KERNEL_OK")
</pallas_src>

<mosaic_0001>
module attributes {stable_mosaic.version = 11 : i64} {
  func.func @_encoder_kernel(%arg0: i32, %arg1: memref<2x16x16xf32, #tpu.memory_space<vmem>>, %arg2: memref<2x16x4xf32, #tpu.memory_space<vmem>>, %arg3: memref<2x16x32xf32, #tpu.memory_space<vmem>>, %arg4: memref<4x128xf32, #tpu.memory_space<vmem>>, %arg5: memref<1x128xf32, #tpu.memory_space<vmem>>, %arg6: memref<128x32xf32, #tpu.memory_space<vmem>>, %arg7: memref<1x32xf32, #tpu.memory_space<vmem>>, %arg8: memref<3x32x32xf32, #tpu.memory_space<vmem>>, %arg9: memref<4x32x256xf32, #tpu.memory_space<vmem>>, %arg10: memref<1x256xf32, #tpu.memory_space<vmem>>, %arg11: memref<128x32xf32, #tpu.memory_space<vmem>>, %arg12: memref<1x32xf32, #tpu.memory_space<vmem>>, %arg13: memref<128x32xf32, #tpu.memory_space<vmem>>, %arg14: memref<1x32xf32, #tpu.memory_space<vmem>>, %arg15: memref<32x96xf32, #tpu.memory_space<vmem>>) attributes {dimension_semantics = [#tpu.dimension_semantics<arbitrary>], iteration_bounds = array<i64: 1>, scalar_prefetch = 0 : i64, scratch_operands = 0 : i64, tpu.core_type = #tpu.core_type<tc>, window_params = [{pipeline_mode = #tpu.pipeline_mode<synchronous>, transform_indices = @transform_0, window_bounds = array<i64: 2, 16, 16>}, {pipeline_mode = #tpu.pipeline_mode<synchronous>, transform_indices = @transform_1, window_bounds = array<i64: 2, 16, 4>}, {pipeline_mode = #tpu.pipeline_mode<synchronous>, transform_indices = @transform_2, window_bounds = array<i64: 2, 16, 32>}, {pipeline_mode = #tpu.pipeline_mode<synchronous>, transform_indices = @transform_3, window_bounds = array<i64: 4, 128>}, {pipeline_mode = #tpu.pipeline_mode<synchronous>, transform_indices = @transform_4, window_bounds = array<i64: 1, 128>}, {pipeline_mode = #tpu.pipeline_mode<synchronous>, transform_indices = @transform_5, window_bounds = array<i64: 128, 32>}, {pipeline_mode = #tpu.pipeline_mode<synchronous>, transform_indices = @transform_6, window_bounds = array<i64: 1, 32>}, {pipeline_mode = #tpu.pipeline_mode<synchronous>, transform_indices = @transform_7, window_bounds = array<i64: 3, 32, 32>}, {pipeline_mode = #tpu.pipeline_mode<synchronous>, transform_indices = @transform_8, window_bounds = array<i64: 4, 32, 256>}, {pipeline_mode = #tpu.pipeline_mode<synchronous>, transform_indices = @transform_9, window_bounds = array<i64: 1, 256>}, {pipeline_mode = #tpu.pipeline_mode<synchronous>, transform_indices = @transform_10, window_bounds = array<i64: 128, 32>}, {pipeline_mode = #tpu.pipeline_mode<synchronous>, transform_indices = @transform_11, window_bounds = array<i64: 1, 32>}, {pipeline_mode = #tpu.pipeline_mode<synchronous>, transform_indices = @transform_12, window_bounds = array<i64: 128, 32>}, {pipeline_mode = #tpu.pipeline_mode<synchronous>, transform_indices = @transform_13, window_bounds = array<i64: 1, 32>}, {pipeline_mode = #tpu.pipeline_mode<synchronous>, transform_indices = @transform_14, window_bounds = array<i64: 32, 96>}]} {
    %c0 = arith.constant 0 : index
    %c0_0 = arith.constant 0 : index
    %c0_1 = arith.constant 0 : index
    %0 = vector.load %arg1[%c0, %c0_0, %c0_1] : memref<2x16x16xf32, #tpu.memory_space<vmem>>, vector<2x16x16xf32>
    %1 = arith.truncf %0 : vector<2x16x16xf32> to vector<2x16x16xbf16>
    %c0_2 = arith.constant 0 : index
    %c0_3 = arith.constant 0 : index
    %c0_4 = arith.constant 0 : index
    %2 = vector.load %arg2[%c0_2, %c0_3, %c0_4] : memref<2x16x4xf32, #tpu.memory_space<vmem>>, vector<2x16x4xf32>
    %3 = vector.shape_cast %2 : vector<2x16x4xf32> to vector<32x4xf32>
    %4 = arith.truncf %3 : vector<32x4xf32> to vector<32x4xbf16>
    %c0_5 = arith.constant 0 : index
    %c0_6 = arith.constant 0 : index
    %5 = vector.load %arg4[%c0_5, %c0_6] : memref<4x128xf32, #tpu.memory_space<vmem>>, vector<4x128xf32>
    %6 = arith.truncf %5 : vector<4x128xf32> to vector<4x128xbf16>
    %cst = arith.constant dense<0.000000e+00> : vector<32x128xf32>
    %7 = tpu.matmul %4, %6, %cst {dimension_numbers = #tpu.dot_dimension_numbers<[1], [0], [0], [1], [0, 0, 1, 1], [], []>} : vector<32x4xbf16>, vector<4x128xbf16>, vector<32x128xf32> -> vector<32x128xf32>
    %c0_7 = arith.constant 0 : index
    %c0_8 = arith.constant 0 : index
    %8 = vector.load %arg5[%c0_7, %c0_8] : memref<1x128xf32, #tpu.memory_space<vmem>>, vector<1x128xf32>
    %9 = vector.broadcast %8 : vector<1x128xf32> to vector<32x128xf32>
    %10 = arith.addf %7, %9 : vector<32x128xf32>
    %11 = math.tanh %10 : vector<32x128xf32>
    %12 = arith.truncf %11 : vector<32x128xf32> to vector<32x128xbf16>
    %c0_9 = arith.constant 0 : index
    %c0_10 = arith.constant 0 : index
    %13 = vector.load %arg6[%c0_9, %c0_10] : memref<128x32xf32, #tpu.memory_space<vmem>>, vector<128x32xf32>
    %14 = arith.truncf %13 : vector<128x32xf32> to vector<128x32xbf16>
    %cst_11 = arith.constant dense<0.000000e+00> : vector<32x32xf32>
    %15 = tpu.matmul %12, %14, %cst_11 {dimension_numbers = #tpu.dot_dimension_numbers<[1], [0], [0], [1], [0, 0, 1, 1], [], []>} : vector<32x128xbf16>, vector<128x32xbf16>, vector<32x32xf32> -> vector<32x32xf32>
    %c0_12 = arith.constant 0 : index
    %c0_13 = arith.constant 0 : index
    %16 = vector.load %arg7[%c0_12, %c0_13] : memref<1x32xf32, #tpu.memory_space<vmem>>, vector<1x32xf32>
    %17 = vector.broadcast %16 : vector<1x32xf32> to vector<32x32xf32>
    %18 = arith.addf %15, %17 : vector<32x32xf32>
    %19 = math.tanh %18 : vector<32x32xf32>
    %20 = arith.truncf %19 : vector<32x32xf32> to vector<32x32xbf16>
    %c0_14 = arith.constant 0 : index
    %c0_15 = arith.constant 0 : index
    %c0_16 = arith.constant 0 : index
    %21 = vector.load %arg9[%c0_14, %c0_15, %c0_16] : memref<4x32x256xf32, #tpu.memory_space<vmem>>, vector<1x32x256xf32>
    %22 = vector.shape_cast %21 : vector<1x32x256xf32> to vector<32x256xf32>
    %23 = arith.truncf %22 : vector<32x256xf32> to vector<32x256xbf16>
    %cst_17 = arith.constant dense<0.000000e+00> : vector<32x256xf32>
    %24 = tpu.matmul %20, %23, %cst_17 {dimension_numbers = #tpu.dot_dimension_numbers<[1], [0], [0], [1], [0, 0, 1, 1], [], []>} : vector<32x32xbf16>, vector<32x256xbf16>, vector<32x256xf32> -> vector<32x256xf32>
    %25 = arith.truncf %19 : vector<32x32xf32> to vector<32x32xbf16>
    %c0_18 = arith.constant 0 : index
    %c0_19 = arith.constant 0 : index
    %c0_20 = arith.constant 0 : index
    %26 = vector.load %arg8[%c0_18, %c0_19, %c0_20] : memref<3x32x32xf32, #tpu.memory_space<vmem>>, vector<1x32x32xf32>
    %27 = vector.shape_cast %26 : vector<1x32x32xf32> to vector<32x32xf32>
    %28 = arith.truncf %27 : vector<32x32xf32> to vector<32x32xbf16>
    %cst_21 = arith.constant dense<0.000000e+00> : vector<32x32xf32>
    %29 = tpu.matmul %25, %28, %cst_21 {dimension_numbers = #tpu.dot_dimension_numbers<[1], [0], [0], [1], [0, 0, 1, 1], [], []>} : vector<32x32xbf16>, vector<32x32xbf16>, vector<32x32xf32> -> vector<32x32xf32>
    %30 = vector.shape_cast %29 : vector<32x32xf32> to vector<2x16x32xf32>
    %31 = arith.truncf %30 : vector<2x16x32xf32> to vector<2x16x32xbf16>
    "tpu.trace_start"() <{level = 10 : i32, message = "bnm,bmh->bnh"}> : () -> ()
    %cst_22 = arith.constant dense<0.000000e+00> : vector<2x16x32xf32>
    %32 = tpu.matmul %1, %31, %cst_22 {dimension_numbers = #tpu.dot_dimension_numbers<[2], [1], [1], [2], [0, 0, 0, 1, 1, 2], [0], [0]>} : vector<2x16x16xbf16>, vector<2x16x32xbf16>, vector<2x16x32xf32> -> vector<2x16x32xf32>
    "tpu.trace_stop"() : () -> ()
    %33 = math.tanh %32 : vector<2x16x32xf32>
    %34 = vector.shape_cast %33 : vector<2x16x32xf32> to vector<32x32xf32>
    %35 = arith.truncf %34 : vector<32x32xf32> to vector<32x32xbf16>
    %c1 = arith.constant 1 : index
    %c0_23 = arith.constant 0 : index
    %c0_24 = arith.constant 0 : index
    %36 = vector.load %arg9[%c1, %c0_23, %c0_24] : memref<4x32x256xf32, #tpu.memory_space<vmem>>, vector<1x32x256xf32>
    %37 = vector.shape_cast %36 : vector<1x32x256xf32> to vector<32x256xf32>
    %38 = arith.truncf %37 : vector<32x256xf32> to vector<32x256xbf16>
    %cst_25 = arith.constant dense<0.000000e+00> : vector<32x256xf32>
    %39 = tpu.matmul %35, %38, %cst_25 {dimension_numbers = #tpu.dot_dimension_numbers<[1], [0], [0], [1], [0, 0, 1, 1], [], []>} : vector<32x32xbf16>, vector<32x256xbf16>, vector<32x256xf32> -> vector<32x256xf32>
    %40 = arith.addf %24, %39 : vector<32x256xf32>
    %41 = arith.truncf %34 : vector<32x32xf32> to vector<32x32xbf16>
    %c1_26 = arith.constant 1 : index
    %c0_27 = arith.constant 0 : index
    %c0_28 = arith.constant 0 : index
    %42 = vector.load %arg8[%c1_26, %c0_27, %c0_28] : memref<3x32x32xf32, #tpu.memory_space<vmem>>, vector<1x32x32xf32>
    %43 = vector.shape_cast %42 : vector<1x32x32xf32> to vector<32x32xf32>
    %44 = arith.truncf %43 : vector<32x32xf32> to vector<32x32xbf16>
    %cst_29 = arith.constant dense<0.000000e+00> : vector<32x32xf32>
    %45 = tpu.matmul %41, %44, %cst_29 {dimension_numbers = #tpu.dot_dimension_numbers<[1], [0], [0], [1], [0, 0, 1, 1], [], []>} : vector<32x32xbf16>, vector<32x32xbf16>, vector<32x32xf32> -> vector<32x32xf32>
    %46 = vector.shape_cast %45 : vector<32x32xf32> to vector<2x16x32xf32>
    %47 = arith.truncf %46 : vector<2x16x32xf32> to vector<2x16x32xbf16>
    "tpu.trace_start"() <{level = 10 : i32, message = "bnm,bmh->bnh"}> : () -> ()
    %cst_30 = arith.constant dense<0.000000e+00> : vector<2x16x32xf32>
    %48 = tpu.matmul %1, %47, %cst_30 {dimension_numbers = #tpu.dot_dimension_numbers<[2], [1], [1], [2], [0, 0, 0, 1, 1, 2], [0], [0]>} : vector<2x16x16xbf16>, vector<2x16x32xbf16>, vector<2x16x32xf32> -> vector<2x16x32xf32>
    "tpu.trace_stop"() : () -> ()
    %49 = math.tanh %48 : vector<2x16x32xf32>
    %50 = vector.shape_cast %49 : vector<2x16x32xf32> to vector<32x32xf32>
    %51 = arith.truncf %50 : vector<32x32xf32> to vector<32x32xbf16>
    %c2 = arith.constant 2 : index
    %c0_31 = arith.constant 0 : index
    %c0_32 = arith.constant 0 : index
    %52 = vector.load %arg9[%c2, %c0_31, %c0_32] : memref<4x32x256xf32, #tpu.memory_space<vmem>>, vector<1x32x256xf32>
    %53 = vector.shape_cast %52 : vector<1x32x256xf32> to vector<32x256xf32>
    %54 = arith.truncf %53 : vector<32x256xf32> to vector<32x256xbf16>
    %cst_33 = arith.constant dense<0.000000e+00> : vector<32x256xf32>
    %55 = tpu.matmul %51, %54, %cst_33 {dimension_numbers = #tpu.dot_dimension_numbers<[1], [0], [0], [1], [0, 0, 1, 1], [], []>} : vector<32x32xbf16>, vector<32x256xbf16>, vector<32x256xf32> -> vector<32x256xf32>
    %56 = arith.addf %40, %55 : vector<32x256xf32>
    %57 = arith.truncf %50 : vector<32x32xf32> to vector<32x32xbf16>
    %c2_34 = arith.constant 2 : index
    %c0_35 = arith.constant 0 : index
    %c0_36 = arith.constant 0 : index
    %58 = vector.load %arg8[%c2_34, %c0_35, %c0_36] : memref<3x32x32xf32, #tpu.memory_space<vmem>>, vector<1x32x32xf32>
    %59 = vector.shape_cast %58 : vector<1x32x32xf32> to vector<32x32xf32>
    %60 = arith.truncf %59 : vector<32x32xf32> to vector<32x32xbf16>
    %cst_37 = arith.constant dense<0.000000e+00> : vector<32x32xf32>
    %61 = tpu.matmul %57, %60, %cst_37 {dimension_numbers = #tpu.dot_dimension_numbers<[1], [0], [0], [1], [0, 0, 1, 1], [], []>} : vector<32x32xbf16>, vector<32x32xbf16>, vector<32x32xf32> -> vector<32x32xf32>
    %62 = vector.shape_cast %61 : vector<32x32xf32> to vector<2x16x32xf32>
    %63 = arith.truncf %62 : vector<2x16x32xf32> to vector<2x16x32xbf16>
    "tpu.trace_start"() <{level = 10 : i32, message = "bnm,bmh->bnh"}> : () -> ()
    %cst_38 = arith.constant dense<0.000000e+00> : vector<2x16x32xf32>
    %64 = tpu.matmul %1, %63, %cst_38 {dimension_numbers = #tpu.dot_dimension_numbers<[2], [1], [1], [2], [0, 0, 0, 1, 1, 2], [0], [0]>} : vector<2x16x16xbf16>, vector<2x16x32xbf16>, vector<2x16x32xf32> -> vector<2x16x32xf32>
    "tpu.trace_stop"() : () -> ()
    %65 = math.tanh %64 : vector<2x16x32xf32>
    %66 = vector.shape_cast %65 : vector<2x16x32xf32> to vector<32x32xf32>
    %67 = arith.truncf %66 : vector<32x32xf32> to vector<32x32xbf16>
    %c3 = arith.constant 3 : index
    %c0_39 = arith.constant 0 : index
    %c0_40 = arith.constant 0 : index
    %68 = vector.load %arg9[%c3, %c0_39, %c0_40] : memref<4x32x256xf32, #tpu.memory_space<vmem>>, vector<1x32x256xf32>
    %69 = vector.shape_cast %68 : vector<1x32x256xf32> to vector<32x256xf32>
    %70 = arith.truncf %69 : vector<32x256xf32> to vector<32x256xbf16>
    %cst_41 = arith.constant dense<0.000000e+00> : vector<32x256xf32>
    %71 = tpu.matmul %67, %70, %cst_41 {dimension_numbers = #tpu.dot_dimension_numbers<[1], [0], [0], [1], [0, 0, 1, 1], [], []>} : vector<32x32xbf16>, vector<32x256xbf16>, vector<32x256xf32> -> vector<32x256xf32>
    %72 = arith.addf %56, %71 : vector<32x256xf32>
    %c0_42 = arith.constant 0 : index
    %c0_43 = arith.constant 0 : index
    %73 = vector.load %arg10[%c0_42, %c0_43] : memref<1x256xf32, #tpu.memory_space<vmem>>, vector<1x256xf32>
    %74 = vector.broadcast %73 : vector<1x256xf32> to vector<32x256xf32>
    %75 = arith.addf %72, %74 : vector<32x256xf32>
    %76 = math.tanh %75 : vector<32x256xf32>
    %77 = vector.extract_strided_slice %76 {offsets = [0, 0], sizes = [32, 128], strides = [1, 1]} : vector<32x256xf32> to vector<32x128xf32>
    %78 = arith.truncf %77 : vector<32x128xf32> to vector<32x128xbf16>
    %c0_44 = arith.constant 0 : index
    %c0_45 = arith.constant 0 : index
    %79 = vector.load %arg11[%c0_44, %c0_45] : memref<128x32xf32, #tpu.memory_space<vmem>>, vector<128x32xf32>
    %80 = arith.truncf %79 : vector<128x32xf32> to vector<128x32xbf16>
    %cst_46 = arith.constant dense<0.000000e+00> : vector<32x32xf32>
    %81 = tpu.matmul %78, %80, %cst_46 {dimension_numbers = #tpu.dot_dimension_numbers<[1], [0], [0], [1], [0, 0, 1, 1], [], []>} : vector<32x128xbf16>, vector<128x32xbf16>, vector<32x32xf32> -> vector<32x32xf32>
    %c0_47 = arith.constant 0 : index
    %c0_48 = arith.constant 0 : index
    %82 = vector.load %arg12[%c0_47, %c0_48] : memref<1x32xf32, #tpu.memory_space<vmem>>, vector<1x32xf32>
    %83 = vector.broadcast %82 : vector<1x32xf32> to vector<32x32xf32>
    %84 = arith.addf %81, %83 : vector<32x32xf32>
    %85 = vector.extract_strided_slice %76 {offsets = [0, 128], sizes = [32, 128], strides = [1, 1]} : vector<32x256xf32> to vector<32x128xf32>
    %86 = arith.truncf %85 : vector<32x128xf32> to vector<32x128xbf16>
    %c0_49 = arith.constant 0 : index
    %c0_50 = arith.constant 0 : index
    %87 = vector.load %arg13[%c0_49, %c0_50] : memref<128x32xf32, #tpu.memory_space<vmem>>, vector<128x32xf32>
    %88 = arith.truncf %87 : vector<128x32xf32> to vector<128x32xbf16>
    %cst_51 = arith.constant dense<0.000000e+00> : vector<32x32xf32>
    %89 = tpu.matmul %86, %88, %cst_51 {dimension_numbers = #tpu.dot_dimension_numbers<[1], [0], [0], [1], [0, 0, 1, 1], [], []>} : vector<32x128xbf16>, vector<128x32xbf16>, vector<32x32xf32> -> vector<32x32xf32>
    %c0_52 = arith.constant 0 : index
    %c0_53 = arith.constant 0 : index
    %90 = vector.load %arg14[%c0_52, %c0_53] : memref<1x32xf32, #tpu.memory_space<vmem>>, vector<1x32xf32>
    %91 = vector.broadcast %90 : vector<1x32xf32> to vector<32x32xf32>
    %92 = arith.addf %89, %91 : vector<32x32xf32>
    %c0_54 = arith.constant 0 : index
    %c0_55 = arith.constant 0 : index
    %c0_56 = arith.constant 0 : index
    %93 = vector.load %arg3[%c0_54, %c0_55, %c0_56] : memref<2x16x32xf32, #tpu.memory_space<vmem>>, vector<2x16x32xf32>
    %94 = vector.shape_cast %93 : vector<2x16x32xf32> to vector<32x32xf32>
    %95 = math.exp %92 : vector<32x32xf32>
    %96 = arith.mulf %94, %95 : vector<32x32xf32>
    %97 = arith.addf %96, %84 : vector<32x32xf32>
    %98 = tpu.concatenate %97, %84, %92 in 1 : vector<32x32xf32>, vector<32x32xf32>, vector<32x32xf32> -> vector<32x96xf32>
    %c0_57 = arith.constant 0 : index
    %c0_58 = arith.constant 0 : index
    %99 = vector.load %arg15[%c0_57, %c0_58] : memref<32x96xf32, #tpu.memory_space<vmem>>, vector<32x96xf32>
    tpu.vector_store %arg15[%c0_57, %c0_58], %98 {strides = array<i32>} : memref<32x96xf32, #tpu.memory_space<vmem>>, vector<32x96xf32>,
    return
  }
  func.func @transform_0(%arg0: i32) -> (i32, i32, i32) {
    %c0_i32 = arith.constant 0 : i32
    %c0_i32_0 = arith.constant 0 : i32
    %c0_i32_1 = arith.constant 0 : i32
    %c0_i32_2 = arith.constant 0 : i32
    return %c0_i32, %c0_i32_0, %c0_i32_1 : i32, i32, i32
  }
  func.func @transform_1(%arg0: i32) -> (i32, i32, i32) {
    %c0_i32 = arith.constant 0 : i32
    %c0_i32_0 = arith.constant 0 : i32
    %c0_i32_1 = arith.constant 0 : i32
    %c0_i32_2 = arith.constant 0 : i32
    return %c0_i32, %c0_i32_0, %c0_i32_1 : i32, i32, i32
  }
  func.func @transform_2(%arg0: i32) -> (i32, i32, i32) {
    %c0_i32 = arith.constant 0 : i32
    %c0_i32_0 = arith.constant 0 : i32
    %c0_i32_1 = arith.constant 0 : i32
    %c0_i32_2 = arith.constant 0 : i32
    return %c0_i32, %c0_i32_0, %c0_i32_1 : i32, i32, i32
  }
  func.func @transform_3(%arg0: i32) -> (i32, i32) {
    %c0_i32 = arith.constant 0 : i32
    %c0_i32_0 = arith.constant 0 : i32
    %c0_i32_1 = arith.constant 0 : i32
    return %c0_i32, %c0_i32_0 : i32, i32
  }
  func.func @transform_4(%arg0: i32) -> (i32, i32) {
    %c0_i32 = arith.constant 0 : i32
    %c0_i32_0 = arith.constant 0 : i32
    %c0_i32_1 = arith.constant 0 : i32
    return %c0_i32, %c0_i32_0 : i32, i32
  }
  func.func @transform_5(%arg0: i32) -> (i32, i32) {
    %c0_i32 = arith.constant 0 : i32
    %c0_i32_0 = arith.constant 0 : i32
    %c0_i32_1 = arith.constant 0 : i32
    return %c0_i32, %c0_i32_0 : i32, i32
  }
  func.func @transform_6(%arg0: i32) -> (i32, i32) {
    %c0_i32 = arith.constant 0 : i32
    %c0_i32_0 = arith.constant 0 : i32
    %c0_i32_1 = arith.constant 0 : i32
    return %c0_i32, %c0_i32_0 : i32, i32
  }
  func.func @transform_7(%arg0: i32) -> (i32, i32, i32) {
    %c0_i32 = arith.constant 0 : i32
    %c0_i32_0 = arith.constant 0 : i32
    %c0_i32_1 = arith.constant 0 : i32
    %c0_i32_2 = arith.constant 0 : i32
    return %c0_i32, %c0_i32_0, %c0_i32_1 : i32, i32, i32
  }
  func.func @transform_8(%arg0: i32) -> (i32, i32, i32) {
    %c0_i32 = arith.constant 0 : i32
    %c0_i32_0 = arith.constant 0 : i32
    %c0_i32_1 = arith.constant 0 : i32
    %c0_i32_2 = arith.constant 0 : i32
    return %c0_i32, %c0_i32_0, %c0_i32_1 : i32, i32, i32
  }
  func.func @transform_9(%arg0: i32) -> (i32, i32) {
    %c0_i32 = arith.constant 0 : i32
    %c0_i32_0 = arith.constant 0 : i32
    %c0_i32_1 = arith.constant 0 : i32
    return %c0_i32, %c0_i32_0 : i32, i32
  }
  func.func @transform_10(%arg0: i32) -> (i32, i32) {
    %c0_i32 = arith.constant 0 : i32
    %c0_i32_0 = arith.constant 0 : i32
    %c0_i32_1 = arith.constant 0 : i32
    return %c0_i32, %c0_i32_0 : i32, i32
  }
  func.func @transform_11(%arg0: i32) -> (i32, i32) {
    %c0_i32 = arith.constant 0 : i32
    %c0_i32_0 = arith.constant 0 : i32
    %c0_i32_1 = arith.constant 0 : i32
    return %c0_i32, %c0_i32_0 : i32, i32
  }
  func.func @transform_12(%arg0: i32) -> (i32, i32) {
    %c0_i32 = arith.constant 0 : i32
    %c0_i32_0 = arith.constant 0 : i32
    %c0_i32_1 = arith.constant 0 : i32
    return %c0_i32, %c0_i32_0 : i32, i32
  }
  func.func @transform_13(%arg0: i32) -> (i32, i32) {
    %c0_i32 = arith.constant 0 : i32
    %c0_i32_0 = arith.constant 0 : i32
    %c0_i32_1 = arith.constant 0 : i32
    return %c0_i32, %c0_i32_0 : i32, i32
  }
  func.func @transform_14(%arg0: i32) -> (i32, i32) {
    %c0_i32 = arith.constant 0 : i32
    %c0_i32_0 = arith.constant 0 : i32
    %c0_i32_1 = arith.constant 0 : i32
    return %c0_i32, %c0_i32_0 : i32, i32
  }
}

module attributes {stable_mosaic.version = 11 : i64} {
  func.func @_cluster_pool_kernel(%arg0: i32, %arg1: memref<2x16x16xf32, #tpu.memory_space<vmem>>, %arg2: memref<2x16x32xf32, #tpu.memory_space<vmem>>, %arg3: memref<2x16x4xf32, #tpu.memory_space<vmem>>, %arg4: memref<32x128xf32, #tpu.memory_space<vmem>>, %arg5: memref<1x128xf32, #tpu.memory_space<vmem>>, %arg6: memref<128x32xf32, #tpu.memory_space<vmem>>, %arg7: memref<1x32xf32, #tpu.memory_space<vmem>>, %arg8: memref<2x32x32xf32, #tpu.memory_space<vmem>>, %arg9: memref<32x4xf32, #tpu.memory_space<vmem>>, %arg10: memref<2x4x32xf32, #tpu.memory_space<vmem>>, %arg11: memref<2x4x4xf32, #tpu.memory_space<vmem>>) attributes {dimension_semantics = [#tpu.dimension_semantics<arbitrary>], iteration_bounds = array<i64: 1>, scalar_prefetch = 0 : i64, scratch_operands = 0 : i64, tpu.core_type = #tpu.core_type<tc>, window_params = [{pipeline_mode = #tpu.pipeline_mode<synchronous>, transform_indices = @transform_0, window_bounds = array<i64: 2, 16, 16>}, {pipeline_mode = #tpu.pipeline_mode<synchronous>, transform_indices = @transform_1, window_bounds = array<i64: 2, 16, 32>}, {pipeline_mode = #tpu.pipeline_mode<synchronous>, transform_indices = @transform_2, window_bounds = array<i64: 2, 16, 4>}, {pipeline_mode = #tpu.pipeline_mode<synchronous>, transform_indices = @transform_3, window_bounds = array<i64: 32, 128>}, {pipeline_mode = #tpu.pipeline_mode<synchronous>, transform_indices = @transform_4, window_bounds = array<i64: 1, 128>}, {pipeline_mode = #tpu.pipeline_mode<synchronous>, transform_indices = @transform_5, window_bounds = array<i64: 128, 32>}, {pipeline_mode = #tpu.pipeline_mode<synchronous>, transform_indices = @transform_6, window_bounds = array<i64: 1, 32>}, {pipeline_mode = #tpu.pipeline_mode<synchronous>, transform_indices = @transform_7, window_bounds = array<i64: 2, 32, 32>}, {pipeline_mode = #tpu.pipeline_mode<synchronous>, transform_indices = @transform_8, window_bounds = array<i64: 32, 4>}, {pipeline_mode = #tpu.pipeline_mode<synchronous>, transform_indices = @transform_9, window_bounds = array<i64: 2, 4, 32>}, {pipeline_mode = #tpu.pipeline_mode<synchronous>, transform_indices = @transform_10, window_bounds = array<i64: 2, 4, 4>}]} {
    %c0 = arith.constant 0 : index
    %c0_0 = arith.constant 0 : index
    %c0_1 = arith.constant 0 : index
    %0 = vector.load %arg1[%c0, %c0_0, %c0_1] : memref<2x16x16xf32, #tpu.memory_space<vmem>>, vector<2x16x16xf32>
    %1 = arith.truncf %0 : vector<2x16x16xf32> to vector<2x16x16xbf16>
    %c0_2 = arith.constant 0 : index
    %c0_3 = arith.constant 0 : index
    %c0_4 = arith.constant 0 : index
    %2 = vector.load %arg2[%c0_2, %c0_3, %c0_4] : memref<2x16x32xf32, #tpu.memory_space<vmem>>, vector<2x16x32xf32>
    %3 = vector.shape_cast %2 : vector<2x16x32xf32> to vector<32x32xf32>
    %4 = arith.truncf %3 : vector<32x32xf32> to vector<32x32xbf16>
    %c0_5 = arith.constant 0 : index
    %c0_6 = arith.constant 0 : index
    %5 = vector.load %arg4[%c0_5, %c0_6] : memref<32x128xf32, #tpu.memory_space<vmem>>, vector<32x128xf32>
    %6 = arith.truncf %5 : vector<32x128xf32> to vector<32x128xbf16>
    %cst = arith.constant dense<0.000000e+00> : vector<32x128xf32>
    %7 = tpu.matmul %4, %6, %cst {dimension_numbers = #tpu.dot_dimension_numbers<[1], [0], [0], [1], [0, 0, 1, 1], [], []>} : vector<32x32xbf16>, vector<32x128xbf16>, vector<32x128xf32> -> vector<32x128xf32>
    %c0_7 = arith.constant 0 : index
    %c0_8 = arith.constant 0 : index
    %8 = vector.load %arg5[%c0_7, %c0_8] : memref<1x128xf32, #tpu.memory_space<vmem>>, vector<1x128xf32>
    %9 = vector.broadcast %8 : vector<1x128xf32> to vector<32x128xf32>
    %10 = arith.addf %7, %9 : vector<32x128xf32>
    %11 = math.tanh %10 : vector<32x128xf32>
    %12 = arith.truncf %11 : vector<32x128xf32> to vector<32x128xbf16>
    %c0_9 = arith.constant 0 : index
    %c0_10 = arith.constant 0 : index
    %13 = vector.load %arg6[%c0_9, %c0_10] : memref<128x32xf32, #tpu.memory_space<vmem>>, vector<128x32xf32>
    %14 = arith.truncf %13 : vector<128x32xf32> to vector<128x32xbf16>
    %cst_11 = arith.constant dense<0.000000e+00> : vector<32x32xf32>
    %15 = tpu.matmul %12, %14, %cst_11 {dimension_numbers = #tpu.dot_dimension_numbers<[1], [0], [0], [1], [0, 0, 1, 1], [], []>} : vector<32x128xbf16>, vector<128x32xbf16>, vector<32x32xf32> -> vector<32x32xf32>
    %c0_12 = arith.constant 0 : index
    %c0_13 = arith.constant 0 : index
    %16 = vector.load %arg7[%c0_12, %c0_13] : memref<1x32xf32, #tpu.memory_space<vmem>>, vector<1x32xf32>
    %17 = vector.broadcast %16 : vector<1x32xf32> to vector<32x32xf32>
    %18 = arith.addf %15, %17 : vector<32x32xf32>
    %19 = math.tanh %18 : vector<32x32xf32>
    %20 = arith.truncf %19 : vector<32x32xf32> to vector<32x32xbf16>
    %c0_14 = arith.constant 0 : index
    %c0_15 = arith.constant 0 : index
    %c0_16 = arith.constant 0 : index
    %21 = vector.load %arg8[%c0_14, %c0_15, %c0_16] : memref<2x32x32xf32, #tpu.memory_space<vmem>>, vector<1x32x32xf32>
    %22 = vector.shape_cast %21 : vector<1x32x32xf32> to vector<32x32xf32>
    %23 = arith.truncf %22 : vector<32x32xf32> to vector<32x32xbf16>
    %cst_17 = arith.constant dense<0.000000e+00> : vector<32x32xf32>
    %24 = tpu.matmul %20, %23, %cst_17 {dimension_numbers = #tpu.dot_dimension_numbers<[1], [0], [0], [1], [0, 0, 1, 1], [], []>} : vector<32x32xbf16>, vector<32x32xbf16>, vector<32x32xf32> -> vector<32x32xf32>
    %25 = vector.shape_cast %24 : vector<32x32xf32> to vector<2x16x32xf32>
    %26 = arith.truncf %25 : vector<2x16x32xf32> to vector<2x16x32xbf16>
    "tpu.trace_start"() <{level = 10 : i32, message = "bnm,bmh->bnh"}> : () -> ()
    %cst_18 = arith.constant dense<0.000000e+00> : vector<2x16x32xf32>
    %27 = tpu.matmul %1, %26, %cst_18 {dimension_numbers = #tpu.dot_dimension_numbers<[2], [1], [1], [2], [0, 0, 0, 1, 1, 2], [0], [0]>} : vector<2x16x16xbf16>, vector<2x16x32xbf16>, vector<2x16x32xf32> -> vector<2x16x32xf32>
    "tpu.trace_stop"() : () -> ()
    %28 = math.tanh %27 : vector<2x16x32xf32>
    %29 = vector.shape_cast %28 : vector<2x16x32xf32> to vector<32x32xf32>
    %30 = arith.truncf %29 : vector<32x32xf32> to vector<32x32xbf16>
    %c1 = arith.constant 1 : index
    %c0_19 = arith.constant 0 : index
    %c0_20 = arith.constant 0 : index
    %31 = vector.load %arg8[%c1, %c0_19, %c0_20] : memref<2x32x32xf32, #tpu.memory_space<vmem>>, vector<1x32x32xf32>
    %32 = vector.shape_cast %31 : vector<1x32x32xf32> to vector<32x32xf32>
    %33 = arith.truncf %32 : vector<32x32xf32> to vector<32x32xbf16>
    %cst_21 = arith.constant dense<0.000000e+00> : vector<32x32xf32>
    %34 = tpu.matmul %30, %33, %cst_21 {dimension_numbers = #tpu.dot_dimension_numbers<[1], [0], [0], [1], [0, 0, 1, 1], [], []>} : vector<32x32xbf16>, vector<32x32xbf16>, vector<32x32xf32> -> vector<32x32xf32>
    %35 = vector.shape_cast %34 : vector<32x32xf32> to vector<2x16x32xf32>
    %36 = arith.truncf %35 : vector<2x16x32xf32> to vector<2x16x32xbf16>
    "tpu.trace_start"() <{level = 10 : i32, message = "bnm,bmh->bnh"}> : () -> ()
    %cst_22 = arith.constant dense<0.000000e+00> : vector<2x16x32xf32>
    %37 = tpu.matmul %1, %36, %cst_22 {dimension_numbers = #tpu.dot_dimension_numbers<[2], [1], [1], [2], [0, 0, 0, 1, 1, 2], [0], [0]>} : vector<2x16x16xbf16>, vector<2x16x32xbf16>, vector<2x16x32xf32> -> vector<2x16x32xf32>
    "tpu.trace_stop"() : () -> ()
    %38 = math.tanh %37 : vector<2x16x32xf32>
    %39 = vector.shape_cast %38 : vector<2x16x32xf32> to vector<32x32xf32>
    %40 = arith.truncf %39 : vector<32x32xf32> to vector<32x32xbf16>
    %c0_23 = arith.constant 0 : index
    %c0_24 = arith.constant 0 : index
    %41 = vector.load %arg9[%c0_23, %c0_24] : memref<32x4xf32, #tpu.memory_space<vmem>>, vector<32x4xf32>
    %42 = arith.truncf %41 : vector<32x4xf32> to vector<32x4xbf16>
    %cst_25 = arith.constant dense<0.000000e+00> : vector<32x4xf32>
    %43 = tpu.matmul %40, %42, %cst_25 {dimension_numbers = #tpu.dot_dimension_numbers<[1], [0], [0], [1], [0, 0, 1, 1], [], []>} : vector<32x32xbf16>, vector<32x4xbf16>, vector<32x4xf32> -> vector<32x4xf32>
    %44 = vector.shape_cast %43 : vector<32x4xf32> to vector<2x16x4xf32>
    %45 = arith.truncf %44 : vector<2x16x4xf32> to vector<2x16x4xbf16>
    "tpu.trace_start"() <{level = 10 : i32, message = "bnm,bmk->bnk"}> : () -> ()
    %cst_26 = arith.constant dense<0.000000e+00> : vector<2x16x4xf32>
    %46 = tpu.matmul %1, %45, %cst_26 {dimension_numbers = #tpu.dot_dimension_numbers<[2], [1], [1], [2], [0, 0, 0, 1, 1, 2], [0], [0]>} : vector<2x16x16xbf16>, vector<2x16x4xbf16>, vector<2x16x4xf32> -> vector<2x16x4xf32>
    "tpu.trace_stop"() : () -> ()
    %47 = math.tanh %46 : vector<2x16x4xf32>
    %c0_27 = arith.constant 0 : index
    %c0_28 = arith.constant 0 : index
    %c0_29 = arith.constant 0 : index
    %48 = vector.load %arg3[%c0_27, %c0_28, %c0_29] : memref<2x16x4xf32, #tpu.memory_space<vmem>>, vector<2x16x4xf32>
    %49 = arith.addf %47, %48 : vector<2x16x4xf32>
    %cst_30 = arith.constant dense<0xFF800000> : vector<2x16xf32>
    %50 = vector.multi_reduction <maximumf>, %49, %cst_30 [2] : vector<2x16x4xf32> to vector<2x16xf32>
    %51 = vector.shape_cast %50 : vector<2x16xf32> to vector<2x16x1xf32>
    %52 = tpu.iota {dimensions = array<i32: 2>} : vector<2x16x4xi32>
    %53 = vector.broadcast %51 : vector<2x16x1xf32> to vector<2x16x4xf32>
    %54 = arith.cmpf oge, %49, %53 : vector<2x16x4xf32>
    %c4_i32 = arith.constant 4 : i32
    %55 = vector.broadcast %c4_i32 : i32 to vector<2x16x4xi32>
    %56 = arith.select %54, %52, %55 : vector<2x16x4xi1>, vector<2x16x4xi32>
    %cst_31 = arith.constant dense<2147483647> : vector<2x16xi32>
    %57 = vector.multi_reduction <minsi>, %56, %cst_31 [2] : vector<2x16x4xi32> to vector<2x16xi32>
    %58 = vector.shape_cast %57 : vector<2x16xi32> to vector<2x16x1xi32>
    %59 = vector.broadcast %58 : vector<2x16x1xi32> to vector<2x16x4xi32>
    %60 = arith.cmpi eq, %52, %59 : vector<2x16x4xi32>
    %61 = arith.extui %60 : vector<2x16x4xi1> to vector<2x16x4xi32>
    %62 = arith.sitofp %61 : vector<2x16x4xi32> to vector<2x16x4xf32>
    "tpu.trace_start"() <{level = 10 : i32, message = "bnk,bnz->bkz"}> : () -> ()
    %cst_32 = arith.constant dense<0.000000e+00> : vector<2x4x32xf32>
    %63 = tpu.matmul %62, %2, %cst_32 {dimension_numbers = #tpu.dot_dimension_numbers<[1], [1], [2], [2], [0, 0, 0, 2, 1, 2], [0], [0]>} : vector<2x16x4xf32>, vector<2x16x32xf32>, vector<2x4x32xf32> -> vector<2x4x32xf32>
    "tpu.trace_stop"() : () -> ()
    %64 = arith.truncf %62 : vector<2x16x4xf32> to vector<2x16x4xbf16>
    "tpu.trace_start"() <{level = 10 : i32, message = "bnk,bnm->bkm"}> : () -> ()
    %cst_33 = arith.constant dense<0.000000e+00> : vector<2x4x16xf32>
    %65 = tpu.matmul %64, %1, %cst_33 {dimension_numbers = #tpu.dot_dimension_numbers<[1], [1], [2], [2], [0, 0, 0, 2, 1, 2], [0], [0]>} : vector<2x16x4xbf16>, vector<2x16x16xbf16>, vector<2x4x16xf32> -> vector<2x4x16xf32>
    "tpu.trace_stop"() : () -> ()
    %66 = arith.truncf %65 : vector<2x4x16xf32> to vector<2x4x16xbf16>
    "tpu.trace_start"() <{level = 10 : i32, message = "bkm,bmj->bkj"}> : () -> ()
    %cst_34 = arith.constant dense<0.000000e+00> : vector<2x4x4xf32>
    %67 = tpu.matmul %66, %64, %cst_34 {dimension_numbers = #tpu.dot_dimension_numbers<[2], [1], [1], [2], [0, 0, 0, 1, 1, 2], [0], [0]>} : vector<2x4x16xbf16>, vector<2x16x4xbf16>, vector<2x4x4xf32> -> vector<2x4x4xf32>
    "tpu.trace_stop"() : () -> ()
    %68 = arith.mulf %63, %63 : vector<2x4x32xf32>
    %cst_35 = arith.constant dense<0.000000e+00> : vector<2x32xf32>
    %69 = vector.multi_reduction <add>, %68, %cst_35 [1] : vector<2x4x32xf32> to vector<2x32xf32>
    %70 = vector.shape_cast %69 : vector<2x32xf32> to vector<2x1x32xf32>
    %71 = math.sqrt %70 : vector<2x1x32xf32>
    %cst_36 = arith.constant 9.99999996E-13 : f32
    %72 = vector.broadcast %cst_36 : f32 to vector<2x1x32xf32>
    %73 = arith.maximumf %71, %72 : vector<2x1x32xf32>
    %74 = vector.broadcast %73 : vector<2x1x32xf32> to vector<2x4x32xf32>
    %75 = arith.divf %63, %74 : vector<2x4x32xf32>
    %76 = vector.shape_cast %67 : vector<2x4x4xf32> to vector<1x2x4x4xf32>
    %cst_37 = arith.constant dense<0.000000e+00> : vector<1xf32>
    %77 = vector.multi_reduction <add>, %76, %cst_37 [1, 2, 3] : vector<1x2x4x4xf32> to vector<1xf32>
    %78 = vector.shape_cast %77 : vector<1xf32> to vector<1x1x1x1xf32>
    %79 = vector.extract %78[0, 0, 0, 0] : f32 from vector<1x1x1x1xf32>
    %80 = vector.broadcast %79 : f32 to vector<2x4x4xf32>
    %81 = arith.divf %67, %80 : vector<2x4x4xf32>
    %c0_38 = arith.constant 0 : index
    %c0_39 = arith.constant 0 : index
    %c0_40 = arith.constant 0 : index
    %82 = vector.load %arg10[%c0_38, %c0_39, %c0_40] : memref<2x4x32xf32, #tpu.memory_space<vmem>>, vector<2x4x32xf32>
    tpu.vector_store %arg10[%c0_38, %c0_39, %c0_40], %75 {strides = array<i32>} : memref<2x4x32xf32, #tpu.memory_space<vmem>>, vector<2x4x32xf32>,
    %c0_41 = arith.constant 0 : index
    %c0_42 = arith.constant 0 : index
    %c0_43 = arith.constant 0 : index
    %83 = vector.load %arg11[%c0_41, %c0_42, %c0_43] : memref<2x4x4xf32, #tpu.memory_space<vmem>>, vector<2x4x4xf32>
    tpu.vector_store %arg11[%c0_41, %c0_42, %c0_43], %81 {strides = array<i32>} : memref<2x4x4xf32, #tpu.memory_space<vmem>>, vector<2x4x4xf32>,
    return
  }
  func.func @transform_0(%arg0: i32) -> (i32, i32, i32) {
    %c0_i32 = arith.constant 0 : i32
    %c0_i32_0 = arith.constant 0 : i32
    %c0_i32_1 = arith.constant 0 : i32
    %c0_i32_2 = arith.constant 0 : i32
    return %c0_i32, %c0_i32_0, %c0_i32_1 : i32, i32, i32
  }
  func.func @transform_1(%arg0: i32) -> (i32, i32, i32) {
    %c0_i32 = arith.constant 0 : i32
    %c0_i32_0 = arith.constant 0 : i32
    %c0_i32_1 = arith.constant 0 : i32
    %c0_i32_2 = arith.constant 0 : i32
    return %c0_i32, %c0_i32_0, %c0_i32_1 : i32, i32, i32
  }
  func.func @transform_2(%arg0: i32) -> (i32, i32, i32) {
    %c0_i32 = arith.constant 0 : i32
    %c0_i32_0 = arith.constant 0 : i32
    %c0_i32_1 = arith.constant 0 : i32
    %c0_i32_2 = arith.constant 0 : i32
    return %c0_i32, %c0_i32_0, %c0_i32_1 : i32, i32, i32
  }
  func.func @transform_3(%arg0: i32) -> (i32, i32) {
    %c0_i32 = arith.constant 0 : i32
    %c0_i32_0 = arith.constant 0 : i32
    %c0_i32_1 = arith.constant 0 : i32
    return %c0_i32, %c0_i32_0 : i32, i32
  }
  func.func @transform_4(%arg0: i32) -> (i32, i32) {
    %c0_i32 = arith.constant 0 : i32
    %c0_i32_0 = arith.constant 0 : i32
    %c0_i32_1 = arith.constant 0 : i32
    return %c0_i32, %c0_i32_0 : i32, i32
  }
  func.func @transform_5(%arg0: i32) -> (i32, i32) {
    %c0_i32 = arith.constant 0 : i32
    %c0_i32_0 = arith.constant 0 : i32
    %c0_i32_1 = arith.constant 0 : i32
    return %c0_i32, %c0_i32_0 : i32, i32
  }
  func.func @transform_6(%arg0: i32) -> (i32, i32) {
    %c0_i32 = arith.constant 0 : i32
    %c0_i32_0 = arith.constant 0 : i32
    %c0_i32_1 = arith.constant 0 : i32
    return %c0_i32, %c0_i32_0 : i32, i32
  }
  func.func @transform_7(%arg0: i32) -> (i32, i32, i32) {
    %c0_i32 = arith.constant 0 : i32
    %c0_i32_0 = arith.constant 0 : i32
    %c0_i32_1 = arith.constant 0 : i32
    %c0_i32_2 = arith.constant 0 : i32
    return %c0_i32, %c0_i32_0, %c0_i32_1 : i32, i32, i32
  }
  func.func @transform_8(%arg0: i32) -> (i32, i32) {
    %c0_i32 = arith.constant 0 : i32
    %c0_i32_0 = arith.constant 0 : i32
    %c0_i32_1 = arith.constant 0 : i32
    return %c0_i32, %c0_i32_0 : i32, i32
  }
  func.func @transform_9(%arg0: i32) -> (i32, i32, i32) {
    %c0_i32 = arith.constant 0 : i32
    %c0_i32_0 = arith.constant 0 : i32
    %c0_i32_1 = arith.constant 0 : i32
    %c0_i32_2 = arith.constant 0 : i32
    return %c0_i32, %c0_i32_0, %c0_i32_1 : i32, i32, i32
  }
  func.func @transform_10(%arg0: i32) -> (i32, i32, i32) {
    %c0_i32 = arith.constant 0 : i32
    %c0_i32_0 = arith.constant 0 : i32
    %c0_i32_1 = arith.constant 0 : i32
    %c0_i32_2 = arith.constant 0 : i32
    return %c0_i32, %c0_i32_0, %c0_i32_1 : i32, i32, i32
  }
}

module attributes {stable_mosaic.version = 11 : i64} {
  func.func @_encoder_kernel(%arg0: i32, %arg1: memref<2x4x4xf32, #tpu.memory_space<vmem>>, %arg2: memref<2x4x32xf32, #tpu.memory_space<vmem>>, %arg3: memref<2x4x32xf32, #tpu.memory_space<vmem>>, %arg4: memref<32x128xf32, #tpu.memory_space<vmem>>, %arg5: memref<1x128xf32, #tpu.memory_space<vmem>>, %arg6: memref<128x32xf32, #tpu.memory_space<vmem>>, %arg7: memref<1x32xf32, #tpu.memory_space<vmem>>, %arg8: memref<2x32x32xf32, #tpu.memory_space<vmem>>, %arg9: memref<3x32x256xf32, #tpu.memory_space<vmem>>, %arg10: memref<1x256xf32, #tpu.memory_space<vmem>>, %arg11: memref<128x32xf32, #tpu.memory_space<vmem>>, %arg12: memref<1x32xf32, #tpu.memory_space<vmem>>, %arg13: memref<128x32xf32, #tpu.memory_space<vmem>>, %arg14: memref<1x32xf32, #tpu.memory_space<vmem>>, %arg15: memref<8x96xf32, #tpu.memory_space<vmem>>) attributes {dimension_semantics = [#tpu.dimension_semantics<arbitrary>], iteration_bounds = array<i64: 1>, scalar_prefetch = 0 : i64, scratch_operands = 0 : i64, tpu.core_type = #tpu.core_type<tc>, window_params = [{pipeline_mode = #tpu.pipeline_mode<synchronous>, transform_indices = @transform_0, window_bounds = array<i64: 2, 4, 4>}, {pipeline_mode = #tpu.pipeline_mode<synchronous>, transform_indices = @transform_1, window_bounds = array<i64: 2, 4, 32>}, {pipeline_mode = #tpu.pipeline_mode<synchronous>, transform_indices = @transform_2, window_bounds = array<i64: 2, 4, 32>}, {pipeline_mode = #tpu.pipeline_mode<synchronous>, transform_indices = @transform_3, window_bounds = array<i64: 32, 128>}, {pipeline_mode = #tpu.pipeline_mode<synchronous>, transform_indices = @transform_4, window_bounds = array<i64: 1, 128>}, {pipeline_mode = #tpu.pipeline_mode<synchronous>, transform_indices = @transform_5, window_bounds = array<i64: 128, 32>}, {pipeline_mode = #tpu.pipeline_mode<synchronous>, transform_indices = @transform_6, window_bounds = array<i64: 1, 32>}, {pipeline_mode = #tpu.pipeline_mode<synchronous>, transform_indices = @transform_7, window_bounds = array<i64: 2, 32, 32>}, {pipeline_mode = #tpu.pipeline_mode<synchronous>, transform_indices = @transform_8, window_bounds = array<i64: 3, 32, 256>}, {pipeline_mode = #tpu.pipeline_mode<synchronous>, transform_indices = @transform_9, window_bounds = array<i64: 1, 256>}, {pipeline_mode = #tpu.pipeline_mode<synchronous>, transform_indices = @transform_10, window_bounds = array<i64: 128, 32>}, {pipeline_mode = #tpu.pipeline_mode<synchronous>, transform_indices = @transform_11, window_bounds = array<i64: 1, 32>}, {pipeline_mode = #tpu.pipeline_mode<synchronous>, transform_indices = @transform_12, window_bounds = array<i64: 128, 32>}, {pipeline_mode = #tpu.pipeline_mode<synchronous>, transform_indices = @transform_13, window_bounds = array<i64: 1, 32>}, {pipeline_mode = #tpu.pipeline_mode<synchronous>, transform_indices = @transform_14, window_bounds = array<i64: 8, 96>}]} {
    %c0 = arith.constant 0 : index
    %c0_0 = arith.constant 0 : index
    %c0_1 = arith.constant 0 : index
    %0 = vector.load %arg1[%c0, %c0_0, %c0_1] : memref<2x4x4xf32, #tpu.memory_space<vmem>>, vector<2x4x4xf32>
    %1 = arith.truncf %0 : vector<2x4x4xf32> to vector<2x4x4xbf16>
    %c0_2 = arith.constant 0 : index
    %c0_3 = arith.constant 0 : index
    %c0_4 = arith.constant 0 : index
    %2 = vector.load %arg2[%c0_2, %c0_3, %c0_4] : memref<2x4x32xf32, #tpu.memory_space<vmem>>, vector<2x4x32xf32>
    %3 = vector.shape_cast %2 : vector<2x4x32xf32> to vector<8x32xf32>
    %4 = arith.truncf %3 : vector<8x32xf32> to vector<8x32xbf16>
    %c0_5 = arith.constant 0 : index
    %c0_6 = arith.constant 0 : index
    %5 = vector.load %arg4[%c0_5, %c0_6] : memref<32x128xf32, #tpu.memory_space<vmem>>, vector<32x128xf32>
    %6 = arith.truncf %5 : vector<32x128xf32> to vector<32x128xbf16>
    %cst = arith.constant dense<0.000000e+00> : vector<8x128xf32>
    %7 = tpu.matmul %4, %6, %cst {dimension_numbers = #tpu.dot_dimension_numbers<[1], [0], [0], [1], [0, 0, 1, 1], [], []>} : vector<8x32xbf16>, vector<32x128xbf16>, vector<8x128xf32> -> vector<8x128xf32>
    %c0_7 = arith.constant 0 : index
    %c0_8 = arith.constant 0 : index
    %8 = vector.load %arg5[%c0_7, %c0_8] : memref<1x128xf32, #tpu.memory_space<vmem>>, vector<1x128xf32>
    %9 = vector.broadcast %8 : vector<1x128xf32> to vector<8x128xf32>
    %10 = arith.addf %7, %9 : vector<8x128xf32>
    %11 = math.tanh %10 : vector<8x128xf32>
    %12 = arith.truncf %11 : vector<8x128xf32> to vector<8x128xbf16>
    %c0_9 = arith.constant 0 : index
    %c0_10 = arith.constant 0 : index
    %13 = vector.load %arg6[%c0_9, %c0_10] : memref<128x32xf32, #tpu.memory_space<vmem>>, vector<128x32xf32>
    %14 = arith.truncf %13 : vector<128x32xf32> to vector<128x32xbf16>
    %cst_11 = arith.constant dense<0.000000e+00> : vector<8x32xf32>
    %15 = tpu.matmul %12, %14, %cst_11 {dimension_numbers = #tpu.dot_dimension_numbers<[1], [0], [0], [1], [0, 0, 1, 1], [], []>} : vector<8x128xbf16>, vector<128x32xbf16>, vector<8x32xf32> -> vector<8x32xf32>
    %c0_12 = arith.constant 0 : index
    %c0_13 = arith.constant 0 : index
    %16 = vector.load %arg7[%c0_12, %c0_13] : memref<1x32xf32, #tpu.memory_space<vmem>>, vector<1x32xf32>
    %17 = vector.broadcast %16 : vector<1x32xf32> to vector<8x32xf32>
    %18 = arith.addf %15, %17 : vector<8x32xf32>
    %19 = math.tanh %18 : vector<8x32xf32>
    %20 = arith.truncf %19 : vector<8x32xf32> to vector<8x32xbf16>
    %c0_14 = arith.constant 0 : index
    %c0_15 = arith.constant 0 : index
    %c0_16 = arith.constant 0 : index
    %21 = vector.load %arg9[%c0_14, %c0_15, %c0_16] : memref<3x32x256xf32, #tpu.memory_space<vmem>>, vector<1x32x256xf32>
    %22 = vector.shape_cast %21 : vector<1x32x256xf32> to vector<32x256xf32>
    %23 = arith.truncf %22 : vector<32x256xf32> to vector<32x256xbf16>
    %cst_17 = arith.constant dense<0.000000e+00> : vector<8x256xf32>
    %24 = tpu.matmul %20, %23, %cst_17 {dimension_numbers = #tpu.dot_dimension_numbers<[1], [0], [0], [1], [0, 0, 1, 1], [], []>} : vector<8x32xbf16>, vector<32x256xbf16>, vector<8x256xf32> -> vector<8x256xf32>
    %25 = arith.truncf %19 : vector<8x32xf32> to vector<8x32xbf16>
    %c0_18 = arith.constant 0 : index
    %c0_19 = arith.constant 0 : index
    %c0_20 = arith.constant 0 : index
    %26 = vector.load %arg8[%c0_18, %c0_19, %c0_20] : memref<2x32x32xf32, #tpu.memory_space<vmem>>, vector<1x32x32xf32>
    %27 = vector.shape_cast %26 : vector<1x32x32xf32> to vector<32x32xf32>
    %28 = arith.truncf %27 : vector<32x32xf32> to vector<32x32xbf16>
    %cst_21 = arith.constant dense<0.000000e+00> : vector<8x32xf32>
    %29 = tpu.matmul %25, %28, %cst_21 {dimension_numbers = #tpu.dot_dimension_numbers<[1], [0], [0], [1], [0, 0, 1, 1], [], []>} : vector<8x32xbf16>, vector<32x32xbf16>, vector<8x32xf32> -> vector<8x32xf32>
    %30 = vector.shape_cast %29 : vector<8x32xf32> to vector<2x4x32xf32>
    %31 = arith.truncf %30 : vector<2x4x32xf32> to vector<2x4x32xbf16>
    "tpu.trace_start"() <{level = 10 : i32, message = "bnm,bmh->bnh"}> : () -> ()
    %cst_22 = arith.constant dense<0.000000e+00> : vector<2x4x32xf32>
    %32 = tpu.matmul %1, %31, %cst_22 {dimension_numbers = #tpu.dot_dimension_numbers<[2], [1], [1], [2], [0, 0, 0, 1, 1, 2], [0], [0]>} : vector<2x4x4xbf16>, vector<2x4x32xbf16>, vector<2x4x32xf32> -> vector<2x4x32xf32>
    "tpu.trace_stop"() : () -> ()
    %33 = math.tanh %32 : vector<2x4x32xf32>
    %34 = vector.shape_cast %33 : vector<2x4x32xf32> to vector<8x32xf32>
    %35 = arith.truncf %34 : vector<8x32xf32> to vector<8x32xbf16>
    %c1 = arith.constant 1 : index
    %c0_23 = arith.constant 0 : index
    %c0_24 = arith.constant 0 : index
    %36 = vector.load %arg9[%c1, %c0_23, %c0_24] : memref<3x32x256xf32, #tpu.memory_space<vmem>>, vector<1x32x256xf32>
    %37 = vector.shape_cast %36 : vector<1x32x256xf32> to vector<32x256xf32>
    %38 = arith.truncf %37 : vector<32x256xf32> to vector<32x256xbf16>
    %cst_25 = arith.constant dense<0.000000e+00> : vector<8x256xf32>
    %39 = tpu.matmul %35, %38, %cst_25 {dimension_numbers = #tpu.dot_dimension_numbers<[1], [0], [0], [1], [0, 0, 1, 1], [], []>} : vector<8x32xbf16>, vector<32x256xbf16>, vector<8x256xf32> -> vector<8x256xf32>
    %40 = arith.addf %24, %39 : vector<8x256xf32>
    %41 = arith.truncf %34 : vector<8x32xf32> to vector<8x32xbf16>
    %c1_26 = arith.constant 1 : index
    %c0_27 = arith.constant 0 : index
    %c0_28 = arith.constant 0 : index
    %42 = vector.load %arg8[%c1_26, %c0_27, %c0_28] : memref<2x32x32xf32, #tpu.memory_space<vmem>>, vector<1x32x32xf32>
    %43 = vector.shape_cast %42 : vector<1x32x32xf32> to vector<32x32xf32>
    %44 = arith.truncf %43 : vector<32x32xf32> to vector<32x32xbf16>
    %cst_29 = arith.constant dense<0.000000e+00> : vector<8x32xf32>
    %45 = tpu.matmul %41, %44, %cst_29 {dimension_numbers = #tpu.dot_dimension_numbers<[1], [0], [0], [1], [0, 0, 1, 1], [], []>} : vector<8x32xbf16>, vector<32x32xbf16>, vector<8x32xf32> -> vector<8x32xf32>
    %46 = vector.shape_cast %45 : vector<8x32xf32> to vector<2x4x32xf32>
    %47 = arith.truncf %46 : vector<2x4x32xf32> to vector<2x4x32xbf16>
    "tpu.trace_start"() <{level = 10 : i32, message = "bnm,bmh->bnh"}> : () -> ()
    %cst_30 = arith.constant dense<0.000000e+00> : vector<2x4x32xf32>
    %48 = tpu.matmul %1, %47, %cst_30 {dimension_numbers = #tpu.dot_dimension_numbers<[2], [1], [1], [2], [0, 0, 0, 1, 1, 2], [0], [0]>} : vector<2x4x4xbf16>, vector<2x4x32xbf16>, vector<2x4x32xf32> -> vector<2x4x32xf32>
    "tpu.trace_stop"() : () -> ()
    %49 = math.tanh %48 : vector<2x4x32xf32>
    %50 = vector.shape_cast %49 : vector<2x4x32xf32> to vector<8x32xf32>
    %51 = arith.truncf %50 : vector<8x32xf32> to vector<8x32xbf16>
    %c2 = arith.constant 2 : index
    %c0_31 = arith.constant 0 : index
    %c0_32 = arith.constant 0 : index
    %52 = vector.load %arg9[%c2, %c0_31, %c0_32] : memref<3x32x256xf32, #tpu.memory_space<vmem>>, vector<1x32x256xf32>
    %53 = vector.shape_cast %52 : vector<1x32x256xf32> to vector<32x256xf32>
    %54 = arith.truncf %53 : vector<32x256xf32> to vector<32x256xbf16>
    %cst_33 = arith.constant dense<0.000000e+00> : vector<8x256xf32>
    %55 = tpu.matmul %51, %54, %cst_33 {dimension_numbers = #tpu.dot_dimension_numbers<[1], [0], [0], [1], [0, 0, 1, 1], [], []>} : vector<8x32xbf16>, vector<32x256xbf16>, vector<8x256xf32> -> vector<8x256xf32>
    %56 = arith.addf %40, %55 : vector<8x256xf32>
    %c0_34 = arith.constant 0 : index
    %c0_35 = arith.constant 0 : index
    %57 = vector.load %arg10[%c0_34, %c0_35] : memref<1x256xf32, #tpu.memory_space<vmem>>, vector<1x256xf32>
    %58 = vector.broadcast %57 : vector<1x256xf32> to vector<8x256xf32>
    %59 = arith.addf %56, %58 : vector<8x256xf32>
    %60 = math.tanh %59 : vector<8x256xf32>
    %61 = vector.extract_strided_slice %60 {offsets = [0, 0], sizes = [8, 128], strides = [1, 1]} : vector<8x256xf32> to vector<8x128xf32>
    %62 = arith.truncf %61 : vector<8x128xf32> to vector<8x128xbf16>
    %c0_36 = arith.constant 0 : index
    %c0_37 = arith.constant 0 : index
    %63 = vector.load %arg11[%c0_36, %c0_37] : memref<128x32xf32, #tpu.memory_space<vmem>>, vector<128x32xf32>
    %64 = arith.truncf %63 : vector<128x32xf32> to vector<128x32xbf16>
    %cst_38 = arith.constant dense<0.000000e+00> : vector<8x32xf32>
    %65 = tpu.matmul %62, %64, %cst_38 {dimension_numbers = #tpu.dot_dimension_numbers<[1], [0], [0], [1], [0, 0, 1, 1], [], []>} : vector<8x128xbf16>, vector<128x32xbf16>, vector<8x32xf32> -> vector<8x32xf32>
    %c0_39 = arith.constant 0 : index
    %c0_40 = arith.constant 0 : index
    %66 = vector.load %arg12[%c0_39, %c0_40] : memref<1x32xf32, #tpu.memory_space<vmem>>, vector<1x32xf32>
    %67 = vector.broadcast %66 : vector<1x32xf32> to vector<8x32xf32>
    %68 = arith.addf %65, %67 : vector<8x32xf32>
    %69 = vector.extract_strided_slice %60 {offsets = [0, 128], sizes = [8, 128], strides = [1, 1]} : vector<8x256xf32> to vector<8x128xf32>
    %70 = arith.truncf %69 : vector<8x128xf32> to vector<8x128xbf16>
    %c0_41 = arith.constant 0 : index
    %c0_42 = arith.constant 0 : index
    %71 = vector.load %arg13[%c0_41, %c0_42] : memref<128x32xf32, #tpu.memory_space<vmem>>, vector<128x32xf32>
    %72 = arith.truncf %71 : vector<128x32xf32> to vector<128x32xbf16>
    %cst_43 = arith.constant dense<0.000000e+00> : vector<8x32xf32>
    %73 = tpu.matmul %70, %72, %cst_43 {dimension_numbers = #tpu.dot_dimension_numbers<[1], [0], [0], [1], [0, 0, 1, 1], [], []>} : vector<8x128xbf16>, vector<128x32xbf16>, vector<8x32xf32> -> vector<8x32xf32>
    %c0_44 = arith.constant 0 : index
    %c0_45 = arith.constant 0 : index
    %74 = vector.load %arg14[%c0_44, %c0_45] : memref<1x32xf32, #tpu.memory_space<vmem>>, vector<1x32xf32>
    %75 = vector.broadcast %74 : vector<1x32xf32> to vector<8x32xf32>
    %76 = arith.addf %73, %75 : vector<8x32xf32>
    %c0_46 = arith.constant 0 : index
    %c0_47 = arith.constant 0 : index
    %c0_48 = arith.constant 0 : index
    %77 = vector.load %arg3[%c0_46, %c0_47, %c0_48] : memref<2x4x32xf32, #tpu.memory_space<vmem>>, vector<2x4x32xf32>
    %78 = vector.shape_cast %77 : vector<2x4x32xf32> to vector<8x32xf32>
    %79 = math.exp %76 : vector<8x32xf32>
    %80 = arith.mulf %78, %79 : vector<8x32xf32>
    %81 = arith.addf %80, %68 : vector<8x32xf32>
    %82 = tpu.concatenate %81, %68, %76 in 1 : vector<8x32xf32>, vector<8x32xf32>, vector<8x32xf32> -> vector<8x96xf32>
    %c0_49 = arith.constant 0 : index
    %c0_50 = arith.constant 0 : index
    %83 = vector.load %arg15[%c0_49, %c0_50] : memref<8x96xf32, #tpu.memory_space<vmem>>, vector<8x96xf32>
    tpu.vector_store %arg15[%c0_49, %c0_50], %82 {strides = array<i32>} : memref<8x96xf32, #tpu.memory_space<vmem>>, vector<8x96xf32>,
    return
  }
  func.func @transform_0(%arg0: i32) -> (i32, i32, i32) {
    %c0_i32 = arith.constant 0 : i32
    %c0_i32_0 = arith.constant 0 : i32
    %c0_i32_1 = arith.constant 0 : i32
    %c0_i32_2 = arith.constant 0 : i32
    return %c0_i32, %c0_i32_0, %c0_i32_1 : i32, i32, i32
  }
  func.func @transform_1(%arg0: i32) -> (i32, i32, i32) {
    %c0_i32 = arith.constant 0 : i32
    %c0_i32_0 = arith.constant 0 : i32
    %c0_i32_1 = arith.constant 0 : i32
    %c0_i32_2 = arith.constant 0 : i32
    return %c0_i32, %c0_i32_0, %c0_i32_1 : i32, i32, i32
  }
  func.func @transform_2(%arg0: i32) -> (i32, i32, i32) {
    %c0_i32 = arith.constant 0 : i32
    %c0_i32_0 = arith.constant 0 : i32
    %c0_i32_1 = arith.constant 0 : i32
    %c0_i32_2 = arith.constant 0 : i32
    return %c0_i32, %c0_i32_0, %c0_i32_1 : i32, i32, i32
  }
  func.func @transform_3(%arg0: i32) -> (i32, i32) {
    %c0_i32 = arith.constant 0 : i32
    %c0_i32_0 = arith.constant 0 : i32
    %c0_i32_1 = arith.constant 0 : i32
    return %c0_i32, %c0_i32_0 : i32, i32
  }
  func.func @transform_4(%arg0: i32) -> (i32, i32) {
    %c0_i32 = arith.constant 0 : i32
    %c0_i32_0 = arith.constant 0 : i32
    %c0_i32_1 = arith.constant 0 : i32
    return %c0_i32, %c0_i32_0 : i32, i32
  }
  func.func @transform_5(%arg0: i32) -> (i32, i32) {
    %c0_i32 = arith.constant 0 : i32
    %c0_i32_0 = arith.constant 0 : i32
    %c0_i32_1 = arith.constant 0 : i32
    return %c0_i32, %c0_i32_0 : i32, i32
  }
  func.func @transform_6(%arg0: i32) -> (i32, i32) {
    %c0_i32 = arith.constant 0 : i32
    %c0_i32_0 = arith.constant 0 : i32
    %c0_i32_1 = arith.constant 0 : i32
    return %c0_i32, %c0_i32_0 : i32, i32
  }
  func.func @transform_7(%arg0: i32) -> (i32, i32, i32) {
    %c0_i32 = arith.constant 0 : i32
    %c0_i32_0 = arith.constant 0 : i32
    %c0_i32_1 = arith.constant 0 : i32
    %c0_i32_2 = arith.constant 0 : i32
    return %c0_i32, %c0_i32_0, %c0_i32_1 : i32, i32, i32
  }
  func.func @transform_8(%arg0: i32) -> (i32, i32, i32) {
    %c0_i32 = arith.constant 0 : i32
    %c0_i32_0 = arith.constant 0 : i32
    %c0_i32_1 = arith.constant 0 : i32
    %c0_i32_2 = arith.constant 0 : i32
    return %c0_i32, %c0_i32_0, %c0_i32_1 : i32, i32, i32
  }
  func.func @transform_9(%arg0: i32) -> (i32, i32) {
    %c0_i32 = arith.constant 0 : i32
    %c0_i32_0 = arith.constant 0 : i32
    %c0_i32_1 = arith.constant 0 : i32
    return %c0_i32, %c0_i32_0 : i32, i32
  }
  func.func @transform_10(%arg0: i32) -> (i32, i32) {
    %c0_i32 = arith.constant 0 : i32
    %c0_i32_0 = arith.constant 0 : i32
    %c0_i32_1 = arith.constant 0 : i32
    return %c0_i32, %c0_i32_0 : i32, i32
  }
  func.func @transform_11(%arg0: i32) -> (i32, i32) {
    %c0_i32 = arith.constant 0 : i32
    %c0_i32_0 = arith.constant 0 : i32
    %c0_i32_1 = arith.constant 0 : i32
    return %c0_i32, %c0_i32_0 : i32, i32
  }
  func.func @transform_12(%arg0: i32) -> (i32, i32) {
    %c0_i32 = arith.constant 0 : i32
    %c0_i32_0 = arith.constant 0 : i32
    %c0_i32_1 = arith.constant 0 : i32
    return %c0_i32, %c0_i32_0 : i32, i32
  }
  func.func @transform_13(%arg0: i32) -> (i32, i32) {
    %c0_i32 = arith.constant 0 : i32
    %c0_i32_0 = arith.constant 0 : i32
    %c0_i32_1 = arith.constant 0 : i32
    return %c0_i32, %c0_i32_0 : i32, i32
  }
  func.func @transform_14(%arg0: i32) -> (i32, i32) {
    %c0_i32 = arith.constant 0 : i32
    %c0_i32_0 = arith.constant 0 : i32
    %c0_i32_1 = arith.constant 0 : i32
    return %c0_i32, %c0_i32_0 : i32, i32
  }
}

module attributes {stable_mosaic.version = 11 : i64} {
  func.func @_cluster_pool_kernel(%arg0: i32, %arg1: memref<2x4x4xf32, #tpu.memory_space<vmem>>, %arg2: memref<2x4x32xf32, #tpu.memory_space<vmem>>, %arg3: memref<2x4x2xf32, #tpu.memory_space<vmem>>, %arg4: memref<32x128xf32, #tpu.memory_space<vmem>>, %arg5: memref<1x128xf32, #tpu.memory_space<vmem>>, %arg6: memref<128x32xf32, #tpu.memory_space<vmem>>, %arg7: memref<1x32xf32, #tpu.memory_space<vmem>>, %arg8: memref<2x32x32xf32, #tpu.memory_space<vmem>>, %arg9: memref<32x2xf32, #tpu.memory_space<vmem>>, %arg10: memref<2x2x32xf32, #tpu.memory_space<vmem>>, %arg11: memref<2x2x2xf32, #tpu.memory_space<vmem>>) attributes {dimension_semantics = [#tpu.dimension_semantics<arbitrary>], iteration_bounds = array<i64: 1>, scalar_prefetch = 0 : i64, scratch_operands = 0 : i64, tpu.core_type = #tpu.core_type<tc>, window_params = [{pipeline_mode = #tpu.pipeline_mode<synchronous>, transform_indices = @transform_0, window_bounds = array<i64: 2, 4, 4>}, {pipeline_mode = #tpu.pipeline_mode<synchronous>, transform_indices = @transform_1, window_bounds = array<i64: 2, 4, 32>}, {pipeline_mode = #tpu.pipeline_mode<synchronous>, transform_indices = @transform_2, window_bounds = array<i64: 2, 4, 2>}, {pipeline_mode = #tpu.pipeline_mode<synchronous>, transform_indices = @transform_3, window_bounds = array<i64: 32, 128>}, {pipeline_mode = #tpu.pipeline_mode<synchronous>, transform_indices = @transform_4, window_bounds = array<i64: 1, 128>}, {pipeline_mode = #tpu.pipeline_mode<synchronous>, transform_indices = @transform_5, window_bounds = array<i64: 128, 32>}, {pipeline_mode = #tpu.pipeline_mode<synchronous>, transform_indices = @transform_6, window_bounds = array<i64: 1, 32>}, {pipeline_mode = #tpu.pipeline_mode<synchronous>, transform_indices = @transform_7, window_bounds = array<i64: 2, 32, 32>}, {pipeline_mode = #tpu.pipeline_mode<synchronous>, transform_indices = @transform_8, window_bounds = array<i64: 32, 2>}, {pipeline_mode = #tpu.pipeline_mode<synchronous>, transform_indices = @transform_9, window_bounds = array<i64: 2, 2, 32>}, {pipeline_mode = #tpu.pipeline_mode<synchronous>, transform_indices = @transform_10, window_bounds = array<i64: 2, 2, 2>}]} {
    %c0 = arith.constant 0 : index
    %c0_0 = arith.constant 0 : index
    %c0_1 = arith.constant 0 : index
    %0 = vector.load %arg1[%c0, %c0_0, %c0_1] : memref<2x4x4xf32, #tpu.memory_space<vmem>>, vector<2x4x4xf32>
    %1 = arith.truncf %0 : vector<2x4x4xf32> to vector<2x4x4xbf16>
    %c0_2 = arith.constant 0 : index
    %c0_3 = arith.constant 0 : index
    %c0_4 = arith.constant 0 : index
    %2 = vector.load %arg2[%c0_2, %c0_3, %c0_4] : memref<2x4x32xf32, #tpu.memory_space<vmem>>, vector<2x4x32xf32>
    %3 = vector.shape_cast %2 : vector<2x4x32xf32> to vector<8x32xf32>
    %4 = arith.truncf %3 : vector<8x32xf32> to vector<8x32xbf16>
    %c0_5 = arith.constant 0 : index
    %c0_6 = arith.constant 0 : index
    %5 = vector.load %arg4[%c0_5, %c0_6] : memref<32x128xf32, #tpu.memory_space<vmem>>, vector<32x128xf32>
    %6 = arith.truncf %5 : vector<32x128xf32> to vector<32x128xbf16>
    %cst = arith.constant dense<0.000000e+00> : vector<8x128xf32>
    %7 = tpu.matmul %4, %6, %cst {dimension_numbers = #tpu.dot_dimension_numbers<[1], [0], [0], [1], [0, 0, 1, 1], [], []>} : vector<8x32xbf16>, vector<32x128xbf16>, vector<8x128xf32> -> vector<8x128xf32>
    %c0_7 = arith.constant 0 : index
    %c0_8 = arith.constant 0 : index
    %8 = vector.load %arg5[%c0_7, %c0_8] : memref<1x128xf32, #tpu.memory_space<vmem>>, vector<1x128xf32>
    %9 = vector.broadcast %8 : vector<1x128xf32> to vector<8x128xf32>
    %10 = arith.addf %7, %9 : vector<8x128xf32>
    %11 = math.tanh %10 : vector<8x128xf32>
    %12 = arith.truncf %11 : vector<8x128xf32> to vector<8x128xbf16>
    %c0_9 = arith.constant 0 : index
    %c0_10 = arith.constant 0 : index
    %13 = vector.load %arg6[%c0_9, %c0_10] : memref<128x32xf32, #tpu.memory_space<vmem>>, vector<128x32xf32>
    %14 = arith.truncf %13 : vector<128x32xf32> to vector<128x32xbf16>
    %cst_11 = arith.constant dense<0.000000e+00> : vector<8x32xf32>
    %15 = tpu.matmul %12, %14, %cst_11 {dimension_numbers = #tpu.dot_dimension_numbers<[1], [0], [0], [1], [0, 0, 1, 1], [], []>} : vector<8x128xbf16>, vector<128x32xbf16>, vector<8x32xf32> -> vector<8x32xf32>
    %c0_12 = arith.constant 0 : index
    %c0_13 = arith.constant 0 : index
    %16 = vector.load %arg7[%c0_12, %c0_13] : memref<1x32xf32, #tpu.memory_space<vmem>>, vector<1x32xf32>
    %17 = vector.broadcast %16 : vector<1x32xf32> to vector<8x32xf32>
    %18 = arith.addf %15, %17 : vector<8x32xf32>
    %19 = math.tanh %18 : vector<8x32xf32>
    %20 = arith.truncf %19 : vector<8x32xf32> to vector<8x32xbf16>
    %c0_14 = arith.constant 0 : index
    %c0_15 = arith.constant 0 : index
    %c0_16 = arith.constant 0 : index
    %21 = vector.load %arg8[%c0_14, %c0_15, %c0_16] : memref<2x32x32xf32, #tpu.memory_space<vmem>>, vector<1x32x32xf32>
    %22 = vector.shape_cast %21 : vector<1x32x32xf32> to vector<32x32xf32>
    %23 = arith.truncf %22 : vector<32x32xf32> to vector<32x32xbf16>
    %cst_17 = arith.constant dense<0.000000e+00> : vector<8x32xf32>
    %24 = tpu.matmul %20, %23, %cst_17 {dimension_numbers = #tpu.dot_dimension_numbers<[1], [0], [0], [1], [0, 0, 1, 1], [], []>} : vector<8x32xbf16>, vector<32x32xbf16>, vector<8x32xf32> -> vector<8x32xf32>
    %25 = vector.shape_cast %24 : vector<8x32xf32> to vector<2x4x32xf32>
    %26 = arith.truncf %25 : vector<2x4x32xf32> to vector<2x4x32xbf16>
    "tpu.trace_start"() <{level = 10 : i32, message = "bnm,bmh->bnh"}> : () -> ()
    %cst_18 = arith.constant dense<0.000000e+00> : vector<2x4x32xf32>
    %27 = tpu.matmul %1, %26, %cst_18 {dimension_numbers = #tpu.dot_dimension_numbers<[2], [1], [1], [2], [0, 0, 0, 1, 1, 2], [0], [0]>} : vector<2x4x4xbf16>, vector<2x4x32xbf16>, vector<2x4x32xf32> -> vector<2x4x32xf32>
    "tpu.trace_stop"() : () -> ()
    %28 = math.tanh %27 : vector<2x4x32xf32>
    %29 = vector.shape_cast %28 : vector<2x4x32xf32> to vector<8x32xf32>
    %30 = arith.truncf %29 : vector<8x32xf32> to vector<8x32xbf16>
    %c1 = arith.constant 1 : index
    %c0_19 = arith.constant 0 : index
    %c0_20 = arith.constant 0 : index
    %31 = vector.load %arg8[%c1, %c0_19, %c0_20] : memref<2x32x32xf32, #tpu.memory_space<vmem>>, vector<1x32x32xf32>
    %32 = vector.shape_cast %31 : vector<1x32x32xf32> to vector<32x32xf32>
    %33 = arith.truncf %32 : vector<32x32xf32> to vector<32x32xbf16>
    %cst_21 = arith.constant dense<0.000000e+00> : vector<8x32xf32>
    %34 = tpu.matmul %30, %33, %cst_21 {dimension_numbers = #tpu.dot_dimension_numbers<[1], [0], [0], [1], [0, 0, 1, 1], [], []>} : vector<8x32xbf16>, vector<32x32xbf16>, vector<8x32xf32> -> vector<8x32xf32>
    %35 = vector.shape_cast %34 : vector<8x32xf32> to vector<2x4x32xf32>
    %36 = arith.truncf %35 : vector<2x4x32xf32> to vector<2x4x32xbf16>
    "tpu.trace_start"() <{level = 10 : i32, message = "bnm,bmh->bnh"}> : () -> ()
    %cst_22 = arith.constant dense<0.000000e+00> : vector<2x4x32xf32>
    %37 = tpu.matmul %1, %36, %cst_22 {dimension_numbers = #tpu.dot_dimension_numbers<[2], [1], [1], [2], [0, 0, 0, 1, 1, 2], [0], [0]>} : vector<2x4x4xbf16>, vector<2x4x32xbf16>, vector<2x4x32xf32> -> vector<2x4x32xf32>
    "tpu.trace_stop"() : () -> ()
    %38 = math.tanh %37 : vector<2x4x32xf32>
    %39 = vector.shape_cast %38 : vector<2x4x32xf32> to vector<8x32xf32>
    %40 = arith.truncf %39 : vector<8x32xf32> to vector<8x32xbf16>
    %c0_23 = arith.constant 0 : index
    %c0_24 = arith.constant 0 : index
    %41 = vector.load %arg9[%c0_23, %c0_24] : memref<32x2xf32, #tpu.memory_space<vmem>>, vector<32x2xf32>
    %42 = arith.truncf %41 : vector<32x2xf32> to vector<32x2xbf16>
    %cst_25 = arith.constant dense<0.000000e+00> : vector<8x2xf32>
    %43 = tpu.matmul %40, %42, %cst_25 {dimension_numbers = #tpu.dot_dimension_numbers<[1], [0], [0], [1], [0, 0, 1, 1], [], []>} : vector<8x32xbf16>, vector<32x2xbf16>, vector<8x2xf32> -> vector<8x2xf32>
    %44 = vector.shape_cast %43 : vector<8x2xf32> to vector<2x4x2xf32>
    %45 = arith.truncf %44 : vector<2x4x2xf32> to vector<2x4x2xbf16>
    "tpu.trace_start"() <{level = 10 : i32, message = "bnm,bmk->bnk"}> : () -> ()
    %cst_26 = arith.constant dense<0.000000e+00> : vector<2x4x2xf32>
    %46 = tpu.matmul %1, %45, %cst_26 {dimension_numbers = #tpu.dot_dimension_numbers<[2], [1], [1], [2], [0, 0, 0, 1, 1, 2], [0], [0]>} : vector<2x4x4xbf16>, vector<2x4x2xbf16>, vector<2x4x2xf32> -> vector<2x4x2xf32>
    "tpu.trace_stop"() : () -> ()
    %47 = math.tanh %46 : vector<2x4x2xf32>
    %c0_27 = arith.constant 0 : index
    %c0_28 = arith.constant 0 : index
    %c0_29 = arith.constant 0 : index
    %48 = vector.load %arg3[%c0_27, %c0_28, %c0_29] : memref<2x4x2xf32, #tpu.memory_space<vmem>>, vector<2x4x2xf32>
    %49 = arith.addf %47, %48 : vector<2x4x2xf32>
    %cst_30 = arith.constant dense<0xFF800000> : vector<2x4xf32>
    %50 = vector.multi_reduction <maximumf>, %49, %cst_30 [2] : vector<2x4x2xf32> to vector<2x4xf32>
    %51 = vector.shape_cast %50 : vector<2x4xf32> to vector<2x4x1xf32>
    %52 = tpu.iota {dimensions = array<i32: 2>} : vector<2x4x2xi32>
    %53 = vector.broadcast %51 : vector<2x4x1xf32> to vector<2x4x2xf32>
    %54 = arith.cmpf oge, %49, %53 : vector<2x4x2xf32>
    %c2_i32 = arith.constant 2 : i32
    %55 = vector.broadcast %c2_i32 : i32 to vector<2x4x2xi32>
    %56 = arith.select %54, %52, %55 : vector<2x4x2xi1>, vector<2x4x2xi32>
    %cst_31 = arith.constant dense<2147483647> : vector<2x4xi32>
    %57 = vector.multi_reduction <minsi>, %56, %cst_31 [2] : vector<2x4x2xi32> to vector<2x4xi32>
    %58 = vector.shape_cast %57 : vector<2x4xi32> to vector<2x4x1xi32>
    %59 = vector.broadcast %58 : vector<2x4x1xi32> to vector<2x4x2xi32>
    %60 = arith.cmpi eq, %52, %59 : vector<2x4x2xi32>
    %61 = arith.extui %60 : vector<2x4x2xi1> to vector<2x4x2xi32>
    %62 = arith.sitofp %61 : vector<2x4x2xi32> to vector<2x4x2xf32>
    "tpu.trace_start"() <{level = 10 : i32, message = "bnk,bnz->bkz"}> : () -> ()
    %cst_32 = arith.constant dense<0.000000e+00> : vector<2x2x32xf32>
    %63 = tpu.matmul %62, %2, %cst_32 {dimension_numbers = #tpu.dot_dimension_numbers<[1], [1], [2], [2], [0, 0, 0, 2, 1, 2], [0], [0]>} : vector<2x4x2xf32>, vector<2x4x32xf32>, vector<2x2x32xf32> -> vector<2x2x32xf32>
    "tpu.trace_stop"() : () -> ()
    %64 = arith.truncf %62 : vector<2x4x2xf32> to vector<2x4x2xbf16>
    "tpu.trace_start"() <{level = 10 : i32, message = "bnk,bnm->bkm"}> : () -> ()
    %cst_33 = arith.constant dense<0.000000e+00> : vector<2x2x4xf32>
    %65 = tpu.matmul %64, %1, %cst_33 {dimension_numbers = #tpu.dot_dimension_numbers<[1], [1], [2], [2], [0, 0, 0, 2, 1, 2], [0], [0]>} : vector<2x4x2xbf16>, vector<2x4x4xbf16>, vector<2x2x4xf32> -> vector<2x2x4xf32>
    "tpu.trace_stop"() : () -> ()
    %66 = arith.truncf %65 : vector<2x2x4xf32> to vector<2x2x4xbf16>
    "tpu.trace_start"() <{level = 10 : i32, message = "bkm,bmj->bkj"}> : () -> ()
    %cst_34 = arith.constant dense<0.000000e+00> : vector<2x2x2xf32>
    %67 = tpu.matmul %66, %64, %cst_34 {dimension_numbers = #tpu.dot_dimension_numbers<[2], [1], [1], [2], [0, 0, 0, 1, 1, 2], [0], [0]>} : vector<2x2x4xbf16>, vector<2x4x2xbf16>, vector<2x2x2xf32> -> vector<2x2x2xf32>
    "tpu.trace_stop"() : () -> ()
    %68 = arith.mulf %63, %63 : vector<2x2x32xf32>
    %cst_35 = arith.constant dense<0.000000e+00> : vector<2x32xf32>
    %69 = vector.multi_reduction <add>, %68, %cst_35 [1] : vector<2x2x32xf32> to vector<2x32xf32>
    %70 = vector.shape_cast %69 : vector<2x32xf32> to vector<2x1x32xf32>
    %71 = math.sqrt %70 : vector<2x1x32xf32>
    %cst_36 = arith.constant 9.99999996E-13 : f32
    %72 = vector.broadcast %cst_36 : f32 to vector<2x1x32xf32>
    %73 = arith.maximumf %71, %72 : vector<2x1x32xf32>
    %74 = vector.broadcast %73 : vector<2x1x32xf32> to vector<2x2x32xf32>
    %75 = arith.divf %63, %74 : vector<2x2x32xf32>
    %76 = vector.shape_cast %67 : vector<2x2x2xf32> to vector<1x2x2x2xf32>
    %cst_37 = arith.constant dense<0.000000e+00> : vector<1xf32>
    %77 = vector.multi_reduction <add>, %76, %cst_37 [1, 2, 3] : vector<1x2x2x2xf32> to vector<1xf32>
    %78 = vector.shape_cast %77 : vector<1xf32> to vector<1x1x1x1xf32>
    %79 = vector.extract %78[0, 0, 0, 0] : f32 from vector<1x1x1x1xf32>
    %80 = vector.broadcast %79 : f32 to vector<2x2x2xf32>
    %81 = arith.divf %67, %80 : vector<2x2x2xf32>
    %c0_38 = arith.constant 0 : index
    %c0_39 = arith.constant 0 : index
    %c0_40 = arith.constant 0 : index
    %82 = vector.load %arg10[%c0_38, %c0_39, %c0_40] : memref<2x2x32xf32, #tpu.memory_space<vmem>>, vector<2x2x32xf32>
    tpu.vector_store %arg10[%c0_38, %c0_39, %c0_40], %75 {strides = array<i32>} : memref<2x2x32xf32, #tpu.memory_space<vmem>>, vector<2x2x32xf32>,
    %c0_41 = arith.constant 0 : index
    %c0_42 = arith.constant 0 : index
    %c0_43 = arith.constant 0 : index
    %83 = vector.load %arg11[%c0_41, %c0_42, %c0_43] : memref<2x2x2xf32, #tpu.memory_space<vmem>>, vector<2x2x2xf32>
    tpu.vector_store %arg11[%c0_41, %c0_42, %c0_43], %81 {strides = array<i32>} : memref<2x2x2xf32, #tpu.memory_space<vmem>>, vector<2x2x2xf32>,
    return
  }
  func.func @transform_0(%arg0: i32) -> (i32, i32, i32) {
    %c0_i32 = arith.constant 0 : i32
    %c0_i32_0 = arith.constant 0 : i32
    %c0_i32_1 = arith.constant 0 : i32
    %c0_i32_2 = arith.constant 0 : i32
    return %c0_i32, %c0_i32_0, %c0_i32_1 : i32, i32, i32
  }
  func.func @transform_1(%arg0: i32) -> (i32, i32, i32) {
    %c0_i32 = arith.constant 0 : i32
    %c0_i32_0 = arith.constant 0 : i32
    %c0_i32_1 = arith.constant 0 : i32
    %c0_i32_2 = arith.constant 0 : i32
    return %c0_i32, %c0_i32_0, %c0_i32_1 : i32, i32, i32
  }
  func.func @transform_2(%arg0: i32) -> (i32, i32, i32) {
    %c0_i32 = arith.constant 0 : i32
    %c0_i32_0 = arith.constant 0 : i32
    %c0_i32_1 = arith.constant 0 : i32
    %c0_i32_2 = arith.constant 0 : i32
    return %c0_i32, %c0_i32_0, %c0_i32_1 : i32, i32, i32
  }
  func.func @transform_3(%arg0: i32) -> (i32, i32) {
    %c0_i32 = arith.constant 0 : i32
    %c0_i32_0 = arith.constant 0 : i32
    %c0_i32_1 = arith.constant 0 : i32
    return %c0_i32, %c0_i32_0 : i32, i32
  }
  func.func @transform_4(%arg0: i32) -> (i32, i32) {
    %c0_i32 = arith.constant 0 : i32
    %c0_i32_0 = arith.constant 0 : i32
    %c0_i32_1 = arith.constant 0 : i32
    return %c0_i32, %c0_i32_0 : i32, i32
  }
  func.func @transform_5(%arg0: i32) -> (i32, i32) {
    %c0_i32 = arith.constant 0 : i32
    %c0_i32_0 = arith.constant 0 : i32
    %c0_i32_1 = arith.constant 0 : i32
    return %c0_i32, %c0_i32_0 : i32, i32
  }
  func.func @transform_6(%arg0: i32) -> (i32, i32) {
    %c0_i32 = arith.constant 0 : i32
    %c0_i32_0 = arith.constant 0 : i32
    %c0_i32_1 = arith.constant 0 : i32
    return %c0_i32, %c0_i32_0 : i32, i32
  }
  func.func @transform_7(%arg0: i32) -> (i32, i32, i32) {
    %c0_i32 = arith.constant 0 : i32
    %c0_i32_0 = arith.constant 0 : i32
    %c0_i32_1 = arith.constant 0 : i32
    %c0_i32_2 = arith.constant 0 : i32
    return %c0_i32, %c0_i32_0, %c0_i32_1 : i32, i32, i32
  }
  func.func @transform_8(%arg0: i32) -> (i32, i32) {
    %c0_i32 = arith.constant 0 : i32
    %c0_i32_0 = arith.constant 0 : i32
    %c0_i32_1 = arith.constant 0 : i32
    return %c0_i32, %c0_i32_0 : i32, i32
  }
  func.func @transform_9(%arg0: i32) -> (i32, i32, i32) {
    %c0_i32 = arith.constant 0 : i32
    %c0_i32_0 = arith.constant 0 : i32
    %c0_i32_1 = arith.constant 0 : i32
    %c0_i32_2 = arith.constant 0 : i32
    return %c0_i32, %c0_i32_0, %c0_i32_1 : i32, i32, i32
  }
  func.func @transform_10(%arg0: i32) -> (i32, i32, i32) {
    %c0_i32 = arith.constant 0 : i32
    %c0_i32_0 = arith.constant 0 : i32
    %c0_i32_1 = arith.constant 0 : i32
    %c0_i32_2 = arith.constant 0 : i32
    return %c0_i32, %c0_i32_0, %c0_i32_1 : i32, i32, i32
  }
}

module attributes {stable_mosaic.version = 11 : i64} {
  func.func @_encoder_kernel(%arg0: i32, %arg1: memref<2x2x2xf32, #tpu.memory_space<vmem>>, %arg2: memref<2x2x32xf32, #tpu.memory_space<vmem>>, %arg3: memref<2x2x32xf32, #tpu.memory_space<vmem>>, %arg4: memref<32x128xf32, #tpu.memory_space<vmem>>, %arg5: memref<1x128xf32, #tpu.memory_space<vmem>>, %arg6: memref<128x32xf32, #tpu.memory_space<vmem>>, %arg7: memref<1x32xf32, #tpu.memory_space<vmem>>, %arg8: memref<2x32x32xf32, #tpu.memory_space<vmem>>, %arg9: memref<3x32x256xf32, #tpu.memory_space<vmem>>, %arg10: memref<1x256xf32, #tpu.memory_space<vmem>>, %arg11: memref<128x32xf32, #tpu.memory_space<vmem>>, %arg12: memref<1x32xf32, #tpu.memory_space<vmem>>, %arg13: memref<128x32xf32, #tpu.memory_space<vmem>>, %arg14: memref<1x32xf32, #tpu.memory_space<vmem>>, %arg15: memref<4x96xf32, #tpu.memory_space<vmem>>) attributes {dimension_semantics = [#tpu.dimension_semantics<arbitrary>], iteration_bounds = array<i64: 1>, scalar_prefetch = 0 : i64, scratch_operands = 0 : i64, tpu.core_type = #tpu.core_type<tc>, window_params = [{pipeline_mode = #tpu.pipeline_mode<synchronous>, transform_indices = @transform_0, window_bounds = array<i64: 2, 2, 2>}, {pipeline_mode = #tpu.pipeline_mode<synchronous>, transform_indices = @transform_1, window_bounds = array<i64: 2, 2, 32>}, {pipeline_mode = #tpu.pipeline_mode<synchronous>, transform_indices = @transform_2, window_bounds = array<i64: 2, 2, 32>}, {pipeline_mode = #tpu.pipeline_mode<synchronous>, transform_indices = @transform_3, window_bounds = array<i64: 32, 128>}, {pipeline_mode = #tpu.pipeline_mode<synchronous>, transform_indices = @transform_4, window_bounds = array<i64: 1, 128>}, {pipeline_mode = #tpu.pipeline_mode<synchronous>, transform_indices = @transform_5, window_bounds = array<i64: 128, 32>}, {pipeline_mode = #tpu.pipeline_mode<synchronous>, transform_indices = @transform_6, window_bounds = array<i64: 1, 32>}, {pipeline_mode = #tpu.pipeline_mode<synchronous>, transform_indices = @transform_7, window_bounds = array<i64: 2, 32, 32>}, {pipeline_mode = #tpu.pipeline_mode<synchronous>, transform_indices = @transform_8, window_bounds = array<i64: 3, 32, 256>}, {pipeline_mode = #tpu.pipeline_mode<synchronous>, transform_indices = @transform_9, window_bounds = array<i64: 1, 256>}, {pipeline_mode = #tpu.pipeline_mode<synchronous>, transform_indices = @transform_10, window_bounds = array<i64: 128, 32>}, {pipeline_mode = #tpu.pipeline_mode<synchronous>, transform_indices = @transform_11, window_bounds = array<i64: 1, 32>}, {pipeline_mode = #tpu.pipeline_mode<synchronous>, transform_indices = @transform_12, window_bounds = array<i64: 128, 32>}, {pipeline_mode = #tpu.pipeline_mode<synchronous>, transform_indices = @transform_13, window_bounds = array<i64: 1, 32>}, {pipeline_mode = #tpu.pipeline_mode<synchronous>, transform_indices = @transform_14, window_bounds = array<i64: 4, 96>}]} {
    %c0 = arith.constant 0 : index
    %c0_0 = arith.constant 0 : index
    %c0_1 = arith.constant 0 : index
    %0 = vector.load %arg1[%c0, %c0_0, %c0_1] : memref<2x2x2xf32, #tpu.memory_space<vmem>>, vector<2x2x2xf32>
    %1 = arith.truncf %0 : vector<2x2x2xf32> to vector<2x2x2xbf16>
    %c0_2 = arith.constant 0 : index
    %c0_3 = arith.constant 0 : index
    %c0_4 = arith.constant 0 : index
    %2 = vector.load %arg2[%c0_2, %c0_3, %c0_4] : memref<2x2x32xf32, #tpu.memory_space<vmem>>, vector<2x2x32xf32>
    %3 = vector.shape_cast %2 : vector<2x2x32xf32> to vector<4x32xf32>
    %4 = arith.truncf %3 : vector<4x32xf32> to vector<4x32xbf16>
    %c0_5 = arith.constant 0 : index
    %c0_6 = arith.constant 0 : index
    %5 = vector.load %arg4[%c0_5, %c0_6] : memref<32x128xf32, #tpu.memory_space<vmem>>, vector<32x128xf32>
    %6 = arith.truncf %5 : vector<32x128xf32> to vector<32x128xbf16>
    %cst = arith.constant dense<0.000000e+00> : vector<4x128xf32>
    %7 = tpu.matmul %4, %6, %cst {dimension_numbers = #tpu.dot_dimension_numbers<[1], [0], [0], [1], [0, 0, 1, 1], [], []>} : vector<4x32xbf16>, vector<32x128xbf16>, vector<4x128xf32> -> vector<4x128xf32>
    %c0_7 = arith.constant 0 : index
    %c0_8 = arith.constant 0 : index
    %8 = vector.load %arg5[%c0_7, %c0_8] : memref<1x128xf32, #tpu.memory_space<vmem>>, vector<1x128xf32>
    %9 = vector.broadcast %8 : vector<1x128xf32> to vector<4x128xf32>
    %10 = arith.addf %7, %9 : vector<4x128xf32>
    %11 = math.tanh %10 : vector<4x128xf32>
    %12 = arith.truncf %11 : vector<4x128xf32> to vector<4x128xbf16>
    %c0_9 = arith.constant 0 : index
    %c0_10 = arith.constant 0 : index
    %13 = vector.load %arg6[%c0_9, %c0_10] : memref<128x32xf32, #tpu.memory_space<vmem>>, vector<128x32xf32>
    %14 = arith.truncf %13 : vector<128x32xf32> to vector<128x32xbf16>
    %cst_11 = arith.constant dense<0.000000e+00> : vector<4x32xf32>
    %15 = tpu.matmul %12, %14, %cst_11 {dimension_numbers = #tpu.dot_dimension_numbers<[1], [0], [0], [1], [0, 0, 1, 1], [], []>} : vector<4x128xbf16>, vector<128x32xbf16>, vector<4x32xf32> -> vector<4x32xf32>
    %c0_12 = arith.constant 0 : index
    %c0_13 = arith.constant 0 : index
    %16 = vector.load %arg7[%c0_12, %c0_13] : memref<1x32xf32, #tpu.memory_space<vmem>>, vector<1x32xf32>
    %17 = vector.broadcast %16 : vector<1x32xf32> to vector<4x32xf32>
    %18 = arith.addf %15, %17 : vector<4x32xf32>
    %19 = math.tanh %18 : vector<4x32xf32>
    %20 = arith.truncf %19 : vector<4x32xf32> to vector<4x32xbf16>
    %c0_14 = arith.constant 0 : index
    %c0_15 = arith.constant 0 : index
    %c0_16 = arith.constant 0 : index
    %21 = vector.load %arg9[%c0_14, %c0_15, %c0_16] : memref<3x32x256xf32, #tpu.memory_space<vmem>>, vector<1x32x256xf32>
    %22 = vector.shape_cast %21 : vector<1x32x256xf32> to vector<32x256xf32>
    %23 = arith.truncf %22 : vector<32x256xf32> to vector<32x256xbf16>
    %cst_17 = arith.constant dense<0.000000e+00> : vector<4x256xf32>
    %24 = tpu.matmul %20, %23, %cst_17 {dimension_numbers = #tpu.dot_dimension_numbers<[1], [0], [0], [1], [0, 0, 1, 1], [], []>} : vector<4x32xbf16>, vector<32x256xbf16>, vector<4x256xf32> -> vector<4x256xf32>
    %25 = arith.truncf %19 : vector<4x32xf32> to vector<4x32xbf16>
    %c0_18 = arith.constant 0 : index
    %c0_19 = arith.constant 0 : index
    %c0_20 = arith.constant 0 : index
    %26 = vector.load %arg8[%c0_18, %c0_19, %c0_20] : memref<2x32x32xf32, #tpu.memory_space<vmem>>, vector<1x32x32xf32>
    %27 = vector.shape_cast %26 : vector<1x32x32xf32> to vector<32x32xf32>
    %28 = arith.truncf %27 : vector<32x32xf32> to vector<32x32xbf16>
    %cst_21 = arith.constant dense<0.000000e+00> : vector<4x32xf32>
    %29 = tpu.matmul %25, %28, %cst_21 {dimension_numbers = #tpu.dot_dimension_numbers<[1], [0], [0], [1], [0, 0, 1, 1], [], []>} : vector<4x32xbf16>, vector<32x32xbf16>, vector<4x32xf32> -> vector<4x32xf32>
    %30 = vector.shape_cast %29 : vector<4x32xf32> to vector<2x2x32xf32>
    %31 = arith.truncf %30 : vector<2x2x32xf32> to vector<2x2x32xbf16>
    "tpu.trace_start"() <{level = 10 : i32, message = "bnm,bmh->bnh"}> : () -> ()
    %cst_22 = arith.constant dense<0.000000e+00> : vector<2x2x32xf32>
    %32 = tpu.matmul %1, %31, %cst_22 {dimension_numbers = #tpu.dot_dimension_numbers<[2], [1], [1], [2], [0, 0, 0, 1, 1, 2], [0], [0]>} : vector<2x2x2xbf16>, vector<2x2x32xbf16>, vector<2x2x32xf32> -> vector<2x2x32xf32>
    "tpu.trace_stop"() : () -> ()
    %33 = math.tanh %32 : vector<2x2x32xf32>
    %34 = vector.shape_cast %33 : vector<2x2x32xf32> to vector<4x32xf32>
    %35 = arith.truncf %34 : vector<4x32xf32> to vector<4x32xbf16>
    %c1 = arith.constant 1 : index
    %c0_23 = arith.constant 0 : index
    %c0_24 = arith.constant 0 : index
    %36 = vector.load %arg9[%c1, %c0_23, %c0_24] : memref<3x32x256xf32, #tpu.memory_space<vmem>>, vector<1x32x256xf32>
    %37 = vector.shape_cast %36 : vector<1x32x256xf32> to vector<32x256xf32>
    %38 = arith.truncf %37 : vector<32x256xf32> to vector<32x256xbf16>
    %cst_25 = arith.constant dense<0.000000e+00> : vector<4x256xf32>
    %39 = tpu.matmul %35, %38, %cst_25 {dimension_numbers = #tpu.dot_dimension_numbers<[1], [0], [0], [1], [0, 0, 1, 1], [], []>} : vector<4x32xbf16>, vector<32x256xbf16>, vector<4x256xf32> -> vector<4x256xf32>
    %40 = arith.addf %24, %39 : vector<4x256xf32>
    %41 = arith.truncf %34 : vector<4x32xf32> to vector<4x32xbf16>
    %c1_26 = arith.constant 1 : index
    %c0_27 = arith.constant 0 : index
    %c0_28 = arith.constant 0 : index
    %42 = vector.load %arg8[%c1_26, %c0_27, %c0_28] : memref<2x32x32xf32, #tpu.memory_space<vmem>>, vector<1x32x32xf32>
    %43 = vector.shape_cast %42 : vector<1x32x32xf32> to vector<32x32xf32>
    %44 = arith.truncf %43 : vector<32x32xf32> to vector<32x32xbf16>
    %cst_29 = arith.constant dense<0.000000e+00> : vector<4x32xf32>
    %45 = tpu.matmul %41, %44, %cst_29 {dimension_numbers = #tpu.dot_dimension_numbers<[1], [0], [0], [1], [0, 0, 1, 1], [], []>} : vector<4x32xbf16>, vector<32x32xbf16>, vector<4x32xf32> -> vector<4x32xf32>
    %46 = vector.shape_cast %45 : vector<4x32xf32> to vector<2x2x32xf32>
    %47 = arith.truncf %46 : vector<2x2x32xf32> to vector<2x2x32xbf16>
    "tpu.trace_start"() <{level = 10 : i32, message = "bnm,bmh->bnh"}> : () -> ()
    %cst_30 = arith.constant dense<0.000000e+00> : vector<2x2x32xf32>
    %48 = tpu.matmul %1, %47, %cst_30 {dimension_numbers = #tpu.dot_dimension_numbers<[2], [1], [1], [2], [0, 0, 0, 1, 1, 2], [0], [0]>} : vector<2x2x2xbf16>, vector<2x2x32xbf16>, vector<2x2x32xf32> -> vector<2x2x32xf32>
    "tpu.trace_stop"() : () -> ()
    %49 = math.tanh %48 : vector<2x2x32xf32>
    %50 = vector.shape_cast %49 : vector<2x2x32xf32> to vector<4x32xf32>
    %51 = arith.truncf %50 : vector<4x32xf32> to vector<4x32xbf16>
    %c2 = arith.constant 2 : index
    %c0_31 = arith.constant 0 : index
    %c0_32 = arith.constant 0 : index
    %52 = vector.load %arg9[%c2, %c0_31, %c0_32] : memref<3x32x256xf32, #tpu.memory_space<vmem>>, vector<1x32x256xf32>
    %53 = vector.shape_cast %52 : vector<1x32x256xf32> to vector<32x256xf32>
    %54 = arith.truncf %53 : vector<32x256xf32> to vector<32x256xbf16>
    %cst_33 = arith.constant dense<0.000000e+00> : vector<4x256xf32>
    %55 = tpu.matmul %51, %54, %cst_33 {dimension_numbers = #tpu.dot_dimension_numbers<[1], [0], [0], [1], [0, 0, 1, 1], [], []>} : vector<4x32xbf16>, vector<32x256xbf16>, vector<4x256xf32> -> vector<4x256xf32>
    %56 = arith.addf %40, %55 : vector<4x256xf32>
    %c0_34 = arith.constant 0 : index
    %c0_35 = arith.constant 0 : index
    %57 = vector.load %arg10[%c0_34, %c0_35] : memref<1x256xf32, #tpu.memory_space<vmem>>, vector<1x256xf32>
    %58 = vector.broadcast %57 : vector<1x256xf32> to vector<4x256xf32>
    %59 = arith.addf %56, %58 : vector<4x256xf32>
    %60 = math.tanh %59 : vector<4x256xf32>
    %61 = vector.extract_strided_slice %60 {offsets = [0, 0], sizes = [4, 128], strides = [1, 1]} : vector<4x256xf32> to vector<4x128xf32>
    %62 = arith.truncf %61 : vector<4x128xf32> to vector<4x128xbf16>
    %c0_36 = arith.constant 0 : index
    %c0_37 = arith.constant 0 : index
    %63 = vector.load %arg11[%c0_36, %c0_37] : memref<128x32xf32, #tpu.memory_space<vmem>>, vector<128x32xf32>
    %64 = arith.truncf %63 : vector<128x32xf32> to vector<128x32xbf16>
    %cst_38 = arith.constant dense<0.000000e+00> : vector<4x32xf32>
    %65 = tpu.matmul %62, %64, %cst_38 {dimension_numbers = #tpu.dot_dimension_numbers<[1], [0], [0], [1], [0, 0, 1, 1], [], []>} : vector<4x128xbf16>, vector<128x32xbf16>, vector<4x32xf32> -> vector<4x32xf32>
    %c0_39 = arith.constant 0 : index
    %c0_40 = arith.constant 0 : index
    %66 = vector.load %arg12[%c0_39, %c0_40] : memref<1x32xf32, #tpu.memory_space<vmem>>, vector<1x32xf32>
    %67 = vector.broadcast %66 : vector<1x32xf32> to vector<4x32xf32>
    %68 = arith.addf %65, %67 : vector<4x32xf32>
    %69 = vector.extract_strided_slice %60 {offsets = [0, 128], sizes = [4, 128], strides = [1, 1]} : vector<4x256xf32> to vector<4x128xf32>
    %70 = arith.truncf %69 : vector<4x128xf32> to vector<4x128xbf16>
    %c0_41 = arith.constant 0 : index
    %c0_42 = arith.constant 0 : index
    %71 = vector.load %arg13[%c0_41, %c0_42] : memref<128x32xf32, #tpu.memory_space<vmem>>, vector<128x32xf32>
    %72 = arith.truncf %71 : vector<128x32xf32> to vector<128x32xbf16>
    %cst_43 = arith.constant dense<0.000000e+00> : vector<4x32xf32>
    %73 = tpu.matmul %70, %72, %cst_43 {dimension_numbers = #tpu.dot_dimension_numbers<[1], [0], [0], [1], [0, 0, 1, 1], [], []>} : vector<4x128xbf16>, vector<128x32xbf16>, vector<4x32xf32> -> vector<4x32xf32>
    %c0_44 = arith.constant 0 : index
    %c0_45 = arith.constant 0 : index
    %74 = vector.load %arg14[%c0_44, %c0_45] : memref<1x32xf32, #tpu.memory_space<vmem>>, vector<1x32xf32>
    %75 = vector.broadcast %74 : vector<1x32xf32> to vector<4x32xf32>
    %76 = arith.addf %73, %75 : vector<4x32xf32>
    %c0_46 = arith.constant 0 : index
    %c0_47 = arith.constant 0 : index
    %c0_48 = arith.constant 0 : index
    %77 = vector.load %arg3[%c0_46, %c0_47, %c0_48] : memref<2x2x32xf32, #tpu.memory_space<vmem>>, vector<2x2x32xf32>
    %78 = vector.shape_cast %77 : vector<2x2x32xf32> to vector<4x32xf32>
    %79 = math.exp %76 : vector<4x32xf32>
    %80 = arith.mulf %78, %79 : vector<4x32xf32>
    %81 = arith.addf %80, %68 : vector<4x32xf32>
    %82 = tpu.concatenate %81, %68, %76 in 1 : vector<4x32xf32>, vector<4x32xf32>, vector<4x32xf32> -> vector<4x96xf32>
    %c0_49 = arith.constant 0 : index
    %c0_50 = arith.constant 0 : index
    %83 = vector.load %arg15[%c0_49, %c0_50] : memref<4x96xf32, #tpu.memory_space<vmem>>, vector<4x96xf32>
    tpu.vector_store %arg15[%c0_49, %c0_50], %82 {strides = array<i32>} : memref<4x96xf32, #tpu.memory_space<vmem>>, vector<4x96xf32>,
    return
  }
  func.func @transform_0(%arg0: i32) -> (i32, i32, i32) {
    %c0_i32 = arith.constant 0 : i32
    %c0_i32_0 = arith.constant 0 : i32
    %c0_i32_1 = arith.constant 0 : i32
    %c0_i32_2 = arith.constant 0 : i32
    return %c0_i32, %c0_i32_0, %c0_i32_1 : i32, i32, i32
  }
  func.func @transform_1(%arg0: i32) -> (i32, i32, i32) {
    %c0_i32 = arith.constant 0 : i32
    %c0_i32_0 = arith.constant 0 : i32
    %c0_i32_1 = arith.constant 0 : i32
    %c0_i32_2 = arith.constant 0 : i32
    return %c0_i32, %c0_i32_0, %c0_i32_1 : i32, i32, i32
  }
  func.func @transform_2(%arg0: i32) -> (i32, i32, i32) {
    %c0_i32 = arith.constant 0 : i32
    %c0_i32_0 = arith.constant 0 : i32
    %c0_i32_1 = arith.constant 0 : i32
    %c0_i32_2 = arith.constant 0 : i32
    return %c0_i32, %c0_i32_0, %c0_i32_1 : i32, i32, i32
  }
  func.func @transform_3(%arg0: i32) -> (i32, i32) {
    %c0_i32 = arith.constant 0 : i32
    %c0_i32_0 = arith.constant 0 : i32
    %c0_i32_1 = arith.constant 0 : i32
    return %c0_i32, %c0_i32_0 : i32, i32
  }
  func.func @transform_4(%arg0: i32) -> (i32, i32) {
    %c0_i32 = arith.constant 0 : i32
    %c0_i32_0 = arith.constant 0 : i32
    %c0_i32_1 = arith.constant 0 : i32
    return %c0_i32, %c0_i32_0 : i32, i32
  }
  func.func @transform_5(%arg0: i32) -> (i32, i32) {
    %c0_i32 = arith.constant 0 : i32
    %c0_i32_0 = arith.constant 0 : i32
    %c0_i32_1 = arith.constant 0 : i32
    return %c0_i32, %c0_i32_0 : i32, i32
  }
  func.func @transform_6(%arg0: i32) -> (i32, i32) {
    %c0_i32 = arith.constant 0 : i32
    %c0_i32_0 = arith.constant 0 : i32
    %c0_i32_1 = arith.constant 0 : i32
    return %c0_i32, %c0_i32_0 : i32, i32
  }
  func.func @transform_7(%arg0: i32) -> (i32, i32, i32) {
    %c0_i32 = arith.constant 0 : i32
    %c0_i32_0 = arith.constant 0 : i32
    %c0_i32_1 = arith.constant 0 : i32
    %c0_i32_2 = arith.constant 0 : i32
    return %c0_i32, %c0_i32_0, %c0_i32_1 : i32, i32, i32
  }
  func.func @transform_8(%arg0: i32) -> (i32, i32, i32) {
    %c0_i32 = arith.constant 0 : i32
    %c0_i32_0 = arith.constant 0 : i32
    %c0_i32_1 = arith.constant 0 : i32
    %c0_i32_2 = arith.constant 0 : i32
    return %c0_i32, %c0_i32_0, %c0_i32_1 : i32, i32, i32
  }
  func.func @transform_9(%arg0: i32) -> (i32, i32) {
    %c0_i32 = arith.constant 0 : i32
    %c0_i32_0 = arith.constant 0 : i32
    %c0_i32_1 = arith.constant 0 : i32
    return %c0_i32, %c0_i32_0 : i32, i32
  }
  func.func @transform_10(%arg0: i32) -> (i32, i32) {
    %c0_i32 = arith.constant 0 : i32
    %c0_i32_0 = arith.constant 0 : i32
    %c0_i32_1 = arith.constant 0 : i32
    return %c0_i32, %c0_i32_0 : i32, i32
  }
  func.func @transform_11(%arg0: i32) -> (i32, i32) {
    %c0_i32 = arith.constant 0 : i32
    %c0_i32_0 = arith.constant 0 : i32
    %c0_i32_1 = arith.constant 0 : i32
    return %c0_i32, %c0_i32_0 : i32, i32
  }
  func.func @transform_12(%arg0: i32) -> (i32, i32) {
    %c0_i32 = arith.constant 0 : i32
    %c0_i32_0 = arith.constant 0 : i32
    %c0_i32_1 = arith.constant 0 : i32
    return %c0_i32, %c0_i32_0 : i32, i32
  }
  func.func @transform_13(%arg0: i32) -> (i32, i32) {
    %c0_i32 = arith.constant 0 : i32
    %c0_i32_0 = arith.constant 0 : i32
    %c0_i32_1 = arith.constant 0 : i32
    return %c0_i32, %c0_i32_0 : i32, i32
  }
  func.func @transform_14(%arg0: i32) -> (i32, i32) {
    %c0_i32 = arith.constant 0 : i32
    %c0_i32_0 = arith.constant 0 : i32
    %c0_i32_1 = arith.constant 0 : i32
    return %c0_i32, %c0_i32_0 : i32, i32
  }
}

module attributes {stable_mosaic.version = 11 : i64} {
  func.func @_decoder_node_kernel(%arg0: i32, %arg1: memref<2x16x32xf32, #tpu.memory_space<vmem>>, %arg2: memref<512x256xf32, #tpu.memory_space<vmem>>, %arg3: memref<1x256xf32, #tpu.memory_space<vmem>>, %arg4: memref<256x256xf32, #tpu.memory_space<vmem>>, %arg5: memref<1x256xf32, #tpu.memory_space<vmem>>, %arg6: memref<256x256xf32, #tpu.memory_space<vmem>>, %arg7: memref<1x256xf32, #tpu.memory_space<vmem>>, %arg8: memref<32x128xf32, #tpu.memory_space<vmem>>, %arg9: memref<1x128xf32, #tpu.memory_space<vmem>>, %arg10: memref<128x4xf32, #tpu.memory_space<vmem>>, %arg11: memref<1x4xf32, #tpu.memory_space<vmem>>, %arg12: memref<2x256xf32, #tpu.memory_space<vmem>>, %arg13: memref<32x4xf32, #tpu.memory_space<vmem>>) attributes {dimension_semantics = [#tpu.dimension_semantics<arbitrary>], iteration_bounds = array<i64: 1>, scalar_prefetch = 0 : i64, scratch_operands = 0 : i64, tpu.core_type = #tpu.core_type<tc>, window_params = [{pipeline_mode = #tpu.pipeline_mode<synchronous>, transform_indices = @transform_0, window_bounds = array<i64: 2, 16, 32>}, {pipeline_mode = #tpu.pipeline_mode<synchronous>, transform_indices = @transform_1, window_bounds = array<i64: 512, 256>}, {pipeline_mode = #tpu.pipeline_mode<synchronous>, transform_indices = @transform_2, window_bounds = array<i64: 1, 256>}, {pipeline_mode = #tpu.pipeline_mode<synchronous>, transform_indices = @transform_3, window_bounds = array<i64: 256, 256>}, {pipeline_mode = #tpu.pipeline_mode<synchronous>, transform_indices = @transform_4, window_bounds = array<i64: 1, 256>}, {pipeline_mode = #tpu.pipeline_mode<synchronous>, transform_indices = @transform_5, window_bounds = array<i64: 256, 256>}, {pipeline_mode = #tpu.pipeline_mode<synchronous>, transform_indices = @transform_6, window_bounds = array<i64: 1, 256>}, {pipeline_mode = #tpu.pipeline_mode<synchronous>, transform_indices = @transform_7, window_bounds = array<i64: 32, 128>}, {pipeline_mode = #tpu.pipeline_mode<synchronous>, transform_indices = @transform_8, window_bounds = array<i64: 1, 128>}, {pipeline_mode = #tpu.pipeline_mode<synchronous>, transform_indices = @transform_9, window_bounds = array<i64: 128, 4>}, {pipeline_mode = #tpu.pipeline_mode<synchronous>, transform_indices = @transform_10, window_bounds = array<i64: 1, 4>}, {pipeline_mode = #tpu.pipeline_mode<synchronous>, transform_indices = @transform_11, window_bounds = array<i64: 2, 256>}, {pipeline_mode = #tpu.pipeline_mode<synchronous>, transform_indices = @transform_12, window_bounds = array<i64: 32, 4>}]} {
    %c0 = arith.constant 0 : index
    %c0_0 = arith.constant 0 : index
    %c0_1 = arith.constant 0 : index
    %0 = vector.load %arg1[%c0, %c0_0, %c0_1] : memref<2x16x32xf32, #tpu.memory_space<vmem>>, vector<2x16x32xf32>
    %1 = vector.shape_cast %0 : vector<2x16x32xf32> to vector<2x512xf32>
    %2 = arith.truncf %1 : vector<2x512xf32> to vector<2x512xbf16>
    %c0_2 = arith.constant 0 : index
    %c0_3 = arith.constant 0 : index
    %3 = vector.load %arg2[%c0_2, %c0_3] : memref<512x256xf32, #tpu.memory_space<vmem>>, vector<512x256xf32>
    %4 = arith.truncf %3 : vector<512x256xf32> to vector<512x256xbf16>
    %cst = arith.constant dense<0.000000e+00> : vector<2x256xf32>
    %5 = tpu.matmul %2, %4, %cst {dimension_numbers = #tpu.dot_dimension_numbers<[1], [0], [0], [1], [0, 0, 1, 1], [], []>} : vector<2x512xbf16>, vector<512x256xbf16>, vector<2x256xf32> -> vector<2x256xf32>
    %c0_4 = arith.constant 0 : index
    %c0_5 = arith.constant 0 : index
    %6 = vector.load %arg3[%c0_4, %c0_5] : memref<1x256xf32, #tpu.memory_space<vmem>>, vector<1x256xf32>
    %7 = vector.broadcast %6 : vector<1x256xf32> to vector<2x256xf32>
    %8 = arith.addf %5, %7 : vector<2x256xf32>
    %9 = arith.negf %8 : vector<2x256xf32>
    %10 = math.exp %9 : vector<2x256xf32>
    %cst_6 = arith.constant 1.000000e+00 : f32
    %11 = vector.broadcast %cst_6 : f32 to vector<2x256xf32>
    %12 = arith.addf %11, %10 : vector<2x256xf32>
    %13 = arith.divf %11, %12 : vector<2x256xf32>
    %14 = arith.truncf %13 : vector<2x256xf32> to vector<2x256xbf16>
    %c0_7 = arith.constant 0 : index
    %c0_8 = arith.constant 0 : index
    %15 = vector.load %arg4[%c0_7, %c0_8] : memref<256x256xf32, #tpu.memory_space<vmem>>, vector<256x256xf32>
    %16 = arith.truncf %15 : vector<256x256xf32> to vector<256x256xbf16>
    %cst_9 = arith.constant dense<0.000000e+00> : vector<2x256xf32>
    %17 = tpu.matmul %14, %16, %cst_9 {dimension_numbers = #tpu.dot_dimension_numbers<[1], [0], [0], [1], [0, 0, 1, 1], [], []>} : vector<2x256xbf16>, vector<256x256xbf16>, vector<2x256xf32> -> vector<2x256xf32>
    %c0_10 = arith.constant 0 : index
    %c0_11 = arith.constant 0 : index
    %18 = vector.load %arg5[%c0_10, %c0_11] : memref<1x256xf32, #tpu.memory_space<vmem>>, vector<1x256xf32>
    %19 = vector.broadcast %18 : vector<1x256xf32> to vector<2x256xf32>
    %20 = arith.addf %17, %19 : vector<2x256xf32>
    %21 = arith.negf %20 : vector<2x256xf32>
    %22 = math.exp %21 : vector<2x256xf32>
    %cst_12 = arith.constant 1.000000e+00 : f32
    %23 = vector.broadcast %cst_12 : f32 to vector<2x256xf32>
    %24 = arith.addf %23, %22 : vector<2x256xf32>
    %25 = arith.divf %23, %24 : vector<2x256xf32>
    %26 = arith.truncf %25 : vector<2x256xf32> to vector<2x256xbf16>
    %c0_13 = arith.constant 0 : index
    %c0_14 = arith.constant 0 : index
    %27 = vector.load %arg6[%c0_13, %c0_14] : memref<256x256xf32, #tpu.memory_space<vmem>>, vector<256x256xf32>
    %28 = arith.truncf %27 : vector<256x256xf32> to vector<256x256xbf16>
    %cst_15 = arith.constant dense<0.000000e+00> : vector<2x256xf32>
    %29 = tpu.matmul %26, %28, %cst_15 {dimension_numbers = #tpu.dot_dimension_numbers<[1], [0], [0], [1], [0, 0, 1, 1], [], []>} : vector<2x256xbf16>, vector<256x256xbf16>, vector<2x256xf32> -> vector<2x256xf32>
    %c0_16 = arith.constant 0 : index
    %c0_17 = arith.constant 0 : index
    %30 = vector.load %arg7[%c0_16, %c0_17] : memref<1x256xf32, #tpu.memory_space<vmem>>, vector<1x256xf32>
    %31 = vector.broadcast %30 : vector<1x256xf32> to vector<2x256xf32>
    %32 = arith.addf %29, %31 : vector<2x256xf32>
    %33 = arith.negf %32 : vector<2x256xf32>
    %34 = math.exp %33 : vector<2x256xf32>
    %cst_18 = arith.constant 1.000000e+00 : f32
    %35 = vector.broadcast %cst_18 : f32 to vector<2x256xf32>
    %36 = arith.addf %35, %34 : vector<2x256xf32>
    %37 = arith.divf %35, %36 : vector<2x256xf32>
    %c0_19 = arith.constant 0 : index
    %c0_20 = arith.constant 0 : index
    %38 = vector.load %arg12[%c0_19, %c0_20] : memref<2x256xf32, #tpu.memory_space<vmem>>, vector<2x256xf32>
    tpu.vector_store %arg12[%c0_19, %c0_20], %37 {strides = array<i32>} : memref<2x256xf32, #tpu.memory_space<vmem>>, vector<2x256xf32>,
    %39 = vector.shape_cast %0 : vector<2x16x32xf32> to vector<32x32xf32>
    %40 = arith.truncf %39 : vector<32x32xf32> to vector<32x32xbf16>
    %c0_21 = arith.constant 0 : index
    %c0_22 = arith.constant 0 : index
    %41 = vector.load %arg8[%c0_21, %c0_22] : memref<32x128xf32, #tpu.memory_space<vmem>>, vector<32x128xf32>
    %42 = arith.truncf %41 : vector<32x128xf32> to vector<32x128xbf16>
    %cst_23 = arith.constant dense<0.000000e+00> : vector<32x128xf32>
    %43 = tpu.matmul %40, %42, %cst_23 {dimension_numbers = #tpu.dot_dimension_numbers<[1], [0], [0], [1], [0, 0, 1, 1], [], []>} : vector<32x32xbf16>, vector<32x128xbf16>, vector<32x128xf32> -> vector<32x128xf32>
    %c0_24 = arith.constant 0 : index
    %c0_25 = arith.constant 0 : index
    %44 = vector.load %arg9[%c0_24, %c0_25] : memref<1x128xf32, #tpu.memory_space<vmem>>, vector<1x128xf32>
    %45 = vector.broadcast %44 : vector<1x128xf32> to vector<32x128xf32>
    %46 = arith.addf %43, %45 : vector<32x128xf32>
    %47 = math.tanh %46 : vector<32x128xf32>
    %48 = arith.truncf %47 : vector<32x128xf32> to vector<32x128xbf16>
    %c0_26 = arith.constant 0 : index
    %c0_27 = arith.constant 0 : index
    %49 = vector.load %arg10[%c0_26, %c0_27] : memref<128x4xf32, #tpu.memory_space<vmem>>, vector<128x4xf32>
    %50 = arith.truncf %49 : vector<128x4xf32> to vector<128x4xbf16>
    %cst_28 = arith.constant dense<0.000000e+00> : vector<32x4xf32>
    %51 = tpu.matmul %48, %50, %cst_28 {dimension_numbers = #tpu.dot_dimension_numbers<[1], [0], [0], [1], [0, 0, 1, 1], [], []>} : vector<32x128xbf16>, vector<128x4xbf16>, vector<32x4xf32> -> vector<32x4xf32>
    %c0_29 = arith.constant 0 : index
    %c0_30 = arith.constant 0 : index
    %52 = vector.load %arg11[%c0_29, %c0_30] : memref<1x4xf32, #tpu.memory_space<vmem>>, vector<1x4xf32>
    %53 = vector.broadcast %52 : vector<1x4xf32> to vector<32x4xf32>
    %54 = arith.addf %51, %53 : vector<32x4xf32>
    %c0_31 = arith.constant 0 : index
    %c0_32 = arith.constant 0 : index
    %55 = vector.load %arg13[%c0_31, %c0_32] : memref<32x4xf32, #tpu.memory_space<vmem>>, vector<32x4xf32>
    tpu.vector_store %arg13[%c0_31, %c0_32], %54 {strides = array<i32>} : memref<32x4xf32, #tpu.memory_space<vmem>>, vector<32x4xf32>,
    return
  }
  func.func @transform_0(%arg0: i32) -> (i32, i32, i32) {
    %c0_i32 = arith.constant 0 : i32
    %c0_i32_0 = arith.constant 0 : i32
    %c0_i32_1 = arith.constant 0 : i32
    %c0_i32_2 = arith.constant 0 : i32
    return %c0_i32, %c0_i32_0, %c0_i32_1 : i32, i32, i32
  }
  func.func @transform_1(%arg0: i32) -> (i32, i32) {
    %c0_i32 = arith.constant 0 : i32
    %c0_i32_0 = arith.constant 0 : i32
    %c0_i32_1 = arith.constant 0 : i32
    return %c0_i32, %c0_i32_0 : i32, i32
  }
  func.func @transform_2(%arg0: i32) -> (i32, i32) {
    %c0_i32 = arith.constant 0 : i32
    %c0_i32_0 = arith.constant 0 : i32
    %c0_i32_1 = arith.constant 0 : i32
    return %c0_i32, %c0_i32_0 : i32, i32
  }
  func.func @transform_3(%arg0: i32) -> (i32, i32) {
    %c0_i32 = arith.constant 0 : i32
    %c0_i32_0 = arith.constant 0 : i32
    %c0_i32_1 = arith.constant 0 : i32
    return %c0_i32, %c0_i32_0 : i32, i32
  }
  func.func @transform_4(%arg0: i32) -> (i32, i32) {
    %c0_i32 = arith.constant 0 : i32
    %c0_i32_0 = arith.constant 0 : i32
    %c0_i32_1 = arith.constant 0 : i32
    return %c0_i32, %c0_i32_0 : i32, i32
  }
  func.func @transform_5(%arg0: i32) -> (i32, i32) {
    %c0_i32 = arith.constant 0 : i32
    %c0_i32_0 = arith.constant 0 : i32
    %c0_i32_1 = arith.constant 0 : i32
    return %c0_i32, %c0_i32_0 : i32, i32
  }
  func.func @transform_6(%arg0: i32) -> (i32, i32) {
    %c0_i32 = arith.constant 0 : i32
    %c0_i32_0 = arith.constant 0 : i32
    %c0_i32_1 = arith.constant 0 : i32
    return %c0_i32, %c0_i32_0 : i32, i32
  }
  func.func @transform_7(%arg0: i32) -> (i32, i32) {
    %c0_i32 = arith.constant 0 : i32
    %c0_i32_0 = arith.constant 0 : i32
    %c0_i32_1 = arith.constant 0 : i32
    return %c0_i32, %c0_i32_0 : i32, i32
  }
  func.func @transform_8(%arg0: i32) -> (i32, i32) {
    %c0_i32 = arith.constant 0 : i32
    %c0_i32_0 = arith.constant 0 : i32
    %c0_i32_1 = arith.constant 0 : i32
    return %c0_i32, %c0_i32_0 : i32, i32
  }
  func.func @transform_9(%arg0: i32) -> (i32, i32) {
    %c0_i32 = arith.constant 0 : i32
    %c0_i32_0 = arith.constant 0 : i32
    %c0_i32_1 = arith.constant 0 : i32
    return %c0_i32, %c0_i32_0 : i32, i32
  }
  func.func @transform_10(%arg0: i32) -> (i32, i32) {
    %c0_i32 = arith.constant 0 : i32
    %c0_i32_0 = arith.constant 0 : i32
    %c0_i32_1 = arith.constant 0 : i32
    return %c0_i32, %c0_i32_0 : i32, i32
  }
  func.func @transform_11(%arg0: i32) -> (i32, i32) {
    %c0_i32 = arith.constant 0 : i32
    %c0_i32_0 = arith.constant 0 : i32
    %c0_i32_1 = arith.constant 0 : i32
    return %c0_i32, %c0_i32_0 : i32, i32
  }
  func.func @transform_12(%arg0: i32) -> (i32, i32) {
    %c0_i32 = arith.constant 0 : i32
    %c0_i32_0 = arith.constant 0 : i32
    %c0_i32_1 = arith.constant 0 : i32
    return %c0_i32, %c0_i32_0 : i32, i32
  }
}

</mosaic_0001>

<llo_original>
// kernel: _lambda_.8
$region0: #{_lambda_.8}
  #allocation0 [shape = 'u32[]', space=smem, size = 0x4, offset = 0x4, fixed_abs, tag = 'smem constant byte address 0x4 - core index']
  #allocation1 [shape = 'u32[144,128]{1,0:T(1,128)}', space=vmem, size = 0x12000, scoped, tag = 'internal scratch']
  %s0 = inlined_call_operand.vmem [shape: f32[2,16,16], index: 0, kind: input, shape index: {}]
  %s1 = inlined_call_operand.vmem [shape: f32[2,16,32], index: 1, kind: input, shape index: {}]
  %s2 = inlined_call_operand.vmem [shape: f32[2,16,4], index: 2, kind: input, shape index: {}]
  %s3 = inlined_call_operand.hbm [shape: f32[32,128], index: 3, kind: input, shape index: {}]
  %s4 = inlined_call_operand.hbm [shape: f32[1,128], index: 4, kind: input, shape index: {}]
  %s5 = inlined_call_operand.hbm [shape: f32[128,32], index: 5, kind: input, shape index: {}]
  %s6 = inlined_call_operand.hbm [shape: f32[1,32], index: 6, kind: input, shape index: {}]
  %s7 = inlined_call_operand.hbm [shape: f32[2,32,32], index: 7, kind: input, shape index: {}]
  %s8 = inlined_call_operand.hbm [shape: f32[32,4], index: 8, kind: input, shape index: {}]
  %s9 = inlined_call_operand.vmem [shape: f32[2,4,32], index: 9, kind: output, shape index: {0}]
  %s10 = inlined_call_operand.vmem [shape: f32[2,4,4], index: 10, kind: output, shape index: {1}]
  %11 = xla_tuple %s9, %s10
  %s12 = sld [smem:[#allocation0]]
  $region78: #{_lambda_.8} parent=0
    _
  %s14 = ssub.s32 1, %s12
  %s15 = scalar_select 0, %s14, %s12
  $region1: #{_lambda_.8} parent=0
    #allocation2 [shape = 'u8[16384]{0}', space=vmem, size = 0x4000, scoped, tag = 'input window, operand 3, single buffered']
    #allocation3 [shape = 's32[1]{0}', space=sflag, size = 0x4, scoped, tag = 'scoped memory for _lambda_.8']
    #allocation4 [shape = 'u8[512]{0}', space=vmem, size = 0x400, scoped, tag = 'input window, operand 4, single buffered']
    #allocation5 [shape = 's32[1]{0}', space=sflag, size = 0x4, scoped, tag = 'scoped memory for _lambda_.8']
    #allocation6 [shape = 'u8[65536]{0}', space=vmem, size = 0x10000, scoped, tag = 'input window, operand 5, single buffered']
    #allocation7 [shape = 'u8[512]{0}', space=vmem, size = 0x400, scoped, tag = 'input window, operand 6, single buffered']
    #allocation8 [shape = 's32[1]{0}', space=sflag, size = 0x4, scoped, tag = 'scoped memory for _lambda_.8']
    #allocation9 [shape = 'u8[32768]{0}', space=vmem, size = 0x8000, scoped, tag = 'input window, operand 7, single buffered']
    #allocation10 [shape = 'u8[16384]{0}', space=vmem, size = 0x4000, scoped, tag = 'input window, operand 8, single buffered']
    #allocation11 [shape = 's32[1]{0}', space=sflag, size = 0x4, scoped, tag = 'scoped memory for _lambda_.8']
    %16 = vsyncpa [#allocation3], 0
    %17 = vsyncpa [#allocation5], 0
    %18 = vsyncpa [#allocation8], 0
    %19 = vsyncpa [#allocation11], 0
    // Predicated region
    $region2: #{_lambda_.8} parent=1 // pred_check
      _
    $region3: #{_lambda_.8} parent=1 // pred_check_branch
      %21 = sbr.rel (0) target = $region5
    $region4: #{_lambda_.8} parent=1 // pred_region
      _
    $region5: #{_lambda_.8} parent=1 // pred_fallthru
      _
    // Predicated region
    $region6: #{_lambda_.8} parent=1 // pred_check
      _
    $region7: #{_lambda_.8} parent=1 // pred_check_branch
      %23 = sbr.rel (0) target = $region9
    $region8: #{_lambda_.8} parent=1 // pred_region
      _
    $region9: #{_lambda_.8} parent=1 // pred_fallthru
      _
    // Predicated region
    $region10: #{_lambda_.8} parent=1 // pred_check
      _
    $region11: #{_lambda_.8} parent=1 // pred_check_branch
      %25 = sbr.rel (0) target = $region13
    $region12: #{_lambda_.8} parent=1 // pred_region
      _
    $region13: #{_lambda_.8} parent=1 // pred_fallthru
      _
    // Predicated region
    $region14: #{_lambda_.8} parent=1 // pred_check
      _
    $region15: #{_lambda_.8} parent=1 // pred_check_branch
      %27 = sbr.rel (0) target = $region17
    $region16: #{_lambda_.8} parent=1 // pred_region
      %s29 = ssub.s32 512, 512
      %30 = vsyncadd [#allocation3], %s29
      %s31 = sshll.u32 [#allocation2], 4
      %s32 = int_to_ptr.vmem [resolvable:$true] %s31
      %37 = dma.hbm_to_vmem [thread:$0]  %s3, 512, %s32, [#allocation3], 128, 128, 8
    $region17: #{_lambda_.8} parent=1 // pred_fallthru
      _
    // Predicated region
    $region18: #{_lambda_.8} parent=1 // pred_check
      _
    $region19: #{_lambda_.8} parent=1 // pred_check_branch
      %39 = sbr.rel (0) target = $region21
    $region20: #{_lambda_.8} parent=1 // pred_region
      %s41 = ssub.s32 16, 16
      %42 = vsyncadd [#allocation5], %s41
      %s44 = sshll.u32 [#allocation4], 4
      %s45 = int_to_ptr.vmem [resolvable:$true] %s44
      %47 = dma.hbm_to_vmem [thread:$0]  %s4, 16, %s45, [#allocation5]
    $region21: #{_lambda_.8} parent=1 // pred_fallthru
      _
    // Predicated region
    $region22: #{_lambda_.8} parent=1 // pred_check
      _
    $region23: #{_lambda_.8} parent=1 // pred_check_branch
      %49 = sbr.rel (0) target = $region25
    $region24: #{_lambda_.8} parent=1 // pred_region
      %s51 = ssub.s32 2048, 2048
      %52 = vsyncadd [#allocation5], %s51
      %s53 = sshll.u32 [#allocation6], 4
      %s54 = int_to_ptr.vmem [resolvable:$true] %s53
      %59 = dma.hbm_to_vmem [thread:$0]  %s5, 2048, %s54, [#allocation5], 128, 128, 8
    $region25: #{_lambda_.8} parent=1 // pred_fallthru
      _
    // Predicated region
    $region26: #{_lambda_.8} parent=1 // pred_check
      _
    $region27: #{_lambda_.8} parent=1 // pred_check_branch
      %61 = sbr.rel (0) target = $region29
    $region28: #{_lambda_.8} parent=1 // pred_region
      %s63 = ssub.s32 16, 16
      %64 = vsyncadd [#allocation8], %s63
      %s66 = sshll.u32 [#allocation7], 4
      %s67 = int_to_ptr.vmem [resolvable:$true] %s66
      %69 = dma.hbm_to_vmem [thread:$0]  %s6, 16, %s67, [#allocation8]
    $region29: #{_lambda_.8} parent=1 // pred_fallthru
      _
    // Predicated region
    $region30: #{_lambda_.8} parent=1 // pred_check
      _
    $region31: #{_lambda_.8} parent=1 // pred_check_branch
      %71 = sbr.rel (0) target = $region33
    $region32: #{_lambda_.8} parent=1 // pred_region
      %s73 = ssub.s32 1024, 1024
      %74 = vsyncadd [#allocation8], %s73
      %s75 = sshll.u32 [#allocation9], 4
      %s76 = int_to_ptr.vmem [resolvable:$true] %s75
      %81 = dma.hbm_to_vmem [thread:$0]  %s7, 1024, %s76, [#allocation8], 128, 128, 8
    $region33: #{_lambda_.8} parent=1 // pred_fallthru
      _
    // Predicated region
    $region34: #{_lambda_.8} parent=1 // pred_check
      _
    $region35: #{_lambda_.8} parent=1 // pred_check_branch
      %83 = sbr.rel (0) target = $region37
    $region36: #{_lambda_.8} parent=1 // pred_region
      %s85 = ssub.s32 512, 512
      %86 = vsyncadd [#allocation11], %s85
      %s87 = sshll.u32 [#allocation10], 4
      %s88 = int_to_ptr.vmem [resolvable:$true] %s87
      %93 = dma.hbm_to_vmem [thread:$0]  %s8, 512, %s88, [#allocation11], 128, 128, 8
    $region37: #{_lambda_.8} parent=1 // pred_fallthru
      _
    // Predicated region
    $region38: #{_lambda_.8} parent=1 // pred_check
      _
    $region39: #{_lambda_.8} parent=1 // pred_check_branch
      %95 = sbr.rel (0) target = $region41
    $region40: #{_lambda_.8} parent=1 // pred_region
      %96 = dma.done [#allocation3], 512
    $region41: #{_lambda_.8} parent=1 // pred_fallthru
      _
    // Predicated region
    $region42: #{_lambda_.8} parent=1 // pred_check
      _
    $region43: #{_lambda_.8} parent=1 // pred_check_branch
      %98 = sbr.rel (0) target = $region45
    $region44: #{_lambda_.8} parent=1 // pred_region
      %99 = dma.done [#allocation5], 16
    $region45: #{_lambda_.8} parent=1 // pred_fallthru
      _
    // Predicated region
    $region46: #{_lambda_.8} parent=1 // pred_check
      _
    $region47: #{_lambda_.8} parent=1 // pred_check_branch
      %101 = sbr.rel (0) target = $region49
    $region48: #{_lambda_.8} parent=1 // pred_region
      %102 = dma.done [#allocation5], 2048
    $region49: #{_lambda_.8} parent=1 // pred_fallthru
      _
    // Predicated region
    $region50: #{_lambda_.8} parent=1 // pred_check
      _
    $region51: #{_lambda_.8} parent=1 // pred_check_branch
      %104 = sbr.rel (0) target = $region53
    $region52: #{_lambda_.8} parent=1 // pred_region
      %105 = dma.done [#allocation8], 16
    $region53: #{_lambda_.8} parent=1 // pred_fallthru
      _
    // Predicated region
    $region54: #{_lambda_.8} parent=1 // pred_check
      _
    $region55: #{_lambda_.8} parent=1 // pred_check_branch
      %107 = sbr.rel (0) target = $region57
    $region56: #{_lambda_.8} parent=1 // pred_region
      %108 = dma.done [#allocation8], 1024
    $region57: #{_lambda_.8} parent=1 // pred_fallthru
      _
    // Predicated region
    $region58: #{_lambda_.8} parent=1 // pred_check
      _
    $region59: #{_lambda_.8} parent=1 // pred_check_branch
      %110 = sbr.rel (0) target = $region61
    $region60: #{_lambda_.8} parent=1 // pred_region
      %111 = dma.done [#allocation11], 512
    $region61: #{_lambda_.8} parent=1 // pred_fallthru
      _
    %v113 = vld [vmem:[%s0] sm:$0xff]
    %v114 = vld [vmem:[%s0 + $0x8] sm:$0xff]
    %v115 = vld [vmem:[%s0 + $0x10] sm:$0xff]
    %v116 = vld [vmem:[%s0 + $0x18] sm:$0xff]
    %v117 = vpack.c.bf16 %v114, %v113
    %v118 = vpack.c.bf16 %v116, %v115
    %v119 = vld [vmem:[%s1] sm:$0xff]
    %v120 = vld [vmem:[%s1 + $0x8] sm:$0xff]
    %v121 = vld [vmem:[%s1 + $0x10] sm:$0xff]
    %v122 = vld [vmem:[%s1 + $0x18] sm:$0xff]
    %v123 = vpack.c.bf16 %v120, %v119
    %v124 = vpack.c.bf16 %v122, %v121
    %v125 = vld [vmem:[#allocation2] sm:$0xff]
    %v126 = vld [vmem:[#allocation2 + $0x8] sm:$0xff]
    %v127 = vld [vmem:[#allocation2 + $0x10] sm:$0xff]
    %v128 = vld [vmem:[#allocation2 + $0x18] sm:$0xff]
    %v129 = vpack.c.bf16 %v126, %v125
    %v130 = vpack.c.bf16 %v128, %v127
    %v131 = vld [vmem:[#allocation4] sm:$0x1]
    %v133 = vlaneseq
    %v134 = vshrl.u32 %v133, 7
    %v135 = vsub.s32 0, %v134
    %v136 = vrot.slane %v131, %v135
    %vm138 = vcmask 261120
    %v140 = vsel %vm138, %v123, 0
    %v143 = vsel %vm138, %v124, 0
    %145 = vmatprep.subr.bf16.mxu0 0
    %146 = vmatpush1.bf16.msra.mxu0 %v129
    %147 = vmatprep.subr.bf16.mxu0 0
    %148 = vmatpush1.bf16.msra.mxu0 %v130
    %149 = vmatprep.subr.bf16.mxu0 0
    %150 = vmatpush1.bf16.msra.mxu0 0
    %151 = vmatprep.subr.bf16.mxu0 0
    %152 = vmatpush1.bf16.msra.mxu0 0
    %153 = vmatprep.subr.bf16.mxu0 0
    %154 = vmatpush1.bf16.msra.mxu0 0
    %155 = vmatprep.subr.bf16.mxu0 0
    %156 = vmatpush1.bf16.msra.mxu0 0
    %157 = vmatprep.subr.bf16.mxu0 0
    %158 = vmatpush1.bf16.msra.mxu0 0
    %159 = vmatprep.subr.bf16.mxu0 0
    %160 = vmatpush1.bf16.msra.mxu0 0
    %161 = vmatprep.subr.bf16.mxu0 0
    %162 = vmatpush1.bf16.msra.mxu0 0
    %163 = vmatprep.subr.bf16.mxu0 0
    %164 = vmatpush1.bf16.msra.mxu0 0
    %165 = vmatprep.subr.bf16.mxu0 0
    %166 = vmatpush1.bf16.msra.mxu0 0
    %167 = vmatprep.subr.bf16.mxu0 0
    %168 = vmatpush1.bf16.msra.mxu0 0
    %169 = vmatprep.subr.bf16.mxu0 0
    %170 = vmatpush1.bf16.msra.mxu0 0
    %171 = vmatprep.subr.bf16.mxu0 0
    %172 = vmatpush1.bf16.msra.mxu0 0
    %173 = vmatprep.subr.bf16.mxu0 0
    %174 = vmatpush1.bf16.msra.mxu0 0
    %175 = vmatprep.subr.bf16.mxu0 0
    %176 = vmatpush1.bf16.msra.mxu0 0
    %177 = vmatprep.mubr.bf16.mxu0 0
    %178 = vmatmul.mubr.bf16.gmra.mrb[0].mxu0 %v140
    %v179 = vpop.f32.mrb[0].mxu0
    %v180 = vadd.f32 %v136, %v179
    %v181 = vpop.f32.mrb[0].mxu0
    %v182 = vpop.f32.mrb[0].mxu0
    %v183 = vadd.f32 %v136, %v182
    %v184 = vpop.f32.mrb[0].mxu0
    %185 = vmatprep.mubr.bf16.mxu0 0
    %186 = vmatmul.mubr.bf16.gmra.mrb[0].mxu0 %v143
    %v187 = vpop.f32.mrb[0].mxu0
    %v188 = vadd.f32 %v136, %v187
    %v189 = vpop.f32.mrb[0].mxu0
    %v190 = vpop.f32.mrb[0].mxu0
    %v191 = vadd.f32 %v136, %v190
    %v192 = vpop.f32.mrb[0].mxu0
    %193 = vdwg.mxu0
    %v194 = vtanh.pop %v180
    %v195 = vtanh.pop %v183
    %v196 = vtanh.pop %v188
    %v197 = vtanh.pop %v191
    %v198 = vpack.c.bf16 %v195, %v194
    %v199 = vpack.c.bf16 %v197, %v196
    %v200 = vld [vmem:[#allocation6] sm:$0xff]
    %v201 = vld [vmem:[#allocation6 + $0x8] sm:$0xff]
    %v202 = vld [vmem:[#allocation6 + $0x10] sm:$0xff]
    %v203 = vld [vmem:[#allocation6 + $0x18] sm:$0xff]
    %v204 = vld [vmem:[#allocation6 + $0x20] sm:$0xff]
    %v205 = vld [vmem:[#allocation6 + $0x28] sm:$0xff]
    %v206 = vld [vmem:[#allocation6 + $0x30] sm:$0xff]
    %v207 = vld [vmem:[#allocation6 + $0x38] sm:$0xff]
    %v208 = vld [vmem:[#allocation6 + $0x40] sm:$0xff]
    %v209 = vld [vmem:[#allocation6 + $0x48] sm:$0xff]
    %v210 = vld [vmem:[#allocation6 + $0x50] sm:$0xff]
    %v211 = vld [vmem:[#allocation6 + $0x58] sm:$0xff]
    %v212 = vld [vmem:[#allocation6 + $0x60] sm:$0xff]
    %v213 = vld [vmem:[#allocation6 + $0x68] sm:$0xff]
    %v214 = vld [vmem:[#allocation6 + $0x70] sm:$0xff]
    %v215 = vld [vmem:[#allocation6 + $0x78] sm:$0xff]
    %v216 = vpack.c.bf16 %v201, %v200
    %v217 = vpack.c.bf16 %v203, %v202
    %v218 = vpack.c.bf16 %v205, %v204
    %v219 = vpack.c.bf16 %v207, %v206
    %v220 = vpack.c.bf16 %v209, %v208
    %v221 = vpack.c.bf16 %v211, %v210
    %v222 = vpack.c.bf16 %v213, %v212
    %v223 = vpack.c.bf16 %v215, %v214
    %v224 = vld [vmem:[#allocation7] sm:$0x1]
    %v226 = vlaneseq
    %v227 = vshrl.u32 %v226, 7
    %v228 = vsub.s32 0, %v227
    %v229 = vrot.slane %v224, %v228
    %231 = vmatprep.subr.bf16.mxu0 0
    %232 = vmatpush1.bf16.msra.mxu0 %v216
    %233 = vmatprep.subr.bf16.mxu0 0
    %234 = vmatpush1.bf16.msra.mxu0 %v217
    %235 = vmatprep.subr.bf16.mxu0 0
    %236 = vmatpush1.bf16.msra.mxu0 %v218
    %237 = vmatprep.subr.bf16.mxu0 0
    %238 = vmatpush1.bf16.msra.mxu0 %v219
    %239 = vmatprep.subr.bf16.mxu0 0
    %240 = vmatpush1.bf16.msra.mxu0 %v220
    %241 = vmatprep.subr.bf16.mxu0 0
    %242 = vmatpush1.bf16.msra.mxu0 %v221
    %243 = vmatprep.subr.bf16.mxu0 0
    %244 = vmatpush1.bf16.msra.mxu0 %v222
    %245 = vmatprep.subr.bf16.mxu0 0
    %246 = vmatpush1.bf16.msra.mxu0 %v223
    %247 = vmatprep.subr.bf16.mxu0 0
    %248 = vmatpush1.bf16.msra.mxu0 0
    %249 = vmatprep.subr.bf16.mxu0 0
    %250 = vmatpush1.bf16.msra.mxu0 0
    %251 = vmatprep.subr.bf16.mxu0 0
    %252 = vmatpush1.bf16.msra.mxu0 0
    %253 = vmatprep.subr.bf16.mxu0 0
    %254 = vmatpush1.bf16.msra.mxu0 0
    %255 = vmatprep.subr.bf16.mxu0 0
    %256 = vmatpush1.bf16.msra.mxu0 0
    %257 = vmatprep.subr.bf16.mxu0 0
    %258 = vmatpush1.bf16.msra.mxu0 0
    %259 = vmatprep.subr.bf16.mxu0 0
    %260 = vmatpush1.bf16.msra.mxu0 0
    %261 = vmatprep.subr.bf16.mxu0 0
    %262 = vmatpush1.bf16.msra.mxu0 0
    %263 = vmatprep.mubr.bf16.mxu0 0
    %264 = vmatmul.mubr.bf16.gmra.mrb[0].mxu0 %v198
    %v265 = vpop.f32.mrb[0].mxu0
    %v266 = vadd.f32 %v229, %v265
    %v267 = vpop.f32.mrb[0].mxu0
    %v268 = vpop.f32.mrb[0].mxu0
    %v269 = vadd.f32 %v229, %v268
    %v270 = vpop.f32.mrb[0].mxu0
    %271 = vmatprep.mubr.bf16.mxu0 0
    %272 = vmatmul.mubr.bf16.gmra.mrb[0].mxu0 %v199
    %v273 = vpop.f32.mrb[0].mxu0
    %v274 = vadd.f32 %v229, %v273
    %v275 = vpop.f32.mrb[0].mxu0
    %v276 = vpop.f32.mrb[0].mxu0
    %v277 = vadd.f32 %v229, %v276
    %v278 = vpop.f32.mrb[0].mxu0
    %279 = vdwg.mxu0
    %v280 = vtanh.pop %v266
    %v281 = vtanh.pop %v269
    %v282 = vtanh.pop %v274
    %v283 = vtanh.pop %v277
    %v284 = vpack.c.bf16 %v281, %v280
    %v285 = vpack.c.bf16 %v283, %v282
    %v286 = vld [vmem:[#allocation9] sm:$0xff]
    %v287 = vld [vmem:[#allocation9 + $0x8] sm:$0xff]
    %v288 = vld [vmem:[#allocation9 + $0x10] sm:$0xff]
    %v289 = vld [vmem:[#allocation9 + $0x18] sm:$0xff]
    %v290 = vpack.c.bf16 %v287, %v286
    %v291 = vpack.c.bf16 %v289, %v288
    %v293 = vsel %vm138, %v284, 0
    %v296 = vsel %vm138, %v285, 0
    %298 = vmatprep.subr.bf16.mxu0 0
    %299 = vmatpush1.bf16.msra.mxu0 %v290
    %300 = vmatprep.subr.bf16.mxu0 0
    %301 = vmatpush1.bf16.msra.mxu0 %v291
    %302 = vmatprep.subr.bf16.mxu0 0
    %303 = vmatpush1.bf16.msra.mxu0 0
    %304 = vmatprep.subr.bf16.mxu0 0
    %305 = vmatpush1.bf16.msra.mxu0 0
    %306 = vmatprep.subr.bf16.mxu0 0
    %307 = vmatpush1.bf16.msra.mxu0 0
    %308 = vmatprep.subr.bf16.mxu0 0
    %309 = vmatpush1.bf16.msra.mxu0 0
    %310 = vmatprep.subr.bf16.mxu0 0
    %311 = vmatpush1.bf16.msra.mxu0 0
    %312 = vmatprep.subr.bf16.mxu0 0
    %313 = vmatpush1.bf16.msra.mxu0 0
    %314 = vmatprep.subr.bf16.mxu0 0
    %315 = vmatpush1.bf16.msra.mxu0 0
    %316 = vmatprep.subr.bf16.mxu0 0
    %317 = vmatpush1.bf16.msra.mxu0 0
    %318 = vmatprep.subr.bf16.mxu0 0
    %319 = vmatpush1.bf16.msra.mxu0 0
    %320 = vmatprep.subr.bf16.mxu0 0
    %321 = vmatpush1.bf16.msra.mxu0 0
    %322 = vmatprep.subr.bf16.mxu0 0
    %323 = vmatpush1.bf16.msra.mxu0 0
    %324 = vmatprep.subr.bf16.mxu0 0
    %325 = vmatpush1.bf16.msra.mxu0 0
    %326 = vmatprep.subr.bf16.mxu0 0
    %327 = vmatpush1.bf16.msra.mxu0 0
    %328 = vmatprep.subr.bf16.mxu0 0
    %329 = vmatpush1.bf16.msra.mxu0 0
    %330 = vmatprep.mubr.bf16.mxu0 0
    %331 = vmatmul.mubr.bf16.gmra.mrb[0].mxu0 %v293
    %v332 = vpop.f32.mrb[0].mxu0
    %v333 = vadd.f32 0.0, %v332
    %v334 = vpop.f32.mrb[0].mxu0
    %v335 = vpop.f32.mrb[0].mxu0
    %v336 = vadd.f32 0.0, %v335
    %v337 = vpop.f32.mrb[0].mxu0
    %338 = vmatprep.mubr.bf16.mxu0 0
    %339 = vmatmul.mubr.bf16.gmra.mrb[0].mxu0 %v296
    %v340 = vpop.f32.mrb[0].mxu0
    %v341 = vadd.f32 0.0, %v340
    %v342 = vpop.f32.mrb[0].mxu0
    %v343 = vpop.f32.mrb[0].mxu0
    %v344 = vadd.f32 0.0, %v343
    %v345 = vpop.f32.mrb[0].mxu0
    %346 = vdwg.mxu0
    %v347 = vpack.c.bf16 %v336, %v333
    %v348 = vpack.c.bf16 %v344, %v341
    %vm349 = vcmask 130048
    %v351 = vsel %vm349, %v117, 0
    %353 = vmatprep.subr.bf16.mxu0 0
    %354 = vmatpush1.bf16.msra.mxu0 %v347
    %355 = vmatprep.subr.bf16.mxu0 0
    %356 = vmatpush1.bf16.msra.mxu0 0
    %357 = vmatprep.subr.bf16.mxu0 0
    %358 = vmatpush1.bf16.msra.mxu0 0
    %359 = vmatprep.subr.bf16.mxu0 0
    %360 = vmatpush1.bf16.msra.mxu0 0
    %361 = vmatprep.subr.bf16.mxu0 0
    %362 = vmatpush1.bf16.msra.mxu0 0
    %363 = vmatprep.subr.bf16.mxu0 0
    %364 = vmatpush1.bf16.msra.mxu0 0
    %365 = vmatprep.subr.bf16.mxu0 0
    %366 = vmatpush1.bf16.msra.mxu0 0
    %367 = vmatprep.subr.bf16.mxu0 0
    %368 = vmatpush1.bf16.msra.mxu0 0
    %369 = vmatprep.subr.bf16.mxu0 0
    %370 = vmatpush1.bf16.msra.mxu0 0
    %371 = vmatprep.subr.bf16.mxu0 0
    %372 = vmatpush1.bf16.msra.mxu0 0
    %373 = vmatprep.subr.bf16.mxu0 0
    %374 = vmatpush1.bf16.msra.mxu0 0
    %375 = vmatprep.subr.bf16.mxu0 0
    %376 = vmatpush1.bf16.msra.mxu0 0
    %377 = vmatprep.subr.bf16.mxu0 0
    %378 = vmatpush1.bf16.msra.mxu0 0
    %379 = vmatprep.subr.bf16.mxu0 0
    %380 = vmatpush1.bf16.msra.mxu0 0
    %381 = vmatprep.subr.bf16.mxu0 0
    %382 = vmatpush1.bf16.msra.mxu0 0
    %383 = vmatprep.subr.bf16.mxu0 0
    %384 = vmatpush1.bf16.msra.mxu0 0
    %385 = vmatprep.mubr.bf16.mxu0 0
    %386 = vmatmul.mubr.bf16.gmra.mrb[0].mxu0 %v351
    %v387 = vpop.f32.mrb[0].mxu0
    %v388 = vadd.f32 0.0, %v387
    %v389 = vpop.f32.mrb[0].mxu0
    %v390 = vpop.f32.mrb[0].mxu0
    %v391 = vadd.f32 0.0, %v390
    %v392 = vpop.f32.mrb[0].mxu0
    %393 = vdwg.mxu0
    %v395 = vsel %vm349, %v118, 0
    %397 = vmatprep.subr.bf16.mxu0 0
    %398 = vmatpush1.bf16.msra.mxu0 %v348
    %399 = vmatprep.subr.bf16.mxu0 0
    %400 = vmatpush1.bf16.msra.mxu0 0
    %401 = vmatprep.subr.bf16.mxu0 0
    %402 = vmatpush1.bf16.msra.mxu0 0
    %403 = vmatprep.subr.bf16.mxu0 0
    %404 = vmatpush1.bf16.msra.mxu0 0
    %405 = vmatprep.subr.bf16.mxu0 0
    %406 = vmatpush1.bf16.msra.mxu0 0
    %407 = vmatprep.subr.bf16.mxu0 0
    %408 = vmatpush1.bf16.msra.mxu0 0
    %409 = vmatprep.subr.bf16.mxu0 0
    %410 = vmatpush1.bf16.msra.mxu0 0
    %411 = vmatprep.subr.bf16.mxu0 0
    %412 = vmatpush1.bf16.msra.mxu0 0
    %413 = vmatprep.subr.bf16.mxu0 0
    %414 = vmatpush1.bf16.msra.mxu0 0
    %415 = vmatprep.subr.bf16.mxu0 0
    %416 = vmatpush1.bf16.msra.mxu0 0
    %417 = vmatprep.subr.bf16.mxu0 0
    %418 = vmatpush1.bf16.msra.mxu0 0
    %419 = vmatprep.subr.bf16.mxu0 0
    %420 = vmatpush1.bf16.msra.mxu0 0
    %421 = vmatprep.subr.bf16.mxu0 0
    %422 = vmatpush1.bf16.msra.mxu0 0
    %423 = vmatprep.subr.bf16.mxu0 0
    %424 = vmatpush1.bf16.msra.mxu0 0
    %425 = vmatprep.subr.bf16.mxu0 0
    %426 = vmatpush1.bf16.msra.mxu0 0
    %427 = vmatprep.subr.bf16.mxu0 0
    %428 = vmatpush1.bf16.msra.mxu0 0
    %429 = vmatprep.mubr.bf16.mxu0 0
    %430 = vmatmul.mubr.bf16.gmra.mrb[0].mxu0 %v395
    %v431 = vpop.f32.mrb[0].mxu0
    %v432 = vadd.f32 0.0, %v431
    %v433 = vpop.f32.mrb[0].mxu0
    %v434 = vpop.f32.mrb[0].mxu0
    %v435 = vadd.f32 0.0, %v434
    %v436 = vpop.f32.mrb[0].mxu0
    %437 = vdwg.mxu0
    %v438 = vtanh.pop %v388
    %v439 = vtanh.pop %v391
    %v440 = vtanh.pop %v432
    %v441 = vtanh.pop %v435
    %v442 = vpack.c.bf16 %v439, %v438
    %v443 = vpack.c.bf16 %v441, %v440
    %s444 = scalar_lea.vmem [#allocation9], 32
    %v445 = vld [vmem:[%s444] sm:$0xff]
    %v446 = vld [vmem:[%s444 + $0x8] sm:$0xff]
    %v447 = vld [vmem:[%s444 + $0x10] sm:$0xff]
    %v448 = vld [vmem:[%s444 + $0x18] sm:$0xff]
    %v449 = vpack.c.bf16 %v446, %v445
    %v450 = vpack.c.bf16 %v448, %v447
    %v452 = vsel %vm138, %v442, 0
    %v455 = vsel %vm138, %v443, 0
    %457 = vmatprep.subr.bf16.mxu0 0
    %458 = vmatpush1.bf16.msra.mxu0 %v449
    %459 = vmatprep.subr.bf16.mxu0 0
    %460 = vmatpush1.bf16.msra.mxu0 %v450
    %461 = vmatprep.subr.bf16.mxu0 0
    %462 = vmatpush1.bf16.msra.mxu0 0
    %463 = vmatprep.subr.bf16.mxu0 0
    %464 = vmatpush1.bf16.msra.mxu0 0
    %465 = vmatprep.subr.bf16.mxu0 0
    %466 = vmatpush1.bf16.msra.mxu0 0
    %467 = vmatprep.subr.bf16.mxu0 0
    %468 = vmatpush1.bf16.msra.mxu0 0
    %469 = vmatprep.subr.bf16.mxu0 0
    %470 = vmatpush1.bf16.msra.mxu0 0
    %471 = vmatprep.subr.bf16.mxu0 0
    %472 = vmatpush1.bf16.msra.mxu0 0
    %473 = vmatprep.subr.bf16.mxu0 0
    %474 = vmatpush1.bf16.msra.mxu0 0
    %475 = vmatprep.subr.bf16.mxu0 0
    %476 = vmatpush1.bf16.msra.mxu0 0
    %477 = vmatprep.subr.bf16.mxu0 0
    %478 = vmatpush1.bf16.msra.mxu0 0
    %479 = vmatprep.subr.bf16.mxu0 0
    %480 = vmatpush1.bf16.msra.mxu0 0
    %481 = vmatprep.subr.bf16.mxu0 0
    %482 = vmatpush1.bf16.msra.mxu0 0
    %483 = vmatprep.subr.bf16.mxu0 0
    %484 = vmatpush1.bf16.msra.mxu0 0
    %485 = vmatprep.subr.bf16.mxu0 0
    %486 = vmatpush1.bf16.msra.mxu0 0
    %487 = vmatprep.subr.bf16.mxu0 0
    %488 = vmatpush1.bf16.msra.mxu0 0
    %489 = vmatprep.mubr.bf16.mxu0 0
    %490 = vmatmul.mubr.bf16.gmra.mrb[0].mxu0 %v452
    %v491 = vpop.f32.mrb[0].mxu0
    %v492 = vadd.f32 0.0, %v491
    %v493 = vpop.f32.mrb[0].mxu0
    %v494 = vpop.f32.mrb[0].mxu0
    %v495 = vadd.f32 0.0, %v494
    %v496 = vpop.f32.mrb[0].mxu0
    %497 = vmatprep.mubr.bf16.mxu0 0
    %498 = vmatmul.mubr.bf16.gmra.mrb[0].mxu0 %v455
    %v499 = vpop.f32.mrb[0].mxu0
    %v500 = vadd.f32 0.0, %v499
    %v501 = vpop.f32.mrb[0].mxu0
    %v502 = vpop.f32.mrb[0].mxu0
    %v503 = vadd.f32 0.0, %v502
    %v504 = vpop.f32.mrb[0].mxu0
    %505 = vdwg.mxu0
    %v506 = vpack.c.bf16 %v495, %v492
    %v507 = vpack.c.bf16 %v503, %v500
    %508 = vmatprep.subr.bf16.mxu0 0
    %509 = vmatpush1.bf16.msra.mxu0 %v506
    %510 = vmatprep.subr.bf16.mxu0 0
    %511 = vmatpush1.bf16.msra.mxu0 0
    %512 = vmatprep.subr.bf16.mxu0 0
    %513 = vmatpush1.bf16.msra.mxu0 0
    %514 = vmatprep.subr.bf16.mxu0 0
    %515 = vmatpush1.bf16.msra.mxu0 0
    %516 = vmatprep.subr.bf16.mxu0 0
    %517 = vmatpush1.bf16.msra.mxu0 0
    %518 = vmatprep.subr.bf16.mxu0 0
    %519 = vmatpush1.bf16.msra.mxu0 0
    %520 = vmatprep.subr.bf16.mxu0 0
    %521 = vmatpush1.bf16.msra.mxu0 0
    %522 = vmatprep.subr.bf16.mxu0 0
    %523 = vmatpush1.bf16.msra.mxu0 0
    %524 = vmatprep.subr.bf16.mxu0 0
    %525 = vmatpush1.bf16.msra.mxu0 0
    %526 = vmatprep.subr.bf16.mxu0 0
    %527 = vmatpush1.bf16.msra.mxu0 0
    %528 = vmatprep.subr.bf16.mxu0 0
    %529 = vmatpush1.bf16.msra.mxu0 0
    %530 = vmatprep.subr.bf16.mxu0 0
    %531 = vmatpush1.bf16.msra.mxu0 0
    %532 = vmatprep.subr.bf16.mxu0 0
    %533 = vmatpush1.bf16.msra.mxu0 0
    %534 = vmatprep.subr.bf16.mxu0 0
    %535 = vmatpush1.bf16.msra.mxu0 0
    %536 = vmatprep.subr.bf16.mxu0 0
    %537 = vmatpush1.bf16.msra.mxu0 0
    %538 = vmatprep.subr.bf16.mxu0 0
    %539 = vmatpush1.bf16.msra.mxu0 0
    %540 = vmatprep.mubr.bf16.mxu0 0
    %541 = vmatmul.mubr.bf16.gmra.mrb[0].mxu0 %v351
    %v542 = vpop.f32.mrb[0].mxu0
    %v543 = vadd.f32 0.0, %v542
    %v544 = vpop.f32.mrb[0].mxu0
    %v545 = vpop.f32.mrb[0].mxu0
    %v546 = vadd.f32 0.0, %v545
    %v547 = vpop.f32.mrb[0].mxu0
    %548 = vdwg.mxu0
    %549 = vmatprep.subr.bf16.mxu0 0
    %550 = vmatpush1.bf16.msra.mxu0 %v507
    %551 = vmatprep.subr.bf16.mxu0 0
    %552 = vmatpush1.bf16.msra.mxu0 0
    %553 = vmatprep.subr.bf16.mxu0 0
    %554 = vmatpush1.bf16.msra.mxu0 0
    %555 = vmatprep.subr.bf16.mxu0 0
    %556 = vmatpush1.bf16.msra.mxu0 0
    %557 = vmatprep.subr.bf16.mxu0 0
    %558 = vmatpush1.bf16.msra.mxu0 0
    %559 = vmatprep.subr.bf16.mxu0 0
    %560 = vmatpush1.bf16.msra.mxu0 0
    %561 = vmatprep.subr.bf16.mxu0 0
    %562 = vmatpush1.bf16.msra.mxu0 0
    %563 = vmatprep.subr.bf16.mxu0 0
    %564 = vmatpush1.bf16.msra.mxu0 0
    %565 = vmatprep.subr.bf16.mxu0 0
    %566 = vmatpush1.bf16.msra.mxu0 0
    %567 = vmatprep.subr.bf16.mxu0 0
    %568 = vmatpush1.bf16.msra.mxu0 0
    %569 = vmatprep.subr.bf16.mxu0 0
    %570 = vmatpush1.bf16.msra.mxu0 0
    %571 = vmatprep.subr.bf16.mxu0 0
    %572 = vmatpush1.bf16.msra.mxu0 0
    %573 = vmatprep.subr.bf16.mxu0 0
    %574 = vmatpush1.bf16.msra.mxu0 0
    %575 = vmatprep.subr.bf16.mxu0 0
    %576 = vmatpush1.bf16.msra.mxu0 0
    %577 = vmatprep.subr.bf16.mxu0 0
    %578 = vmatpush1.bf16.msra.mxu0 0
    %579 = vmatprep.subr.bf16.mxu0 0
    %580 = vmatpush1.bf16.msra.mxu0 0
    %581 = vmatprep.mubr.bf16.mxu0 0
    %582 = vmatmul.mubr.bf16.gmra.mrb[0].mxu0 %v395
    %v583 = vpop.f32.mrb[0].mxu0
    %v584 = vadd.f32 0.0, %v583
    %v585 = vpop.f32.mrb[0].mxu0
    %v586 = vpop.f32.mrb[0].mxu0
    %v587 = vadd.f32 0.0, %v586
    %v588 = vpop.f32.mrb[0].mxu0
    %589 = vdwg.mxu0
    %v590 = vtanh.pop %v543
    %v591 = vtanh.pop %v546
    %v592 = vtanh.pop %v584
    %v593 = vtanh.pop %v587
    %v594 = vpack.c.bf16 %v591, %v590
    %v595 = vpack.c.bf16 %v593, %v592
    %v596 = vld [vmem:[#allocation10] sm:$0xff]
    %v597 = vld [vmem:[#allocation10 + $0x8] sm:$0xff]
    %v598 = vld [vmem:[#allocation10 + $0x10] sm:$0xff]
    %v599 = vld [vmem:[#allocation10 + $0x18] sm:$0xff]
    %v600 = vpack.c.bf16 %v597, %v596
    %v601 = vpack.c.bf16 %v599, %v598
    %v603 = vsel %vm138, %v594, 0
    %v606 = vsel %vm138, %v595, 0
    %608 = vmatprep.subr.bf16.mxu0 0
    %609 = vmatpush1.bf16.msra.mxu0 %v600
    %610 = vmatprep.subr.bf16.mxu0 0
    %611 = vmatpush1.bf16.msra.mxu0 %v601
    %612 = vmatprep.subr.bf16.mxu0 0
    %613 = vmatpush1.bf16.msra.mxu0 0
    %614 = vmatprep.subr.bf16.mxu0 0
    %615 = vmatpush1.bf16.msra.mxu0 0
    %616 = vmatprep.subr.bf16.mxu0 0
    %617 = vmatpush1.bf16.msra.mxu0 0
    %618 = vmatprep.subr.bf16.mxu0 0
    %619 = vmatpush1.bf16.msra.mxu0 0
    %620 = vmatprep.subr.bf16.mxu0 0
    %621 = vmatpush1.bf16.msra.mxu0 0
    %622 = vmatprep.subr.bf16.mxu0 0
    %623 = vmatpush1.bf16.msra.mxu0 0
    %624 = vmatprep.subr.bf16.mxu0 0
    %625 = vmatpush1.bf16.msra.mxu0 0
    %626 = vmatprep.subr.bf16.mxu0 0
    %627 = vmatpush1.bf16.msra.mxu0 0
    %628 = vmatprep.subr.bf16.mxu0 0
    %629 = vmatpush1.bf16.msra.mxu0 0
    %630 = vmatprep.subr.bf16.mxu0 0
    %631 = vmatpush1.bf16.msra.mxu0 0
    %632 = vmatprep.subr.bf16.mxu0 0
    %633 = vmatpush1.bf16.msra.mxu0 0
    %634 = vmatprep.subr.bf16.mxu0 0
    %635 = vmatpush1.bf16.msra.mxu0 0
    %636 = vmatprep.subr.bf16.mxu0 0
    %637 = vmatpush1.bf16.msra.mxu0 0
    %638 = vmatprep.subr.bf16.mxu0 0
    %639 = vmatpush1.bf16.msra.mxu0 0
    %640 = vmatprep.mubr.bf16.mxu0 0
    %641 = vmatmul.mubr.bf16.gmra.mrb[0].mxu0 %v603
    %v642 = vpop.f32.mrb[0].mxu0
    %v643 = vadd.f32 0.0, %v642
    %v644 = vpop.f32.mrb[0].mxu0
    %v645 = vpop.f32.mrb[0].mxu0
    %v646 = vadd.f32 0.0, %v645
    %v647 = vpop.f32.mrb[0].mxu0
    %648 = vmatprep.mubr.bf16.mxu0 0
    %649 = vmatmul.mubr.bf16.gmra.mrb[0].mxu0 %v606
    %v650 = vpop.f32.mrb[0].mxu0
    %v651 = vadd.f32 0.0, %v650
    %v652 = vpop.f32.mrb[0].mxu0
    %v653 = vpop.f32.mrb[0].mxu0
    %v654 = vadd.f32 0.0, %v653
    %v655 = vpop.f32.mrb[0].mxu0
    %656 = vdwg.mxu0
    %v657 = vpack.c.bf16 %v646, %v643
    %v658 = vpack.c.bf16 %v654, %v651
    %659 = vmatprep.subr.bf16.mxu0 0
    %660 = vmatpush1.bf16.msra.mxu0 %v657
    %661 = vmatprep.subr.bf16.mxu0 0
    %662 = vmatpush1.bf16.msra.mxu0 0
    %663 = vmatprep.subr.bf16.mxu0 0
    %664 = vmatpush1.bf16.msra.mxu0 0
    %665 = vmatprep.subr.bf16.mxu0 0
    %666 = vmatpush1.bf16.msra.mxu0 0
    %667 = vmatprep.subr.bf16.mxu0 0
    %668 = vmatpush1.bf16.msra.mxu0 0
    %669 = vmatprep.subr.bf16.mxu0 0
    %670 = vmatpush1.bf16.msra.mxu0 0
    %671 = vmatprep.subr.bf16.mxu0 0
    %672 = vmatpush1.bf16.msra.mxu0 0
    %673 = vmatprep.subr.bf16.mxu0 0
    %674 = vmatpush1.bf16.msra.mxu0 0
    %675 = vmatprep.subr.bf16.mxu0 0
    %676 = vmatpush1.bf16.msra.mxu0 0
    %677 = vmatprep.subr.bf16.mxu0 0
    %678 = vmatpush1.bf16.msra.mxu0 0
    %679 = vmatprep.subr.bf16.mxu0 0
    %680 = vmatpush1.bf16.msra.mxu0 0
    %681 = vmatprep.subr.bf16.mxu0 0
    %682 = vmatpush1.bf16.msra.mxu0 0
    %683 = vmatprep.subr.bf16.mxu0 0
    %684 = vmatpush1.bf16.msra.mxu0 0
    %685 = vmatprep.subr.bf16.mxu0 0
    %686 = vmatpush1.bf16.msra.mxu0 0
    %687 = vmatprep.subr.bf16.mxu0 0
    %688 = vmatpush1.bf16.msra.mxu0 0
    %689 = vmatprep.subr.bf16.mxu0 0
    %690 = vmatpush1.bf16.msra.mxu0 0
    %691 = vmatprep.mubr.bf16.mxu0 0
    %692 = vmatmul.mubr.bf16.gmra.mrb[0].mxu0 %v351
    %v693 = vpop.f32.mrb[0].mxu0
    %v694 = vadd.f32 0.0, %v693
    %v695 = vpop.f32.mrb[0].mxu0
    %v696 = vpop.f32.mrb[0].mxu0
    %v697 = vadd.f32 0.0, %v696
    %v698 = vpop.f32.mrb[0].mxu0
    %699 = vdwg.mxu0
    %700 = vmatprep.subr.bf16.mxu0 0
    %701 = vmatpush1.bf16.msra.mxu0 %v658
    %702 = vmatprep.subr.bf16.mxu0 0
    %703 = vmatpush1.bf16.msra.mxu0 0
    %704 = vmatprep.subr.bf16.mxu0 0
    %705 = vmatpush1.bf16.msra.mxu0 0
    %706 = vmatprep.subr.bf16.mxu0 0
    %707 = vmatpush1.bf16.msra.mxu0 0
    %708 = vmatprep.subr.bf16.mxu0 0
    %709 = vmatpush1.bf16.msra.mxu0 0
    %710 = vmatprep.subr.bf16.mxu0 0
    %711 = vmatpush1.bf16.msra.mxu0 0
    %712 = vmatprep.subr.bf16.mxu0 0
    %713 = vmatpush1.bf16.msra.mxu0 0
    %714 = vmatprep.subr.bf16.mxu0 0
    %715 = vmatpush1.bf16.msra.mxu0 0
    %716 = vmatprep.subr.bf16.mxu0 0
    %717 = vmatpush1.bf16.msra.mxu0 0
    %718 = vmatprep.subr.bf16.mxu0 0
    %719 = vmatpush1.bf16.msra.mxu0 0
    %720 = vmatprep.subr.bf16.mxu0 0
    %721 = vmatpush1.bf16.msra.mxu0 0
    %722 = vmatprep.subr.bf16.mxu0 0
    %723 = vmatpush1.bf16.msra.mxu0 0
    %724 = vmatprep.subr.bf16.mxu0 0
    %725 = vmatpush1.bf16.msra.mxu0 0
    %726 = vmatprep.subr.bf16.mxu0 0
    %727 = vmatpush1.bf16.msra.mxu0 0
    %728 = vmatprep.subr.bf16.mxu0 0
    %729 = vmatpush1.bf16.msra.mxu0 0
    %730 = vmatprep.subr.bf16.mxu0 0
    %731 = vmatpush1.bf16.msra.mxu0 0
    %732 = vmatprep.mubr.bf16.mxu0 0
    %733 = vmatmul.mubr.bf16.gmra.mrb[0].mxu0 %v395
    %v734 = vpop.f32.mrb[0].mxu0
    %v735 = vadd.f32 0.0, %v734
    %v736 = vpop.f32.mrb[0].mxu0
    %v737 = vpop.f32.mrb[0].mxu0
    %v738 = vadd.f32 0.0, %v737
    %v739 = vpop.f32.mrb[0].mxu0
    %740 = vdwg.mxu0
    %v741 = vtanh.pop %v694
    %v742 = vtanh.pop %v697
    %v743 = vtanh.pop %v735
    %v744 = vtanh.pop %v738
    %v745 = vld [vmem:[%s2] sm:$0xff]
    %v746 = vld [vmem:[%s2 + $0x8] sm:$0xff]
    %v747 = vld [vmem:[%s2 + $0x10] sm:$0xff]
    %v748 = vld [vmem:[%s2 + $0x18] sm:$0xff]
    %v749 = vadd.f32 %v741, %v745
    %v750 = vadd.f32 %v742, %v746
    %v751 = vadd.f32 %v743, %v747
    %v752 = vadd.f32 %v744, %v748
    %vm753 = vcmask 31744
    %v754 = vsel %vm753, %v749, -inf
    %755 = vmax.xlane.f32.xlu0 %v754
    %v756 = vpop.xlane.xlu0 %755
    %v757 = vsel %vm753, %v750, -inf
    %758 = vmax.xlane.f32.xlu0 %v757
    %v759 = vpop.xlane.xlu0 %758
    %v760 = vsel %vm753, %v751, -inf
    %761 = vmax.xlane.f32.xlu0 %v760
    %v762 = vpop.xlane.xlu0 %761
    %v763 = vsel %vm753, %v752, -inf
    %764 = vmax.xlane.f32.xlu0 %v763
    %v765 = vpop.xlane.xlu0 %764
    %v766 = vlaneseq
    %v767 = vand.u32 %v766, 127
    %vm768 = vcmp.ge.f32.partialorder %v749, %v756
    %vm769 = vcmp.ge.f32.partialorder %v750, %v759
    %vm770 = vcmp.ge.f32.partialorder %v751, %v762
    %vm771 = vcmp.ge.f32.partialorder %v752, %v765
    %v772 = vsel %vm768, %v767, 4
    %v773 = vsel %vm769, %v767, 4
    %v774 = vsel %vm770, %v767, 4
    %v775 = vsel %vm771, %v767, 4
    %v776 = vsel %vm753, %v772, 2147483647
    %v777 = vand.u32 %v776, 65535
    %v778 = vshra.s32 %v776, 16
    %v779 = vcvt.s32.f32 %v777
    %v780 = vcvt.s32.f32 %v778
    %781 = vmin.xlane.f32.xlu0 %v780
    %v782 = vpop.xlane.xlu0 %781
    %vm783 = vcmp.eq.f32.partialorder %v780, %v782
    %v784 = vsel %vm783, %v779, inf
    %785 = vmin.xlane.f32.xlu0 %v784
    %v786 = vpop.xlane.xlu0 %785
    %v787 = vcvt.f32.s32 %v786
    %v788 = vcvt.f32.s32 %v782
    %v789 = vshll.u32 %v788, 16
    %v790 = vadd.s32 %v789, %v787
    %v791 = vsel %vm753, %v773, 2147483647
    %v792 = vand.u32 %v791, 65535
    %v793 = vshra.s32 %v791, 16
    %v794 = vcvt.s32.f32 %v792
    %v795 = vcvt.s32.f32 %v793
    %796 = vmin.xlane.f32.xlu0 %v795
    %v797 = vpop.xlane.xlu0 %796
    %vm798 = vcmp.eq.f32.partialorder %v795, %v797
    %v799 = vsel %vm798, %v794, inf
    %800 = vmin.xlane.f32.xlu0 %v799
    %v801 = vpop.xlane.xlu0 %800
    %v802 = vcvt.f32.s32 %v801
    %v803 = vcvt.f32.s32 %v797
    %v804 = vshll.u32 %v803, 16
    %v805 = vadd.s32 %v804, %v802
    %v806 = vsel %vm753, %v774, 2147483647
    %v807 = vand.u32 %v806, 65535
    %v808 = vshra.s32 %v806, 16
    %v809 = vcvt.s32.f32 %v807
    %v810 = vcvt.s32.f32 %v808
    %811 = vmin.xlane.f32.xlu0 %v810
    %v812 = vpop.xlane.xlu0 %811
    %vm813 = vcmp.eq.f32.partialorder %v810, %v812
    %v814 = vsel %vm813, %v809, inf
    %815 = vmin.xlane.f32.xlu0 %v814
    %v816 = vpop.xlane.xlu0 %815
    %v817 = vcvt.f32.s32 %v816
    %v818 = vcvt.f32.s32 %v812
    %v819 = vshll.u32 %v818, 16
    %v820 = vadd.s32 %v819, %v817
    %v821 = vsel %vm753, %v775, 2147483647
    %v822 = vand.u32 %v821, 65535
    %v823 = vshra.s32 %v821, 16
    %v824 = vcvt.s32.f32 %v822
    %v825 = vcvt.s32.f32 %v823
    %826 = vmin.xlane.f32.xlu0 %v825
    %v827 = vpop.xlane.xlu0 %826
    %vm828 = vcmp.eq.f32.partialorder %v825, %v827
    %v829 = vsel %vm828, %v824, inf
    %830 = vmin.xlane.f32.xlu0 %v829
    %v831 = vpop.xlane.xlu0 %830
    %v832 = vcvt.f32.s32 %v831
    %v833 = vcvt.f32.s32 %v827
    %v834 = vshll.u32 %v833, 16
    %v835 = vadd.s32 %v834, %v832
    %vm836 = vcmp.eq.s32.totalorder %v767, %v790
    %vm837 = vcmp.eq.s32.totalorder %v767, %v805
    %vm838 = vcmp.eq.s32.totalorder %v767, %v820
    %vm839 = vcmp.eq.s32.totalorder %v767, %v835
    %v840 = vsel %vm836, 1, 0
    %v841 = vsel %vm837, 1, 0
    %v842 = vsel %vm838, 1, 0
    %v843 = vsel %vm839, 1, 0
    %v844 = vcvt.s32.f32 %v840
    %v845 = vcvt.s32.f32 %v841
    %v846 = vcvt.s32.f32 %v842
    %v847 = vcvt.s32.f32 %v843
    %848 = vxpose.xlu0.b32.start [1/16] %v844, 128
    %849 = vxpose.xlu0.b32.cont [2/16] %v845, 128
    %850 = vxpose.xlu0.b32.cont [3/16] 0.0, 128
    %851 = vxpose.xlu0.b32.cont [4/16] 0.0, 128
    %852 = vxpose.xlu0.b32.cont [5/16] 0.0, 128
    %853 = vxpose.xlu0.b32.cont [6/16] 0.0, 128
    %854 = vxpose.xlu0.b32.cont [7/16] 0.0, 128
    %855 = vxpose.xlu0.b32.cont [8/16] 0.0, 128
    %856 = vxpose.xlu0.b32.cont [9/16] 0.0, 128
    %857 = vxpose.xlu0.b32.cont [10/16] 0.0, 128
    %858 = vxpose.xlu0.b32.cont [11/16] 0.0, 128
    %859 = vxpose.xlu0.b32.cont [12/16] 0.0, 128
    %860 = vxpose.xlu0.b32.cont [13/16] 0.0, 128
    %861 = vxpose.xlu0.b32.cont [14/16] 0.0, 128
    %862 = vxpose.xlu0.b32.cont [15/16] 0.0, 128
    %863 = vxpose.xlu0.b32.end [16/16] 0.0, 128
    %v864 = vpop.trf.xlu0
    %v865 = vpop.trf.xlu0
    %v866 = vpop.trf.xlu0
    %v867 = vpop.trf.xlu0
    %v868 = vpop.trf.xlu0
    %v869 = vpop.trf.xlu0
    %v870 = vpop.trf.xlu0
    %v871 = vpop.trf.xlu0
    %v872 = vpop.trf.xlu0
    %v873 = vpop.trf.xlu0
    %v874 = vpop.trf.xlu0
    %v875 = vpop.trf.xlu0
    %v876 = vpop.trf.xlu0
    %v877 = vpop.trf.xlu0
    %v878 = vpop.trf.xlu0
    %v879 = vpop.trf.xlu0
    %v881 = vsel %vm349, %v864, 0
    %883 = vmatprep.subr.mxu0 0.0
    %884 = vmatpush1.msra.mxu0 %v119
    %885 = vmatprep.subr.mxu0 0.0
    %886 = vmatpush1.msra.mxu0 %v120
    %887 = vmatprep.subr.mxu0 0.0
    %888 = vmatpush1.msra.mxu0 0.0
    %889 = vmatprep.subr.mxu0 0.0
    %890 = vmatpush1.msra.mxu0 0.0
    %891 = vmatprep.subr.mxu0 0.0
    %892 = vmatpush1.msra.mxu0 0.0
    %893 = vmatprep.subr.mxu0 0.0
    %894 = vmatpush1.msra.mxu0 0.0
    %895 = vmatprep.subr.mxu0 0.0
    %896 = vmatpush1.msra.mxu0 0.0
    %897 = vmatprep.subr.mxu0 0.0
    %898 = vmatpush1.msra.mxu0 0.0
    %899 = vmatprep.subr.mxu0 0.0
    %900 = vmatpush1.msra.mxu0 0.0
    %901 = vmatprep.subr.mxu0 0.0
    %902 = vmatpush1.msra.mxu0 0.0
    %903 = vmatprep.subr.mxu0 0.0
    %904 = vmatpush1.msra.mxu0 0.0
    %905 = vmatprep.subr.mxu0 0.0
    %906 = vmatpush1.msra.mxu0 0.0
    %907 = vmatprep.subr.mxu0 0.0
    %908 = vmatpush1.msra.mxu0 0.0
    %909 = vmatprep.subr.mxu0 0.0
    %910 = vmatpush1.msra.mxu0 0.0
    %911 = vmatprep.subr.mxu0 0.0
    %912 = vmatpush1.msra.mxu0 0.0
    %913 = vmatprep.subr.mxu0 0.0
    %914 = vmatpush1.msra.mxu0 0.0
    %915 = vmatprep.subr.mxu0 0.0
    %916 = vmatpush1.msra.mxu0 0.0
    %917 = vmatprep.subr.mxu0 0.0
    %918 = vmatpush1.msra.mxu0 0.0
    %919 = vmatprep.subr.mxu0 0.0
    %920 = vmatpush1.msra.mxu0 0.0
    %921 = vmatprep.subr.mxu0 0.0
    %922 = vmatpush1.msra.mxu0 0.0
    %923 = vmatprep.subr.mxu0 0.0
    %924 = vmatpush1.msra.mxu0 0.0
    %925 = vmatprep.subr.mxu0 0.0
    %926 = vmatpush1.msra.mxu0 0.0
    %927 = vmatprep.subr.mxu0 0.0
    %928 = vmatpush1.msra.mxu0 0.0
    %929 = vmatprep.subr.mxu0 0.0
    %930 = vmatpush1.msra.mxu0 0.0
    %931 = vmatprep.subr.mxu0 0.0
    %932 = vmatpush1.msra.mxu0 0.0
    %933 = vmatprep.subr.mxu0 0.0
    %934 = vmatpush1.msra.mxu0 0.0
    %935 = vmatprep.subr.mxu0 0.0
    %936 = vmatpush1.msra.mxu0 0.0
    %937 = vmatprep.subr.mxu0 0.0
    %938 = vmatpush1.msra.mxu0 0.0
    %939 = vmatprep.subr.mxu0 0.0
    %940 = vmatpush1.msra.mxu0 0.0
    %941 = vmatprep.subr.mxu0 0.0
    %942 = vmatpush1.msra.mxu0 0.0
    %943 = vmatprep.subr.mxu0 0.0
    %944 = vmatpush1.msra.mxu0 0.0
    %945 = vmatprep.subr.mxu0 0.0
    %946 = vmatpush1.msra.mxu0 0.0
    %947 = vmatprep.mubr.f32.mxu0 0.0
    %948 = vmatmul.mubr.f32.gmra.mrb[0].mxu0 %v881
    %v949 = vpop.f32.mrb[0].mxu0
    %v950 = vadd.f32 0.0, %v949
    %v951 = vpop.f32.mrb[0].mxu0
    %952 = vdwg.mxu0
    %953 = vxpose.xlu0.b32.start [1/16] %v846, 128
    %954 = vxpose.xlu0.b32.cont [2/16] %v847, 128
    %955 = vxpose.xlu0.b32.cont [3/16] 0.0, 128
    %956 = vxpose.xlu0.b32.cont [4/16] 0.0, 128
    %957 = vxpose.xlu0.b32.cont [5/16] 0.0, 128
    %958 = vxpose.xlu0.b32.cont [6/16] 0.0, 128
    %959 = vxpose.xlu0.b32.cont [7/16] 0.0, 128
    %960 = vxpose.xlu0.b32.cont [8/16] 0.0, 128
    %961 = vxpose.xlu0.b32.cont [9/16] 0.0, 128
    %962 = vxpose.xlu0.b32.cont [10/16] 0.0, 128
    %963 = vxpose.xlu0.b32.cont [11/16] 0.0, 128
    %964 = vxpose.xlu0.b32.cont [12/16] 0.0, 128
    %965 = vxpose.xlu0.b32.cont [13/16] 0.0, 128
    %966 = vxpose.xlu0.b32.cont [14/16] 0.0, 128
    %967 = vxpose.xlu0.b32.cont [15/16] 0.0, 128
    %968 = vxpose.xlu0.b32.end [16/16] 0.0, 128
    %v969 = vpop.trf.xlu0
    %v970 = vpop.trf.xlu0
    %v971 = vpop.trf.xlu0
    %v972 = vpop.trf.xlu0
    %v973 = vpop.trf.xlu0
    %v974 = vpop.trf.xlu0
    %v975 = vpop.trf.xlu0
    %v976 = vpop.trf.xlu0
    %v977 = vpop.trf.xlu0
    %v978 = vpop.trf.xlu0
    %v979 = vpop.trf.xlu0
    %v980 = vpop.trf.xlu0
    %v981 = vpop.trf.xlu0
    %v982 = vpop.trf.xlu0
    %v983 = vpop.trf.xlu0
    %v984 = vpop.trf.xlu0
    %v986 = vsel %vm349, %v969, 0
    %988 = vmatprep.subr.mxu0 0.0
    %989 = vmatpush1.msra.mxu0 %v121
    %990 = vmatprep.subr.mxu0 0.0
    %991 = vmatpush1.msra.mxu0 %v122
    %992 = vmatprep.subr.mxu0 0.0
    %993 = vmatpush1.msra.mxu0 0.0
    %994 = vmatprep.subr.mxu0 0.0
    %995 = vmatpush1.msra.mxu0 0.0
    %996 = vmatprep.subr.mxu0 0.0
    %997 = vmatpush1.msra.mxu0 0.0
    %998 = vmatprep.subr.mxu0 0.0
    %999 = vmatpush1.msra.mxu0 0.0
    %1000 = vmatprep.subr.mxu0 0.0
    %1001 = vmatpush1.msra.mxu0 0.0
    %1002 = vmatprep.subr.mxu0 0.0
    %1003 = vmatpush1.msra.mxu0 0.0
    %1004 = vmatprep.subr.mxu0 0.0
    %1005 = vmatpush1.msra.mxu0 0.0
    %1006 = vmatprep.subr.mxu0 0.0
    %1007 = vmatpush1.msra.mxu0 0.0
    %1008 = vmatprep.subr.mxu0 0.0
    %1009 = vmatpush1.msra.mxu0 0.0
    %1010 = vmatprep.subr.mxu0 0.0
    %1011 = vmatpush1.msra.mxu0 0.0
    %1012 = vmatprep.subr.mxu0 0.0
    %1013 = vmatpush1.msra.mxu0 0.0
    %1014 = vmatprep.subr.mxu0 0.0
    %1015 = vmatpush1.msra.mxu0 0.0
    %1016 = vmatprep.subr.mxu0 0.0
    %1017 = vmatpush1.msra.mxu0 0.0
    %1018 = vmatprep.subr.mxu0 0.0
    %1019 = vmatpush1.msra.mxu0 0.0
    %1020 = vmatprep.subr.mxu0 0.0
    %1021 = vmatpush1.msra.mxu0 0.0
    %1022 = vmatprep.subr.mxu0 0.0
    %1023 = vmatpush1.msra.mxu0 0.0
    %1024 = vmatprep.subr.mxu0 0.0
    %1025 = vmatpush1.msra.mxu0 0.0
    %1026 = vmatprep.subr.mxu0 0.0
    %1027 = vmatpush1.msra.mxu0 0.0
    %1028 = vmatprep.subr.mxu0 0.0
    %1029 = vmatpush1.msra.mxu0 0.0
    %1030 = vmatprep.subr.mxu0 0.0
    %1031 = vmatpush1.msra.mxu0 0.0
    %1032 = vmatprep.subr.mxu0 0.0
    %1033 = vmatpush1.msra.mxu0 0.0
    %1034 = vmatprep.subr.mxu0 0.0
    %1035 = vmatpush1.msra.mxu0 0.0
    %1036 = vmatprep.subr.mxu0 0.0
    %1037 = vmatpush1.msra.mxu0 0.0
    %1038 = vmatprep.subr.mxu0 0.0
    %1039 = vmatpush1.msra.mxu0 0.0
    %1040 = vmatprep.subr.mxu0 0.0
    %1041 = vmatpush1.msra.mxu0 0.0
    %1042 = vmatprep.subr.mxu0 0.0
    %1043 = vmatpush1.msra.mxu0 0.0
    %1044 = vmatprep.subr.mxu0 0.0
    %1045 = vmatpush1.msra.mxu0 0.0
    %1046 = vmatprep.subr.mxu0 0.0
    %1047 = vmatpush1.msra.mxu0 0.0
    %1048 = vmatprep.subr.mxu0 0.0
    %1049 = vmatpush1.msra.mxu0 0.0
    %1050 = vmatprep.subr.mxu0 0.0
    %1051 = vmatpush1.msra.mxu0 0.0
    %1052 = vmatprep.mubr.f32.mxu0 0.0
    %1053 = vmatmul.mubr.f32.gmra.mrb[0].mxu0 %v986
    %v1054 = vpop.f32.mrb[0].mxu0
    %v1055 = vadd.f32 0.0, %v1054
    %v1056 = vpop.f32.mrb[0].mxu0
    %1057 = vdwg.mxu0
    %v1058 = vpack.c.bf16 %v845, %v844
    %v1059 = vpack.c.bf16 %v847, %v846
    %1060 = vxpose.xlu0.c.b16.start [1/8] %v1058, 128
    %1061 = vxpose.xlu0.c.b16.cont [2/8] 0, 128
    %1062 = vxpose.xlu0.c.b16.cont [3/8] 0, 128
    %1063 = vxpose.xlu0.c.b16.cont [4/8] 0, 128
    %1064 = vxpose.xlu0.c.b16.cont [5/8] 0, 128
    %1065 = vxpose.xlu0.c.b16.cont [6/8] 0, 128
    %1066 = vxpose.xlu0.c.b16.cont [7/8] 0, 128
    %1067 = vxpose.xlu0.c.b16.end [8/8] 0, 128
    %v1068 = vpop.trf.xlu0
    %v1069 = vpop.trf.xlu0
    %v1070 = vpop.trf.xlu0
    %v1071 = vpop.trf.xlu0
    %v1072 = vpop.trf.xlu0
    %v1073 = vpop.trf.xlu0
    %v1074 = vpop.trf.xlu0
    %v1075 = vpop.trf.xlu0
    %v1077 = vsel %vm349, %v1068, 0
    %1079 = vmatprep.subr.bf16.mxu0 0
    %1080 = vmatpush1.bf16.msra.mxu0 %v117
    %1081 = vmatprep.subr.bf16.mxu0 0
    %1082 = vmatpush1.bf16.msra.mxu0 0
    %1083 = vmatprep.subr.bf16.mxu0 0
    %1084 = vmatpush1.bf16.msra.mxu0 0
    %1085 = vmatprep.subr.bf16.mxu0 0
    %1086 = vmatpush1.bf16.msra.mxu0 0
    %1087 = vmatprep.subr.bf16.mxu0 0
    %1088 = vmatpush1.bf16.msra.mxu0 0
    %1089 = vmatprep.subr.bf16.mxu0 0
    %1090 = vmatpush1.bf16.msra.mxu0 0
    %1091 = vmatprep.subr.bf16.mxu0 0
    %1092 = vmatpush1.bf16.msra.mxu0 0
    %1093 = vmatprep.subr.bf16.mxu0 0
    %1094 = vmatpush1.bf16.msra.mxu0 0
    %1095 = vmatprep.subr.bf16.mxu0 0
    %1096 = vmatpush1.bf16.msra.mxu0 0
    %1097 = vmatprep.subr.bf16.mxu0 0
    %1098 = vmatpush1.bf16.msra.mxu0 0
    %1099 = vmatprep.subr.bf16.mxu0 0
    %1100 = vmatpush1.bf16.msra.mxu0 0
    %1101 = vmatprep.subr.bf16.mxu0 0
    %1102 = vmatpush1.bf16.msra.mxu0 0
    %1103 = vmatprep.subr.bf16.mxu0 0
    %1104 = vmatpush1.bf16.msra.mxu0 0
    %1105 = vmatprep.subr.bf16.mxu0 0
    %1106 = vmatpush1.bf16.msra.mxu0 0
    %1107 = vmatprep.subr.bf16.mxu0 0
    %1108 = vmatpush1.bf16.msra.mxu0 0
    %1109 = vmatprep.subr.bf16.mxu0 0
    %1110 = vmatpush1.bf16.msra.mxu0 0
    %1111 = vmatprep.mubr.bf16.mxu0 0
    %1112 = vmatmul.mubr.bf16.gmra.mrb[0].mxu0 %v1077
    %v1113 = vpop.f32.mrb[0].mxu0
    %v1114 = vadd.f32 0.0, %v1113
    %v1115 = vpop.f32.mrb[0].mxu0
    %v1116 = vpop.f32.mrb[0].mxu0
    %v1117 = vpop.f32.mrb[0].mxu0
    %1118 = vdwg.mxu0
    %1119 = vxpose.xlu0.c.b16.start [1/8] %v1059, 128
    %1120 = vxpose.xlu0.c.b16.cont [2/8] 0, 128
    %1121 = vxpose.xlu0.c.b16.cont [3/8] 0, 128
    %1122 = vxpose.xlu0.c.b16.cont [4/8] 0, 128
    %1123 = vxpose.xlu0.c.b16.cont [5/8] 0, 128
    %1124 = vxpose.xlu0.c.b16.cont [6/8] 0, 128
    %1125 = vxpose.xlu0.c.b16.cont [7/8] 0, 128
    %1126 = vxpose.xlu0.c.b16.end [8/8] 0, 128
    %v1127 = vpop.trf.xlu0
    %v1128 = vpop.trf.xlu0
    %v1129 = vpop.trf.xlu0
    %v1130 = vpop.trf.xlu0
    %v1131 = vpop.trf.xlu0
    %v1132 = vpop.trf.xlu0
    %v1133 = vpop.trf.xlu0
    %v1134 = vpop.trf.xlu0
    %v1136 = vsel %vm349, %v1127, 0
    %1138 = vmatprep.subr.bf16.mxu0 0
    %1139 = vmatpush1.bf16.msra.mxu0 %v118
    %1140 = vmatprep.subr.bf16.mxu0 0
    %1141 = vmatpush1.bf16.msra.mxu0 0
    %1142 = vmatprep.subr.bf16.mxu0 0
    %1143 = vmatpush1.bf16.msra.mxu0 0
    %1144 = vmatprep.subr.bf16.mxu0 0
    %1145 = vmatpush1.bf16.msra.mxu0 0
    %1146 = vmatprep.subr.bf16.mxu0 0
    %1147 = vmatpush1.bf16.msra.mxu0 0
    %1148 = vmatprep.subr.bf16.mxu0 0
    %1149 = vmatpush1.bf16.msra.mxu0 0
    %1150 = vmatprep.subr.bf16.mxu0 0
    %1151 = vmatpush1.bf16.msra.mxu0 0
    %1152 = vmatprep.subr.bf16.mxu0 0
    %1153 = vmatpush1.bf16.msra.mxu0 0
    %1154 = vmatprep.subr.bf16.mxu0 0
    %1155 = vmatpush1.bf16.msra.mxu0 0
    %1156 = vmatprep.subr.bf16.mxu0 0
    %1157 = vmatpush1.bf16.msra.mxu0 0
    %1158 = vmatprep.subr.bf16.mxu0 0
    %1159 = vmatpush1.bf16.msra.mxu0 0
    %1160 = vmatprep.subr.bf16.mxu0 0
    %1161 = vmatpush1.bf16.msra.mxu0 0
    %1162 = vmatprep.subr.bf16.mxu0 0
    %1163 = vmatpush1.bf16.msra.mxu0 0
    %1164 = vmatprep.subr.bf16.mxu0 0
    %1165 = vmatpush1.bf16.msra.mxu0 0
    %1166 = vmatprep.subr.bf16.mxu0 0
    %1167 = vmatpush1.bf16.msra.mxu0 0
    %1168 = vmatprep.subr.bf16.mxu0 0
    %1169 = vmatpush1.bf16.msra.mxu0 0
    %1170 = vmatprep.mubr.bf16.mxu0 0
    %1171 = vmatmul.mubr.bf16.gmra.mrb[0].mxu0 %v1136
    %v1172 = vpop.f32.mrb[0].mxu0
    %v1173 = vadd.f32 0.0, %v1172
    %v1174 = vpop.f32.mrb[0].mxu0
    %v1175 = vpop.f32.mrb[0].mxu0
    %v1176 = vpop.f32.mrb[0].mxu0
    %1177 = vdwg.mxu0
    %v1178 = vpack.c.bf16 %v1114, %v1114
    %v1179 = vpack.c.bf16 %v1173, %v1173
    %v1181 = vsel %vm349, %v1178, 0
    %1183 = vmatprep.subr.bf16.mxu0 0
    %1184 = vmatpush1.bf16.msra.mxu0 %v1058
    %1185 = vmatprep.subr.bf16.mxu0 0
    %1186 = vmatpush1.bf16.msra.mxu0 0
    %1187 = vmatprep.subr.bf16.mxu0 0
    %1188 = vmatpush1.bf16.msra.mxu0 0
    %1189 = vmatprep.subr.bf16.mxu0 0
    %1190 = vmatpush1.bf16.msra.mxu0 0
    %1191 = vmatprep.subr.bf16.mxu0 0
    %1192 = vmatpush1.bf16.msra.mxu0 0
    %1193 = vmatprep.subr.bf16.mxu0 0
    %1194 = vmatpush1.bf16.msra.mxu0 0
    %1195 = vmatprep.subr.bf16.mxu0 0
    %1196 = vmatpush1.bf16.msra.mxu0 0
    %1197 = vmatprep.subr.bf16.mxu0 0
    %1198 = vmatpush1.bf16.msra.mxu0 0
    %1199 = vmatprep.subr.bf16.mxu0 0
    %1200 = vmatpush1.bf16.msra.mxu0 0
    %1201 = vmatprep.subr.bf16.mxu0 0
    %1202 = vmatpush1.bf16.msra.mxu0 0
    %1203 = vmatprep.subr.bf16.mxu0 0
    %1204 = vmatpush1.bf16.msra.mxu0 0
    %1205 = vmatprep.subr.bf16.mxu0 0
    %1206 = vmatpush1.bf16.msra.mxu0 0
    %1207 = vmatprep.subr.bf16.mxu0 0
    %1208 = vmatpush1.bf16.msra.mxu0 0
    %1209 = vmatprep.subr.bf16.mxu0 0
    %1210 = vmatpush1.bf16.msra.mxu0 0
    %1211 = vmatprep.subr.bf16.mxu0 0
    %1212 = vmatpush1.bf16.msra.mxu0 0
    %1213 = vmatprep.subr.bf16.mxu0 0
    %1214 = vmatpush1.bf16.msra.mxu0 0
    %1215 = vmatprep.mubr.bf16.mxu0 0
    %1216 = vmatmul.mubr.bf16.gmra.mrb[0].mxu0 %v1181
    %v1217 = vpop.f32.mrb[0].mxu0
    %v1218 = vadd.f32 0.0, %v1217
    %v1219 = vpop.f32.mrb[0].mxu0
    %v1220 = vpop.f32.mrb[0].mxu0
    %v1221 = vpop.f32.mrb[0].mxu0
    %1222 = vdwg.mxu0
    %v1224 = vsel %vm349, %v1179, 0
    %1226 = vmatprep.subr.bf16.mxu0 0
    %1227 = vmatpush1.bf16.msra.mxu0 %v1059
    %1228 = vmatprep.subr.bf16.mxu0 0
    %1229 = vmatpush1.bf16.msra.mxu0 0
    %1230 = vmatprep.subr.bf16.mxu0 0
    %1231 = vmatpush1.bf16.msra.mxu0 0
    %1232 = vmatprep.subr.bf16.mxu0 0
    %1233 = vmatpush1.bf16.msra.mxu0 0
    %1234 = vmatprep.subr.bf16.mxu0 0
    %1235 = vmatpush1.bf16.msra.mxu0 0
    %1236 = vmatprep.subr.bf16.mxu0 0
    %1237 = vmatpush1.bf16.msra.mxu0 0
    %1238 = vmatprep.subr.bf16.mxu0 0
    %1239 = vmatpush1.bf16.msra.mxu0 0
    %1240 = vmatprep.subr.bf16.mxu0 0
    %1241 = vmatpush1.bf16.msra.mxu0 0
    %1242 = vmatprep.subr.bf16.mxu0 0
    %1243 = vmatpush1.bf16.msra.mxu0 0
    %1244 = vmatprep.subr.bf16.mxu0 0
    %1245 = vmatpush1.bf16.msra.mxu0 0
    %1246 = vmatprep.subr.bf16.mxu0 0
    %1247 = vmatpush1.bf16.msra.mxu0 0
    %1248 = vmatprep.subr.bf16.mxu0 0
    %1249 = vmatpush1.bf16.msra.mxu0 0
    %1250 = vmatprep.subr.bf16.mxu0 0
    %1251 = vmatpush1.bf16.msra.mxu0 0
    %1252 = vmatprep.subr.bf16.mxu0 0
    %1253 = vmatpush1.bf16.msra.mxu0 0
    %1254 = vmatprep.subr.bf16.mxu0 0
    %1255 = vmatpush1.bf16.msra.mxu0 0
    %1256 = vmatprep.subr.bf16.mxu0 0
    %1257 = vmatpush1.bf16.msra.mxu0 0
    %1258 = vmatprep.mubr.bf16.mxu0 0
    %1259 = vmatmul.mubr.bf16.gmra.mrb[0].mxu0 %v1224
    %v1260 = vpop.f32.mrb[0].mxu0
    %v1261 = vadd.f32 0.0, %v1260
    %v1262 = vpop.f32.mrb[0].mxu0
    %v1263 = vpop.f32.mrb[0].mxu0
    %v1264 = vpop.f32.mrb[0].mxu0
    %1265 = vdwg.mxu0
    %v1266 = vmul.f32 %v950, %v950
    %v1267 = vmul.f32 %v1055, %v1055
    %vm1268 = vcmask 257024
    %v1269 = vsel %vm1268, %v1266, 0.0
    %v1270 = vrot.slane %v1269, 4
    %v1271 = vadd.f32 %v1269, %v1270
    %v1272 = vrot.slane %v1271, 2
    %v1273 = vadd.f32 %v1271, %v1272
    %v1274 = vrot.slane %v1273, 1
    %v1275 = vadd.f32 %v1273, %v1274
    %v1276 = vsel %vm1268, %v1267, 0.0
    %v1277 = vrot.slane %v1276, 4
    %v1278 = vadd.f32 %v1276, %v1277
    %v1279 = vrot.slane %v1278, 2
    %v1280 = vadd.f32 %v1278, %v1279
    %v1281 = vrot.slane %v1280, 1
    %v1282 = vadd.f32 %v1280, %v1281
    %v1283 = vrsqrt.pop %v1275
    %v1284 = vmul.f32 %v1275, %v1283
    %vm1285 = vcmp.eq.f32.partialorder %v1275, inf
    %v1286 = vsel %vm1285, %v1275, %v1284
    %vm1287 = vcmp.eq.f32.partialorder %v1275, 0.0
    %v1288 = vand.u32 %v1275, 2147483648
    %v1289 = vsel %vm1287, %v1288, %v1286
    %v1290 = vrsqrt.pop %v1282
    %v1291 = vmul.f32 %v1282, %v1290
    %vm1292 = vcmp.eq.f32.partialorder %v1282, inf
    %v1293 = vsel %vm1292, %v1282, %v1291
    %vm1294 = vcmp.eq.f32.partialorder %v1282, 0.0
    %v1295 = vand.u32 %v1282, 2147483648
    %v1296 = vsel %vm1294, %v1295, %v1293
    %v1297 = vmax.f32 %v1289, 1e-12
    %v1298 = vmax.f32 %v1296, 1e-12
    %v1299 = vrcp.pop %v1297
    %v1300 = vmul.f32 %v950, %v1299
    %v1301 = vrcp.pop %v1298
    %v1302 = vmul.f32 %v1055, %v1301
    %vm1303 = vcmask 27648
    %v1304 = vsel %vm1303, %v1218, 0.0
    %v1305 = vsel %vm1303, %v1261, 0.0
    %v1306 = vadd.f32 %v1304, %v1305
    %1307 = vadd.xlane.f32.xlu0 %v1306
    %v1308 = vpop.xlane.xlu0 %1307
    %v1309 = vrot.slane %v1308, 4
    %v1310 = vadd.f32 %v1308, %v1309
    %v1311 = vrot.slane %v1310, 2
    %v1312 = vadd.f32 %v1310, %v1311
    %v1313 = vrot.slane %v1312, 1
    %v1314 = vadd.f32 %v1312, %v1313
    %s1315 = vtos %v1314
    %v1316 = vstv %s1315
    %v1317 = vrcp.pop %v1316
    %v1318 = vmul.f32 %v1218, %v1317
    %v1319 = vmul.f32 %v1261, %v1317
    %1320 = vst.msk [vmem:[%s9] sm:$0xf] %vm1268, %v1300
    %1321 = vst.msk [vmem:[%s9 + $0x4] sm:$0xf] %vm1268, %v1302
    %1322 = vst.msk [vmem:[%s10] sm:$0xf] %vm1303, %v1318
    %1323 = vst.msk [vmem:[%s10 + $0x4] sm:$0xf] %vm1303, %v1319
    // Predicated region
    $region62: #{_lambda_.8} parent=1 // pred_check
      _
    $region63: #{_lambda_.8} parent=1 // pred_check_branch
      %1325 = sbr.rel (0) target = $region65
    $region64: #{_lambda_.8} parent=1 // pred_region
      _
    $region65: #{_lambda_.8} parent=1 // pred_fallthru
      _
    // Predicated region
    $region66: #{_lambda_.8} parent=1 // pred_check
      _
    $region67: #{_lambda_.8} parent=1 // pred_check_branch
      %1327 = sbr.rel (0) target = $region69
    $region68: #{_lambda_.8} parent=1 // pred_region
      _
    $region69: #{_lambda_.8} parent=1 // pred_fallthru
      _
    // Predicated region
    $region70: #{_lambda_.8} parent=1 // pred_check
      _
    $region71: #{_lambda_.8} parent=1 // pred_check_branch
      %1329 = sbr.rel (0) target = $region73
    $region72: #{_lambda_.8} parent=1 // pred_region
      _
    $region73: #{_lambda_.8} parent=1 // pred_fallthru
      _
    // Predicated region
    $region74: #{_lambda_.8} parent=1 // pred_check
      _
    $region75: #{_lambda_.8} parent=1 // pred_check_branch
      %1331 = sbr.rel (0) target = $region77
    $region76: #{_lambda_.8} parent=1 // pred_region
      _
    $region77: #{_lambda_.8} parent=1 // pred_fallthru
      _
    %1332 = vsyncpa [#allocation3], 1
    %1333 = vsyncpa [#allocation5], 1
    %1334 = vsyncpa [#allocation8], 1
    %1335 = vsyncpa [#allocation11], 1

// kernel: _lambda_.9
$region0: #{_lambda_.9}
  #allocation0 [shape = 'u32[]', space=smem, size = 0x4, offset = 0x4, fixed_abs, tag = 'smem constant byte address 0x4 - core index']
  #allocation1 [shape = 'u32[144,128]{1,0:T(1,128)}', space=vmem, size = 0x12000, scoped, tag = 'internal scratch']
  %s0 = inlined_call_operand.vmem [shape: f32[2,4,4], index: 0, kind: input, shape index: {}]
  %s1 = inlined_call_operand.vmem [shape: f32[2,4,32], index: 1, kind: input, shape index: {}]
  %s2 = inlined_call_operand.vmem [shape: f32[2,4,32], index: 2, kind: input, shape index: {}]
  %s3 = inlined_call_operand.hbm [shape: f32[32,128], index: 3, kind: input, shape index: {}]
  %s4 = inlined_call_operand.hbm [shape: f32[1,128], index: 4, kind: input, shape index: {}]
  %s5 = inlined_call_operand.vmem [shape: f32[128,32], index: 5, kind: input, shape index: {}]
  %s6 = inlined_call_operand.hbm [shape: f32[1,32], index: 6, kind: input, shape index: {}]
  %s7 = inlined_call_operand.hbm [shape: f32[2,32,32], index: 7, kind: input, shape index: {}]
  %s8 = inlined_call_operand.vmem [shape: f32[3,32,256], index: 8, kind: input, shape index: {}]
  %s9 = inlined_call_operand.hbm [shape: f32[1,256], index: 9, kind: input, shape index: {}]
  %s10 = inlined_call_operand.vmem [shape: f32[128,32], index: 10, kind: input, shape index: {}]
  %s11 = inlined_call_operand.hbm [shape: f32[1,32], index: 11, kind: input, shape index: {}]
  %s12 = inlined_call_operand.vmem [shape: f32[128,32], index: 12, kind: input, shape index: {}]
  %s13 = inlined_call_operand.hbm [shape: f32[1,32], index: 13, kind: input, shape index: {}]
  %s14 = inlined_call_operand.vmem [shape: f32[8,96], index: 14, kind: output, shape index: {}]
  %s15 = sld [smem:[#allocation0]]
  $region94: #{_lambda_.9} parent=0
    _
  %s17 = ssub.s32 1, %s15
  %s18 = scalar_select 0, %s17, %s15
  $region1: #{_lambda_.9} parent=0
    #allocation2 [shape = 'u8[16384]{0}', space=vmem, size = 0x4000, scoped, tag = 'input window, operand 3, single buffered']
    #allocation3 [shape = 's32[1]{0}', space=sflag, size = 0x4, scoped, tag = 'scoped memory for _lambda_.9']
    #allocation4 [shape = 'u8[512]{0}', space=vmem, size = 0x400, scoped, tag = 'input window, operand 4, single buffered']
    #allocation5 [shape = 's32[1]{0}', space=sflag, size = 0x4, scoped, tag = 'scoped memory for _lambda_.9']
    #allocation6 [shape = 'u8[512]{0}', space=vmem, size = 0x400, scoped, tag = 'input window, operand 6, single buffered']
    #allocation7 [shape = 'u8[32768]{0}', space=vmem, size = 0x8000, scoped, tag = 'input window, operand 7, single buffered']
    #allocation8 [shape = 's32[1]{0}', space=sflag, size = 0x4, scoped, tag = 'scoped memory for _lambda_.9']
    #allocation9 [shape = 'u8[1024]{0}', space=vmem, size = 0x400, scoped, tag = 'input window, operand 9, single buffered']
    #allocation10 [shape = 'u8[512]{0}', space=vmem, size = 0x400, scoped, tag = 'input window, operand 11, single buffered']
    #allocation11 [shape = 's32[1]{0}', space=sflag, size = 0x4, scoped, tag = 'scoped memory for _lambda_.9']
    #allocation12 [shape = 'u8[512]{0}', space=vmem, size = 0x400, scoped, tag = 'input window, operand 13, single buffered']
    %19 = vsyncpa [#allocation3], 0
    %20 = vsyncpa [#allocation5], 0
    %21 = vsyncpa [#allocation8], 0
    %22 = vsyncpa [#allocation11], 0
    // Predicated region
    $region2: #{_lambda_.9} parent=1 // pred_check
      _
    $region3: #{_lambda_.9} parent=1 // pred_check_branch
      %24 = sbr.rel (0) target = $region5
    $region4: #{_lambda_.9} parent=1 // pred_region
      _
    $region5: #{_lambda_.9} parent=1 // pred_fallthru
      _
    // Predicated region
    $region6: #{_lambda_.9} parent=1 // pred_check
      _
    $region7: #{_lambda_.9} parent=1 // pred_check_branch
      %26 = sbr.rel (0) target = $region9
    $region8: #{_lambda_.9} parent=1 // pred_region
      _
    $region9: #{_lambda_.9} parent=1 // pred_fallthru
      _
    // Predicated region
    $region10: #{_lambda_.9} parent=1 // pred_check
      _
    $region11: #{_lambda_.9} parent=1 // pred_check_branch
      %28 = sbr.rel (0) target = $region13
    $region12: #{_lambda_.9} parent=1 // pred_region
      _
    $region13: #{_lambda_.9} parent=1 // pred_fallthru
      _
    // Predicated region
    $region14: #{_lambda_.9} parent=1 // pred_check
      _
    $region15: #{_lambda_.9} parent=1 // pred_check_branch
      %30 = sbr.rel (0) target = $region17
    $region16: #{_lambda_.9} parent=1 // pred_region
      %s32 = ssub.s32 512, 512
      %33 = vsyncadd [#allocation3], %s32
      %s34 = sshll.u32 [#allocation2], 4
      %s35 = int_to_ptr.vmem [resolvable:$true] %s34
      %40 = dma.hbm_to_vmem [thread:$0]  %s3, 512, %s35, [#allocation3], 128, 128, 8
    $region17: #{_lambda_.9} parent=1 // pred_fallthru
      _
    // Predicated region
    $region18: #{_lambda_.9} parent=1 // pred_check
      _
    $region19: #{_lambda_.9} parent=1 // pred_check_branch
      %42 = sbr.rel (0) target = $region21
    $region20: #{_lambda_.9} parent=1 // pred_region
      %s44 = ssub.s32 16, 16
      %45 = vsyncadd [#allocation5], %s44
      %s47 = sshll.u32 [#allocation4], 4
      %s48 = int_to_ptr.vmem [resolvable:$true] %s47
      %50 = dma.hbm_to_vmem [thread:$0]  %s4, 16, %s48, [#allocation5]
    $region21: #{_lambda_.9} parent=1 // pred_fallthru
      _
    // Predicated region
    $region22: #{_lambda_.9} parent=1 // pred_check
      _
    $region23: #{_lambda_.9} parent=1 // pred_check_branch
      %52 = sbr.rel (0) target = $region25
    $region24: #{_lambda_.9} parent=1 // pred_region
      _
    $region25: #{_lambda_.9} parent=1 // pred_fallthru
      _
    // Predicated region
    $region26: #{_lambda_.9} parent=1 // pred_check
      _
    $region27: #{_lambda_.9} parent=1 // pred_check_branch
      %54 = sbr.rel (0) target = $region29
    $region28: #{_lambda_.9} parent=1 // pred_region
      %s56 = ssub.s32 16, 16
      %57 = vsyncadd [#allocation5], %s56
      %s59 = sshll.u32 [#allocation6], 4
      %s60 = int_to_ptr.vmem [resolvable:$true] %s59
      %62 = dma.hbm_to_vmem [thread:$0]  %s6, 16, %s60, [#allocation5]
    $region29: #{_lambda_.9} parent=1 // pred_fallthru
      _
    // Predicated region
    $region30: #{_lambda_.9} parent=1 // pred_check
      _
    $region31: #{_lambda_.9} parent=1 // pred_check_branch
      %64 = sbr.rel (0) target = $region33
    $region32: #{_lambda_.9} parent=1 // pred_region
      %s66 = ssub.s32 1024, 1024
      %67 = vsyncadd [#allocation8], %s66
      %s68 = sshll.u32 [#allocation7], 4
      %s69 = int_to_ptr.vmem [resolvable:$true] %s68
      %74 = dma.hbm_to_vmem [thread:$0]  %s7, 1024, %s69, [#allocation8], 128, 128, 8
    $region33: #{_lambda_.9} parent=1 // pred_fallthru
      _
    // Predicated region
    $region34: #{_lambda_.9} parent=1 // pred_check
      _
    $region35: #{_lambda_.9} parent=1 // pred_check_branch
      %76 = sbr.rel (0) target = $region37
    $region36: #{_lambda_.9} parent=1 // pred_region
      _
    $region37: #{_lambda_.9} parent=1 // pred_fallthru
      _
    // Predicated region
    $region38: #{_lambda_.9} parent=1 // pred_check
      _
    $region39: #{_lambda_.9} parent=1 // pred_check_branch
      %78 = sbr.rel (0) target = $region41
    $region40: #{_lambda_.9} parent=1 // pred_region
      %s80 = ssub.s32 32, 32
      %81 = vsyncadd [#allocation8], %s80
      %s83 = sshll.u32 [#allocation9], 4
      %s84 = int_to_ptr.vmem [resolvable:$true] %s83
      %86 = dma.hbm_to_vmem [thread:$0]  %s9, 32, %s84, [#allocation8]
    $region41: #{_lambda_.9} parent=1 // pred_fallthru
      _
    // Predicated region
    $region42: #{_lambda_.9} parent=1 // pred_check
      _
    $region43: #{_lambda_.9} parent=1 // pred_check_branch
      %88 = sbr.rel (0) target = $region45
    $region44: #{_lambda_.9} parent=1 // pred_region
      _
    $region45: #{_lambda_.9} parent=1 // pred_fallthru
      _
    // Predicated region
    $region46: #{_lambda_.9} parent=1 // pred_check
      _
    $region47: #{_lambda_.9} parent=1 // pred_check_branch
      %90 = sbr.rel (0) target = $region49
    $region48: #{_lambda_.9} parent=1 // pred_region
      %s92 = ssub.s32 16, 16
      %93 = vsyncadd [#allocation11], %s92
      %s95 = sshll.u32 [#allocation10], 4
      %s96 = int_to_ptr.vmem [resolvable:$true] %s95
      %98 = dma.hbm_to_vmem [thread:$0]  %s11, 16, %s96, [#allocation11]
    $region49: #{_lambda_.9} parent=1 // pred_fallthru
      _
    // Predicated region
    $region50: #{_lambda_.9} parent=1 // pred_check
      _
    $region51: #{_lambda_.9} parent=1 // pred_check_branch
      %100 = sbr.rel (0) target = $region53
    $region52: #{_lambda_.9} parent=1 // pred_region
      _
    $region53: #{_lambda_.9} parent=1 // pred_fallthru
      _
    // Predicated region
    $region54: #{_lambda_.9} parent=1 // pred_check
      _
    $region55: #{_lambda_.9} parent=1 // pred_check_branch
      %102 = sbr.rel (0) target = $region57
    $region56: #{_lambda_.9} parent=1 // pred_region
      %s104 = ssub.s32 16, 16
      %105 = vsyncadd [#allocation11], %s104
      %s107 = sshll.u32 [#allocation12], 4
      %s108 = int_to_ptr.vmem [resolvable:$true] %s107
      %110 = dma.hbm_to_vmem [thread:$0]  %s13, 16, %s108, [#allocation11]
    $region57: #{_lambda_.9} parent=1 // pred_fallthru
      _
    // Predicated region
    $region58: #{_lambda_.9} parent=1 // pred_check
      _
    $region59: #{_lambda_.9} parent=1 // pred_check_branch
      %112 = sbr.rel (0) target = $region61
    $region60: #{_lambda_.9} parent=1 // pred_region
      %113 = dma.done [#allocation3], 512
    $region61: #{_lambda_.9} parent=1 // pred_fallthru
      _
    // Predicated region
    $region62: #{_lambda_.9} parent=1 // pred_check
      _
    $region63: #{_lambda_.9} parent=1 // pred_check_branch
      %115 = sbr.rel (0) target = $region65
    $region64: #{_lambda_.9} parent=1 // pred_region
      %116 = dma.done [#allocation5], 16
    $region65: #{_lambda_.9} parent=1 // pred_fallthru
      _
    // Predicated region
    $region66: #{_lambda_.9} parent=1 // pred_check
      _
    $region67: #{_lambda_.9} parent=1 // pred_check_branch
      %118 = sbr.rel (0) target = $region69
    $region68: #{_lambda_.9} parent=1 // pred_region
      %119 = dma.done [#allocation5], 16
    $region69: #{_lambda_.9} parent=1 // pred_fallthru
      _
    // Predicated region
    $region70: #{_lambda_.9} parent=1 // pred_check
      _
    $region71: #{_lambda_.9} parent=1 // pred_check_branch
      %121 = sbr.rel (0) target = $region73
    $region72: #{_lambda_.9} parent=1 // pred_region
      %122 = dma.done [#allocation8], 1024
    $region73: #{_lambda_.9} parent=1 // pred_fallthru
      _
    // Predicated region
    $region74: #{_lambda_.9} parent=1 // pred_check
      _
    $region75: #{_lambda_.9} parent=1 // pred_check_branch
      %124 = sbr.rel (0) target = $region77
    $region76: #{_lambda_.9} parent=1 // pred_region
      %125 = dma.done [#allocation8], 32
    $region77: #{_lambda_.9} parent=1 // pred_fallthru
      _
    // Predicated region
    $region78: #{_lambda_.9} parent=1 // pred_check
      _
    $region79: #{_lambda_.9} parent=1 // pred_check_branch
      %127 = sbr.rel (0) target = $region81
    $region80: #{_lambda_.9} parent=1 // pred_region
      %128 = dma.done [#allocation11], 16
    $region81: #{_lambda_.9} parent=1 // pred_fallthru
      _
    // Predicated region
    $region82: #{_lambda_.9} parent=1 // pred_check
      _
    $region83: #{_lambda_.9} parent=1 // pred_check_branch
      %130 = sbr.rel (0) target = $region85
    $region84: #{_lambda_.9} parent=1 // pred_region
      %131 = dma.done [#allocation11], 16
    $region85: #{_lambda_.9} parent=1 // pred_fallthru
      _
    %v133 = vld [vmem:[%s0] sm:$0xf]
    %v134 = vld [vmem:[%s0 + $0x4] sm:$0xf]
    %v135 = vpack.c.bf16 %v133, %v133
    %v136 = vpack.c.bf16 %v134, %v134
    %v137 = vld [vmem:[%s1] sm:$0xf]
    %v138 = vld [vmem:[%s1 + $0x4] sm:$0xf]
    %v141 = vcombine.low %v137, %v138
    %v143 = vpack.c.bf16 %v141, %v141
    %v144 = vld [vmem:[#allocation2] sm:$0xff]
    %v145 = vld [vmem:[#allocation2 + $0x8] sm:$0xff]
    %v146 = vld [vmem:[#allocation2 + $0x10] sm:$0xff]
    %v147 = vld [vmem:[#allocation2 + $0x18] sm:$0xff]
    %v148 = vpack.c.bf16 %v145, %v144
    %v149 = vpack.c.bf16 %v147, %v146
    %v150 = vld [vmem:[#allocation4] sm:$0x1]
    %v152 = vlaneseq
    %v153 = vshrl.u32 %v152, 7
    %v154 = vsub.s32 0, %v153
    %v155 = vrot.slane %v150, %v154
    %vm157 = vcmask 261120
    %v159 = vsel %vm157, %v143, 0
    %161 = vmatprep.subr.bf16.mxu0 0
    %162 = vmatpush1.bf16.msra.mxu0 %v148
    %163 = vmatprep.subr.bf16.mxu0 0
    %164 = vmatpush1.bf16.msra.mxu0 %v149
    %165 = vmatprep.subr.bf16.mxu0 0
    %166 = vmatpush1.bf16.msra.mxu0 0
    %167 = vmatprep.subr.bf16.mxu0 0
    %168 = vmatpush1.bf16.msra.mxu0 0
    %169 = vmatprep.subr.bf16.mxu0 0
    %170 = vmatpush1.bf16.msra.mxu0 0
    %171 = vmatprep.subr.bf16.mxu0 0
    %172 = vmatpush1.bf16.msra.mxu0 0
    %173 = vmatprep.subr.bf16.mxu0 0
    %174 = vmatpush1.bf16.msra.mxu0 0
    %175 = vmatprep.subr.bf16.mxu0 0
    %176 = vmatpush1.bf16.msra.mxu0 0
    %177 = vmatprep.subr.bf16.mxu0 0
    %178 = vmatpush1.bf16.msra.mxu0 0
    %179 = vmatprep.subr.bf16.mxu0 0
    %180 = vmatpush1.bf16.msra.mxu0 0
    %181 = vmatprep.subr.bf16.mxu0 0
    %182 = vmatpush1.bf16.msra.mxu0 0
    %183 = vmatprep.subr.bf16.mxu0 0
    %184 = vmatpush1.bf16.msra.mxu0 0
    %185 = vmatprep.subr.bf16.mxu0 0
    %186 = vmatpush1.bf16.msra.mxu0 0
    %187 = vmatprep.subr.bf16.mxu0 0
    %188 = vmatpush1.bf16.msra.mxu0 0
    %189 = vmatprep.subr.bf16.mxu0 0
    %190 = vmatpush1.bf16.msra.mxu0 0
    %191 = vmatprep.subr.bf16.mxu0 0
    %192 = vmatpush1.bf16.msra.mxu0 0
    %193 = vmatprep.mubr.bf16.mxu0 0
    %194 = vmatmul.mubr.bf16.gmra.mrb[0].mxu0 %v159
    %v195 = vpop.f32.mrb[0].mxu0
    %v196 = vadd.f32 %v155, %v195
    %v197 = vpop.f32.mrb[0].mxu0
    %v198 = vpop.f32.mrb[0].mxu0
    %v199 = vpop.f32.mrb[0].mxu0
    %200 = vdwg.mxu0
    %v201 = vtanh.pop %v196
    %v202 = vpack.c.bf16 %v201, %v201
    %v203 = vld [vmem:[%s5] sm:$0xff]
    %v204 = vld [vmem:[%s5 + $0x8] sm:$0xff]
    %v205 = vld [vmem:[%s5 + $0x10] sm:$0xff]
    %v206 = vld [vmem:[%s5 + $0x18] sm:$0xff]
    %v207 = vld [vmem:[%s5 + $0x20] sm:$0xff]
    %v208 = vld [vmem:[%s5 + $0x28] sm:$0xff]
    %v209 = vld [vmem:[%s5 + $0x30] sm:$0xff]
    %v210 = vld [vmem:[%s5 + $0x38] sm:$0xff]
    %v211 = vld [vmem:[%s5 + $0x40] sm:$0xff]
    %v212 = vld [vmem:[%s5 + $0x48] sm:$0xff]
    %v213 = vld [vmem:[%s5 + $0x50] sm:$0xff]
    %v214 = vld [vmem:[%s5 + $0x58] sm:$0xff]
    %v215 = vld [vmem:[%s5 + $0x60] sm:$0xff]
    %v216 = vld [vmem:[%s5 + $0x68] sm:$0xff]
    %v217 = vld [vmem:[%s5 + $0x70] sm:$0xff]
    %v218 = vld [vmem:[%s5 + $0x78] sm:$0xff]
    %v219 = vpack.c.bf16 %v204, %v203
    %v220 = vpack.c.bf16 %v206, %v205
    %v221 = vpack.c.bf16 %v208, %v207
    %v222 = vpack.c.bf16 %v210, %v209
    %v223 = vpack.c.bf16 %v212, %v211
    %v224 = vpack.c.bf16 %v214, %v213
    %v225 = vpack.c.bf16 %v216, %v215
    %v226 = vpack.c.bf16 %v218, %v217
    %v227 = vld [vmem:[#allocation6] sm:$0x1]
    %v229 = vlaneseq
    %v230 = vshrl.u32 %v229, 7
    %v231 = vsub.s32 0, %v230
    %v232 = vrot.slane %v227, %v231
    %234 = vmatprep.subr.bf16.mxu0 0
    %235 = vmatpush1.bf16.msra.mxu0 %v219
    %236 = vmatprep.subr.bf16.mxu0 0
    %237 = vmatpush1.bf16.msra.mxu0 %v220
    %238 = vmatprep.subr.bf16.mxu0 0
    %239 = vmatpush1.bf16.msra.mxu0 %v221
    %240 = vmatprep.subr.bf16.mxu0 0
    %241 = vmatpush1.bf16.msra.mxu0 %v222
    %242 = vmatprep.subr.bf16.mxu0 0
    %243 = vmatpush1.bf16.msra.mxu0 %v223
    %244 = vmatprep.subr.bf16.mxu0 0
    %245 = vmatpush1.bf16.msra.mxu0 %v224
    %246 = vmatprep.subr.bf16.mxu0 0
    %247 = vmatpush1.bf16.msra.mxu0 %v225
    %248 = vmatprep.subr.bf16.mxu0 0
    %249 = vmatpush1.bf16.msra.mxu0 %v226
    %250 = vmatprep.subr.bf16.mxu0 0
    %251 = vmatpush1.bf16.msra.mxu0 0
    %252 = vmatprep.subr.bf16.mxu0 0
    %253 = vmatpush1.bf16.msra.mxu0 0
    %254 = vmatprep.subr.bf16.mxu0 0
    %255 = vmatpush1.bf16.msra.mxu0 0
    %256 = vmatprep.subr.bf16.mxu0 0
    %257 = vmatpush1.bf16.msra.mxu0 0
    %258 = vmatprep.subr.bf16.mxu0 0
    %259 = vmatpush1.bf16.msra.mxu0 0
    %260 = vmatprep.subr.bf16.mxu0 0
    %261 = vmatpush1.bf16.msra.mxu0 0
    %262 = vmatprep.subr.bf16.mxu0 0
    %263 = vmatpush1.bf16.msra.mxu0 0
    %264 = vmatprep.subr.bf16.mxu0 0
    %265 = vmatpush1.bf16.msra.mxu0 0
    %266 = vmatprep.mubr.bf16.mxu0 0
    %267 = vmatmul.mubr.bf16.gmra.mrb[0].mxu0 %v202
    %v268 = vpop.f32.mrb[0].mxu0
    %v269 = vadd.f32 %v232, %v268
    %v270 = vpop.f32.mrb[0].mxu0
    %v271 = vpop.f32.mrb[0].mxu0
    %v272 = vpop.f32.mrb[0].mxu0
    %273 = vdwg.mxu0
    %v274 = vtanh.pop %v269
    %v275 = vpack.c.bf16 %v274, %v274
    %v276 = vld [vmem:[%s8] sm:$0xff]
    %v277 = vld [vmem:[%s8 + $0x8] sm:$0xff]
    %v278 = vld [vmem:[%s8 + $0x10] sm:$0xff]
    %v279 = vld [vmem:[%s8 + $0x18] sm:$0xff]
    %v280 = vld [vmem:[%s8 + $0x20] sm:$0xff]
    %v281 = vld [vmem:[%s8 + $0x28] sm:$0xff]
    %v282 = vld [vmem:[%s8 + $0x30] sm:$0xff]
    %v283 = vld [vmem:[%s8 + $0x38] sm:$0xff]
    %v284 = vpack.c.bf16 %v278, %v276
    %v285 = vpack.c.bf16 %v279, %v277
    %v286 = vpack.c.bf16 %v282, %v280
    %v287 = vpack.c.bf16 %v283, %v281
    %v288 = vld [vmem:[#allocation7] sm:$0xff]
    %v289 = vld [vmem:[#allocation7 + $0x8] sm:$0xff]
    %v290 = vld [vmem:[#allocation7 + $0x10] sm:$0xff]
    %v291 = vld [vmem:[#allocation7 + $0x18] sm:$0xff]
    %v292 = vpack.c.bf16 %v289, %v288
    %v293 = vpack.c.bf16 %v291, %v290
    %v295 = vsel %vm157, %v275, 0
    %297 = vmatprep.subr.bf16.mxu0 0
    %298 = vmatpush1.bf16.msra.mxu0 %v292
    %299 = vmatprep.subr.bf16.mxu0 0
    %300 = vmatpush1.bf16.msra.mxu0 %v293
    %301 = vmatprep.subr.bf16.mxu0 0
    %302 = vmatpush1.bf16.msra.mxu0 0
    %303 = vmatprep.subr.bf16.mxu0 0
    %304 = vmatpush1.bf16.msra.mxu0 0
    %305 = vmatprep.subr.bf16.mxu0 0
    %306 = vmatpush1.bf16.msra.mxu0 0
    %307 = vmatprep.subr.bf16.mxu0 0
    %308 = vmatpush1.bf16.msra.mxu0 0
    %309 = vmatprep.subr.bf16.mxu0 0
    %310 = vmatpush1.bf16.msra.mxu0 0
    %311 = vmatprep.subr.bf16.mxu0 0
    %312 = vmatpush1.bf16.msra.mxu0 0
    %313 = vmatprep.subr.bf16.mxu0 0
    %314 = vmatpush1.bf16.msra.mxu0 0
    %315 = vmatprep.subr.bf16.mxu0 0
    %316 = vmatpush1.bf16.msra.mxu0 0
    %317 = vmatprep.subr.bf16.mxu0 0
    %318 = vmatpush1.bf16.msra.mxu0 0
    %319 = vmatprep.subr.bf16.mxu0 0
    %320 = vmatpush1.bf16.msra.mxu0 0
    %321 = vmatprep.subr.bf16.mxu0 0
    %322 = vmatpush1.bf16.msra.mxu0 0
    %323 = vmatprep.subr.bf16.mxu0 0
    %324 = vmatpush1.bf16.msra.mxu0 0
    %325 = vmatprep.subr.bf16.mxu0 0
    %326 = vmatpush1.bf16.msra.mxu0 0
    %327 = vmatprep.subr.bf16.mxu0 0
    %328 = vmatpush1.bf16.msra.mxu0 0
    %329 = vmatprep.mubr.bf16.mxu0 0
    %330 = vmatmul.mubr.bf16.gmra.mrb[0].mxu0 %v295
    %v331 = vpop.f32.mrb[0].mxu0
    %v332 = vadd.f32 0.0, %v331
    %v333 = vpop.f32.mrb[0].mxu0
    %v334 = vpop.f32.mrb[0].mxu0
    %v335 = vpop.f32.mrb[0].mxu0
    %336 = vdwg.mxu0
    %v338 = vcombine.high %v332, %v332
    %v340 = vpack.c.bf16 %v332, %v332
    %v341 = vpack.c.bf16 %v338, %v338
    %vm342 = vcmask 31744
    %v344 = vsel %vm342, %v135, 0
    %vm346 = vcmask 1041408
    %v348 = vsel %vm346, %v340, 0
    %350 = vmatprep.subr.bf16.mxu0 0
    %351 = vmatpush1.bf16.msra.mxu0 %v348
    %352 = vmatprep.subr.bf16.mxu0 0
    %353 = vmatpush1.bf16.msra.mxu0 0
    %354 = vmatprep.subr.bf16.mxu0 0
    %355 = vmatpush1.bf16.msra.mxu0 0
    %356 = vmatprep.subr.bf16.mxu0 0
    %357 = vmatpush1.bf16.msra.mxu0 0
    %358 = vmatprep.subr.bf16.mxu0 0
    %359 = vmatpush1.bf16.msra.mxu0 0
    %360 = vmatprep.subr.bf16.mxu0 0
    %361 = vmatpush1.bf16.msra.mxu0 0
    %362 = vmatprep.subr.bf16.mxu0 0
    %363 = vmatpush1.bf16.msra.mxu0 0
    %364 = vmatprep.subr.bf16.mxu0 0
    %365 = vmatpush1.bf16.msra.mxu0 0
    %366 = vmatprep.subr.bf16.mxu0 0
    %367 = vmatpush1.bf16.msra.mxu0 0
    %368 = vmatprep.subr.bf16.mxu0 0
    %369 = vmatpush1.bf16.msra.mxu0 0
    %370 = vmatprep.subr.bf16.mxu0 0
    %371 = vmatpush1.bf16.msra.mxu0 0
    %372 = vmatprep.subr.bf16.mxu0 0
    %373 = vmatpush1.bf16.msra.mxu0 0
    %374 = vmatprep.subr.bf16.mxu0 0
    %375 = vmatpush1.bf16.msra.mxu0 0
    %376 = vmatprep.subr.bf16.mxu0 0
    %377 = vmatpush1.bf16.msra.mxu0 0
    %378 = vmatprep.subr.bf16.mxu0 0
    %379 = vmatpush1.bf16.msra.mxu0 0
    %380 = vmatprep.subr.bf16.mxu0 0
    %381 = vmatpush1.bf16.msra.mxu0 0
    %382 = vmatprep.mubr.bf16.mxu0 0
    %383 = vmatmul.mubr.bf16.gmra.mrb[0].mxu0 %v344
    %v384 = vpop.f32.mrb[0].mxu0
    %v385 = vadd.f32 0.0, %v384
    %v386 = vpop.f32.mrb[0].mxu0
    %v387 = vpop.f32.mrb[0].mxu0
    %v388 = vpop.f32.mrb[0].mxu0
    %389 = vdwg.mxu0
    %v391 = vsel %vm342, %v136, 0
    %v394 = vsel %vm346, %v341, 0
    %396 = vmatprep.subr.bf16.mxu0 0
    %397 = vmatpush1.bf16.msra.mxu0 %v394
    %398 = vmatprep.subr.bf16.mxu0 0
    %399 = vmatpush1.bf16.msra.mxu0 0
    %400 = vmatprep.subr.bf16.mxu0 0
    %401 = vmatpush1.bf16.msra.mxu0 0
    %402 = vmatprep.subr.bf16.mxu0 0
    %403 = vmatpush1.bf16.msra.mxu0 0
    %404 = vmatprep.subr.bf16.mxu0 0
    %405 = vmatpush1.bf16.msra.mxu0 0
    %406 = vmatprep.subr.bf16.mxu0 0
    %407 = vmatpush1.bf16.msra.mxu0 0
    %408 = vmatprep.subr.bf16.mxu0 0
    %409 = vmatpush1.bf16.msra.mxu0 0
    %410 = vmatprep.subr.bf16.mxu0 0
    %411 = vmatpush1.bf16.msra.mxu0 0
    %412 = vmatprep.subr.bf16.mxu0 0
    %413 = vmatpush1.bf16.msra.mxu0 0
    %414 = vmatprep.subr.bf16.mxu0 0
    %415 = vmatpush1.bf16.msra.mxu0 0
    %416 = vmatprep.subr.bf16.mxu0 0
    %417 = vmatpush1.bf16.msra.mxu0 0
    %418 = vmatprep.subr.bf16.mxu0 0
    %419 = vmatpush1.bf16.msra.mxu0 0
    %420 = vmatprep.subr.bf16.mxu0 0
    %421 = vmatpush1.bf16.msra.mxu0 0
    %422 = vmatprep.subr.bf16.mxu0 0
    %423 = vmatpush1.bf16.msra.mxu0 0
    %424 = vmatprep.subr.bf16.mxu0 0
    %425 = vmatpush1.bf16.msra.mxu0 0
    %426 = vmatprep.subr.bf16.mxu0 0
    %427 = vmatpush1.bf16.msra.mxu0 0
    %428 = vmatprep.mubr.bf16.mxu0 0
    %429 = vmatmul.mubr.bf16.gmra.mrb[0].mxu0 %v391
    %v430 = vpop.f32.mrb[0].mxu0
    %v431 = vadd.f32 0.0, %v430
    %v432 = vpop.f32.mrb[0].mxu0
    %v433 = vpop.f32.mrb[0].mxu0
    %v434 = vpop.f32.mrb[0].mxu0
    %435 = vdwg.mxu0
    %v436 = vtanh.pop %v385
    %v437 = vtanh.pop %v431
    %v440 = vcombine.low %v436, %v437
    %v442 = vpack.c.bf16 %v440, %v440
    %s443 = scalar_lea.vmem %s8, 64
    %v444 = vld [vmem:[%s443] sm:$0xff]
    %v445 = vld [vmem:[%s443 + $0x8] sm:$0xff]
    %v446 = vld [vmem:[%s443 + $0x10] sm:$0xff]
    %v447 = vld [vmem:[%s443 + $0x18] sm:$0xff]
    %v448 = vld [vmem:[%s443 + $0x20] sm:$0xff]
    %v449 = vld [vmem:[%s443 + $0x28] sm:$0xff]
    %v450 = vld [vmem:[%s443 + $0x30] sm:$0xff]
    %v451 = vld [vmem:[%s443 + $0x38] sm:$0xff]
    %v452 = vpack.c.bf16 %v446, %v444
    %v453 = vpack.c.bf16 %v447, %v445
    %v454 = vpack.c.bf16 %v450, %v448
    %v455 = vpack.c.bf16 %v451, %v449
    %v457 = vsel %vm157, %v442, 0
    %459 = vmatprep.subr.bf16.mxu0 %v453
    %460 = vmatpush1.bf16.msra.mxu0 %v452
    %461 = vmatprep.subr.bf16.mxu0 %v455
    %462 = vmatpush1.bf16.msra.mxu0 %v454
    %463 = vmatprep.subr.bf16.mxu0 0
    %464 = vmatpush1.bf16.msra.mxu0 0
    %465 = vmatprep.subr.bf16.mxu0 0
    %466 = vmatpush1.bf16.msra.mxu0 0
    %467 = vmatprep.subr.bf16.mxu0 0
    %468 = vmatpush1.bf16.msra.mxu0 0
    %469 = vmatprep.subr.bf16.mxu0 0
    %470 = vmatpush1.bf16.msra.mxu0 0
    %471 = vmatprep.subr.bf16.mxu0 0
    %472 = vmatpush1.bf16.msra.mxu0 0
    %473 = vmatprep.subr.bf16.mxu0 0
    %474 = vmatpush1.bf16.msra.mxu0 0
    %475 = vmatprep.subr.bf16.mxu0 0
    %476 = vmatpush1.bf16.msra.mxu0 0
    %477 = vmatprep.subr.bf16.mxu0 0
    %478 = vmatpush1.bf16.msra.mxu0 0
    %479 = vmatprep.subr.bf16.mxu0 0
    %480 = vmatpush1.bf16.msra.mxu0 0
    %481 = vmatprep.subr.bf16.mxu0 0
    %482 = vmatpush1.bf16.msra.mxu0 0
    %483 = vmatprep.subr.bf16.mxu0 0
    %484 = vmatpush1.bf16.msra.mxu0 0
    %485 = vmatprep.subr.bf16.mxu0 0
    %486 = vmatpush1.bf16.msra.mxu0 0
    %487 = vmatprep.subr.bf16.mxu0 0
    %488 = vmatpush1.bf16.msra.mxu0 0
    %489 = vmatprep.subr.bf16.mxu0 0
    %490 = vmatpush1.bf16.msra.mxu0 0
    %491 = vmatprep.mubr.bf16.mxu0 0
    %492 = vmatmul.mubr.bf16.gmra.mrb[0].mxu0 %v457
    %v493 = vpop.f32.mrb[0].mxu0
    %v494 = vadd.f32 0.0, %v493
    %v495 = vpop.f32.mrb[0].mxu0
    %v496 = vadd.f32 0.0, %v495
    %v497 = vpop.f32.mrb[0].mxu0
    %v498 = vpop.f32.mrb[0].mxu0
    %499 = vdwg.mxu0
    %500 = vmatprep.subr.bf16.mxu0 %v285
    %501 = vmatpush1.bf16.msra.mxu0 %v284
    %502 = vmatprep.subr.bf16.mxu0 %v287
    %503 = vmatpush1.bf16.msra.mxu0 %v286
    %504 = vmatprep.subr.bf16.mxu0 0
    %505 = vmatpush1.bf16.msra.mxu0 0
    %506 = vmatprep.subr.bf16.mxu0 0
    %507 = vmatpush1.bf16.msra.mxu0 0
    %508 = vmatprep.subr.bf16.mxu0 0
    %509 = vmatpush1.bf16.msra.mxu0 0
    %510 = vmatprep.subr.bf16.mxu0 0
    %511 = vmatpush1.bf16.msra.mxu0 0
    %512 = vmatprep.subr.bf16.mxu0 0
    %513 = vmatpush1.bf16.msra.mxu0 0
    %514 = vmatprep.subr.bf16.mxu0 0
    %515 = vmatpush1.bf16.msra.mxu0 0
    %516 = vmatprep.subr.bf16.mxu0 0
    %517 = vmatpush1.bf16.msra.mxu0 0
    %518 = vmatprep.subr.bf16.mxu0 0
    %519 = vmatpush1.bf16.msra.mxu0 0
    %520 = vmatprep.subr.bf16.mxu0 0
    %521 = vmatpush1.bf16.msra.mxu0 0
    %522 = vmatprep.subr.bf16.mxu0 0
    %523 = vmatpush1.bf16.msra.mxu0 0
    %524 = vmatprep.subr.bf16.mxu0 0
    %525 = vmatpush1.bf16.msra.mxu0 0
    %526 = vmatprep.subr.bf16.mxu0 0
    %527 = vmatpush1.bf16.msra.mxu0 0
    %528 = vmatprep.subr.bf16.mxu0 0
    %529 = vmatpush1.bf16.msra.mxu0 0
    %530 = vmatprep.subr.bf16.mxu0 0
    %531 = vmatpush1.bf16.msra.mxu0 0
    %532 = vmatprep.mubr.bf16.mxu0 0
    %533 = vmatmul.mubr.bf16.gmra.mrb[0].mxu0 %v295
    %v534 = vpop.f32.mrb[0].mxu0
    %v535 = vadd.f32 %v494, %v534
    %v536 = vpop.f32.mrb[0].mxu0
    %v537 = vadd.f32 %v496, %v536
    %v538 = vpop.f32.mrb[0].mxu0
    %v539 = vpop.f32.mrb[0].mxu0
    %540 = vdwg.mxu0
    %s541 = scalar_lea.vmem [#allocation7], 32
    %v542 = vld [vmem:[%s541] sm:$0xff]
    %v543 = vld [vmem:[%s541 + $0x8] sm:$0xff]
    %v544 = vld [vmem:[%s541 + $0x10] sm:$0xff]
    %v545 = vld [vmem:[%s541 + $0x18] sm:$0xff]
    %v546 = vpack.c.bf16 %v543, %v542
    %v547 = vpack.c.bf16 %v545, %v544
    %548 = vmatprep.subr.bf16.mxu0 0
    %549 = vmatpush1.bf16.msra.mxu0 %v546
    %550 = vmatprep.subr.bf16.mxu0 0
    %551 = vmatpush1.bf16.msra.mxu0 %v547
    %552 = vmatprep.subr.bf16.mxu0 0
    %553 = vmatpush1.bf16.msra.mxu0 0
    %554 = vmatprep.subr.bf16.mxu0 0
    %555 = vmatpush1.bf16.msra.mxu0 0
    %556 = vmatprep.subr.bf16.mxu0 0
    %557 = vmatpush1.bf16.msra.mxu0 0
    %558 = vmatprep.subr.bf16.mxu0 0
    %559 = vmatpush1.bf16.msra.mxu0 0
    %560 = vmatprep.subr.bf16.mxu0 0
    %561 = vmatpush1.bf16.msra.mxu0 0
    %562 = vmatprep.subr.bf16.mxu0 0
    %563 = vmatpush1.bf16.msra.mxu0 0
    %564 = vmatprep.subr.bf16.mxu0 0
    %565 = vmatpush1.bf16.msra.mxu0 0
    %566 = vmatprep.subr.bf16.mxu0 0
    %567 = vmatpush1.bf16.msra.mxu0 0
    %568 = vmatprep.subr.bf16.mxu0 0
    %569 = vmatpush1.bf16.msra.mxu0 0
    %570 = vmatprep.subr.bf16.mxu0 0
    %571 = vmatpush1.bf16.msra.mxu0 0
    %572 = vmatprep.subr.bf16.mxu0 0
    %573 = vmatpush1.bf16.msra.mxu0 0
    %574 = vmatprep.subr.bf16.mxu0 0
    %575 = vmatpush1.bf16.msra.mxu0 0
    %576 = vmatprep.subr.bf16.mxu0 0
    %577 = vmatpush1.bf16.msra.mxu0 0
    %578 = vmatprep.subr.bf16.mxu0 0
    %579 = vmatpush1.bf16.msra.mxu0 0
    %580 = vmatprep.mubr.bf16.mxu0 0
    %581 = vmatmul.mubr.bf16.gmra.mrb[0].mxu0 %v457
    %v582 = vpop.f32.mrb[0].mxu0
    %v583 = vadd.f32 0.0, %v582
    %v584 = vpop.f32.mrb[0].mxu0
    %v585 = vpop.f32.mrb[0].mxu0
    %v586 = vpop.f32.mrb[0].mxu0
    %587 = vdwg.mxu0
    %v589 = vcombine.high %v583, %v583
    %v591 = vpack.c.bf16 %v583, %v583
    %v592 = vpack.c.bf16 %v589, %v589
    %v594 = vsel %vm346, %v591, 0
    %596 = vmatprep.subr.bf16.mxu0 0
    %597 = vmatpush1.bf16.msra.mxu0 %v594
    %598 = vmatprep.subr.bf16.mxu0 0
    %599 = vmatpush1.bf16.msra.mxu0 0
    %600 = vmatprep.subr.bf16.mxu0 0
    %601 = vmatpush1.bf16.msra.mxu0 0
    %602 = vmatprep.subr.bf16.mxu0 0
    %603 = vmatpush1.bf16.msra.mxu0 0
    %604 = vmatprep.subr.bf16.mxu0 0
    %605 = vmatpush1.bf16.msra.mxu0 0
    %606 = vmatprep.subr.bf16.mxu0 0
    %607 = vmatpush1.bf16.msra.mxu0 0
    %608 = vmatprep.subr.bf16.mxu0 0
    %609 = vmatpush1.bf16.msra.mxu0 0
    %610 = vmatprep.subr.bf16.mxu0 0
    %611 = vmatpush1.bf16.msra.mxu0 0
    %612 = vmatprep.subr.bf16.mxu0 0
    %613 = vmatpush1.bf16.msra.mxu0 0
    %614 = vmatprep.subr.bf16.mxu0 0
    %615 = vmatpush1.bf16.msra.mxu0 0
    %616 = vmatprep.subr.bf16.mxu0 0
    %617 = vmatpush1.bf16.msra.mxu0 0
    %618 = vmatprep.subr.bf16.mxu0 0
    %619 = vmatpush1.bf16.msra.mxu0 0
    %620 = vmatprep.subr.bf16.mxu0 0
    %621 = vmatpush1.bf16.msra.mxu0 0
    %622 = vmatprep.subr.bf16.mxu0 0
    %623 = vmatpush1.bf16.msra.mxu0 0
    %624 = vmatprep.subr.bf16.mxu0 0
    %625 = vmatpush1.bf16.msra.mxu0 0
    %626 = vmatprep.subr.bf16.mxu0 0
    %627 = vmatpush1.bf16.msra.mxu0 0
    %628 = vmatprep.mubr.bf16.mxu0 0
    %629 = vmatmul.mubr.bf16.gmra.mrb[0].mxu0 %v344
    %v630 = vpop.f32.mrb[0].mxu0
    %v631 = vadd.f32 0.0, %v630
    %v632 = vpop.f32.mrb[0].mxu0
    %v633 = vpop.f32.mrb[0].mxu0
    %v634 = vpop.f32.mrb[0].mxu0
    %635 = vdwg.mxu0
    %v637 = vsel %vm346, %v592, 0
    %639 = vmatprep.subr.bf16.mxu0 0
    %640 = vmatpush1.bf16.msra.mxu0 %v637
    %641 = vmatprep.subr.bf16.mxu0 0
    %642 = vmatpush1.bf16.msra.mxu0 0
    %643 = vmatprep.subr.bf16.mxu0 0
    %644 = vmatpush1.bf16.msra.mxu0 0
    %645 = vmatprep.subr.bf16.mxu0 0
    %646 = vmatpush1.bf16.msra.mxu0 0
    %647 = vmatprep.subr.bf16.mxu0 0
    %648 = vmatpush1.bf16.msra.mxu0 0
    %649 = vmatprep.subr.bf16.mxu0 0
    %650 = vmatpush1.bf16.msra.mxu0 0
    %651 = vmatprep.subr.bf16.mxu0 0
    %652 = vmatpush1.bf16.msra.mxu0 0
    %653 = vmatprep.subr.bf16.mxu0 0
    %654 = vmatpush1.bf16.msra.mxu0 0
    %655 = vmatprep.subr.bf16.mxu0 0
    %656 = vmatpush1.bf16.msra.mxu0 0
    %657 = vmatprep.subr.bf16.mxu0 0
    %658 = vmatpush1.bf16.msra.mxu0 0
    %659 = vmatprep.subr.bf16.mxu0 0
    %660 = vmatpush1.bf16.msra.mxu0 0
    %661 = vmatprep.subr.bf16.mxu0 0
    %662 = vmatpush1.bf16.msra.mxu0 0
    %663 = vmatprep.subr.bf16.mxu0 0
    %664 = vmatpush1.bf16.msra.mxu0 0
    %665 = vmatprep.subr.bf16.mxu0 0
    %666 = vmatpush1.bf16.msra.mxu0 0
    %667 = vmatprep.subr.bf16.mxu0 0
    %668 = vmatpush1.bf16.msra.mxu0 0
    %669 = vmatprep.subr.bf16.mxu0 0
    %670 = vmatpush1.bf16.msra.mxu0 0
    %671 = vmatprep.mubr.bf16.mxu0 0
    %672 = vmatmul.mubr.bf16.gmra.mrb[0].mxu0 %v391
    %v673 = vpop.f32.mrb[0].mxu0
    %v674 = vadd.f32 0.0, %v673
    %v675 = vpop.f32.mrb[0].mxu0
    %v676 = vpop.f32.mrb[0].mxu0
    %v677 = vpop.f32.mrb[0].mxu0
    %678 = vdwg.mxu0
    %v679 = vtanh.pop %v631
    %v680 = vtanh.pop %v674
    %v683 = vcombine.low %v679, %v680
    %v685 = vpack.c.bf16 %v683, %v683
    %s686 = scalar_lea.vmem %s8, 128
    %v687 = vld [vmem:[%s686] sm:$0xff]
    %v688 = vld [vmem:[%s686 + $0x8] sm:$0xff]
    %v689 = vld [vmem:[%s686 + $0x10] sm:$0xff]
    %v690 = vld [vmem:[%s686 + $0x18] sm:$0xff]
    %v691 = vld [vmem:[%s686 + $0x20] sm:$0xff]
    %v692 = vld [vmem:[%s686 + $0x28] sm:$0xff]
    %v693 = vld [vmem:[%s686 + $0x30] sm:$0xff]
    %v694 = vld [vmem:[%s686 + $0x38] sm:$0xff]
    %v695 = vpack.c.bf16 %v689, %v687
    %v696 = vpack.c.bf16 %v690, %v688
    %v697 = vpack.c.bf16 %v693, %v691
    %v698 = vpack.c.bf16 %v694, %v692
    %v700 = vsel %vm157, %v685, 0
    %702 = vmatprep.subr.bf16.mxu0 %v696
    %703 = vmatpush1.bf16.msra.mxu0 %v695
    %704 = vmatprep.subr.bf16.mxu0 %v698
    %705 = vmatpush1.bf16.msra.mxu0 %v697
    %706 = vmatprep.subr.bf16.mxu0 0
    %707 = vmatpush1.bf16.msra.mxu0 0
    %708 = vmatprep.subr.bf16.mxu0 0
    %709 = vmatpush1.bf16.msra.mxu0 0
    %710 = vmatprep.subr.bf16.mxu0 0
    %711 = vmatpush1.bf16.msra.mxu0 0
    %712 = vmatprep.subr.bf16.mxu0 0
    %713 = vmatpush1.bf16.msra.mxu0 0
    %714 = vmatprep.subr.bf16.mxu0 0
    %715 = vmatpush1.bf16.msra.mxu0 0
    %716 = vmatprep.subr.bf16.mxu0 0
    %717 = vmatpush1.bf16.msra.mxu0 0
    %718 = vmatprep.subr.bf16.mxu0 0
    %719 = vmatpush1.bf16.msra.mxu0 0
    %720 = vmatprep.subr.bf16.mxu0 0
    %721 = vmatpush1.bf16.msra.mxu0 0
    %722 = vmatprep.subr.bf16.mxu0 0
    %723 = vmatpush1.bf16.msra.mxu0 0
    %724 = vmatprep.subr.bf16.mxu0 0
    %725 = vmatpush1.bf16.msra.mxu0 0
    %726 = vmatprep.subr.bf16.mxu0 0
    %727 = vmatpush1.bf16.msra.mxu0 0
    %728 = vmatprep.subr.bf16.mxu0 0
    %729 = vmatpush1.bf16.msra.mxu0 0
    %730 = vmatprep.subr.bf16.mxu0 0
    %731 = vmatpush1.bf16.msra.mxu0 0
    %732 = vmatprep.subr.bf16.mxu0 0
    %733 = vmatpush1.bf16.msra.mxu0 0
    %734 = vmatprep.mubr.bf16.mxu0 0
    %735 = vmatmul.mubr.bf16.gmra.mrb[0].mxu0 %v700
    %v736 = vpop.f32.mrb[0].mxu0
    %v737 = vadd.f32 0.0, %v736
    %v738 = vpop.f32.mrb[0].mxu0
    %v739 = vadd.f32 0.0, %v738
    %v740 = vpop.f32.mrb[0].mxu0
    %v741 = vpop.f32.mrb[0].mxu0
    %742 = vdwg.mxu0
    %v743 = vadd.f32 %v535, %v737
    %v744 = vadd.f32 %v537, %v739
    %v745 = vld [vmem:[#allocation9] sm:$0x3]
    %v747 = vlaneseq
    %v748 = vshrl.u32 %v747, 7
    %v749 = vsub.s32 0, %v748
    %v750 = vrot.slane %v745, %v749
    %v751 = vlaneseq
    %v752 = vshrl.u32 %v751, 7
    %v753 = vsub.s32 1, %v752
    %v754 = vrot.slane %v745, %v753
    %v757 = vadd.f32 %v743, %v750
    %v758 = vadd.f32 %v744, %v754
    %v759 = vtanh.pop %v757
    %v760 = vtanh.pop %v758
    %v761 = vpack.c.bf16 %v759, %v759
    %v762 = vld [vmem:[%s10] sm:$0xff]
    %v763 = vld [vmem:[%s10 + $0x8] sm:$0xff]
    %v764 = vld [vmem:[%s10 + $0x10] sm:$0xff]
    %v765 = vld [vmem:[%s10 + $0x18] sm:$0xff]
    %v766 = vld [vmem:[%s10 + $0x20] sm:$0xff]
    %v767 = vld [vmem:[%s10 + $0x28] sm:$0xff]
    %v768 = vld [vmem:[%s10 + $0x30] sm:$0xff]
    %v769 = vld [vmem:[%s10 + $0x38] sm:$0xff]
    %v770 = vld [vmem:[%s10 + $0x40] sm:$0xff]
    %v771 = vld [vmem:[%s10 + $0x48] sm:$0xff]
    %v772 = vld [vmem:[%s10 + $0x50] sm:$0xff]
    %v773 = vld [vmem:[%s10 + $0x58] sm:$0xff]
    %v774 = vld [vmem:[%s10 + $0x60] sm:$0xff]
    %v775 = vld [vmem:[%s10 + $0x68] sm:$0xff]
    %v776 = vld [vmem:[%s10 + $0x70] sm:$0xff]
    %v777 = vld [vmem:[%s10 + $0x78] sm:$0xff]
    %v778 = vpack.c.bf16 %v763, %v762
    %v779 = vpack.c.bf16 %v765, %v764
    %v780 = vpack.c.bf16 %v767, %v766
    %v781 = vpack.c.bf16 %v769, %v768
    %v782 = vpack.c.bf16 %v771, %v770
    %v783 = vpack.c.bf16 %v773, %v772
    %v784 = vpack.c.bf16 %v775, %v774
    %v785 = vpack.c.bf16 %v777, %v776
    %v786 = vld [vmem:[#allocation10] sm:$0x1]
    %v788 = vlaneseq
    %v789 = vshrl.u32 %v788, 7
    %v790 = vsub.s32 0, %v789
    %v791 = vrot.slane %v786, %v790
    %793 = vmatprep.subr.bf16.mxu0 0
    %794 = vmatpush1.bf16.msra.mxu0 %v778
    %795 = vmatprep.subr.bf16.mxu0 0
    %796 = vmatpush1.bf16.msra.mxu0 %v779
    %797 = vmatprep.subr.bf16.mxu0 0
    %798 = vmatpush1.bf16.msra.mxu0 %v780
    %799 = vmatprep.subr.bf16.mxu0 0
    %800 = vmatpush1.bf16.msra.mxu0 %v781
    %801 = vmatprep.subr.bf16.mxu0 0
    %802 = vmatpush1.bf16.msra.mxu0 %v782
    %803 = vmatprep.subr.bf16.mxu0 0
    %804 = vmatpush1.bf16.msra.mxu0 %v783
    %805 = vmatprep.subr.bf16.mxu0 0
    %806 = vmatpush1.bf16.msra.mxu0 %v784
    %807 = vmatprep.subr.bf16.mxu0 0
    %808 = vmatpush1.bf16.msra.mxu0 %v785
    %809 = vmatprep.subr.bf16.mxu0 0
    %810 = vmatpush1.bf16.msra.mxu0 0
    %811 = vmatprep.subr.bf16.mxu0 0
    %812 = vmatpush1.bf16.msra.mxu0 0
    %813 = vmatprep.subr.bf16.mxu0 0
    %814 = vmatpush1.bf16.msra.mxu0 0
    %815 = vmatprep.subr.bf16.mxu0 0
    %816 = vmatpush1.bf16.msra.mxu0 0
    %817 = vmatprep.subr.bf16.mxu0 0
    %818 = vmatpush1.bf16.msra.mxu0 0
    %819 = vmatprep.subr.bf16.mxu0 0
    %820 = vmatpush1.bf16.msra.mxu0 0
    %821 = vmatprep.subr.bf16.mxu0 0
    %822 = vmatpush1.bf16.msra.mxu0 0
    %823 = vmatprep.subr.bf16.mxu0 0
    %824 = vmatpush1.bf16.msra.mxu0 0
    %825 = vmatprep.mubr.bf16.mxu0 0
    %826 = vmatmul.mubr.bf16.gmra.mrb[0].mxu0 %v761
    %v827 = vpop.f32.mrb[0].mxu0
    %v828 = vadd.f32 %v791, %v827
    %v829 = vpop.f32.mrb[0].mxu0
    %v830 = vpop.f32.mrb[0].mxu0
    %v831 = vpop.f32.mrb[0].mxu0
    %832 = vdwg.mxu0
    %v833 = vpack.c.bf16 %v760, %v760
    %v834 = vld [vmem:[%s12] sm:$0xff]
    %v835 = vld [vmem:[%s12 + $0x8] sm:$0xff]
    %v836 = vld [vmem:[%s12 + $0x10] sm:$0xff]
    %v837 = vld [vmem:[%s12 + $0x18] sm:$0xff]
    %v838 = vld [vmem:[%s12 + $0x20] sm:$0xff]
    %v839 = vld [vmem:[%s12 + $0x28] sm:$0xff]
    %v840 = vld [vmem:[%s12 + $0x30] sm:$0xff]
    %v841 = vld [vmem:[%s12 + $0x38] sm:$0xff]
    %v842 = vld [vmem:[%s12 + $0x40] sm:$0xff]
    %v843 = vld [vmem:[%s12 + $0x48] sm:$0xff]
    %v844 = vld [vmem:[%s12 + $0x50] sm:$0xff]
    %v845 = vld [vmem:[%s12 + $0x58] sm:$0xff]
    %v846 = vld [vmem:[%s12 + $0x60] sm:$0xff]
    %v847 = vld [vmem:[%s12 + $0x68] sm:$0xff]
    %v848 = vld [vmem:[%s12 + $0x70] sm:$0xff]
    %v849 = vld [vmem:[%s12 + $0x78] sm:$0xff]
    %v850 = vpack.c.bf16 %v835, %v834
    %v851 = vpack.c.bf16 %v837, %v836
    %v852 = vpack.c.bf16 %v839, %v838
    %v853 = vpack.c.bf16 %v841, %v840
    %v854 = vpack.c.bf16 %v843, %v842
    %v855 = vpack.c.bf16 %v845, %v844
    %v856 = vpack.c.bf16 %v847, %v846
    %v857 = vpack.c.bf16 %v849, %v848
    %v858 = vld [vmem:[#allocation12] sm:$0x1]
    %v860 = vlaneseq
    %v861 = vshrl.u32 %v860, 7
    %v862 = vsub.s32 0, %v861
    %v863 = vrot.slane %v858, %v862
    %865 = vmatprep.subr.bf16.mxu0 0
    %866 = vmatpush1.bf16.msra.mxu0 %v850
    %867 = vmatprep.subr.bf16.mxu0 0
    %868 = vmatpush1.bf16.msra.mxu0 %v851
    %869 = vmatprep.subr.bf16.mxu0 0
    %870 = vmatpush1.bf16.msra.mxu0 %v852
    %871 = vmatprep.subr.bf16.mxu0 0
    %872 = vmatpush1.bf16.msra.mxu0 %v853
    %873 = vmatprep.subr.bf16.mxu0 0
    %874 = vmatpush1.bf16.msra.mxu0 %v854
    %875 = vmatprep.subr.bf16.mxu0 0
    %876 = vmatpush1.bf16.msra.mxu0 %v855
    %877 = vmatprep.subr.bf16.mxu0 0
    %878 = vmatpush1.bf16.msra.mxu0 %v856
    %879 = vmatprep.subr.bf16.mxu0 0
    %880 = vmatpush1.bf16.msra.mxu0 %v857
    %881 = vmatprep.subr.bf16.mxu0 0
    %882 = vmatpush1.bf16.msra.mxu0 0
    %883 = vmatprep.subr.bf16.mxu0 0
    %884 = vmatpush1.bf16.msra.mxu0 0
    %885 = vmatprep.subr.bf16.mxu0 0
    %886 = vmatpush1.bf16.msra.mxu0 0
    %887 = vmatprep.subr.bf16.mxu0 0
    %888 = vmatpush1.bf16.msra.mxu0 0
    %889 = vmatprep.subr.bf16.mxu0 0
    %890 = vmatpush1.bf16.msra.mxu0 0
    %891 = vmatprep.subr.bf16.mxu0 0
    %892 = vmatpush1.bf16.msra.mxu0 0
    %893 = vmatprep.subr.bf16.mxu0 0
    %894 = vmatpush1.bf16.msra.mxu0 0
    %895 = vmatprep.subr.bf16.mxu0 0
    %896 = vmatpush1.bf16.msra.mxu0 0
    %897 = vmatprep.mubr.bf16.mxu0 0
    %898 = vmatmul.mubr.bf16.gmra.mrb[0].mxu0 %v833
    %v899 = vpop.f32.mrb[0].mxu0
    %v900 = vadd.f32 %v863, %v899
    %v901 = vpop.f32.mrb[0].mxu0
    %v902 = vpop.f32.mrb[0].mxu0
    %v903 = vpop.f32.mrb[0].mxu0
    %904 = vdwg.mxu0
    %v905 = vld [vmem:[%s2] sm:$0xf]
    %v906 = vld [vmem:[%s2 + $0x4] sm:$0xf]
    %v907 = vmul.f32 %v900, 1.442695
    %v908 = vpow.pop %v907
    %v910 = vcombine.high %v908, %v908
    %v912 = vmul.f32 %v905, %v908
    %v913 = vmul.f32 %v906, %v910
    %v915 = vcombine.high %v828, %v828
    %v917 = vadd.f32 %v912, %v828
    %v918 = vadd.f32 %v913, %v915
    %v921 = vcombine.low %v917, %v918
    %923 = vrot.lane.b32.xlu0 %v828, 32
    %v924 = vpop.permute.xlu0 %923
    %927 = vrot.lane.b32.xlu0 %v900, 64
    %v928 = vpop.permute.xlu0 %927
    %v930 = vsel %vm157, %v921, %v924
    %vm931 = vcmask 523264
    %v932 = vsel %vm931, %v930, %v928
    %vm933 = vcmask 785408
    %934 = vst.msk [vmem:[%s14] sm:$0xff] %vm933, %v932
    // Predicated region
    $region86: #{_lambda_.9} parent=1 // pred_check
      _
    $region87: #{_lambda_.9} parent=1 // pred_check_branch
      %936 = sbr.rel (0) target = $region89
    $region88: #{_lambda_.9} parent=1 // pred_region
      _
    $region89: #{_lambda_.9} parent=1 // pred_fallthru
      _
    // Predicated region
    $region90: #{_lambda_.9} parent=1 // pred_check
      _
    $region91: #{_lambda_.9} parent=1 // pred_check_branch
      %938 = sbr.rel (0) target = $region93
    $region92: #{_lambda_.9} parent=1 // pred_region
      _
    $region93: #{_lambda_.9} parent=1 // pred_fallthru
      _
    %939 = vsyncpa [#allocation3], 1
    %940 = vsyncpa [#allocation5], 1
    %941 = vsyncpa [#allocation8], 1
    %942 = vsyncpa [#allocation11], 1

// kernel: _lambda_.6
$region0: #{_lambda_.6}
  #allocation0 [shape = 'u32[]', space=smem, size = 0x4, offset = 0x4, fixed_abs, tag = 'smem constant byte address 0x4 - core index']
  #allocation1 [shape = 'u32[144,128]{1,0:T(1,128)}', space=vmem, size = 0x12000, scoped, tag = 'internal scratch']
  %s0 = inlined_call_operand.vmem [shape: f32[2,16,16], index: 0, kind: input, shape index: {}]
  %s1 = inlined_call_operand.vmem [shape: f32[2,16,4], index: 1, kind: input, shape index: {}]
  %s2 = inlined_call_operand.vmem [shape: f32[2,16,32], index: 2, kind: input, shape index: {}]
  %s3 = inlined_call_operand.vmem [shape: f32[4,128], index: 3, kind: input, shape index: {}]
  %s4 = inlined_call_operand.vmem [shape: f32[1,128], index: 4, kind: input, shape index: {}]
  %s5 = inlined_call_operand.hbm [shape: f32[128,32], index: 5, kind: input, shape index: {}]
  %s6 = inlined_call_operand.hbm [shape: f32[1,32], index: 6, kind: input, shape index: {}]
  %s7 = inlined_call_operand.vmem [shape: f32[3,32,32], index: 7, kind: input, shape index: {}]
  %s8 = inlined_call_operand.vmem [shape: f32[4,32,256], index: 8, kind: input, shape index: {}]
  %s9 = inlined_call_operand.hbm [shape: f32[1,256], index: 9, kind: input, shape index: {}]
  %s10 = inlined_call_operand.hbm [shape: f32[128,32], index: 10, kind: input, shape index: {}]
  %s11 = inlined_call_operand.hbm [shape: f32[1,32], index: 11, kind: input, shape index: {}]
  %s12 = inlined_call_operand.hbm [shape: f32[128,32], index: 12, kind: input, shape index: {}]
  %s13 = inlined_call_operand.hbm [shape: f32[1,32], index: 13, kind: input, shape index: {}]
  %s14 = inlined_call_operand.vmem [shape: f32[32,96], index: 14, kind: output, shape index: {}]
  %s15 = sld [smem:[#allocation0]]
  $region94: #{_lambda_.6} parent=0
    _
  %s17 = ssub.s32 1, %s15
  %s18 = scalar_select 0, %s17, %s15
  $region1: #{_lambda_.6} parent=0
    #allocation2 [shape = 'u8[65536]{0}', space=vmem, size = 0x10000, scoped, tag = 'input window, operand 5, single buffered']
    #allocation3 [shape = 's32[1]{0}', space=sflag, size = 0x4, scoped, tag = 'scoped memory for _lambda_.6']
    #allocation4 [shape = 'u8[512]{0}', space=vmem, size = 0x400, scoped, tag = 'input window, operand 6, single buffered']
    #allocation5 [shape = 's32[1]{0}', space=sflag, size = 0x4, scoped, tag = 'scoped memory for _lambda_.6']
    #allocation6 [shape = 'u8[1024]{0}', space=vmem, size = 0x400, scoped, tag = 'input window, operand 9, single buffered']
    #allocation7 [shape = 'u8[65536]{0}', space=vmem, size = 0x10000, scoped, tag = 'input window, operand 10, single buffered']
    #allocation8 [shape = 's32[1]{0}', space=sflag, size = 0x4, scoped, tag = 'scoped memory for _lambda_.6']
    #allocation9 [shape = 'u8[512]{0}', space=vmem, size = 0x400, scoped, tag = 'input window, operand 11, single buffered']
    #allocation10 [shape = 'u8[65536]{0}', space=vmem, size = 0x10000, scoped, tag = 'input window, operand 12, single buffered']
    #allocation11 [shape = 's32[1]{0}', space=sflag, size = 0x4, scoped, tag = 'scoped memory for _lambda_.6']
    #allocation12 [shape = 'u8[512]{0}', space=vmem, size = 0x400, scoped, tag = 'input window, operand 13, single buffered']
    %19 = vsyncpa [#allocation3], 0
    %20 = vsyncpa [#allocation5], 0
    %21 = vsyncpa [#allocation8], 0
    %22 = vsyncpa [#allocation11], 0
    // Predicated region
    $region2: #{_lambda_.6} parent=1 // pred_check
      _
    $region3: #{_lambda_.6} parent=1 // pred_check_branch
      %24 = sbr.rel (0) target = $region5
    $region4: #{_lambda_.6} parent=1 // pred_region
      _
    $region5: #{_lambda_.6} parent=1 // pred_fallthru
      _
    // Predicated region
    $region6: #{_lambda_.6} parent=1 // pred_check
      _
    $region7: #{_lambda_.6} parent=1 // pred_check_branch
      %26 = sbr.rel (0) target = $region9
    $region8: #{_lambda_.6} parent=1 // pred_region
      _
    $region9: #{_lambda_.6} parent=1 // pred_fallthru
      _
    // Predicated region
    $region10: #{_lambda_.6} parent=1 // pred_check
      _
    $region11: #{_lambda_.6} parent=1 // pred_check_branch
      %28 = sbr.rel (0) target = $region13
    $region12: #{_lambda_.6} parent=1 // pred_region
      _
    $region13: #{_lambda_.6} parent=1 // pred_fallthru
      _
    // Predicated region
    $region14: #{_lambda_.6} parent=1 // pred_check
      _
    $region15: #{_lambda_.6} parent=1 // pred_check_branch
      %30 = sbr.rel (0) target = $region17
    $region16: #{_lambda_.6} parent=1 // pred_region
      _
    $region17: #{_lambda_.6} parent=1 // pred_fallthru
      _
    // Predicated region
    $region18: #{_lambda_.6} parent=1 // pred_check
      _
    $region19: #{_lambda_.6} parent=1 // pred_check_branch
      %32 = sbr.rel (0) target = $region21
    $region20: #{_lambda_.6} parent=1 // pred_region
      _
    $region21: #{_lambda_.6} parent=1 // pred_fallthru
      _
    // Predicated region
    $region22: #{_lambda_.6} parent=1 // pred_check
      _
    $region23: #{_lambda_.6} parent=1 // pred_check_branch
      %34 = sbr.rel (0) target = $region25
    $region24: #{_lambda_.6} parent=1 // pred_region
      %s36 = ssub.s32 2048, 2048
      %37 = vsyncadd [#allocation3], %s36
      %s38 = sshll.u32 [#allocation2], 4
      %s39 = int_to_ptr.vmem [resolvable:$true] %s38
      %44 = dma.hbm_to_vmem [thread:$0]  %s5, 2048, %s39, [#allocation3], 128, 128, 8
    $region25: #{_lambda_.6} parent=1 // pred_fallthru
      _
    // Predicated region
    $region26: #{_lambda_.6} parent=1 // pred_check
      _
    $region27: #{_lambda_.6} parent=1 // pred_check_branch
      %46 = sbr.rel (0) target = $region29
    $region28: #{_lambda_.6} parent=1 // pred_region
      %s48 = ssub.s32 16, 16
      %49 = vsyncadd [#allocation5], %s48
      %s51 = sshll.u32 [#allocation4], 4
      %s52 = int_to_ptr.vmem [resolvable:$true] %s51
      %54 = dma.hbm_to_vmem [thread:$0]  %s6, 16, %s52, [#allocation5]
    $region29: #{_lambda_.6} parent=1 // pred_fallthru
      _
    // Predicated region
    $region30: #{_lambda_.6} parent=1 // pred_check
      _
    $region31: #{_lambda_.6} parent=1 // pred_check_branch
      %56 = sbr.rel (0) target = $region33
    $region32: #{_lambda_.6} parent=1 // pred_region
      _
    $region33: #{_lambda_.6} parent=1 // pred_fallthru
      _
    // Predicated region
    $region34: #{_lambda_.6} parent=1 // pred_check
      _
    $region35: #{_lambda_.6} parent=1 // pred_check_branch
      %58 = sbr.rel (0) target = $region37
    $region36: #{_lambda_.6} parent=1 // pred_region
      _
    $region37: #{_lambda_.6} parent=1 // pred_fallthru
      _
    // Predicated region
    $region38: #{_lambda_.6} parent=1 // pred_check
      _
    $region39: #{_lambda_.6} parent=1 // pred_check_branch
      %60 = sbr.rel (0) target = $region41
    $region40: #{_lambda_.6} parent=1 // pred_region
      %s62 = ssub.s32 32, 32
      %63 = vsyncadd [#allocation5], %s62
      %s65 = sshll.u32 [#allocation6], 4
      %s66 = int_to_ptr.vmem [resolvable:$true] %s65
      %68 = dma.hbm_to_vmem [thread:$0]  %s9, 32, %s66, [#allocation5]
    $region41: #{_lambda_.6} parent=1 // pred_fallthru
      _
    // Predicated region
    $region42: #{_lambda_.6} parent=1 // pred_check
      _
    $region43: #{_lambda_.6} parent=1 // pred_check_branch
      %70 = sbr.rel (0) target = $region45
    $region44: #{_lambda_.6} parent=1 // pred_region
      %s72 = ssub.s32 2048, 2048
      %73 = vsyncadd [#allocation8], %s72
      %s74 = sshll.u32 [#allocation7], 4
      %s75 = int_to_ptr.vmem [resolvable:$true] %s74
      %80 = dma.hbm_to_vmem [thread:$0]  %s10, 2048, %s75, [#allocation8], 128, 128, 8
    $region45: #{_lambda_.6} parent=1 // pred_fallthru
      _
    // Predicated region
    $region46: #{_lambda_.6} parent=1 // pred_check
      _
    $region47: #{_lambda_.6} parent=1 // pred_check_branch
      %82 = sbr.rel (0) target = $region49
    $region48: #{_lambda_.6} parent=1 // pred_region
      %s84 = ssub.s32 16, 16
      %85 = vsyncadd [#allocation8], %s84
      %s87 = sshll.u32 [#allocation9], 4
      %s88 = int_to_ptr.vmem [resolvable:$true] %s87
      %90 = dma.hbm_to_vmem [thread:$0]  %s11, 16, %s88, [#allocation8]
    $region49: #{_lambda_.6} parent=1 // pred_fallthru
      _
    // Predicated region
    $region50: #{_lambda_.6} parent=1 // pred_check
      _
    $region51: #{_lambda_.6} parent=1 // pred_check_branch
      %92 = sbr.rel (0) target = $region53
    $region52: #{_lambda_.6} parent=1 // pred_region
      %s94 = ssub.s32 2048, 2048
      %95 = vsyncadd [#allocation11], %s94
      %s96 = sshll.u32 [#allocation10], 4
      %s97 = int_to_ptr.vmem [resolvable:$true] %s96
      %102 = dma.hbm_to_vmem [thread:$0]  %s12, 2048, %s97, [#allocation11], 128, 128, 8
    $region53: #{_lambda_.6} parent=1 // pred_fallthru
      _
    // Predicated region
    $region54: #{_lambda_.6} parent=1 // pred_check
      _
    $region55: #{_lambda_.6} parent=1 // pred_check_branch
      %104 = sbr.rel (0) target = $region57
    $region56: #{_lambda_.6} parent=1 // pred_region
      %s106 = ssub.s32 16, 16
      %107 = vsyncadd [#allocation11], %s106
      %s109 = sshll.u32 [#allocation12], 4
      %s110 = int_to_ptr.vmem [resolvable:$true] %s109
      %112 = dma.hbm_to_vmem [thread:$0]  %s13, 16, %s110, [#allocation11]
    $region57: #{_lambda_.6} parent=1 // pred_fallthru
      _
    // Predicated region
    $region58: #{_lambda_.6} parent=1 // pred_check
      _
    $region59: #{_lambda_.6} parent=1 // pred_check_branch
      %114 = sbr.rel (0) target = $region61
    $region60: #{_lambda_.6} parent=1 // pred_region
      %115 = dma.done [#allocation3], 2048
    $region61: #{_lambda_.6} parent=1 // pred_fallthru
      _
    // Predicated region
    $region62: #{_lambda_.6} parent=1 // pred_check
      _
    $region63: #{_lambda_.6} parent=1 // pred_check_branch
      %117 = sbr.rel (0) target = $region65
    $region64: #{_lambda_.6} parent=1 // pred_region
      %118 = dma.done [#allocation5], 16
    $region65: #{_lambda_.6} parent=1 // pred_fallthru
      _
    // Predicated region
    $region66: #{_lambda_.6} parent=1 // pred_check
      _
    $region67: #{_lambda_.6} parent=1 // pred_check_branch
      %120 = sbr.rel (0) target = $region69
    $region68: #{_lambda_.6} parent=1 // pred_region
      %121 = dma.done [#allocation5], 32
    $region69: #{_lambda_.6} parent=1 // pred_fallthru
      _
    // Predicated region
    $region70: #{_lambda_.6} parent=1 // pred_check
      _
    $region71: #{_lambda_.6} parent=1 // pred_check_branch
      %123 = sbr.rel (0) target = $region73
    $region72: #{_lambda_.6} parent=1 // pred_region
      %124 = dma.done [#allocation8], 2048
    $region73: #{_lambda_.6} parent=1 // pred_fallthru
      _
    // Predicated region
    $region74: #{_lambda_.6} parent=1 // pred_check
      _
    $region75: #{_lambda_.6} parent=1 // pred_check_branch
      %126 = sbr.rel (0) target = $region77
    $region76: #{_lambda_.6} parent=1 // pred_region
      %127 = dma.done [#allocation8], 16
    $region77: #{_lambda_.6} parent=1 // pred_fallthru
      _
    // Predicated region
    $region78: #{_lambda_.6} parent=1 // pred_check
      _
    $region79: #{_lambda_.6} parent=1 // pred_check_branch
      %129 = sbr.rel (0) target = $region81
    $region80: #{_lambda_.6} parent=1 // pred_region
      %130 = dma.done [#allocation11], 2048
    $region81: #{_lambda_.6} parent=1 // pred_fallthru
      _
    // Predicated region
    $region82: #{_lambda_.6} parent=1 // pred_check
      _
    $region83: #{_lambda_.6} parent=1 // pred_check_branch
      %132 = sbr.rel (0) target = $region85
    $region84: #{_lambda_.6} parent=1 // pred_region
      %133 = dma.done [#allocation11], 16
    $region85: #{_lambda_.6} parent=1 // pred_fallthru
      _
    %v135 = vld [vmem:[%s0] sm:$0xff]
    %v136 = vld [vmem:[%s0 + $0x8] sm:$0xff]
    %v137 = vld [vmem:[%s0 + $0x10] sm:$0xff]
    %v138 = vld [vmem:[%s0 + $0x18] sm:$0xff]
    %v139 = vpack.c.bf16 %v136, %v135
    %v140 = vpack.c.bf16 %v138, %v137
    %v141 = vld [vmem:[%s1] sm:$0xff]
    %v142 = vld [vmem:[%s1 + $0x8] sm:$0xff]
    %v143 = vld [vmem:[%s1 + $0x10] sm:$0xff]
    %v144 = vld [vmem:[%s1 + $0x18] sm:$0xff]
    %v145 = vpack.c.bf16 %v142, %v141
    %v146 = vpack.c.bf16 %v144, %v143
    %v147 = vld [vmem:[%s3] sm:$0xf]
    %v148 = vpack.c.bf16 %v147, %v147
    %v149 = vld [vmem:[%s4] sm:$0x1]
    %v151 = vlaneseq
    %v152 = vshrl.u32 %v151, 7
    %v153 = vsub.s32 0, %v152
    %v154 = vrot.slane %v149, %v153
    %vm156 = vcmask 31744
    %v158 = vsel %vm156, %v145, 0
    %v161 = vsel %vm156, %v146, 0
    %vm163 = vcmask 1041408
    %v165 = vsel %vm163, %v148, 0
    %167 = vmatprep.subr.bf16.mxu0 0
    %168 = vmatpush1.bf16.msra.mxu0 %v165
    %169 = vmatprep.subr.bf16.mxu0 0
    %170 = vmatpush1.bf16.msra.mxu0 0
    %171 = vmatprep.subr.bf16.mxu0 0
    %172 = vmatpush1.bf16.msra.mxu0 0
    %173 = vmatprep.subr.bf16.mxu0 0
    %174 = vmatpush1.bf16.msra.mxu0 0
    %175 = vmatprep.subr.bf16.mxu0 0
    %176 = vmatpush1.bf16.msra.mxu0 0
    %177 = vmatprep.subr.bf16.mxu0 0
    %178 = vmatpush1.bf16.msra.mxu0 0
    %179 = vmatprep.subr.bf16.mxu0 0
    %180 = vmatpush1.bf16.msra.mxu0 0
    %181 = vmatprep.subr.bf16.mxu0 0
    %182 = vmatpush1.bf16.msra.mxu0 0
    %183 = vmatprep.subr.bf16.mxu0 0
    %184 = vmatpush1.bf16.msra.mxu0 0
    %185 = vmatprep.subr.bf16.mxu0 0
    %186 = vmatpush1.bf16.msra.mxu0 0
    %187 = vmatprep.subr.bf16.mxu0 0
    %188 = vmatpush1.bf16.msra.mxu0 0
    %189 = vmatprep.subr.bf16.mxu0 0
    %190 = vmatpush1.bf16.msra.mxu0 0
    %191 = vmatprep.subr.bf16.mxu0 0
    %192 = vmatpush1.bf16.msra.mxu0 0
    %193 = vmatprep.subr.bf16.mxu0 0
    %194 = vmatpush1.bf16.msra.mxu0 0
    %195 = vmatprep.subr.bf16.mxu0 0
    %196 = vmatpush1.bf16.msra.mxu0 0
    %197 = vmatprep.subr.bf16.mxu0 0
    %198 = vmatpush1.bf16.msra.mxu0 0
    %199 = vmatprep.mubr.bf16.mxu0 0
    %200 = vmatmul.mubr.bf16.gmra.mrb[0].mxu0 %v158
    %v201 = vpop.f32.mrb[0].mxu0
    %v202 = vadd.f32 %v154, %v201
    %v203 = vpop.f32.mrb[0].mxu0
    %v204 = vpop.f32.mrb[0].mxu0
    %v205 = vadd.f32 %v154, %v204
    %v206 = vpop.f32.mrb[0].mxu0
    %207 = vmatprep.mubr.bf16.mxu0 0
    %208 = vmatmul.mubr.bf16.gmra.mrb[0].mxu0 %v161
    %v209 = vpop.f32.mrb[0].mxu0
    %v210 = vadd.f32 %v154, %v209
    %v211 = vpop.f32.mrb[0].mxu0
    %v212 = vpop.f32.mrb[0].mxu0
    %v213 = vadd.f32 %v154, %v212
    %v214 = vpop.f32.mrb[0].mxu0
    %215 = vdwg.mxu0
    %v216 = vtanh.pop %v202
    %v217 = vtanh.pop %v205
    %v218 = vtanh.pop %v210
    %v219 = vtanh.pop %v213
    %v220 = vpack.c.bf16 %v217, %v216
    %v221 = vpack.c.bf16 %v219, %v218
    %v222 = vld [vmem:[#allocation2] sm:$0xff]
    %v223 = vld [vmem:[#allocation2 + $0x8] sm:$0xff]
    %v224 = vld [vmem:[#allocation2 + $0x10] sm:$0xff]
    %v225 = vld [vmem:[#allocation2 + $0x18] sm:$0xff]
    %v226 = vld [vmem:[#allocation2 + $0x20] sm:$0xff]
    %v227 = vld [vmem:[#allocation2 + $0x28] sm:$0xff]
    %v228 = vld [vmem:[#allocation2 + $0x30] sm:$0xff]
    %v229 = vld [vmem:[#allocation2 + $0x38] sm:$0xff]
    %v230 = vld [vmem:[#allocation2 + $0x40] sm:$0xff]
    %v231 = vld [vmem:[#allocation2 + $0x48] sm:$0xff]
    %v232 = vld [vmem:[#allocation2 + $0x50] sm:$0xff]
    %v233 = vld [vmem:[#allocation2 + $0x58] sm:$0xff]
    %v234 = vld [vmem:[#allocation2 + $0x60] sm:$0xff]
    %v235 = vld [vmem:[#allocation2 + $0x68] sm:$0xff]
    %v236 = vld [vmem:[#allocation2 + $0x70] sm:$0xff]
    %v237 = vld [vmem:[#allocation2 + $0x78] sm:$0xff]
    %v238 = vpack.c.bf16 %v223, %v222
    %v239 = vpack.c.bf16 %v225, %v224
    %v240 = vpack.c.bf16 %v227, %v226
    %v241 = vpack.c.bf16 %v229, %v228
    %v242 = vpack.c.bf16 %v231, %v230
    %v243 = vpack.c.bf16 %v233, %v232
    %v244 = vpack.c.bf16 %v235, %v234
    %v245 = vpack.c.bf16 %v237, %v236
    %v246 = vld [vmem:[#allocation4] sm:$0x1]
    %v248 = vlaneseq
    %v249 = vshrl.u32 %v248, 7
    %v250 = vsub.s32 0, %v249
    %v251 = vrot.slane %v246, %v250
    %253 = vmatprep.subr.bf16.mxu0 0
    %254 = vmatpush1.bf16.msra.mxu0 %v238
    %255 = vmatprep.subr.bf16.mxu0 0
    %256 = vmatpush1.bf16.msra.mxu0 %v239
    %257 = vmatprep.subr.bf16.mxu0 0
    %258 = vmatpush1.bf16.msra.mxu0 %v240
    %259 = vmatprep.subr.bf16.mxu0 0
    %260 = vmatpush1.bf16.msra.mxu0 %v241
    %261 = vmatprep.subr.bf16.mxu0 0
    %262 = vmatpush1.bf16.msra.mxu0 %v242
    %263 = vmatprep.subr.bf16.mxu0 0
    %264 = vmatpush1.bf16.msra.mxu0 %v243
    %265 = vmatprep.subr.bf16.mxu0 0
    %266 = vmatpush1.bf16.msra.mxu0 %v244
    %267 = vmatprep.subr.bf16.mxu0 0
    %268 = vmatpush1.bf16.msra.mxu0 %v245
    %269 = vmatprep.subr.bf16.mxu0 0
    %270 = vmatpush1.bf16.msra.mxu0 0
    %271 = vmatprep.subr.bf16.mxu0 0
    %272 = vmatpush1.bf16.msra.mxu0 0
    %273 = vmatprep.subr.bf16.mxu0 0
    %274 = vmatpush1.bf16.msra.mxu0 0
    %275 = vmatprep.subr.bf16.mxu0 0
    %276 = vmatpush1.bf16.msra.mxu0 0
    %277 = vmatprep.subr.bf16.mxu0 0
    %278 = vmatpush1.bf16.msra.mxu0 0
    %279 = vmatprep.subr.bf16.mxu0 0
    %280 = vmatpush1.bf16.msra.mxu0 0
    %281 = vmatprep.subr.bf16.mxu0 0
    %282 = vmatpush1.bf16.msra.mxu0 0
    %283 = vmatprep.subr.bf16.mxu0 0
    %284 = vmatpush1.bf16.msra.mxu0 0
    %285 = vmatprep.mubr.bf16.mxu0 0
    %286 = vmatmul.mubr.bf16.gmra.mrb[0].mxu0 %v220
    %v287 = vpop.f32.mrb[0].mxu0
    %v288 = vadd.f32 %v251, %v287
    %v289 = vpop.f32.mrb[0].mxu0
    %v290 = vpop.f32.mrb[0].mxu0
    %v291 = vadd.f32 %v251, %v290
    %v292 = vpop.f32.mrb[0].mxu0
    %293 = vmatprep.mubr.bf16.mxu0 0
    %294 = vmatmul.mubr.bf16.gmra.mrb[0].mxu0 %v221
    %v295 = vpop.f32.mrb[0].mxu0
    %v296 = vadd.f32 %v251, %v295
    %v297 = vpop.f32.mrb[0].mxu0
    %v298 = vpop.f32.mrb[0].mxu0
    %v299 = vadd.f32 %v251, %v298
    %v300 = vpop.f32.mrb[0].mxu0
    %301 = vdwg.mxu0
    %v302 = vtanh.pop %v288
    %v303 = vtanh.pop %v291
    %v304 = vtanh.pop %v296
    %v305 = vtanh.pop %v299
    %v306 = vpack.c.bf16 %v303, %v302
    %v307 = vpack.c.bf16 %v305, %v304
    %v308 = vld [vmem:[%s8] sm:$0xff]
    %v309 = vld [vmem:[%s8 + $0x8] sm:$0xff]
    %v310 = vld [vmem:[%s8 + $0x10] sm:$0xff]
    %v311 = vld [vmem:[%s8 + $0x18] sm:$0xff]
    %v312 = vld [vmem:[%s8 + $0x20] sm:$0xff]
    %v313 = vld [vmem:[%s8 + $0x28] sm:$0xff]
    %v314 = vld [vmem:[%s8 + $0x30] sm:$0xff]
    %v315 = vld [vmem:[%s8 + $0x38] sm:$0xff]
    %v316 = vpack.c.bf16 %v310, %v308
    %v317 = vpack.c.bf16 %v311, %v309
    %v318 = vpack.c.bf16 %v314, %v312
    %v319 = vpack.c.bf16 %v315, %v313
    %v320 = vld [vmem:[%s7] sm:$0xff]
    %v321 = vld [vmem:[%s7 + $0x8] sm:$0xff]
    %v322 = vld [vmem:[%s7 + $0x10] sm:$0xff]
    %v323 = vld [vmem:[%s7 + $0x18] sm:$0xff]
    %v324 = vpack.c.bf16 %v321, %v320
    %v325 = vpack.c.bf16 %v323, %v322
    %vm326 = vcmask 261120
    %v328 = vsel %vm326, %v306, 0
    %v331 = vsel %vm326, %v307, 0
    %333 = vmatprep.subr.bf16.mxu0 0
    %334 = vmatpush1.bf16.msra.mxu0 %v324
    %335 = vmatprep.subr.bf16.mxu0 0
    %336 = vmatpush1.bf16.msra.mxu0 %v325
    %337 = vmatprep.subr.bf16.mxu0 0
    %338 = vmatpush1.bf16.msra.mxu0 0
    %339 = vmatprep.subr.bf16.mxu0 0
    %340 = vmatpush1.bf16.msra.mxu0 0
    %341 = vmatprep.subr.bf16.mxu0 0
    %342 = vmatpush1.bf16.msra.mxu0 0
    %343 = vmatprep.subr.bf16.mxu0 0
    %344 = vmatpush1.bf16.msra.mxu0 0
    %345 = vmatprep.subr.bf16.mxu0 0
    %346 = vmatpush1.bf16.msra.mxu0 0
    %347 = vmatprep.subr.bf16.mxu0 0
    %348 = vmatpush1.bf16.msra.mxu0 0
    %349 = vmatprep.subr.bf16.mxu0 0
    %350 = vmatpush1.bf16.msra.mxu0 0
    %351 = vmatprep.subr.bf16.mxu0 0
    %352 = vmatpush1.bf16.msra.mxu0 0
    %353 = vmatprep.subr.bf16.mxu0 0
    %354 = vmatpush1.bf16.msra.mxu0 0
    %355 = vmatprep.subr.bf16.mxu0 0
    %356 = vmatpush1.bf16.msra.mxu0 0
    %357 = vmatprep.subr.bf16.mxu0 0
    %358 = vmatpush1.bf16.msra.mxu0 0
    %359 = vmatprep.subr.bf16.mxu0 0
    %360 = vmatpush1.bf16.msra.mxu0 0
    %361 = vmatprep.subr.bf16.mxu0 0
    %362 = vmatpush1.bf16.msra.mxu0 0
    %363 = vmatprep.subr.bf16.mxu0 0
    %364 = vmatpush1.bf16.msra.mxu0 0
    %365 = vmatprep.mubr.bf16.mxu0 0
    %366 = vmatmul.mubr.bf16.gmra.mrb[0].mxu0 %v328
    %v367 = vpop.f32.mrb[0].mxu0
    %v368 = vadd.f32 0.0, %v367
    %v369 = vpop.f32.mrb[0].mxu0
    %v370 = vpop.f32.mrb[0].mxu0
    %v371 = vadd.f32 0.0, %v370
    %v372 = vpop.f32.mrb[0].mxu0
    %373 = vmatprep.mubr.bf16.mxu0 0
    %374 = vmatmul.mubr.bf16.gmra.mrb[0].mxu0 %v331
    %v375 = vpop.f32.mrb[0].mxu0
    %v376 = vadd.f32 0.0, %v375
    %v377 = vpop.f32.mrb[0].mxu0
    %v378 = vpop.f32.mrb[0].mxu0
    %v379 = vadd.f32 0.0, %v378
    %v380 = vpop.f32.mrb[0].mxu0
    %381 = vdwg.mxu0
    %v382 = vpack.c.bf16 %v371, %v368
    %v383 = vpack.c.bf16 %v379, %v376
    %vm384 = vcmask 130048
    %v386 = vsel %vm384, %v139, 0
    %388 = vmatprep.subr.bf16.mxu0 0
    %389 = vmatpush1.bf16.msra.mxu0 %v382
    %390 = vmatprep.subr.bf16.mxu0 0
    %391 = vmatpush1.bf16.msra.mxu0 0
    %392 = vmatprep.subr.bf16.mxu0 0
    %393 = vmatpush1.bf16.msra.mxu0 0
    %394 = vmatprep.subr.bf16.mxu0 0
    %395 = vmatpush1.bf16.msra.mxu0 0
    %396 = vmatprep.subr.bf16.mxu0 0
    %397 = vmatpush1.bf16.msra.mxu0 0
    %398 = vmatprep.subr.bf16.mxu0 0
    %399 = vmatpush1.bf16.msra.mxu0 0
    %400 = vmatprep.subr.bf16.mxu0 0
    %401 = vmatpush1.bf16.msra.mxu0 0
    %402 = vmatprep.subr.bf16.mxu0 0
    %403 = vmatpush1.bf16.msra.mxu0 0
    %404 = vmatprep.subr.bf16.mxu0 0
    %405 = vmatpush1.bf16.msra.mxu0 0
    %406 = vmatprep.subr.bf16.mxu0 0
    %407 = vmatpush1.bf16.msra.mxu0 0
    %408 = vmatprep.subr.bf16.mxu0 0
    %409 = vmatpush1.bf16.msra.mxu0 0
    %410 = vmatprep.subr.bf16.mxu0 0
    %411 = vmatpush1.bf16.msra.mxu0 0
    %412 = vmatprep.subr.bf16.mxu0 0
    %413 = vmatpush1.bf16.msra.mxu0 0
    %414 = vmatprep.subr.bf16.mxu0 0
    %415 = vmatpush1.bf16.msra.mxu0 0
    %416 = vmatprep.subr.bf16.mxu0 0
    %417 = vmatpush1.bf16.msra.mxu0 0
    %418 = vmatprep.subr.bf16.mxu0 0
    %419 = vmatpush1.bf16.msra.mxu0 0
    %420 = vmatprep.mubr.bf16.mxu0 0
    %421 = vmatmul.mubr.bf16.gmra.mrb[0].mxu0 %v386
    %v422 = vpop.f32.mrb[0].mxu0
    %v423 = vadd.f32 0.0, %v422
    %v424 = vpop.f32.mrb[0].mxu0
    %v425 = vpop.f32.mrb[0].mxu0
    %v426 = vadd.f32 0.0, %v425
    %v427 = vpop.f32.mrb[0].mxu0
    %428 = vdwg.mxu0
    %v430 = vsel %vm384, %v140, 0
    %432 = vmatprep.subr.bf16.mxu0 0
    %433 = vmatpush1.bf16.msra.mxu0 %v383
    %434 = vmatprep.subr.bf16.mxu0 0
    %435 = vmatpush1.bf16.msra.mxu0 0
    %436 = vmatprep.subr.bf16.mxu0 0
    %437 = vmatpush1.bf16.msra.mxu0 0
    %438 = vmatprep.subr.bf16.mxu0 0
    %439 = vmatpush1.bf16.msra.mxu0 0
    %440 = vmatprep.subr.bf16.mxu0 0
    %441 = vmatpush1.bf16.msra.mxu0 0
    %442 = vmatprep.subr.bf16.mxu0 0
    %443 = vmatpush1.bf16.msra.mxu0 0
    %444 = vmatprep.subr.bf16.mxu0 0
    %445 = vmatpush1.bf16.msra.mxu0 0
    %446 = vmatprep.subr.bf16.mxu0 0
    %447 = vmatpush1.bf16.msra.mxu0 0
    %448 = vmatprep.subr.bf16.mxu0 0
    %449 = vmatpush1.bf16.msra.mxu0 0
    %450 = vmatprep.subr.bf16.mxu0 0
    %451 = vmatpush1.bf16.msra.mxu0 0
    %452 = vmatprep.subr.bf16.mxu0 0
    %453 = vmatpush1.bf16.msra.mxu0 0
    %454 = vmatprep.subr.bf16.mxu0 0
    %455 = vmatpush1.bf16.msra.mxu0 0
    %456 = vmatprep.subr.bf16.mxu0 0
    %457 = vmatpush1.bf16.msra.mxu0 0
    %458 = vmatprep.subr.bf16.mxu0 0
    %459 = vmatpush1.bf16.msra.mxu0 0
    %460 = vmatprep.subr.bf16.mxu0 0
    %461 = vmatpush1.bf16.msra.mxu0 0
    %462 = vmatprep.subr.bf16.mxu0 0
    %463 = vmatpush1.bf16.msra.mxu0 0
    %464 = vmatprep.mubr.bf16.mxu0 0
    %465 = vmatmul.mubr.bf16.gmra.mrb[0].mxu0 %v430
    %v466 = vpop.f32.mrb[0].mxu0
    %v467 = vadd.f32 0.0, %v466
    %v468 = vpop.f32.mrb[0].mxu0
    %v469 = vpop.f32.mrb[0].mxu0
    %v470 = vadd.f32 0.0, %v469
    %v471 = vpop.f32.mrb[0].mxu0
    %472 = vdwg.mxu0
    %v473 = vtanh.pop %v423
    %v474 = vtanh.pop %v426
    %v475 = vtanh.pop %v467
    %v476 = vtanh.pop %v470
    %v477 = vpack.c.bf16 %v474, %v473
    %v478 = vpack.c.bf16 %v476, %v475
    %s479 = scalar_lea.vmem %s8, 64
    %v480 = vld [vmem:[%s479] sm:$0xff]
    %v481 = vld [vmem:[%s479 + $0x8] sm:$0xff]
    %v482 = vld [vmem:[%s479 + $0x10] sm:$0xff]
    %v483 = vld [vmem:[%s479 + $0x18] sm:$0xff]
    %v484 = vld [vmem:[%s479 + $0x20] sm:$0xff]
    %v485 = vld [vmem:[%s479 + $0x28] sm:$0xff]
    %v486 = vld [vmem:[%s479 + $0x30] sm:$0xff]
    %v487 = vld [vmem:[%s479 + $0x38] sm:$0xff]
    %v488 = vpack.c.bf16 %v482, %v480
    %v489 = vpack.c.bf16 %v483, %v481
    %v490 = vpack.c.bf16 %v486, %v484
    %v491 = vpack.c.bf16 %v487, %v485
    %v493 = vsel %vm326, %v477, 0
    %v496 = vsel %vm326, %v478, 0
    %498 = vmatprep.subr.bf16.mxu0 %v489
    %499 = vmatpush1.bf16.msra.mxu0 %v488
    %500 = vmatprep.subr.bf16.mxu0 %v491
    %501 = vmatpush1.bf16.msra.mxu0 %v490
    %502 = vmatprep.subr.bf16.mxu0 0
    %503 = vmatpush1.bf16.msra.mxu0 0
    %504 = vmatprep.subr.bf16.mxu0 0
    %505 = vmatpush1.bf16.msra.mxu0 0
    %506 = vmatprep.subr.bf16.mxu0 0
    %507 = vmatpush1.bf16.msra.mxu0 0
    %508 = vmatprep.subr.bf16.mxu0 0
    %509 = vmatpush1.bf16.msra.mxu0 0
    %510 = vmatprep.subr.bf16.mxu0 0
    %511 = vmatpush1.bf16.msra.mxu0 0
    %512 = vmatprep.subr.bf16.mxu0 0
    %513 = vmatpush1.bf16.msra.mxu0 0
    %514 = vmatprep.subr.bf16.mxu0 0
    %515 = vmatpush1.bf16.msra.mxu0 0
    %516 = vmatprep.subr.bf16.mxu0 0
    %517 = vmatpush1.bf16.msra.mxu0 0
    %518 = vmatprep.subr.bf16.mxu0 0
    %519 = vmatpush1.bf16.msra.mxu0 0
    %520 = vmatprep.subr.bf16.mxu0 0
    %521 = vmatpush1.bf16.msra.mxu0 0
    %522 = vmatprep.subr.bf16.mxu0 0
    %523 = vmatpush1.bf16.msra.mxu0 0
    %524 = vmatprep.subr.bf16.mxu0 0
    %525 = vmatpush1.bf16.msra.mxu0 0
    %526 = vmatprep.subr.bf16.mxu0 0
    %527 = vmatpush1.bf16.msra.mxu0 0
    %528 = vmatprep.subr.bf16.mxu0 0
    %529 = vmatpush1.bf16.msra.mxu0 0
    %530 = vmatprep.mubr.bf16.mxu0 0
    %531 = vmatmul.mubr.bf16.gmra.mrb[0].mxu0 %v493
    %v532 = vpop.f32.mrb[0].mxu0
    %v533 = vadd.f32 0.0, %v532
    %v534 = vpop.f32.mrb[0].mxu0
    %v535 = vadd.f32 0.0, %v534
    %v536 = vpop.f32.mrb[0].mxu0
    %v537 = vadd.f32 0.0, %v536
    %v538 = vpop.f32.mrb[0].mxu0
    %v539 = vadd.f32 0.0, %v538
    %540 = vmatprep.mubr.bf16.mxu0 0
    %541 = vmatmul.mubr.bf16.gmra.mrb[0].mxu0 %v496
    %v542 = vpop.f32.mrb[0].mxu0
    %v543 = vadd.f32 0.0, %v542
    %v544 = vpop.f32.mrb[0].mxu0
    %v545 = vadd.f32 0.0, %v544
    %v546 = vpop.f32.mrb[0].mxu0
    %v547 = vadd.f32 0.0, %v546
    %v548 = vpop.f32.mrb[0].mxu0
    %v549 = vadd.f32 0.0, %v548
    %550 = vdwg.mxu0
    %551 = vmatprep.subr.bf16.mxu0 %v317
    %552 = vmatpush1.bf16.msra.mxu0 %v316
    %553 = vmatprep.subr.bf16.mxu0 %v319
    %554 = vmatpush1.bf16.msra.mxu0 %v318
    %555 = vmatprep.subr.bf16.mxu0 0
    %556 = vmatpush1.bf16.msra.mxu0 0
    %557 = vmatprep.subr.bf16.mxu0 0
    %558 = vmatpush1.bf16.msra.mxu0 0
    %559 = vmatprep.subr.bf16.mxu0 0
    %560 = vmatpush1.bf16.msra.mxu0 0
    %561 = vmatprep.subr.bf16.mxu0 0
    %562 = vmatpush1.bf16.msra.mxu0 0
    %563 = vmatprep.subr.bf16.mxu0 0
    %564 = vmatpush1.bf16.msra.mxu0 0
    %565 = vmatprep.subr.bf16.mxu0 0
    %566 = vmatpush1.bf16.msra.mxu0 0
    %567 = vmatprep.subr.bf16.mxu0 0
    %568 = vmatpush1.bf16.msra.mxu0 0
    %569 = vmatprep.subr.bf16.mxu0 0
    %570 = vmatpush1.bf16.msra.mxu0 0
    %571 = vmatprep.subr.bf16.mxu0 0
    %572 = vmatpush1.bf16.msra.mxu0 0
    %573 = vmatprep.subr.bf16.mxu0 0
    %574 = vmatpush1.bf16.msra.mxu0 0
    %575 = vmatprep.subr.bf16.mxu0 0
    %576 = vmatpush1.bf16.msra.mxu0 0
    %577 = vmatprep.subr.bf16.mxu0 0
    %578 = vmatpush1.bf16.msra.mxu0 0
    %579 = vmatprep.subr.bf16.mxu0 0
    %580 = vmatpush1.bf16.msra.mxu0 0
    %581 = vmatprep.subr.bf16.mxu0 0
    %582 = vmatpush1.bf16.msra.mxu0 0
    %583 = vmatprep.mubr.bf16.mxu0 0
    %584 = vmatmul.mubr.bf16.gmra.mrb[0].mxu0 %v328
    %v585 = vpop.f32.mrb[0].mxu0
    %v586 = vadd.f32 %v533, %v585
    %v587 = vpop.f32.mrb[0].mxu0
    %v588 = vadd.f32 %v535, %v587
    %v589 = vpop.f32.mrb[0].mxu0
    %v590 = vadd.f32 %v537, %v589
    %v591 = vpop.f32.mrb[0].mxu0
    %v592 = vadd.f32 %v539, %v591
    %593 = vmatprep.mubr.bf16.mxu0 0
    %594 = vmatmul.mubr.bf16.gmra.mrb[0].mxu0 %v331
    %v595 = vpop.f32.mrb[0].mxu0
    %v596 = vadd.f32 %v543, %v595
    %v597 = vpop.f32.mrb[0].mxu0
    %v598 = vadd.f32 %v545, %v597
    %v599 = vpop.f32.mrb[0].mxu0
    %v600 = vadd.f32 %v547, %v599
    %v601 = vpop.f32.mrb[0].mxu0
    %v602 = vadd.f32 %v549, %v601
    %603 = vdwg.mxu0
    %s604 = scalar_lea.vmem %s7, 32
    %v605 = vld [vmem:[%s604] sm:$0xff]
    %v606 = vld [vmem:[%s604 + $0x8] sm:$0xff]
    %v607 = vld [vmem:[%s604 + $0x10] sm:$0xff]
    %v608 = vld [vmem:[%s604 + $0x18] sm:$0xff]
    %v609 = vpack.c.bf16 %v606, %v605
    %v610 = vpack.c.bf16 %v608, %v607
    %611 = vmatprep.subr.bf16.mxu0 0
    %612 = vmatpush1.bf16.msra.mxu0 %v609
    %613 = vmatprep.subr.bf16.mxu0 0
    %614 = vmatpush1.bf16.msra.mxu0 %v610
    %615 = vmatprep.subr.bf16.mxu0 0
    %616 = vmatpush1.bf16.msra.mxu0 0
    %617 = vmatprep.subr.bf16.mxu0 0
    %618 = vmatpush1.bf16.msra.mxu0 0
    %619 = vmatprep.subr.bf16.mxu0 0
    %620 = vmatpush1.bf16.msra.mxu0 0
    %621 = vmatprep.subr.bf16.mxu0 0
    %622 = vmatpush1.bf16.msra.mxu0 0
    %623 = vmatprep.subr.bf16.mxu0 0
    %624 = vmatpush1.bf16.msra.mxu0 0
    %625 = vmatprep.subr.bf16.mxu0 0
    %626 = vmatpush1.bf16.msra.mxu0 0
    %627 = vmatprep.subr.bf16.mxu0 0
    %628 = vmatpush1.bf16.msra.mxu0 0
    %629 = vmatprep.subr.bf16.mxu0 0
    %630 = vmatpush1.bf16.msra.mxu0 0
    %631 = vmatprep.subr.bf16.mxu0 0
    %632 = vmatpush1.bf16.msra.mxu0 0
    %633 = vmatprep.subr.bf16.mxu0 0
    %634 = vmatpush1.bf16.msra.mxu0 0
    %635 = vmatprep.subr.bf16.mxu0 0
    %636 = vmatpush1.bf16.msra.mxu0 0
    %637 = vmatprep.subr.bf16.mxu0 0
    %638 = vmatpush1.bf16.msra.mxu0 0
    %639 = vmatprep.subr.bf16.mxu0 0
    %640 = vmatpush1.bf16.msra.mxu0 0
    %641 = vmatprep.subr.bf16.mxu0 0
    %642 = vmatpush1.bf16.msra.mxu0 0
    %643 = vmatprep.mubr.bf16.mxu0 0
    %644 = vmatmul.mubr.bf16.gmra.mrb[0].mxu0 %v493
    %v645 = vpop.f32.mrb[0].mxu0
    %v646 = vadd.f32 0.0, %v645
    %v647 = vpop.f32.mrb[0].mxu0
    %v648 = vpop.f32.mrb[0].mxu0
    %v649 = vadd.f32 0.0, %v648
    %v650 = vpop.f32.mrb[0].mxu0
    %651 = vmatprep.mubr.bf16.mxu0 0
    %652 = vmatmul.mubr.bf16.gmra.mrb[0].mxu0 %v496
    %v653 = vpop.f32.mrb[0].mxu0
    %v654 = vadd.f32 0.0, %v653
    %v655 = vpop.f32.mrb[0].mxu0
    %v656 = vpop.f32.mrb[0].mxu0
    %v657 = vadd.f32 0.0, %v656
    %v658 = vpop.f32.mrb[0].mxu0
    %659 = vdwg.mxu0
    %v660 = vpack.c.bf16 %v649, %v646
    %v661 = vpack.c.bf16 %v657, %v654
    %662 = vmatprep.subr.bf16.mxu0 0
    %663 = vmatpush1.bf16.msra.mxu0 %v660
    %664 = vmatprep.subr.bf16.mxu0 0
    %665 = vmatpush1.bf16.msra.mxu0 0
    %666 = vmatprep.subr.bf16.mxu0 0
    %667 = vmatpush1.bf16.msra.mxu0 0
    %668 = vmatprep.subr.bf16.mxu0 0
    %669 = vmatpush1.bf16.msra.mxu0 0
    %670 = vmatprep.subr.bf16.mxu0 0
    %671 = vmatpush1.bf16.msra.mxu0 0
    %672 = vmatprep.subr.bf16.mxu0 0
    %673 = vmatpush1.bf16.msra.mxu0 0
    %674 = vmatprep.subr.bf16.mxu0 0
    %675 = vmatpush1.bf16.msra.mxu0 0
    %676 = vmatprep.subr.bf16.mxu0 0
    %677 = vmatpush1.bf16.msra.mxu0 0
    %678 = vmatprep.subr.bf16.mxu0 0
    %679 = vmatpush1.bf16.msra.mxu0 0
    %680 = vmatprep.subr.bf16.mxu0 0
    %681 = vmatpush1.bf16.msra.mxu0 0
    %682 = vmatprep.subr.bf16.mxu0 0
    %683 = vmatpush1.bf16.msra.mxu0 0
    %684 = vmatprep.subr.bf16.mxu0 0
    %685 = vmatpush1.bf16.msra.mxu0 0
    %686 = vmatprep.subr.bf16.mxu0 0
    %687 = vmatpush1.bf16.msra.mxu0 0
    %688 = vmatprep.subr.bf16.mxu0 0
    %689 = vmatpush1.bf16.msra.mxu0 0
    %690 = vmatprep.subr.bf16.mxu0 0
    %691 = vmatpush1.bf16.msra.mxu0 0
    %692 = vmatprep.subr.bf16.mxu0 0
    %693 = vmatpush1.bf16.msra.mxu0 0
    %694 = vmatprep.mubr.bf16.mxu0 0
    %695 = vmatmul.mubr.bf16.gmra.mrb[0].mxu0 %v386
    %v696 = vpop.f32.mrb[0].mxu0
    %v697 = vadd.f32 0.0, %v696
    %v698 = vpop.f32.mrb[0].mxu0
    %v699 = vpop.f32.mrb[0].mxu0
    %v700 = vadd.f32 0.0, %v699
    %v701 = vpop.f32.mrb[0].mxu0
    %702 = vdwg.mxu0
    %703 = vmatprep.subr.bf16.mxu0 0
    %704 = vmatpush1.bf16.msra.mxu0 %v661
    %705 = vmatprep.subr.bf16.mxu0 0
    %706 = vmatpush1.bf16.msra.mxu0 0
    %707 = vmatprep.subr.bf16.mxu0 0
    %708 = vmatpush1.bf16.msra.mxu0 0
    %709 = vmatprep.subr.bf16.mxu0 0
    %710 = vmatpush1.bf16.msra.mxu0 0
    %711 = vmatprep.subr.bf16.mxu0 0
    %712 = vmatpush1.bf16.msra.mxu0 0
    %713 = vmatprep.subr.bf16.mxu0 0
    %714 = vmatpush1.bf16.msra.mxu0 0
    %715 = vmatprep.subr.bf16.mxu0 0
    %716 = vmatpush1.bf16.msra.mxu0 0
    %717 = vmatprep.subr.bf16.mxu0 0
    %718 = vmatpush1.bf16.msra.mxu0 0
    %719 = vmatprep.subr.bf16.mxu0 0
    %720 = vmatpush1.bf16.msra.mxu0 0
    %721 = vmatprep.subr.bf16.mxu0 0
    %722 = vmatpush1.bf16.msra.mxu0 0
    %723 = vmatprep.subr.bf16.mxu0 0
    %724 = vmatpush1.bf16.msra.mxu0 0
    %725 = vmatprep.subr.bf16.mxu0 0
    %726 = vmatpush1.bf16.msra.mxu0 0
    %727 = vmatprep.subr.bf16.mxu0 0
    %728 = vmatpush1.bf16.msra.mxu0 0
    %729 = vmatprep.subr.bf16.mxu0 0
    %730 = vmatpush1.bf16.msra.mxu0 0
    %731 = vmatprep.subr.bf16.mxu0 0
    %732 = vmatpush1.bf16.msra.mxu0 0
    %733 = vmatprep.subr.bf16.mxu0 0
    %734 = vmatpush1.bf16.msra.mxu0 0
    %735 = vmatprep.mubr.bf16.mxu0 0
    %736 = vmatmul.mubr.bf16.gmra.mrb[0].mxu0 %v430
    %v737 = vpop.f32.mrb[0].mxu0
    %v738 = vadd.f32 0.0, %v737
    %v739 = vpop.f32.mrb[0].mxu0
    %v740 = vpop.f32.mrb[0].mxu0
    %v741 = vadd.f32 0.0, %v740
    %v742 = vpop.f32.mrb[0].mxu0
    %743 = vdwg.mxu0
    %v744 = vtanh.pop %v697
    %v745 = vtanh.pop %v700
    %v746 = vtanh.pop %v738
    %v747 = vtanh.pop %v741
    %v748 = vpack.c.bf16 %v745, %v744
    %v749 = vpack.c.bf16 %v747, %v746
    %s750 = scalar_lea.vmem %s8, 128
    %v751 = vld [vmem:[%s750] sm:$0xff]
    %v752 = vld [vmem:[%s750 + $0x8] sm:$0xff]
    %v753 = vld [vmem:[%s750 + $0x10] sm:$0xff]
    %v754 = vld [vmem:[%s750 + $0x18] sm:$0xff]
    %v755 = vld [vmem:[%s750 + $0x20] sm:$0xff]
    %v756 = vld [vmem:[%s750 + $0x28] sm:$0xff]
    %v757 = vld [vmem:[%s750 + $0x30] sm:$0xff]
    %v758 = vld [vmem:[%s750 + $0x38] sm:$0xff]
    %v759 = vpack.c.bf16 %v753, %v751
    %v760 = vpack.c.bf16 %v754, %v752
    %v761 = vpack.c.bf16 %v757, %v755
    %v762 = vpack.c.bf16 %v758, %v756
    %v764 = vsel %vm326, %v748, 0
    %v767 = vsel %vm326, %v749, 0
    %769 = vmatprep.subr.bf16.mxu0 %v760
    %770 = vmatpush1.bf16.msra.mxu0 %v759
    %771 = vmatprep.subr.bf16.mxu0 %v762
    %772 = vmatpush1.bf16.msra.mxu0 %v761
    %773 = vmatprep.subr.bf16.mxu0 0
    %774 = vmatpush1.bf16.msra.mxu0 0
    %775 = vmatprep.subr.bf16.mxu0 0
    %776 = vmatpush1.bf16.msra.mxu0 0
    %777 = vmatprep.subr.bf16.mxu0 0
    %778 = vmatpush1.bf16.msra.mxu0 0
    %779 = vmatprep.subr.bf16.mxu0 0
    %780 = vmatpush1.bf16.msra.mxu0 0
    %781 = vmatprep.subr.bf16.mxu0 0
    %782 = vmatpush1.bf16.msra.mxu0 0
    %783 = vmatprep.subr.bf16.mxu0 0
    %784 = vmatpush1.bf16.msra.mxu0 0
    %785 = vmatprep.subr.bf16.mxu0 0
    %786 = vmatpush1.bf16.msra.mxu0 0
    %787 = vmatprep.subr.bf16.mxu0 0
    %788 = vmatpush1.bf16.msra.mxu0 0
    %789 = vmatprep.subr.bf16.mxu0 0
    %790 = vmatpush1.bf16.msra.mxu0 0
    %791 = vmatprep.subr.bf16.mxu0 0
    %792 = vmatpush1.bf16.msra.mxu0 0
    %793 = vmatprep.subr.bf16.mxu0 0
    %794 = vmatpush1.bf16.msra.mxu0 0
    %795 = vmatprep.subr.bf16.mxu0 0
    %796 = vmatpush1.bf16.msra.mxu0 0
    %797 = vmatprep.subr.bf16.mxu0 0
    %798 = vmatpush1.bf16.msra.mxu0 0
    %799 = vmatprep.subr.bf16.mxu0 0
    %800 = vmatpush1.bf16.msra.mxu0 0
    %801 = vmatprep.mubr.bf16.mxu0 0
    %802 = vmatmul.mubr.bf16.gmra.mrb[0].mxu0 %v764
    %v803 = vpop.f32.mrb[0].mxu0
    %v804 = vadd.f32 0.0, %v803
    %v805 = vpop.f32.mrb[0].mxu0
    %v806 = vadd.f32 0.0, %v805
    %v807 = vpop.f32.mrb[0].mxu0
    %v808 = vadd.f32 0.0, %v807
    %v809 = vpop.f32.mrb[0].mxu0
    %v810 = vadd.f32 0.0, %v809
    %811 = vmatprep.mubr.bf16.mxu0 0
    %812 = vmatmul.mubr.bf16.gmra.mrb[0].mxu0 %v767
    %v813 = vpop.f32.mrb[0].mxu0
    %v814 = vadd.f32 0.0, %v813
    %v815 = vpop.f32.mrb[0].mxu0
    %v816 = vadd.f32 0.0, %v815
    %v817 = vpop.f32.mrb[0].mxu0
    %v818 = vadd.f32 0.0, %v817
    %v819 = vpop.f32.mrb[0].mxu0
    %v820 = vadd.f32 0.0, %v819
    %821 = vdwg.mxu0
    %v822 = vadd.f32 %v586, %v804
    %v823 = vadd.f32 %v588, %v806
    %v824 = vadd.f32 %v590, %v808
    %v825 = vadd.f32 %v592, %v810
    %v826 = vadd.f32 %v596, %v814
    %v827 = vadd.f32 %v598, %v816
    %v828 = vadd.f32 %v600, %v818
    %v829 = vadd.f32 %v602, %v820
    %s830 = scalar_lea.vmem %s7, 64
    %v831 = vld [vmem:[%s830] sm:$0xff]
    %v832 = vld [vmem:[%s830 + $0x8] sm:$0xff]
    %v833 = vld [vmem:[%s830 + $0x10] sm:$0xff]
    %v834 = vld [vmem:[%s830 + $0x18] sm:$0xff]
    %v835 = vpack.c.bf16 %v832, %v831
    %v836 = vpack.c.bf16 %v834, %v833
    %837 = vmatprep.subr.bf16.mxu0 0
    %838 = vmatpush1.bf16.msra.mxu0 %v835
    %839 = vmatprep.subr.bf16.mxu0 0
    %840 = vmatpush1.bf16.msra.mxu0 %v836
    %841 = vmatprep.subr.bf16.mxu0 0
    %842 = vmatpush1.bf16.msra.mxu0 0
    %843 = vmatprep.subr.bf16.mxu0 0
    %844 = vmatpush1.bf16.msra.mxu0 0
    %845 = vmatprep.subr.bf16.mxu0 0
    %846 = vmatpush1.bf16.msra.mxu0 0
    %847 = vmatprep.subr.bf16.mxu0 0
    %848 = vmatpush1.bf16.msra.mxu0 0
    %849 = vmatprep.subr.bf16.mxu0 0
    %850 = vmatpush1.bf16.msra.mxu0 0
    %851 = vmatprep.subr.bf16.mxu0 0
    %852 = vmatpush1.bf16.msra.mxu0 0
    %853 = vmatprep.subr.bf16.mxu0 0
    %854 = vmatpush1.bf16.msra.mxu0 0
    %855 = vmatprep.subr.bf16.mxu0 0
    %856 = vmatpush1.bf16.msra.mxu0 0
    %857 = vmatprep.subr.bf16.mxu0 0
    %858 = vmatpush1.bf16.msra.mxu0 0
    %859 = vmatprep.subr.bf16.mxu0 0
    %860 = vmatpush1.bf16.msra.mxu0 0
    %861 = vmatprep.subr.bf16.mxu0 0
    %862 = vmatpush1.bf16.msra.mxu0 0
    %863 = vmatprep.subr.bf16.mxu0 0
    %864 = vmatpush1.bf16.msra.mxu0 0
    %865 = vmatprep.subr.bf16.mxu0 0
    %866 = vmatpush1.bf16.msra.mxu0 0
    %867 = vmatprep.subr.bf16.mxu0 0
    %868 = vmatpush1.bf16.msra.mxu0 0
    %869 = vmatprep.mubr.bf16.mxu0 0
    %870 = vmatmul.mubr.bf16.gmra.mrb[0].mxu0 %v764
    %v871 = vpop.f32.mrb[0].mxu0
    %v872 = vadd.f32 0.0, %v871
    %v873 = vpop.f32.mrb[0].mxu0
    %v874 = vpop.f32.mrb[0].mxu0
    %v875 = vadd.f32 0.0, %v874
    %v876 = vpop.f32.mrb[0].mxu0
    %877 = vmatprep.mubr.bf16.mxu0 0
    %878 = vmatmul.mubr.bf16.gmra.mrb[0].mxu0 %v767
    %v879 = vpop.f32.mrb[0].mxu0
    %v880 = vadd.f32 0.0, %v879
    %v881 = vpop.f32.mrb[0].mxu0
    %v882 = vpop.f32.mrb[0].mxu0
    %v883 = vadd.f32 0.0, %v882
    %v884 = vpop.f32.mrb[0].mxu0
    %885 = vdwg.mxu0
    %v886 = vpack.c.bf16 %v875, %v872
    %v887 = vpack.c.bf16 %v883, %v880
    %888 = vmatprep.subr.bf16.mxu0 0
    %889 = vmatpush1.bf16.msra.mxu0 %v886
    %890 = vmatprep.subr.bf16.mxu0 0
    %891 = vmatpush1.bf16.msra.mxu0 0
    %892 = vmatprep.subr.bf16.mxu0 0
    %893 = vmatpush1.bf16.msra.mxu0 0
    %894 = vmatprep.subr.bf16.mxu0 0
    %895 = vmatpush1.bf16.msra.mxu0 0
    %896 = vmatprep.subr.bf16.mxu0 0
    %897 = vmatpush1.bf16.msra.mxu0 0
    %898 = vmatprep.subr.bf16.mxu0 0
    %899 = vmatpush1.bf16.msra.mxu0 0
    %900 = vmatprep.subr.bf16.mxu0 0
    %901 = vmatpush1.bf16.msra.mxu0 0
    %902 = vmatprep.subr.bf16.mxu0 0
    %903 = vmatpush1.bf16.msra.mxu0 0
    %904 = vmatprep.subr.bf16.mxu0 0
    %905 = vmatpush1.bf16.msra.mxu0 0
    %906 = vmatprep.subr.bf16.mxu0 0
    %907 = vmatpush1.bf16.msra.mxu0 0
    %908 = vmatprep.subr.bf16.mxu0 0
    %909 = vmatpush1.bf16.msra.mxu0 0
    %910 = vmatprep.subr.bf16.mxu0 0
    %911 = vmatpush1.bf16.msra.mxu0 0
    %912 = vmatprep.subr.bf16.mxu0 0
    %913 = vmatpush1.bf16.msra.mxu0 0
    %914 = vmatprep.subr.bf16.mxu0 0
    %915 = vmatpush1.bf16.msra.mxu0 0
    %916 = vmatprep.subr.bf16.mxu0 0
    %917 = vmatpush1.bf16.msra.mxu0 0
    %918 = vmatprep.subr.bf16.mxu0 0
    %919 = vmatpush1.bf16.msra.mxu0 0
    %920 = vmatprep.mubr.bf16.mxu0 0
    %921 = vmatmul.mubr.bf16.gmra.mrb[0].mxu0 %v386
    %v922 = vpop.f32.mrb[0].mxu0
    %v923 = vadd.f32 0.0, %v922
    %v924 = vpop.f32.mrb[0].mxu0
    %v925 = vpop.f32.mrb[0].mxu0
    %v926 = vadd.f32 0.0, %v925
    %v927 = vpop.f32.mrb[0].mxu0
    %928 = vdwg.mxu0
    %929 = vmatprep.subr.bf16.mxu0 0
    %930 = vmatpush1.bf16.msra.mxu0 %v887
    %931 = vmatprep.subr.bf16.mxu0 0
    %932 = vmatpush1.bf16.msra.mxu0 0
    %933 = vmatprep.subr.bf16.mxu0 0
    %934 = vmatpush1.bf16.msra.mxu0 0
    %935 = vmatprep.subr.bf16.mxu0 0
    %936 = vmatpush1.bf16.msra.mxu0 0
    %937 = vmatprep.subr.bf16.mxu0 0
    %938 = vmatpush1.bf16.msra.mxu0 0
    %939 = vmatprep.subr.bf16.mxu0 0
    %940 = vmatpush1.bf16.msra.mxu0 0
    %941 = vmatprep.subr.bf16.mxu0 0
    %942 = vmatpush1.bf16.msra.mxu0 0
    %943 = vmatprep.subr.bf16.mxu0 0
    %944 = vmatpush1.bf16.msra.mxu0 0
    %945 = vmatprep.subr.bf16.mxu0 0
    %946 = vmatpush1.bf16.msra.mxu0 0
    %947 = vmatprep.subr.bf16.mxu0 0
    %948 = vmatpush1.bf16.msra.mxu0 0
    %949 = vmatprep.subr.bf16.mxu0 0
    %950 = vmatpush1.bf16.msra.mxu0 0
    %951 = vmatprep.subr.bf16.mxu0 0
    %952 = vmatpush1.bf16.msra.mxu0 0
    %953 = vmatprep.subr.bf16.mxu0 0
    %954 = vmatpush1.bf16.msra.mxu0 0
    %955 = vmatprep.subr.bf16.mxu0 0
    %956 = vmatpush1.bf16.msra.mxu0 0
    %957 = vmatprep.subr.bf16.mxu0 0
    %958 = vmatpush1.bf16.msra.mxu0 0
    %959 = vmatprep.subr.bf16.mxu0 0
    %960 = vmatpush1.bf16.msra.mxu0 0
    %961 = vmatprep.mubr.bf16.mxu0 0
    %962 = vmatmul.mubr.bf16.gmra.mrb[0].mxu0 %v430
    %v963 = vpop.f32.mrb[0].mxu0
    %v964 = vadd.f32 0.0, %v963
    %v965 = vpop.f32.mrb[0].mxu0
    %v966 = vpop.f32.mrb[0].mxu0
    %v967 = vadd.f32 0.0, %v966
    %v968 = vpop.f32.mrb[0].mxu0
    %969 = vdwg.mxu0
    %v970 = vtanh.pop %v923
    %v971 = vtanh.pop %v926
    %v972 = vtanh.pop %v964
    %v973 = vtanh.pop %v967
    %v974 = vpack.c.bf16 %v971, %v970
    %v975 = vpack.c.bf16 %v973, %v972
    %s976 = scalar_lea.vmem %s8, 192
    %v977 = vld [vmem:[%s976] sm:$0xff]
    %v978 = vld [vmem:[%s976 + $0x8] sm:$0xff]
    %v979 = vld [vmem:[%s976 + $0x10] sm:$0xff]
    %v980 = vld [vmem:[%s976 + $0x18] sm:$0xff]
    %v981 = vld [vmem:[%s976 + $0x20] sm:$0xff]
    %v982 = vld [vmem:[%s976 + $0x28] sm:$0xff]
    %v983 = vld [vmem:[%s976 + $0x30] sm:$0xff]
    %v984 = vld [vmem:[%s976 + $0x38] sm:$0xff]
    %v985 = vpack.c.bf16 %v979, %v977
    %v986 = vpack.c.bf16 %v980, %v978
    %v987 = vpack.c.bf16 %v983, %v981
    %v988 = vpack.c.bf16 %v984, %v982
    %v990 = vsel %vm326, %v974, 0
    %v993 = vsel %vm326, %v975, 0
    %995 = vmatprep.subr.bf16.mxu0 %v986
    %996 = vmatpush1.bf16.msra.mxu0 %v985
    %997 = vmatprep.subr.bf16.mxu0 %v988
    %998 = vmatpush1.bf16.msra.mxu0 %v987
    %999 = vmatprep.subr.bf16.mxu0 0
    %1000 = vmatpush1.bf16.msra.mxu0 0
    %1001 = vmatprep.subr.bf16.mxu0 0
    %1002 = vmatpush1.bf16.msra.mxu0 0
    %1003 = vmatprep.subr.bf16.mxu0 0
    %1004 = vmatpush1.bf16.msra.mxu0 0
    %1005 = vmatprep.subr.bf16.mxu0 0
    %1006 = vmatpush1.bf16.msra.mxu0 0
    %1007 = vmatprep.subr.bf16.mxu0 0
    %1008 = vmatpush1.bf16.msra.mxu0 0
    %1009 = vmatprep.subr.bf16.mxu0 0
    %1010 = vmatpush1.bf16.msra.mxu0 0
    %1011 = vmatprep.subr.bf16.mxu0 0
    %1012 = vmatpush1.bf16.msra.mxu0 0
    %1013 = vmatprep.subr.bf16.mxu0 0
    %1014 = vmatpush1.bf16.msra.mxu0 0
    %1015 = vmatprep.subr.bf16.mxu0 0
    %1016 = vmatpush1.bf16.msra.mxu0 0
    %1017 = vmatprep.subr.bf16.mxu0 0
    %1018 = vmatpush1.bf16.msra.mxu0 0
    %1019 = vmatprep.subr.bf16.mxu0 0
    %1020 = vmatpush1.bf16.msra.mxu0 0
    %1021 = vmatprep.subr.bf16.mxu0 0
    %1022 = vmatpush1.bf16.msra.mxu0 0
    %1023 = vmatprep.subr.bf16.mxu0 0
    %1024 = vmatpush1.bf16.msra.mxu0 0
    %1025 = vmatprep.subr.bf16.mxu0 0
    %1026 = vmatpush1.bf16.msra.mxu0 0
    %1027 = vmatprep.mubr.bf16.mxu0 0
    %1028 = vmatmul.mubr.bf16.gmra.mrb[0].mxu0 %v990
    %v1029 = vpop.f32.mrb[0].mxu0
    %v1030 = vadd.f32 0.0, %v1029
    %v1031 = vpop.f32.mrb[0].mxu0
    %v1032 = vadd.f32 0.0, %v1031
    %v1033 = vpop.f32.mrb[0].mxu0
    %v1034 = vadd.f32 0.0, %v1033
    %v1035 = vpop.f32.mrb[0].mxu0
    %v1036 = vadd.f32 0.0, %v1035
    %1037 = vmatprep.mubr.bf16.mxu0 0
    %1038 = vmatmul.mubr.bf16.gmra.mrb[0].mxu0 %v993
    %v1039 = vpop.f32.mrb[0].mxu0
    %v1040 = vadd.f32 0.0, %v1039
    %v1041 = vpop.f32.mrb[0].mxu0
    %v1042 = vadd.f32 0.0, %v1041
    %v1043 = vpop.f32.mrb[0].mxu0
    %v1044 = vadd.f32 0.0, %v1043
    %v1045 = vpop.f32.mrb[0].mxu0
    %v1046 = vadd.f32 0.0, %v1045
    %1047 = vdwg.mxu0
    %v1048 = vadd.f32 %v822, %v1030
    %v1049 = vadd.f32 %v823, %v1032
    %v1050 = vadd.f32 %v824, %v1034
    %v1051 = vadd.f32 %v825, %v1036
    %v1052 = vadd.f32 %v826, %v1040
    %v1053 = vadd.f32 %v827, %v1042
    %v1054 = vadd.f32 %v828, %v1044
    %v1055 = vadd.f32 %v829, %v1046
    %v1056 = vld [vmem:[#allocation6] sm:$0x3]
    %v1058 = vlaneseq
    %v1059 = vshrl.u32 %v1058, 7
    %v1060 = vsub.s32 0, %v1059
    %v1061 = vrot.slane %v1056, %v1060
    %v1062 = vlaneseq
    %v1063 = vshrl.u32 %v1062, 7
    %v1064 = vsub.s32 1, %v1063
    %v1065 = vrot.slane %v1056, %v1064
    %v1068 = vadd.f32 %v1048, %v1061
    %v1069 = vadd.f32 %v1049, %v1065
    %v1070 = vadd.f32 %v1050, %v1061
    %v1071 = vadd.f32 %v1051, %v1065
    %v1072 = vadd.f32 %v1052, %v1061
    %v1073 = vadd.f32 %v1053, %v1065
    %v1074 = vadd.f32 %v1054, %v1061
    %v1075 = vadd.f32 %v1055, %v1065
    %v1076 = vtanh.pop %v1068
    %v1077 = vtanh.pop %v1069
    %v1078 = vtanh.pop %v1070
    %v1079 = vtanh.pop %v1071
    %v1080 = vtanh.pop %v1072
    %v1081 = vtanh.pop %v1073
    %v1082 = vtanh.pop %v1074
    %v1083 = vtanh.pop %v1075
    %v1084 = vpack.c.bf16 %v1078, %v1076
    %v1085 = vpack.c.bf16 %v1082, %v1080
    %v1086 = vld [vmem:[#allocation7] sm:$0xff]
    %v1087 = vld [vmem:[#allocation7 + $0x8] sm:$0xff]
    %v1088 = vld [vmem:[#allocation7 + $0x10] sm:$0xff]
    %v1089 = vld [vmem:[#allocation7 + $0x18] sm:$0xff]
    %v1090 = vld [vmem:[#allocation7 + $0x20] sm:$0xff]
    %v1091 = vld [vmem:[#allocation7 + $0x28] sm:$0xff]
    %v1092 = vld [vmem:[#allocation7 + $0x30] sm:$0xff]
    %v1093 = vld [vmem:[#allocation7 + $0x38] sm:$0xff]
    %v1094 = vld [vmem:[#allocation7 + $0x40] sm:$0xff]
    %v1095 = vld [vmem:[#allocation7 + $0x48] sm:$0xff]
    %v1096 = vld [vmem:[#allocation7 + $0x50] sm:$0xff]
    %v1097 = vld [vmem:[#allocation7 + $0x58] sm:$0xff]
    %v1098 = vld [vmem:[#allocation7 + $0x60] sm:$0xff]
    %v1099 = vld [vmem:[#allocation7 + $0x68] sm:$0xff]
    %v1100 = vld [vmem:[#allocation7 + $0x70] sm:$0xff]
    %v1101 = vld [vmem:[#allocation7 + $0x78] sm:$0xff]
    %v1102 = vpack.c.bf16 %v1087, %v1086
    %v1103 = vpack.c.bf16 %v1089, %v1088
    %v1104 = vpack.c.bf16 %v1091, %v1090
    %v1105 = vpack.c.bf16 %v1093, %v1092
    %v1106 = vpack.c.bf16 %v1095, %v1094
    %v1107 = vpack.c.bf16 %v1097, %v1096
    %v1108 = vpack.c.bf16 %v1099, %v1098
    %v1109 = vpack.c.bf16 %v1101, %v1100
    %v1110 = vld [vmem:[#allocation9] sm:$0x1]
    %v1112 = vlaneseq
    %v1113 = vshrl.u32 %v1112, 7
    %v1114 = vsub.s32 0, %v1113
    %v1115 = vrot.slane %v1110, %v1114
    %1117 = vmatprep.subr.bf16.mxu0 0
    %1118 = vmatpush1.bf16.msra.mxu0 %v1102
    %1119 = vmatprep.subr.bf16.mxu0 0
    %1120 = vmatpush1.bf16.msra.mxu0 %v1103
    %1121 = vmatprep.subr.bf16.mxu0 0
    %1122 = vmatpush1.bf16.msra.mxu0 %v1104
    %1123 = vmatprep.subr.bf16.mxu0 0
    %1124 = vmatpush1.bf16.msra.mxu0 %v1105
    %1125 = vmatprep.subr.bf16.mxu0 0
    %1126 = vmatpush1.bf16.msra.mxu0 %v1106
    %1127 = vmatprep.subr.bf16.mxu0 0
    %1128 = vmatpush1.bf16.msra.mxu0 %v1107
    %1129 = vmatprep.subr.bf16.mxu0 0
    %1130 = vmatpush1.bf16.msra.mxu0 %v1108
    %1131 = vmatprep.subr.bf16.mxu0 0
    %1132 = vmatpush1.bf16.msra.mxu0 %v1109
    %1133 = vmatprep.subr.bf16.mxu0 0
    %1134 = vmatpush1.bf16.msra.mxu0 0
    %1135 = vmatprep.subr.bf16.mxu0 0
    %1136 = vmatpush1.bf16.msra.mxu0 0
    %1137 = vmatprep.subr.bf16.mxu0 0
    %1138 = vmatpush1.bf16.msra.mxu0 0
    %1139 = vmatprep.subr.bf16.mxu0 0
    %1140 = vmatpush1.bf16.msra.mxu0 0
    %1141 = vmatprep.subr.bf16.mxu0 0
    %1142 = vmatpush1.bf16.msra.mxu0 0
    %1143 = vmatprep.subr.bf16.mxu0 0
    %1144 = vmatpush1.bf16.msra.mxu0 0
    %1145 = vmatprep.subr.bf16.mxu0 0
    %1146 = vmatpush1.bf16.msra.mxu0 0
    %1147 = vmatprep.subr.bf16.mxu0 0
    %1148 = vmatpush1.bf16.msra.mxu0 0
    %1149 = vmatprep.mubr.bf16.mxu0 0
    %1150 = vmatmul.mubr.bf16.gmra.mrb[0].mxu0 %v1084
    %v1151 = vpop.f32.mrb[0].mxu0
    %v1152 = vadd.f32 %v1115, %v1151
    %v1153 = vpop.f32.mrb[0].mxu0
    %v1154 = vpop.f32.mrb[0].mxu0
    %v1155 = vadd.f32 %v1115, %v1154
    %v1156 = vpop.f32.mrb[0].mxu0
    %1157 = vmatprep.mubr.bf16.mxu0 0
    %1158 = vmatmul.mubr.bf16.gmra.mrb[0].mxu0 %v1085
    %v1159 = vpop.f32.mrb[0].mxu0
    %v1160 = vadd.f32 %v1115, %v1159
    %v1161 = vpop.f32.mrb[0].mxu0
    %v1162 = vpop.f32.mrb[0].mxu0
    %v1163 = vadd.f32 %v1115, %v1162
    %v1164 = vpop.f32.mrb[0].mxu0
    %1165 = vdwg.mxu0
    %v1166 = vpack.c.bf16 %v1079, %v1077
    %v1167 = vpack.c.bf16 %v1083, %v1081
    %v1168 = vld [vmem:[#allocation10] sm:$0xff]
    %v1169 = vld [vmem:[#allocation10 + $0x8] sm:$0xff]
    %v1170 = vld [vmem:[#allocation10 + $0x10] sm:$0xff]
    %v1171 = vld [vmem:[#allocation10 + $0x18] sm:$0xff]
    %v1172 = vld [vmem:[#allocation10 + $0x20] sm:$0xff]
    %v1173 = vld [vmem:[#allocation10 + $0x28] sm:$0xff]
    %v1174 = vld [vmem:[#allocation10 + $0x30] sm:$0xff]
    %v1175 = vld [vmem:[#allocation10 + $0x38] sm:$0xff]
    %v1176 = vld [vmem:[#allocation10 + $0x40] sm:$0xff]
    %v1177 = vld [vmem:[#allocation10 + $0x48] sm:$0xff]
    %v1178 = vld [vmem:[#allocation10 + $0x50] sm:$0xff]
    %v1179 = vld [vmem:[#allocation10 + $0x58] sm:$0xff]
    %v1180 = vld [vmem:[#allocation10 + $0x60] sm:$0xff]
    %v1181 = vld [vmem:[#allocation10 + $0x68] sm:$0xff]
    %v1182 = vld [vmem:[#allocation10 + $0x70] sm:$0xff]
    %v1183 = vld [vmem:[#allocation10 + $0x78] sm:$0xff]
    %v1184 = vpack.c.bf16 %v1169, %v1168
    %v1185 = vpack.c.bf16 %v1171, %v1170
    %v1186 = vpack.c.bf16 %v1173, %v1172
    %v1187 = vpack.c.bf16 %v1175, %v1174
    %v1188 = vpack.c.bf16 %v1177, %v1176
    %v1189 = vpack.c.bf16 %v1179, %v1178
    %v1190 = vpack.c.bf16 %v1181, %v1180
    %v1191 = vpack.c.bf16 %v1183, %v1182
    %v1192 = vld [vmem:[#allocation12] sm:$0x1]
    %v1194 = vlaneseq
    %v1195 = vshrl.u32 %v1194, 7
    %v1196 = vsub.s32 0, %v1195
    %v1197 = vrot.slane %v1192, %v1196
    %1199 = vmatprep.subr.bf16.mxu0 0
    %1200 = vmatpush1.bf16.msra.mxu0 %v1184
    %1201 = vmatprep.subr.bf16.mxu0 0
    %1202 = vmatpush1.bf16.msra.mxu0 %v1185
    %1203 = vmatprep.subr.bf16.mxu0 0
    %1204 = vmatpush1.bf16.msra.mxu0 %v1186
    %1205 = vmatprep.subr.bf16.mxu0 0
    %1206 = vmatpush1.bf16.msra.mxu0 %v1187
    %1207 = vmatprep.subr.bf16.mxu0 0
    %1208 = vmatpush1.bf16.msra.mxu0 %v1188
    %1209 = vmatprep.subr.bf16.mxu0 0
    %1210 = vmatpush1.bf16.msra.mxu0 %v1189
    %1211 = vmatprep.subr.bf16.mxu0 0
    %1212 = vmatpush1.bf16.msra.mxu0 %v1190
    %1213 = vmatprep.subr.bf16.mxu0 0
    %1214 = vmatpush1.bf16.msra.mxu0 %v1191
    %1215 = vmatprep.subr.bf16.mxu0 0
    %1216 = vmatpush1.bf16.msra.mxu0 0
    %1217 = vmatprep.subr.bf16.mxu0 0
    %1218 = vmatpush1.bf16.msra.mxu0 0
    %1219 = vmatprep.subr.bf16.mxu0 0
    %1220 = vmatpush1.bf16.msra.mxu0 0
    %1221 = vmatprep.subr.bf16.mxu0 0
    %1222 = vmatpush1.bf16.msra.mxu0 0
    %1223 = vmatprep.subr.bf16.mxu0 0
    %1224 = vmatpush1.bf16.msra.mxu0 0
    %1225 = vmatprep.subr.bf16.mxu0 0
    %1226 = vmatpush1.bf16.msra.mxu0 0
    %1227 = vmatprep.subr.bf16.mxu0 0
    %1228 = vmatpush1.bf16.msra.mxu0 0
    %1229 = vmatprep.subr.bf16.mxu0 0
    %1230 = vmatpush1.bf16.msra.mxu0 0
    %1231 = vmatprep.mubr.bf16.mxu0 0
    %1232 = vmatmul.mubr.bf16.gmra.mrb[0].mxu0 %v1166
    %v1233 = vpop.f32.mrb[0].mxu0
    %v1234 = vadd.f32 %v1197, %v1233
    %v1235 = vpop.f32.mrb[0].mxu0
    %v1236 = vpop.f32.mrb[0].mxu0
    %v1237 = vadd.f32 %v1197, %v1236
    %v1238 = vpop.f32.mrb[0].mxu0
    %1239 = vmatprep.mubr.bf16.mxu0 0
    %1240 = vmatmul.mubr.bf16.gmra.mrb[0].mxu0 %v1167
    %v1241 = vpop.f32.mrb[0].mxu0
    %v1242 = vadd.f32 %v1197, %v1241
    %v1243 = vpop.f32.mrb[0].mxu0
    %v1244 = vpop.f32.mrb[0].mxu0
    %v1245 = vadd.f32 %v1197, %v1244
    %v1246 = vpop.f32.mrb[0].mxu0
    %1247 = vdwg.mxu0
    %v1248 = vld [vmem:[%s2] sm:$0xff]
    %v1249 = vld [vmem:[%s2 + $0x8] sm:$0xff]
    %v1250 = vld [vmem:[%s2 + $0x10] sm:$0xff]
    %v1251 = vld [vmem:[%s2 + $0x18] sm:$0xff]
    %v1252 = vmul.f32 %v1234, 1.442695
    %v1253 = vpow.pop %v1252
    %v1254 = vmul.f32 %v1237, 1.442695
    %v1255 = vpow.pop %v1254
    %v1256 = vmul.f32 %v1242, 1.442695
    %v1257 = vpow.pop %v1256
    %v1258 = vmul.f32 %v1245, 1.442695
    %v1259 = vpow.pop %v1258
    %v1260 = vmul.f32 %v1248, %v1253
    %v1261 = vmul.f32 %v1249, %v1255
    %v1262 = vmul.f32 %v1250, %v1257
    %v1263 = vmul.f32 %v1251, %v1259
    %v1264 = vadd.f32 %v1260, %v1152
    %v1265 = vadd.f32 %v1261, %v1155
    %v1266 = vadd.f32 %v1262, %v1160
    %v1267 = vadd.f32 %v1263, %v1163
    %1272 = vrot.lane.b32.xlu0 %v1152, 32
    %v1273 = vpop.permute.xlu0 %1272
    %1274 = vrot.lane.b32.xlu0 %v1155, 32
    %v1275 = vpop.permute.xlu0 %1274
    %1276 = vrot.lane.b32.xlu0 %v1160, 32
    %v1277 = vpop.permute.xlu0 %1276
    %1278 = vrot.lane.b32.xlu0 %v1163, 32
    %v1279 = vpop.permute.xlu0 %1278
    %1288 = vrot.lane.b32.xlu0 %v1234, 64
    %v1289 = vpop.permute.xlu0 %1288
    %1290 = vrot.lane.b32.xlu0 %v1237, 64
    %v1291 = vpop.permute.xlu0 %1290
    %1292 = vrot.lane.b32.xlu0 %v1242, 64
    %v1293 = vpop.permute.xlu0 %1292
    %1294 = vrot.lane.b32.xlu0 %v1245, 64
    %v1295 = vpop.permute.xlu0 %1294
    %v1300 = vsel %vm326, %v1264, %v1273
    %v1301 = vsel %vm326, %v1265, %v1275
    %v1302 = vsel %vm326, %v1266, %v1277
    %v1303 = vsel %vm326, %v1267, %v1279
    %vm1304 = vcmask 523264
    %v1305 = vsel %vm1304, %v1300, %v1289
    %v1306 = vsel %vm1304, %v1301, %v1291
    %v1307 = vsel %vm1304, %v1302, %v1293
    %v1308 = vsel %vm1304, %v1303, %v1295
    %vm1309 = vcmask 785408
    %1310 = vst.msk [vmem:[%s14] sm:$0xff] %vm1309, %v1305
    %1311 = vst.msk [vmem:[%s14 + $0x8] sm:$0xff] %vm1309, %v1306
    %1312 = vst.msk [vmem:[%s14 + $0x10] sm:$0xff] %vm1309, %v1307
    %1313 = vst.msk [vmem:[%s14 + $0x18] sm:$0xff] %vm1309, %v1308
    // Predicated region
    $region86: #{_lambda_.6} parent=1 // pred_check
      _
    $region87: #{_lambda_.6} parent=1 // pred_check_branch
      %1315 = sbr.rel (0) target = $region89
    $region88: #{_lambda_.6} parent=1 // pred_region
      _
    $region89: #{_lambda_.6} parent=1 // pred_fallthru
      _
    // Predicated region
    $region90: #{_lambda_.6} parent=1 // pred_check
      _
    $region91: #{_lambda_.6} parent=1 // pred_check_branch
      %1317 = sbr.rel (0) target = $region93
    $region92: #{_lambda_.6} parent=1 // pred_region
      _
    $region93: #{_lambda_.6} parent=1 // pred_fallthru
      _
    %1318 = vsyncpa [#allocation3], 1
    %1319 = vsyncpa [#allocation5], 1
    %1320 = vsyncpa [#allocation8], 1
    %1321 = vsyncpa [#allocation11], 1

// kernel: _lambda_.10
$region0: #{_lambda_.10}
  #allocation0 [shape = 'u32[]', space=smem, size = 0x4, offset = 0x4, fixed_abs, tag = 'smem constant byte address 0x4 - core index']
  #allocation1 [shape = 'u32[144,128]{1,0:T(1,128)}', space=vmem, size = 0x12000, scoped, tag = 'internal scratch']
  %s0 = inlined_call_operand.vmem [shape: f32[2,4,4], index: 0, kind: input, shape index: {}]
  %s1 = inlined_call_operand.vmem [shape: f32[2,4,32], index: 1, kind: input, shape index: {}]
  %s2 = inlined_call_operand.vmem [shape: f32[2,4,2], index: 2, kind: input, shape index: {}]
  %s3 = inlined_call_operand.hbm [shape: f32[32,128], index: 3, kind: input, shape index: {}]
  %s4 = inlined_call_operand.hbm [shape: f32[1,128], index: 4, kind: input, shape index: {}]
  %s5 = inlined_call_operand.vmem [shape: f32[128,32], index: 5, kind: input, shape index: {}]
  %s6 = inlined_call_operand.hbm [shape: f32[1,32], index: 6, kind: input, shape index: {}]
  %s7 = inlined_call_operand.hbm [shape: f32[2,32,32], index: 7, kind: input, shape index: {}]
  %s8 = inlined_call_operand.hbm [shape: f32[32,2], index: 8, kind: input, shape index: {}]
  %s9 = inlined_call_operand.vmem [shape: f32[2,2,32], index: 9, kind: output, shape index: {0}]
  %s10 = inlined_call_operand.vmem [shape: f32[2,2,2], index: 10, kind: output, shape index: {1}]
  %11 = xla_tuple %s9, %s10
  %s12 = sld [smem:[#allocation0]]
  $region74: #{_lambda_.10} parent=0
    _
  %s14 = ssub.s32 1, %s12
  %s15 = scalar_select 0, %s14, %s12
  $region1: #{_lambda_.10} parent=0
    #allocation2 [shape = 'u8[16384]{0}', space=vmem, size = 0x4000, scoped, tag = 'input window, operand 3, single buffered']
    #allocation3 [shape = 's32[1]{0}', space=sflag, size = 0x4, scoped, tag = 'scoped memory for _lambda_.10']
    #allocation4 [shape = 'u8[512]{0}', space=vmem, size = 0x400, scoped, tag = 'input window, operand 4, single buffered']
    #allocation5 [shape = 's32[1]{0}', space=sflag, size = 0x4, scoped, tag = 'scoped memory for _lambda_.10']
    #allocation6 [shape = 'u8[512]{0}', space=vmem, size = 0x400, scoped, tag = 'input window, operand 6, single buffered']
    #allocation7 [shape = 'u8[32768]{0}', space=vmem, size = 0x8000, scoped, tag = 'input window, operand 7, single buffered']
    #allocation8 [shape = 's32[1]{0}', space=sflag, size = 0x4, scoped, tag = 'scoped memory for _lambda_.10']
    #allocation9 [shape = 'u8[16384]{0}', space=vmem, size = 0x4000, scoped, tag = 'input window, operand 8, single buffered']
    %16 = vsyncpa [#allocation3], 0
    %17 = vsyncpa [#allocation5], 0
    %18 = vsyncpa [#allocation8], 0
    // Predicated region
    $region2: #{_lambda_.10} parent=1 // pred_check
      _
    $region3: #{_lambda_.10} parent=1 // pred_check_branch
      %20 = sbr.rel (0) target = $region5
    $region4: #{_lambda_.10} parent=1 // pred_region
      _
    $region5: #{_lambda_.10} parent=1 // pred_fallthru
      _
    // Predicated region
    $region6: #{_lambda_.10} parent=1 // pred_check
      _
    $region7: #{_lambda_.10} parent=1 // pred_check_branch
      %22 = sbr.rel (0) target = $region9
    $region8: #{_lambda_.10} parent=1 // pred_region
      _
    $region9: #{_lambda_.10} parent=1 // pred_fallthru
      _
    // Predicated region
    $region10: #{_lambda_.10} parent=1 // pred_check
      _
    $region11: #{_lambda_.10} parent=1 // pred_check_branch
      %24 = sbr.rel (0) target = $region13
    $region12: #{_lambda_.10} parent=1 // pred_region
      _
    $region13: #{_lambda_.10} parent=1 // pred_fallthru
      _
    // Predicated region
    $region14: #{_lambda_.10} parent=1 // pred_check
      _
    $region15: #{_lambda_.10} parent=1 // pred_check_branch
      %26 = sbr.rel (0) target = $region17
    $region16: #{_lambda_.10} parent=1 // pred_region
      %s28 = ssub.s32 512, 512
      %29 = vsyncadd [#allocation3], %s28
      %s30 = sshll.u32 [#allocation2], 4
      %s31 = int_to_ptr.vmem [resolvable:$true] %s30
      %36 = dma.hbm_to_vmem [thread:$0]  %s3, 512, %s31, [#allocation3], 128, 128, 8
    $region17: #{_lambda_.10} parent=1 // pred_fallthru
      _
    // Predicated region
    $region18: #{_lambda_.10} parent=1 // pred_check
      _
    $region19: #{_lambda_.10} parent=1 // pred_check_branch
      %38 = sbr.rel (0) target = $region21
    $region20: #{_lambda_.10} parent=1 // pred_region
      %s40 = ssub.s32 16, 16
      %41 = vsyncadd [#allocation5], %s40
      %s43 = sshll.u32 [#allocation4], 4
      %s44 = int_to_ptr.vmem [resolvable:$true] %s43
      %46 = dma.hbm_to_vmem [thread:$0]  %s4, 16, %s44, [#allocation5]
    $region21: #{_lambda_.10} parent=1 // pred_fallthru
      _
    // Predicated region
    $region22: #{_lambda_.10} parent=1 // pred_check
      _
    $region23: #{_lambda_.10} parent=1 // pred_check_branch
      %48 = sbr.rel (0) target = $region25
    $region24: #{_lambda_.10} parent=1 // pred_region
      _
    $region25: #{_lambda_.10} parent=1 // pred_fallthru
      _
    // Predicated region
    $region26: #{_lambda_.10} parent=1 // pred_check
      _
    $region27: #{_lambda_.10} parent=1 // pred_check_branch
      %50 = sbr.rel (0) target = $region29
    $region28: #{_lambda_.10} parent=1 // pred_region
      %s52 = ssub.s32 16, 16
      %53 = vsyncadd [#allocation5], %s52
      %s55 = sshll.u32 [#allocation6], 4
      %s56 = int_to_ptr.vmem [resolvable:$true] %s55
      %58 = dma.hbm_to_vmem [thread:$0]  %s6, 16, %s56, [#allocation5]
    $region29: #{_lambda_.10} parent=1 // pred_fallthru
      _
    // Predicated region
    $region30: #{_lambda_.10} parent=1 // pred_check
      _
    $region31: #{_lambda_.10} parent=1 // pred_check_branch
      %60 = sbr.rel (0) target = $region33
    $region32: #{_lambda_.10} parent=1 // pred_region
      %s62 = ssub.s32 1024, 1024
      %63 = vsyncadd [#allocation8], %s62
      %s64 = sshll.u32 [#allocation7], 4
      %s65 = int_to_ptr.vmem [resolvable:$true] %s64
      %70 = dma.hbm_to_vmem [thread:$0]  %s7, 1024, %s65, [#allocation8], 128, 128, 8
    $region33: #{_lambda_.10} parent=1 // pred_fallthru
      _
    // Predicated region
    $region34: #{_lambda_.10} parent=1 // pred_check
      _
    $region35: #{_lambda_.10} parent=1 // pred_check_branch
      %72 = sbr.rel (0) target = $region37
    $region36: #{_lambda_.10} parent=1 // pred_region
      %s74 = ssub.s32 512, 512
      %75 = vsyncadd [#allocation8], %s74
      %s76 = sshll.u32 [#allocation9], 4
      %s77 = int_to_ptr.vmem [resolvable:$true] %s76
      %82 = dma.hbm_to_vmem [thread:$0]  %s8, 512, %s77, [#allocation8], 128, 128, 8
    $region37: #{_lambda_.10} parent=1 // pred_fallthru
      _
    // Predicated region
    $region38: #{_lambda_.10} parent=1 // pred_check
      _
    $region39: #{_lambda_.10} parent=1 // pred_check_branch
      %84 = sbr.rel (0) target = $region41
    $region40: #{_lambda_.10} parent=1 // pred_region
      %85 = dma.done [#allocation3], 512
    $region41: #{_lambda_.10} parent=1 // pred_fallthru
      _
    // Predicated region
    $region42: #{_lambda_.10} parent=1 // pred_check
      _
    $region43: #{_lambda_.10} parent=1 // pred_check_branch
      %87 = sbr.rel (0) target = $region45
    $region44: #{_lambda_.10} parent=1 // pred_region
      %88 = dma.done [#allocation5], 16
    $region45: #{_lambda_.10} parent=1 // pred_fallthru
      _
    // Predicated region
    $region46: #{_lambda_.10} parent=1 // pred_check
      _
    $region47: #{_lambda_.10} parent=1 // pred_check_branch
      %90 = sbr.rel (0) target = $region49
    $region48: #{_lambda_.10} parent=1 // pred_region
      %91 = dma.done [#allocation5], 16
    $region49: #{_lambda_.10} parent=1 // pred_fallthru
      _
    // Predicated region
    $region50: #{_lambda_.10} parent=1 // pred_check
      _
    $region51: #{_lambda_.10} parent=1 // pred_check_branch
      %93 = sbr.rel (0) target = $region53
    $region52: #{_lambda_.10} parent=1 // pred_region
      %94 = dma.done [#allocation8], 1024
    $region53: #{_lambda_.10} parent=1 // pred_fallthru
      _
    // Predicated region
    $region54: #{_lambda_.10} parent=1 // pred_check
      _
    $region55: #{_lambda_.10} parent=1 // pred_check_branch
      %96 = sbr.rel (0) target = $region57
    $region56: #{_lambda_.10} parent=1 // pred_region
      %97 = dma.done [#allocation8], 512
    $region57: #{_lambda_.10} parent=1 // pred_fallthru
      _
    %v99 = vld [vmem:[%s0] sm:$0xf]
    %v100 = vld [vmem:[%s0 + $0x4] sm:$0xf]
    %v101 = vpack.c.bf16 %v99, %v99
    %v102 = vpack.c.bf16 %v100, %v100
    %v103 = vld [vmem:[%s1] sm:$0xf]
    %v104 = vld [vmem:[%s1 + $0x4] sm:$0xf]
    %v107 = vcombine.low %v103, %v104
    %v109 = vpack.c.bf16 %v107, %v107
    %v110 = vld [vmem:[#allocation2] sm:$0xff]
    %v111 = vld [vmem:[#allocation2 + $0x8] sm:$0xff]
    %v112 = vld [vmem:[#allocation2 + $0x10] sm:$0xff]
    %v113 = vld [vmem:[#allocation2 + $0x18] sm:$0xff]
    %v114 = vpack.c.bf16 %v111, %v110
    %v115 = vpack.c.bf16 %v113, %v112
    %v116 = vld [vmem:[#allocation4] sm:$0x1]
    %v118 = vlaneseq
    %v119 = vshrl.u32 %v118, 7
    %v120 = vsub.s32 0, %v119
    %v121 = vrot.slane %v116, %v120
    %vm123 = vcmask 261120
    %v125 = vsel %vm123, %v109, 0
    %127 = vmatprep.subr.bf16.mxu0 0
    %128 = vmatpush1.bf16.msra.mxu0 %v114
    %129 = vmatprep.subr.bf16.mxu0 0
    %130 = vmatpush1.bf16.msra.mxu0 %v115
    %131 = vmatprep.subr.bf16.mxu0 0
    %132 = vmatpush1.bf16.msra.mxu0 0
    %133 = vmatprep.subr.bf16.mxu0 0
    %134 = vmatpush1.bf16.msra.mxu0 0
    %135 = vmatprep.subr.bf16.mxu0 0
    %136 = vmatpush1.bf16.msra.mxu0 0
    %137 = vmatprep.subr.bf16.mxu0 0
    %138 = vmatpush1.bf16.msra.mxu0 0
    %139 = vmatprep.subr.bf16.mxu0 0
    %140 = vmatpush1.bf16.msra.mxu0 0
    %141 = vmatprep.subr.bf16.mxu0 0
    %142 = vmatpush1.bf16.msra.mxu0 0
    %143 = vmatprep.subr.bf16.mxu0 0
    %144 = vmatpush1.bf16.msra.mxu0 0
    %145 = vmatprep.subr.bf16.mxu0 0
    %146 = vmatpush1.bf16.msra.mxu0 0
    %147 = vmatprep.subr.bf16.mxu0 0
    %148 = vmatpush1.bf16.msra.mxu0 0
    %149 = vmatprep.subr.bf16.mxu0 0
    %150 = vmatpush1.bf16.msra.mxu0 0
    %151 = vmatprep.subr.bf16.mxu0 0
    %152 = vmatpush1.bf16.msra.mxu0 0
    %153 = vmatprep.subr.bf16.mxu0 0
    %154 = vmatpush1.bf16.msra.mxu0 0
    %155 = vmatprep.subr.bf16.mxu0 0
    %156 = vmatpush1.bf16.msra.mxu0 0
    %157 = vmatprep.subr.bf16.mxu0 0
    %158 = vmatpush1.bf16.msra.mxu0 0
    %159 = vmatprep.mubr.bf16.mxu0 0
    %160 = vmatmul.mubr.bf16.gmra.mrb[0].mxu0 %v125
    %v161 = vpop.f32.mrb[0].mxu0
    %v162 = vadd.f32 %v121, %v161
    %v163 = vpop.f32.mrb[0].mxu0
    %v164 = vpop.f32.mrb[0].mxu0
    %v165 = vpop.f32.mrb[0].mxu0
    %166 = vdwg.mxu0
    %v167 = vtanh.pop %v162
    %v168 = vpack.c.bf16 %v167, %v167
    %v169 = vld [vmem:[%s5] sm:$0xff]
    %v170 = vld [vmem:[%s5 + $0x8] sm:$0xff]
    %v171 = vld [vmem:[%s5 + $0x10] sm:$0xff]
    %v172 = vld [vmem:[%s5 + $0x18] sm:$0xff]
    %v173 = vld [vmem:[%s5 + $0x20] sm:$0xff]
    %v174 = vld [vmem:[%s5 + $0x28] sm:$0xff]
    %v175 = vld [vmem:[%s5 + $0x30] sm:$0xff]
    %v176 = vld [vmem:[%s5 + $0x38] sm:$0xff]
    %v177 = vld [vmem:[%s5 + $0x40] sm:$0xff]
    %v178 = vld [vmem:[%s5 + $0x48] sm:$0xff]
    %v179 = vld [vmem:[%s5 + $0x50] sm:$0xff]
    %v180 = vld [vmem:[%s5 + $0x58] sm:$0xff]
    %v181 = vld [vmem:[%s5 + $0x60] sm:$0xff]
    %v182 = vld [vmem:[%s5 + $0x68] sm:$0xff]
    %v183 = vld [vmem:[%s5 + $0x70] sm:$0xff]
    %v184 = vld [vmem:[%s5 + $0x78] sm:$0xff]
    %v185 = vpack.c.bf16 %v170, %v169
    %v186 = vpack.c.bf16 %v172, %v171
    %v187 = vpack.c.bf16 %v174, %v173
    %v188 = vpack.c.bf16 %v176, %v175
    %v189 = vpack.c.bf16 %v178, %v177
    %v190 = vpack.c.bf16 %v180, %v179
    %v191 = vpack.c.bf16 %v182, %v181
    %v192 = vpack.c.bf16 %v184, %v183
    %v193 = vld [vmem:[#allocation6] sm:$0x1]
    %v195 = vlaneseq
    %v196 = vshrl.u32 %v195, 7
    %v197 = vsub.s32 0, %v196
    %v198 = vrot.slane %v193, %v197
    %200 = vmatprep.subr.bf16.mxu0 0
    %201 = vmatpush1.bf16.msra.mxu0 %v185
    %202 = vmatprep.subr.bf16.mxu0 0
    %203 = vmatpush1.bf16.msra.mxu0 %v186
    %204 = vmatprep.subr.bf16.mxu0 0
    %205 = vmatpush1.bf16.msra.mxu0 %v187
    %206 = vmatprep.subr.bf16.mxu0 0
    %207 = vmatpush1.bf16.msra.mxu0 %v188
    %208 = vmatprep.subr.bf16.mxu0 0
    %209 = vmatpush1.bf16.msra.mxu0 %v189
    %210 = vmatprep.subr.bf16.mxu0 0
    %211 = vmatpush1.bf16.msra.mxu0 %v190
    %212 = vmatprep.subr.bf16.mxu0 0
    %213 = vmatpush1.bf16.msra.mxu0 %v191
    %214 = vmatprep.subr.bf16.mxu0 0
    %215 = vmatpush1.bf16.msra.mxu0 %v192
    %216 = vmatprep.subr.bf16.mxu0 0
    %217 = vmatpush1.bf16.msra.mxu0 0
    %218 = vmatprep.subr.bf16.mxu0 0
    %219 = vmatpush1.bf16.msra.mxu0 0
    %220 = vmatprep.subr.bf16.mxu0 0
    %221 = vmatpush1.bf16.msra.mxu0 0
    %222 = vmatprep.subr.bf16.mxu0 0
    %223 = vmatpush1.bf16.msra.mxu0 0
    %224 = vmatprep.subr.bf16.mxu0 0
    %225 = vmatpush1.bf16.msra.mxu0 0
    %226 = vmatprep.subr.bf16.mxu0 0
    %227 = vmatpush1.bf16.msra.mxu0 0
    %228 = vmatprep.subr.bf16.mxu0 0
    %229 = vmatpush1.bf16.msra.mxu0 0
    %230 = vmatprep.subr.bf16.mxu0 0
    %231 = vmatpush1.bf16.msra.mxu0 0
    %232 = vmatprep.mubr.bf16.mxu0 0
    %233 = vmatmul.mubr.bf16.gmra.mrb[0].mxu0 %v168
    %v234 = vpop.f32.mrb[0].mxu0
    %v235 = vadd.f32 %v198, %v234
    %v236 = vpop.f32.mrb[0].mxu0
    %v237 = vpop.f32.mrb[0].mxu0
    %v238 = vpop.f32.mrb[0].mxu0
    %239 = vdwg.mxu0
    %v240 = vtanh.pop %v235
    %v241 = vpack.c.bf16 %v240, %v240
    %v242 = vld [vmem:[#allocation7] sm:$0xff]
    %v243 = vld [vmem:[#allocation7 + $0x8] sm:$0xff]
    %v244 = vld [vmem:[#allocation7 + $0x10] sm:$0xff]
    %v245 = vld [vmem:[#allocation7 + $0x18] sm:$0xff]
    %v246 = vpack.c.bf16 %v243, %v242
    %v247 = vpack.c.bf16 %v245, %v244
    %v249 = vsel %vm123, %v241, 0
    %251 = vmatprep.subr.bf16.mxu0 0
    %252 = vmatpush1.bf16.msra.mxu0 %v246
    %253 = vmatprep.subr.bf16.mxu0 0
    %254 = vmatpush1.bf16.msra.mxu0 %v247
    %255 = vmatprep.subr.bf16.mxu0 0
    %256 = vmatpush1.bf16.msra.mxu0 0
    %257 = vmatprep.subr.bf16.mxu0 0
    %258 = vmatpush1.bf16.msra.mxu0 0
    %259 = vmatprep.subr.bf16.mxu0 0
    %260 = vmatpush1.bf16.msra.mxu0 0
    %261 = vmatprep.subr.bf16.mxu0 0
    %262 = vmatpush1.bf16.msra.mxu0 0
    %263 = vmatprep.subr.bf16.mxu0 0
    %264 = vmatpush1.bf16.msra.mxu0 0
    %265 = vmatprep.subr.bf16.mxu0 0
    %266 = vmatpush1.bf16.msra.mxu0 0
    %267 = vmatprep.subr.bf16.mxu0 0
    %268 = vmatpush1.bf16.msra.mxu0 0
    %269 = vmatprep.subr.bf16.mxu0 0
    %270 = vmatpush1.bf16.msra.mxu0 0
    %271 = vmatprep.subr.bf16.mxu0 0
    %272 = vmatpush1.bf16.msra.mxu0 0
    %273 = vmatprep.subr.bf16.mxu0 0
    %274 = vmatpush1.bf16.msra.mxu0 0
    %275 = vmatprep.subr.bf16.mxu0 0
    %276 = vmatpush1.bf16.msra.mxu0 0
    %277 = vmatprep.subr.bf16.mxu0 0
    %278 = vmatpush1.bf16.msra.mxu0 0
    %279 = vmatprep.subr.bf16.mxu0 0
    %280 = vmatpush1.bf16.msra.mxu0 0
    %281 = vmatprep.subr.bf16.mxu0 0
    %282 = vmatpush1.bf16.msra.mxu0 0
    %283 = vmatprep.mubr.bf16.mxu0 0
    %284 = vmatmul.mubr.bf16.gmra.mrb[0].mxu0 %v249
    %v285 = vpop.f32.mrb[0].mxu0
    %v286 = vadd.f32 0.0, %v285
    %v287 = vpop.f32.mrb[0].mxu0
    %v288 = vpop.f32.mrb[0].mxu0
    %v289 = vpop.f32.mrb[0].mxu0
    %290 = vdwg.mxu0
    %v292 = vcombine.high %v286, %v286
    %v294 = vpack.c.bf16 %v286, %v286
    %v295 = vpack.c.bf16 %v292, %v292
    %vm296 = vcmask 31744
    %v298 = vsel %vm296, %v101, 0
    %vm300 = vcmask 1041408
    %v302 = vsel %vm300, %v294, 0
    %304 = vmatprep.subr.bf16.mxu0 0
    %305 = vmatpush1.bf16.msra.mxu0 %v302
    %306 = vmatprep.subr.bf16.mxu0 0
    %307 = vmatpush1.bf16.msra.mxu0 0
    %308 = vmatprep.subr.bf16.mxu0 0
    %309 = vmatpush1.bf16.msra.mxu0 0
    %310 = vmatprep.subr.bf16.mxu0 0
    %311 = vmatpush1.bf16.msra.mxu0 0
    %312 = vmatprep.subr.bf16.mxu0 0
    %313 = vmatpush1.bf16.msra.mxu0 0
    %314 = vmatprep.subr.bf16.mxu0 0
    %315 = vmatpush1.bf16.msra.mxu0 0
    %316 = vmatprep.subr.bf16.mxu0 0
    %317 = vmatpush1.bf16.msra.mxu0 0
    %318 = vmatprep.subr.bf16.mxu0 0
    %319 = vmatpush1.bf16.msra.mxu0 0
    %320 = vmatprep.subr.bf16.mxu0 0
    %321 = vmatpush1.bf16.msra.mxu0 0
    %322 = vmatprep.subr.bf16.mxu0 0
    %323 = vmatpush1.bf16.msra.mxu0 0
    %324 = vmatprep.subr.bf16.mxu0 0
    %325 = vmatpush1.bf16.msra.mxu0 0
    %326 = vmatprep.subr.bf16.mxu0 0
    %327 = vmatpush1.bf16.msra.mxu0 0
    %328 = vmatprep.subr.bf16.mxu0 0
    %329 = vmatpush1.bf16.msra.mxu0 0
    %330 = vmatprep.subr.bf16.mxu0 0
    %331 = vmatpush1.bf16.msra.mxu0 0
    %332 = vmatprep.subr.bf16.mxu0 0
    %333 = vmatpush1.bf16.msra.mxu0 0
    %334 = vmatprep.subr.bf16.mxu0 0
    %335 = vmatpush1.bf16.msra.mxu0 0
    %336 = vmatprep.mubr.bf16.mxu0 0
    %337 = vmatmul.mubr.bf16.gmra.mrb[0].mxu0 %v298
    %v338 = vpop.f32.mrb[0].mxu0
    %v339 = vadd.f32 0.0, %v338
    %v340 = vpop.f32.mrb[0].mxu0
    %v341 = vpop.f32.mrb[0].mxu0
    %v342 = vpop.f32.mrb[0].mxu0
    %343 = vdwg.mxu0
    %v345 = vsel %vm296, %v102, 0
    %v348 = vsel %vm300, %v295, 0
    %350 = vmatprep.subr.bf16.mxu0 0
    %351 = vmatpush1.bf16.msra.mxu0 %v348
    %352 = vmatprep.subr.bf16.mxu0 0
    %353 = vmatpush1.bf16.msra.mxu0 0
    %354 = vmatprep.subr.bf16.mxu0 0
    %355 = vmatpush1.bf16.msra.mxu0 0
    %356 = vmatprep.subr.bf16.mxu0 0
    %357 = vmatpush1.bf16.msra.mxu0 0
    %358 = vmatprep.subr.bf16.mxu0 0
    %359 = vmatpush1.bf16.msra.mxu0 0
    %360 = vmatprep.subr.bf16.mxu0 0
    %361 = vmatpush1.bf16.msra.mxu0 0
    %362 = vmatprep.subr.bf16.mxu0 0
    %363 = vmatpush1.bf16.msra.mxu0 0
    %364 = vmatprep.subr.bf16.mxu0 0
    %365 = vmatpush1.bf16.msra.mxu0 0
    %366 = vmatprep.subr.bf16.mxu0 0
    %367 = vmatpush1.bf16.msra.mxu0 0
    %368 = vmatprep.subr.bf16.mxu0 0
    %369 = vmatpush1.bf16.msra.mxu0 0
    %370 = vmatprep.subr.bf16.mxu0 0
    %371 = vmatpush1.bf16.msra.mxu0 0
    %372 = vmatprep.subr.bf16.mxu0 0
    %373 = vmatpush1.bf16.msra.mxu0 0
    %374 = vmatprep.subr.bf16.mxu0 0
    %375 = vmatpush1.bf16.msra.mxu0 0
    %376 = vmatprep.subr.bf16.mxu0 0
    %377 = vmatpush1.bf16.msra.mxu0 0
    %378 = vmatprep.subr.bf16.mxu0 0
    %379 = vmatpush1.bf16.msra.mxu0 0
    %380 = vmatprep.subr.bf16.mxu0 0
    %381 = vmatpush1.bf16.msra.mxu0 0
    %382 = vmatprep.mubr.bf16.mxu0 0
    %383 = vmatmul.mubr.bf16.gmra.mrb[0].mxu0 %v345
    %v384 = vpop.f32.mrb[0].mxu0
    %v385 = vadd.f32 0.0, %v384
    %v386 = vpop.f32.mrb[0].mxu0
    %v387 = vpop.f32.mrb[0].mxu0
    %v388 = vpop.f32.mrb[0].mxu0
    %389 = vdwg.mxu0
    %v390 = vtanh.pop %v339
    %v391 = vtanh.pop %v385
    %v394 = vcombine.low %v390, %v391
    %v396 = vpack.c.bf16 %v394, %v394
    %s397 = scalar_lea.vmem [#allocation7], 32
    %v398 = vld [vmem:[%s397] sm:$0xff]
    %v399 = vld [vmem:[%s397 + $0x8] sm:$0xff]
    %v400 = vld [vmem:[%s397 + $0x10] sm:$0xff]
    %v401 = vld [vmem:[%s397 + $0x18] sm:$0xff]
    %v402 = vpack.c.bf16 %v399, %v398
    %v403 = vpack.c.bf16 %v401, %v400
    %v405 = vsel %vm123, %v396, 0
    %407 = vmatprep.subr.bf16.mxu0 0
    %408 = vmatpush1.bf16.msra.mxu0 %v402
    %409 = vmatprep.subr.bf16.mxu0 0
    %410 = vmatpush1.bf16.msra.mxu0 %v403
    %411 = vmatprep.subr.bf16.mxu0 0
    %412 = vmatpush1.bf16.msra.mxu0 0
    %413 = vmatprep.subr.bf16.mxu0 0
    %414 = vmatpush1.bf16.msra.mxu0 0
    %415 = vmatprep.subr.bf16.mxu0 0
    %416 = vmatpush1.bf16.msra.mxu0 0
    %417 = vmatprep.subr.bf16.mxu0 0
    %418 = vmatpush1.bf16.msra.mxu0 0
    %419 = vmatprep.subr.bf16.mxu0 0
    %420 = vmatpush1.bf16.msra.mxu0 0
    %421 = vmatprep.subr.bf16.mxu0 0
    %422 = vmatpush1.bf16.msra.mxu0 0
    %423 = vmatprep.subr.bf16.mxu0 0
    %424 = vmatpush1.bf16.msra.mxu0 0
    %425 = vmatprep.subr.bf16.mxu0 0
    %426 = vmatpush1.bf16.msra.mxu0 0
    %427 = vmatprep.subr.bf16.mxu0 0
    %428 = vmatpush1.bf16.msra.mxu0 0
    %429 = vmatprep.subr.bf16.mxu0 0
    %430 = vmatpush1.bf16.msra.mxu0 0
    %431 = vmatprep.subr.bf16.mxu0 0
    %432 = vmatpush1.bf16.msra.mxu0 0
    %433 = vmatprep.subr.bf16.mxu0 0
    %434 = vmatpush1.bf16.msra.mxu0 0
    %435 = vmatprep.subr.bf16.mxu0 0
    %436 = vmatpush1.bf16.msra.mxu0 0
    %437 = vmatprep.subr.bf16.mxu0 0
    %438 = vmatpush1.bf16.msra.mxu0 0
    %439 = vmatprep.mubr.bf16.mxu0 0
    %440 = vmatmul.mubr.bf16.gmra.mrb[0].mxu0 %v405
    %v441 = vpop.f32.mrb[0].mxu0
    %v442 = vadd.f32 0.0, %v441
    %v443 = vpop.f32.mrb[0].mxu0
    %v444 = vpop.f32.mrb[0].mxu0
    %v445 = vpop.f32.mrb[0].mxu0
    %446 = vdwg.mxu0
    %v448 = vcombine.high %v442, %v442
    %v450 = vpack.c.bf16 %v442, %v442
    %v451 = vpack.c.bf16 %v448, %v448
    %v453 = vsel %vm300, %v450, 0
    %455 = vmatprep.subr.bf16.mxu0 0
    %456 = vmatpush1.bf16.msra.mxu0 %v453
    %457 = vmatprep.subr.bf16.mxu0 0
    %458 = vmatpush1.bf16.msra.mxu0 0
    %459 = vmatprep.subr.bf16.mxu0 0
    %460 = vmatpush1.bf16.msra.mxu0 0
    %461 = vmatprep.subr.bf16.mxu0 0
    %462 = vmatpush1.bf16.msra.mxu0 0
    %463 = vmatprep.subr.bf16.mxu0 0
    %464 = vmatpush1.bf16.msra.mxu0 0
    %465 = vmatprep.subr.bf16.mxu0 0
    %466 = vmatpush1.bf16.msra.mxu0 0
    %467 = vmatprep.subr.bf16.mxu0 0
    %468 = vmatpush1.bf16.msra.mxu0 0
    %469 = vmatprep.subr.bf16.mxu0 0
    %470 = vmatpush1.bf16.msra.mxu0 0
    %471 = vmatprep.subr.bf16.mxu0 0
    %472 = vmatpush1.bf16.msra.mxu0 0
    %473 = vmatprep.subr.bf16.mxu0 0
    %474 = vmatpush1.bf16.msra.mxu0 0
    %475 = vmatprep.subr.bf16.mxu0 0
    %476 = vmatpush1.bf16.msra.mxu0 0
    %477 = vmatprep.subr.bf16.mxu0 0
    %478 = vmatpush1.bf16.msra.mxu0 0
    %479 = vmatprep.subr.bf16.mxu0 0
    %480 = vmatpush1.bf16.msra.mxu0 0
    %481 = vmatprep.subr.bf16.mxu0 0
    %482 = vmatpush1.bf16.msra.mxu0 0
    %483 = vmatprep.subr.bf16.mxu0 0
    %484 = vmatpush1.bf16.msra.mxu0 0
    %485 = vmatprep.subr.bf16.mxu0 0
    %486 = vmatpush1.bf16.msra.mxu0 0
    %487 = vmatprep.mubr.bf16.mxu0 0
    %488 = vmatmul.mubr.bf16.gmra.mrb[0].mxu0 %v298
    %v489 = vpop.f32.mrb[0].mxu0
    %v490 = vadd.f32 0.0, %v489
    %v491 = vpop.f32.mrb[0].mxu0
    %v492 = vpop.f32.mrb[0].mxu0
    %v493 = vpop.f32.mrb[0].mxu0
    %494 = vdwg.mxu0
    %v496 = vsel %vm300, %v451, 0
    %498 = vmatprep.subr.bf16.mxu0 0
    %499 = vmatpush1.bf16.msra.mxu0 %v496
    %500 = vmatprep.subr.bf16.mxu0 0
    %501 = vmatpush1.bf16.msra.mxu0 0
    %502 = vmatprep.subr.bf16.mxu0 0
    %503 = vmatpush1.bf16.msra.mxu0 0
    %504 = vmatprep.subr.bf16.mxu0 0
    %505 = vmatpush1.bf16.msra.mxu0 0
    %506 = vmatprep.subr.bf16.mxu0 0
    %507 = vmatpush1.bf16.msra.mxu0 0
    %508 = vmatprep.subr.bf16.mxu0 0
    %509 = vmatpush1.bf16.msra.mxu0 0
    %510 = vmatprep.subr.bf16.mxu0 0
    %511 = vmatpush1.bf16.msra.mxu0 0
    %512 = vmatprep.subr.bf16.mxu0 0
    %513 = vmatpush1.bf16.msra.mxu0 0
    %514 = vmatprep.subr.bf16.mxu0 0
    %515 = vmatpush1.bf16.msra.mxu0 0
    %516 = vmatprep.subr.bf16.mxu0 0
    %517 = vmatpush1.bf16.msra.mxu0 0
    %518 = vmatprep.subr.bf16.mxu0 0
    %519 = vmatpush1.bf16.msra.mxu0 0
    %520 = vmatprep.subr.bf16.mxu0 0
    %521 = vmatpush1.bf16.msra.mxu0 0
    %522 = vmatprep.subr.bf16.mxu0 0
    %523 = vmatpush1.bf16.msra.mxu0 0
    %524 = vmatprep.subr.bf16.mxu0 0
    %525 = vmatpush1.bf16.msra.mxu0 0
    %526 = vmatprep.subr.bf16.mxu0 0
    %527 = vmatpush1.bf16.msra.mxu0 0
    %528 = vmatprep.subr.bf16.mxu0 0
    %529 = vmatpush1.bf16.msra.mxu0 0
    %530 = vmatprep.mubr.bf16.mxu0 0
    %531 = vmatmul.mubr.bf16.gmra.mrb[0].mxu0 %v345
    %v532 = vpop.f32.mrb[0].mxu0
    %v533 = vadd.f32 0.0, %v532
    %v534 = vpop.f32.mrb[0].mxu0
    %v535 = vpop.f32.mrb[0].mxu0
    %v536 = vpop.f32.mrb[0].mxu0
    %537 = vdwg.mxu0
    %v538 = vtanh.pop %v490
    %v539 = vtanh.pop %v533
    %v542 = vcombine.low %v538, %v539
    %v544 = vpack.c.bf16 %v542, %v542
    %v545 = vld [vmem:[#allocation9] sm:$0xff]
    %v546 = vld [vmem:[#allocation9 + $0x8] sm:$0xff]
    %v547 = vld [vmem:[#allocation9 + $0x10] sm:$0xff]
    %v548 = vld [vmem:[#allocation9 + $0x18] sm:$0xff]
    %v549 = vpack.c.bf16 %v546, %v545
    %v550 = vpack.c.bf16 %v548, %v547
    %v552 = vsel %vm123, %v544, 0
    %554 = vmatprep.subr.bf16.mxu0 0
    %555 = vmatpush1.bf16.msra.mxu0 %v549
    %556 = vmatprep.subr.bf16.mxu0 0
    %557 = vmatpush1.bf16.msra.mxu0 %v550
    %558 = vmatprep.subr.bf16.mxu0 0
    %559 = vmatpush1.bf16.msra.mxu0 0
    %560 = vmatprep.subr.bf16.mxu0 0
    %561 = vmatpush1.bf16.msra.mxu0 0
    %562 = vmatprep.subr.bf16.mxu0 0
    %563 = vmatpush1.bf16.msra.mxu0 0
    %564 = vmatprep.subr.bf16.mxu0 0
    %565 = vmatpush1.bf16.msra.mxu0 0
    %566 = vmatprep.subr.bf16.mxu0 0
    %567 = vmatpush1.bf16.msra.mxu0 0
    %568 = vmatprep.subr.bf16.mxu0 0
    %569 = vmatpush1.bf16.msra.mxu0 0
    %570 = vmatprep.subr.bf16.mxu0 0
    %571 = vmatpush1.bf16.msra.mxu0 0
    %572 = vmatprep.subr.bf16.mxu0 0
    %573 = vmatpush1.bf16.msra.mxu0 0
    %574 = vmatprep.subr.bf16.mxu0 0
    %575 = vmatpush1.bf16.msra.mxu0 0
    %576 = vmatprep.subr.bf16.mxu0 0
    %577 = vmatpush1.bf16.msra.mxu0 0
    %578 = vmatprep.subr.bf16.mxu0 0
    %579 = vmatpush1.bf16.msra.mxu0 0
    %580 = vmatprep.subr.bf16.mxu0 0
    %581 = vmatpush1.bf16.msra.mxu0 0
    %582 = vmatprep.subr.bf16.mxu0 0
    %583 = vmatpush1.bf16.msra.mxu0 0
    %584 = vmatprep.subr.bf16.mxu0 0
    %585 = vmatpush1.bf16.msra.mxu0 0
    %586 = vmatprep.mubr.bf16.mxu0 0
    %587 = vmatmul.mubr.bf16.gmra.mrb[0].mxu0 %v552
    %v588 = vpop.f32.mrb[0].mxu0
    %v589 = vadd.f32 0.0, %v588
    %v590 = vpop.f32.mrb[0].mxu0
    %v591 = vpop.f32.mrb[0].mxu0
    %v592 = vpop.f32.mrb[0].mxu0
    %593 = vdwg.mxu0
    %v595 = vcombine.high %v589, %v589
    %v597 = vpack.c.bf16 %v589, %v589
    %v598 = vpack.c.bf16 %v595, %v595
    %v600 = vsel %vm300, %v597, 0
    %602 = vmatprep.subr.bf16.mxu0 0
    %603 = vmatpush1.bf16.msra.mxu0 %v600
    %604 = vmatprep.subr.bf16.mxu0 0
    %605 = vmatpush1.bf16.msra.mxu0 0
    %606 = vmatprep.subr.bf16.mxu0 0
    %607 = vmatpush1.bf16.msra.mxu0 0
    %608 = vmatprep.subr.bf16.mxu0 0
    %609 = vmatpush1.bf16.msra.mxu0 0
    %610 = vmatprep.subr.bf16.mxu0 0
    %611 = vmatpush1.bf16.msra.mxu0 0
    %612 = vmatprep.subr.bf16.mxu0 0
    %613 = vmatpush1.bf16.msra.mxu0 0
    %614 = vmatprep.subr.bf16.mxu0 0
    %615 = vmatpush1.bf16.msra.mxu0 0
    %616 = vmatprep.subr.bf16.mxu0 0
    %617 = vmatpush1.bf16.msra.mxu0 0
    %618 = vmatprep.subr.bf16.mxu0 0
    %619 = vmatpush1.bf16.msra.mxu0 0
    %620 = vmatprep.subr.bf16.mxu0 0
    %621 = vmatpush1.bf16.msra.mxu0 0
    %622 = vmatprep.subr.bf16.mxu0 0
    %623 = vmatpush1.bf16.msra.mxu0 0
    %624 = vmatprep.subr.bf16.mxu0 0
    %625 = vmatpush1.bf16.msra.mxu0 0
    %626 = vmatprep.subr.bf16.mxu0 0
    %627 = vmatpush1.bf16.msra.mxu0 0
    %628 = vmatprep.subr.bf16.mxu0 0
    %629 = vmatpush1.bf16.msra.mxu0 0
    %630 = vmatprep.subr.bf16.mxu0 0
    %631 = vmatpush1.bf16.msra.mxu0 0
    %632 = vmatprep.subr.bf16.mxu0 0
    %633 = vmatpush1.bf16.msra.mxu0 0
    %634 = vmatprep.mubr.bf16.mxu0 0
    %635 = vmatmul.mubr.bf16.gmra.mrb[0].mxu0 %v298
    %v636 = vpop.f32.mrb[0].mxu0
    %v637 = vadd.f32 0.0, %v636
    %v638 = vpop.f32.mrb[0].mxu0
    %v639 = vpop.f32.mrb[0].mxu0
    %v640 = vpop.f32.mrb[0].mxu0
    %641 = vdwg.mxu0
    %v643 = vsel %vm300, %v598, 0
    %645 = vmatprep.subr.bf16.mxu0 0
    %646 = vmatpush1.bf16.msra.mxu0 %v643
    %647 = vmatprep.subr.bf16.mxu0 0
    %648 = vmatpush1.bf16.msra.mxu0 0
    %649 = vmatprep.subr.bf16.mxu0 0
    %650 = vmatpush1.bf16.msra.mxu0 0
    %651 = vmatprep.subr.bf16.mxu0 0
    %652 = vmatpush1.bf16.msra.mxu0 0
    %653 = vmatprep.subr.bf16.mxu0 0
    %654 = vmatpush1.bf16.msra.mxu0 0
    %655 = vmatprep.subr.bf16.mxu0 0
    %656 = vmatpush1.bf16.msra.mxu0 0
    %657 = vmatprep.subr.bf16.mxu0 0
    %658 = vmatpush1.bf16.msra.mxu0 0
    %659 = vmatprep.subr.bf16.mxu0 0
    %660 = vmatpush1.bf16.msra.mxu0 0
    %661 = vmatprep.subr.bf16.mxu0 0
    %662 = vmatpush1.bf16.msra.mxu0 0
    %663 = vmatprep.subr.bf16.mxu0 0
    %664 = vmatpush1.bf16.msra.mxu0 0
    %665 = vmatprep.subr.bf16.mxu0 0
    %666 = vmatpush1.bf16.msra.mxu0 0
    %667 = vmatprep.subr.bf16.mxu0 0
    %668 = vmatpush1.bf16.msra.mxu0 0
    %669 = vmatprep.subr.bf16.mxu0 0
    %670 = vmatpush1.bf16.msra.mxu0 0
    %671 = vmatprep.subr.bf16.mxu0 0
    %672 = vmatpush1.bf16.msra.mxu0 0
    %673 = vmatprep.subr.bf16.mxu0 0
    %674 = vmatpush1.bf16.msra.mxu0 0
    %675 = vmatprep.subr.bf16.mxu0 0
    %676 = vmatpush1.bf16.msra.mxu0 0
    %677 = vmatprep.mubr.bf16.mxu0 0
    %678 = vmatmul.mubr.bf16.gmra.mrb[0].mxu0 %v345
    %v679 = vpop.f32.mrb[0].mxu0
    %v680 = vadd.f32 0.0, %v679
    %v681 = vpop.f32.mrb[0].mxu0
    %v682 = vpop.f32.mrb[0].mxu0
    %v683 = vpop.f32.mrb[0].mxu0
    %684 = vdwg.mxu0
    %v685 = vtanh.pop %v637
    %v686 = vtanh.pop %v680
    %v687 = vld [vmem:[%s2] sm:$0xf]
    %v688 = vld [vmem:[%s2 + $0x4] sm:$0xf]
    %v689 = vadd.f32 %v685, %v687
    %v690 = vadd.f32 %v686, %v688
    %vm691 = vcmask 11264
    %v692 = vsel %vm691, %v689, -inf
    %693 = vmax.xlane.f32.xlu0 %v692
    %v694 = vpop.xlane.xlu0 %693
    %v695 = vsel %vm691, %v690, -inf
    %696 = vmax.xlane.f32.xlu0 %v695
    %v697 = vpop.xlane.xlu0 %696
    %v698 = vlaneseq
    %v699 = vand.u32 %v698, 127
    %vm700 = vcmp.ge.f32.partialorder %v689, %v694
    %vm701 = vcmp.ge.f32.partialorder %v690, %v697
    %v702 = vsel %vm700, %v699, 2
    %v703 = vsel %vm701, %v699, 2
    %v704 = vsel %vm691, %v702, 2147483647
    %v705 = vand.u32 %v704, 65535
    %v706 = vshra.s32 %v704, 16
    %v707 = vcvt.s32.f32 %v705
    %v708 = vcvt.s32.f32 %v706
    %709 = vmin.xlane.f32.xlu0 %v708
    %v710 = vpop.xlane.xlu0 %709
    %vm711 = vcmp.eq.f32.partialorder %v708, %v710
    %v712 = vsel %vm711, %v707, inf
    %713 = vmin.xlane.f32.xlu0 %v712
    %v714 = vpop.xlane.xlu0 %713
    %v715 = vcvt.f32.s32 %v714
    %v716 = vcvt.f32.s32 %v710
    %v717 = vshll.u32 %v716, 16
    %v718 = vadd.s32 %v717, %v715
    %v719 = vsel %vm691, %v703, 2147483647
    %v720 = vand.u32 %v719, 65535
    %v721 = vshra.s32 %v719, 16
    %v722 = vcvt.s32.f32 %v720
    %v723 = vcvt.s32.f32 %v721
    %724 = vmin.xlane.f32.xlu0 %v723
    %v725 = vpop.xlane.xlu0 %724
    %vm726 = vcmp.eq.f32.partialorder %v723, %v725
    %v727 = vsel %vm726, %v722, inf
    %728 = vmin.xlane.f32.xlu0 %v727
    %v729 = vpop.xlane.xlu0 %728
    %v730 = vcvt.f32.s32 %v729
    %v731 = vcvt.f32.s32 %v725
    %v732 = vshll.u32 %v731, 16
    %v733 = vadd.s32 %v732, %v730
    %vm734 = vcmp.eq.s32.totalorder %v699, %v718
    %vm735 = vcmp.eq.s32.totalorder %v699, %v733
    %v736 = vsel %vm734, 1, 0
    %v737 = vsel %vm735, 1, 0
    %v738 = vcvt.s32.f32 %v736
    %v739 = vcvt.s32.f32 %v737
    %740 = vxpose.xlu0.b32.start [1/16] %v738, 128
    %741 = vxpose.xlu0.b32.cont [2/16] 0.0, 128
    %742 = vxpose.xlu0.b32.cont [3/16] 0.0, 128
    %743 = vxpose.xlu0.b32.cont [4/16] 0.0, 128
    %744 = vxpose.xlu0.b32.cont [5/16] 0.0, 128
    %745 = vxpose.xlu0.b32.cont [6/16] 0.0, 128
    %746 = vxpose.xlu0.b32.cont [7/16] 0.0, 128
    %747 = vxpose.xlu0.b32.cont [8/16] 0.0, 128
    %748 = vxpose.xlu0.b32.cont [9/16] 0.0, 128
    %749 = vxpose.xlu0.b32.cont [10/16] 0.0, 128
    %750 = vxpose.xlu0.b32.cont [11/16] 0.0, 128
    %751 = vxpose.xlu0.b32.cont [12/16] 0.0, 128
    %752 = vxpose.xlu0.b32.cont [13/16] 0.0, 128
    %753 = vxpose.xlu0.b32.cont [14/16] 0.0, 128
    %754 = vxpose.xlu0.b32.cont [15/16] 0.0, 128
    %755 = vxpose.xlu0.b32.end [16/16] 0.0, 128
    %v756 = vpop.trf.xlu0
    %v757 = vpop.trf.xlu0
    %v758 = vpop.trf.xlu0
    %v759 = vpop.trf.xlu0
    %v760 = vpop.trf.xlu0
    %v761 = vpop.trf.xlu0
    %v762 = vpop.trf.xlu0
    %v763 = vpop.trf.xlu0
    %v764 = vpop.trf.xlu0
    %v765 = vpop.trf.xlu0
    %v766 = vpop.trf.xlu0
    %v767 = vpop.trf.xlu0
    %v768 = vpop.trf.xlu0
    %v769 = vpop.trf.xlu0
    %v770 = vpop.trf.xlu0
    %v771 = vpop.trf.xlu0
    %v773 = vsel %vm296, %v756, 0
    %vm775 = vcmask 1043456
    %v776 = vsel %vm775, %v103, 0
    %778 = vmatprep.subr.mxu0 0.0
    %779 = vmatpush1.msra.mxu0 %v776
    %780 = vmatprep.subr.mxu0 0.0
    %781 = vmatpush1.msra.mxu0 0.0
    %782 = vmatprep.subr.mxu0 0.0
    %783 = vmatpush1.msra.mxu0 0.0
    %784 = vmatprep.subr.mxu0 0.0
    %785 = vmatpush1.msra.mxu0 0.0
    %786 = vmatprep.subr.mxu0 0.0
    %787 = vmatpush1.msra.mxu0 0.0
    %788 = vmatprep.subr.mxu0 0.0
    %789 = vmatpush1.msra.mxu0 0.0
    %790 = vmatprep.subr.mxu0 0.0
    %791 = vmatpush1.msra.mxu0 0.0
    %792 = vmatprep.subr.mxu0 0.0
    %793 = vmatpush1.msra.mxu0 0.0
    %794 = vmatprep.subr.mxu0 0.0
    %795 = vmatpush1.msra.mxu0 0.0
    %796 = vmatprep.subr.mxu0 0.0
    %797 = vmatpush1.msra.mxu0 0.0
    %798 = vmatprep.subr.mxu0 0.0
    %799 = vmatpush1.msra.mxu0 0.0
    %800 = vmatprep.subr.mxu0 0.0
    %801 = vmatpush1.msra.mxu0 0.0
    %802 = vmatprep.subr.mxu0 0.0
    %803 = vmatpush1.msra.mxu0 0.0
    %804 = vmatprep.subr.mxu0 0.0
    %805 = vmatpush1.msra.mxu0 0.0
    %806 = vmatprep.subr.mxu0 0.0
    %807 = vmatpush1.msra.mxu0 0.0
    %808 = vmatprep.subr.mxu0 0.0
    %809 = vmatpush1.msra.mxu0 0.0
    %810 = vmatprep.subr.mxu0 0.0
    %811 = vmatpush1.msra.mxu0 0.0
    %812 = vmatprep.subr.mxu0 0.0
    %813 = vmatpush1.msra.mxu0 0.0
    %814 = vmatprep.subr.mxu0 0.0
    %815 = vmatpush1.msra.mxu0 0.0
    %816 = vmatprep.subr.mxu0 0.0
    %817 = vmatpush1.msra.mxu0 0.0
    %818 = vmatprep.subr.mxu0 0.0
    %819 = vmatpush1.msra.mxu0 0.0
    %820 = vmatprep.subr.mxu0 0.0
    %821 = vmatpush1.msra.mxu0 0.0
    %822 = vmatprep.subr.mxu0 0.0
    %823 = vmatpush1.msra.mxu0 0.0
    %824 = vmatprep.subr.mxu0 0.0
    %825 = vmatpush1.msra.mxu0 0.0
    %826 = vmatprep.subr.mxu0 0.0
    %827 = vmatpush1.msra.mxu0 0.0
    %828 = vmatprep.subr.mxu0 0.0
    %829 = vmatpush1.msra.mxu0 0.0
    %830 = vmatprep.subr.mxu0 0.0
    %831 = vmatpush1.msra.mxu0 0.0
    %832 = vmatprep.subr.mxu0 0.0
    %833 = vmatpush1.msra.mxu0 0.0
    %834 = vmatprep.subr.mxu0 0.0
    %835 = vmatpush1.msra.mxu0 0.0
    %836 = vmatprep.subr.mxu0 0.0
    %837 = vmatpush1.msra.mxu0 0.0
    %838 = vmatprep.subr.mxu0 0.0
    %839 = vmatpush1.msra.mxu0 0.0
    %840 = vmatprep.subr.mxu0 0.0
    %841 = vmatpush1.msra.mxu0 0.0
    %842 = vmatprep.mubr.f32.mxu0 0.0
    %843 = vmatmul.mubr.f32.gmra.mrb[0].mxu0 %v773
    %v844 = vpop.f32.mrb[0].mxu0
    %v845 = vadd.f32 0.0, %v844
    %v846 = vpop.f32.mrb[0].mxu0
    %847 = vdwg.mxu0
    %848 = vxpose.xlu0.b32.start [1/16] %v739, 128
    %849 = vxpose.xlu0.b32.cont [2/16] 0.0, 128
    %850 = vxpose.xlu0.b32.cont [3/16] 0.0, 128
    %851 = vxpose.xlu0.b32.cont [4/16] 0.0, 128
    %852 = vxpose.xlu0.b32.cont [5/16] 0.0, 128
    %853 = vxpose.xlu0.b32.cont [6/16] 0.0, 128
    %854 = vxpose.xlu0.b32.cont [7/16] 0.0, 128
    %855 = vxpose.xlu0.b32.cont [8/16] 0.0, 128
    %856 = vxpose.xlu0.b32.cont [9/16] 0.0, 128
    %857 = vxpose.xlu0.b32.cont [10/16] 0.0, 128
    %858 = vxpose.xlu0.b32.cont [11/16] 0.0, 128
    %859 = vxpose.xlu0.b32.cont [12/16] 0.0, 128
    %860 = vxpose.xlu0.b32.cont [13/16] 0.0, 128
    %861 = vxpose.xlu0.b32.cont [14/16] 0.0, 128
    %862 = vxpose.xlu0.b32.cont [15/16] 0.0, 128
    %863 = vxpose.xlu0.b32.end [16/16] 0.0, 128
    %v864 = vpop.trf.xlu0
    %v865 = vpop.trf.xlu0
    %v866 = vpop.trf.xlu0
    %v867 = vpop.trf.xlu0
    %v868 = vpop.trf.xlu0
    %v869 = vpop.trf.xlu0
    %v870 = vpop.trf.xlu0
    %v871 = vpop.trf.xlu0
    %v872 = vpop.trf.xlu0
    %v873 = vpop.trf.xlu0
    %v874 = vpop.trf.xlu0
    %v875 = vpop.trf.xlu0
    %v876 = vpop.trf.xlu0
    %v877 = vpop.trf.xlu0
    %v878 = vpop.trf.xlu0
    %v879 = vpop.trf.xlu0
    %v881 = vsel %vm296, %v864, 0
    %v883 = vsel %vm775, %v104, 0
    %885 = vmatprep.subr.mxu0 0.0
    %886 = vmatpush1.msra.mxu0 %v883
    %887 = vmatprep.subr.mxu0 0.0
    %888 = vmatpush1.msra.mxu0 0.0
    %889 = vmatprep.subr.mxu0 0.0
    %890 = vmatpush1.msra.mxu0 0.0
    %891 = vmatprep.subr.mxu0 0.0
    %892 = vmatpush1.msra.mxu0 0.0
    %893 = vmatprep.subr.mxu0 0.0
    %894 = vmatpush1.msra.mxu0 0.0
    %895 = vmatprep.subr.mxu0 0.0
    %896 = vmatpush1.msra.mxu0 0.0
    %897 = vmatprep.subr.mxu0 0.0
    %898 = vmatpush1.msra.mxu0 0.0
    %899 = vmatprep.subr.mxu0 0.0
    %900 = vmatpush1.msra.mxu0 0.0
    %901 = vmatprep.subr.mxu0 0.0
    %902 = vmatpush1.msra.mxu0 0.0
    %903 = vmatprep.subr.mxu0 0.0
    %904 = vmatpush1.msra.mxu0 0.0
    %905 = vmatprep.subr.mxu0 0.0
    %906 = vmatpush1.msra.mxu0 0.0
    %907 = vmatprep.subr.mxu0 0.0
    %908 = vmatpush1.msra.mxu0 0.0
    %909 = vmatprep.subr.mxu0 0.0
    %910 = vmatpush1.msra.mxu0 0.0
    %911 = vmatprep.subr.mxu0 0.0
    %912 = vmatpush1.msra.mxu0 0.0
    %913 = vmatprep.subr.mxu0 0.0
    %914 = vmatpush1.msra.mxu0 0.0
    %915 = vmatprep.subr.mxu0 0.0
    %916 = vmatpush1.msra.mxu0 0.0
    %917 = vmatprep.subr.mxu0 0.0
    %918 = vmatpush1.msra.mxu0 0.0
    %919 = vmatprep.subr.mxu0 0.0
    %920 = vmatpush1.msra.mxu0 0.0
    %921 = vmatprep.subr.mxu0 0.0
    %922 = vmatpush1.msra.mxu0 0.0
    %923 = vmatprep.subr.mxu0 0.0
    %924 = vmatpush1.msra.mxu0 0.0
    %925 = vmatprep.subr.mxu0 0.0
    %926 = vmatpush1.msra.mxu0 0.0
    %927 = vmatprep.subr.mxu0 0.0
    %928 = vmatpush1.msra.mxu0 0.0
    %929 = vmatprep.subr.mxu0 0.0
    %930 = vmatpush1.msra.mxu0 0.0
    %931 = vmatprep.subr.mxu0 0.0
    %932 = vmatpush1.msra.mxu0 0.0
    %933 = vmatprep.subr.mxu0 0.0
    %934 = vmatpush1.msra.mxu0 0.0
    %935 = vmatprep.subr.mxu0 0.0
    %936 = vmatpush1.msra.mxu0 0.0
    %937 = vmatprep.subr.mxu0 0.0
    %938 = vmatpush1.msra.mxu0 0.0
    %939 = vmatprep.subr.mxu0 0.0
    %940 = vmatpush1.msra.mxu0 0.0
    %941 = vmatprep.subr.mxu0 0.0
    %942 = vmatpush1.msra.mxu0 0.0
    %943 = vmatprep.subr.mxu0 0.0
    %944 = vmatpush1.msra.mxu0 0.0
    %945 = vmatprep.subr.mxu0 0.0
    %946 = vmatpush1.msra.mxu0 0.0
    %947 = vmatprep.subr.mxu0 0.0
    %948 = vmatpush1.msra.mxu0 0.0
    %949 = vmatprep.mubr.f32.mxu0 0.0
    %950 = vmatmul.mubr.f32.gmra.mrb[0].mxu0 %v881
    %v951 = vpop.f32.mrb[0].mxu0
    %v952 = vadd.f32 0.0, %v951
    %v953 = vpop.f32.mrb[0].mxu0
    %954 = vdwg.mxu0
    %v955 = vpack.c.bf16 %v738, %v738
    %v956 = vpack.c.bf16 %v739, %v739
    %957 = vxpose.xlu0.c.b16.start [1/8] %v955, 128
    %958 = vxpose.xlu0.c.b16.cont [2/8] 0, 128
    %959 = vxpose.xlu0.c.b16.cont [3/8] 0, 128
    %960 = vxpose.xlu0.c.b16.cont [4/8] 0, 128
    %961 = vxpose.xlu0.c.b16.cont [5/8] 0, 128
    %962 = vxpose.xlu0.c.b16.cont [6/8] 0, 128
    %963 = vxpose.xlu0.c.b16.cont [7/8] 0, 128
    %964 = vxpose.xlu0.c.b16.end [8/8] 0, 128
    %v965 = vpop.trf.xlu0
    %v966 = vpop.trf.xlu0
    %v967 = vpop.trf.xlu0
    %v968 = vpop.trf.xlu0
    %v969 = vpop.trf.xlu0
    %v970 = vpop.trf.xlu0
    %v971 = vpop.trf.xlu0
    %v972 = vpop.trf.xlu0
    %v974 = vsel %vm296, %v965, 0
    %v976 = vsel %vm300, %v101, 0
    %978 = vmatprep.subr.bf16.mxu0 0
    %979 = vmatpush1.bf16.msra.mxu0 %v976
    %980 = vmatprep.subr.bf16.mxu0 0
    %981 = vmatpush1.bf16.msra.mxu0 0
    %982 = vmatprep.subr.bf16.mxu0 0
    %983 = vmatpush1.bf16.msra.mxu0 0
    %984 = vmatprep.subr.bf16.mxu0 0
    %985 = vmatpush1.bf16.msra.mxu0 0
    %986 = vmatprep.subr.bf16.mxu0 0
    %987 = vmatpush1.bf16.msra.mxu0 0
    %988 = vmatprep.subr.bf16.mxu0 0
    %989 = vmatpush1.bf16.msra.mxu0 0
    %990 = vmatprep.subr.bf16.mxu0 0
    %991 = vmatpush1.bf16.msra.mxu0 0
    %992 = vmatprep.subr.bf16.mxu0 0
    %993 = vmatpush1.bf16.msra.mxu0 0
    %994 = vmatprep.subr.bf16.mxu0 0
    %995 = vmatpush1.bf16.msra.mxu0 0
    %996 = vmatprep.subr.bf16.mxu0 0
    %997 = vmatpush1.bf16.msra.mxu0 0
    %998 = vmatprep.subr.bf16.mxu0 0
    %999 = vmatpush1.bf16.msra.mxu0 0
    %1000 = vmatprep.subr.bf16.mxu0 0
    %1001 = vmatpush1.bf16.msra.mxu0 0
    %1002 = vmatprep.subr.bf16.mxu0 0
    %1003 = vmatpush1.bf16.msra.mxu0 0
    %1004 = vmatprep.subr.bf16.mxu0 0
    %1005 = vmatpush1.bf16.msra.mxu0 0
    %1006 = vmatprep.subr.bf16.mxu0 0
    %1007 = vmatpush1.bf16.msra.mxu0 0
    %1008 = vmatprep.subr.bf16.mxu0 0
    %1009 = vmatpush1.bf16.msra.mxu0 0
    %1010 = vmatprep.mubr.bf16.mxu0 0
    %1011 = vmatmul.mubr.bf16.gmra.mrb[0].mxu0 %v974
    %v1012 = vpop.f32.mrb[0].mxu0
    %v1013 = vadd.f32 0.0, %v1012
    %v1014 = vpop.f32.mrb[0].mxu0
    %v1015 = vpop.f32.mrb[0].mxu0
    %v1016 = vpop.f32.mrb[0].mxu0
    %1017 = vdwg.mxu0
    %1018 = vxpose.xlu0.c.b16.start [1/8] %v956, 128
    %1019 = vxpose.xlu0.c.b16.cont [2/8] 0, 128
    %1020 = vxpose.xlu0.c.b16.cont [3/8] 0, 128
    %1021 = vxpose.xlu0.c.b16.cont [4/8] 0, 128
    %1022 = vxpose.xlu0.c.b16.cont [5/8] 0, 128
    %1023 = vxpose.xlu0.c.b16.cont [6/8] 0, 128
    %1024 = vxpose.xlu0.c.b16.cont [7/8] 0, 128
    %1025 = vxpose.xlu0.c.b16.end [8/8] 0, 128
    %v1026 = vpop.trf.xlu0
    %v1027 = vpop.trf.xlu0
    %v1028 = vpop.trf.xlu0
    %v1029 = vpop.trf.xlu0
    %v1030 = vpop.trf.xlu0
    %v1031 = vpop.trf.xlu0
    %v1032 = vpop.trf.xlu0
    %v1033 = vpop.trf.xlu0
    %v1035 = vsel %vm296, %v1026, 0
    %v1037 = vsel %vm300, %v102, 0
    %1039 = vmatprep.subr.bf16.mxu0 0
    %1040 = vmatpush1.bf16.msra.mxu0 %v1037
    %1041 = vmatprep.subr.bf16.mxu0 0
    %1042 = vmatpush1.bf16.msra.mxu0 0
    %1043 = vmatprep.subr.bf16.mxu0 0
    %1044 = vmatpush1.bf16.msra.mxu0 0
    %1045 = vmatprep.subr.bf16.mxu0 0
    %1046 = vmatpush1.bf16.msra.mxu0 0
    %1047 = vmatprep.subr.bf16.mxu0 0
    %1048 = vmatpush1.bf16.msra.mxu0 0
    %1049 = vmatprep.subr.bf16.mxu0 0
    %1050 = vmatpush1.bf16.msra.mxu0 0
    %1051 = vmatprep.subr.bf16.mxu0 0
    %1052 = vmatpush1.bf16.msra.mxu0 0
    %1053 = vmatprep.subr.bf16.mxu0 0
    %1054 = vmatpush1.bf16.msra.mxu0 0
    %1055 = vmatprep.subr.bf16.mxu0 0
    %1056 = vmatpush1.bf16.msra.mxu0 0
    %1057 = vmatprep.subr.bf16.mxu0 0
    %1058 = vmatpush1.bf16.msra.mxu0 0
    %1059 = vmatprep.subr.bf16.mxu0 0
    %1060 = vmatpush1.bf16.msra.mxu0 0
    %1061 = vmatprep.subr.bf16.mxu0 0
    %1062 = vmatpush1.bf16.msra.mxu0 0
    %1063 = vmatprep.subr.bf16.mxu0 0
    %1064 = vmatpush1.bf16.msra.mxu0 0
    %1065 = vmatprep.subr.bf16.mxu0 0
    %1066 = vmatpush1.bf16.msra.mxu0 0
    %1067 = vmatprep.subr.bf16.mxu0 0
    %1068 = vmatpush1.bf16.msra.mxu0 0
    %1069 = vmatprep.subr.bf16.mxu0 0
    %1070 = vmatpush1.bf16.msra.mxu0 0
    %1071 = vmatprep.mubr.bf16.mxu0 0
    %1072 = vmatmul.mubr.bf16.gmra.mrb[0].mxu0 %v1035
    %v1073 = vpop.f32.mrb[0].mxu0
    %v1074 = vadd.f32 0.0, %v1073
    %v1075 = vpop.f32.mrb[0].mxu0
    %v1076 = vpop.f32.mrb[0].mxu0
    %v1077 = vpop.f32.mrb[0].mxu0
    %1078 = vdwg.mxu0
    %v1079 = vpack.c.bf16 %v1013, %v1013
    %v1080 = vpack.c.bf16 %v1074, %v1074
    %v1082 = vsel %vm296, %v1079, 0
    %v1085 = vsel %vm300, %v955, 0
    %1087 = vmatprep.subr.bf16.mxu0 0
    %1088 = vmatpush1.bf16.msra.mxu0 %v1085
    %1089 = vmatprep.subr.bf16.mxu0 0
    %1090 = vmatpush1.bf16.msra.mxu0 0
    %1091 = vmatprep.subr.bf16.mxu0 0
    %1092 = vmatpush1.bf16.msra.mxu0 0
    %1093 = vmatprep.subr.bf16.mxu0 0
    %1094 = vmatpush1.bf16.msra.mxu0 0
    %1095 = vmatprep.subr.bf16.mxu0 0
    %1096 = vmatpush1.bf16.msra.mxu0 0
    %1097 = vmatprep.subr.bf16.mxu0 0
    %1098 = vmatpush1.bf16.msra.mxu0 0
    %1099 = vmatprep.subr.bf16.mxu0 0
    %1100 = vmatpush1.bf16.msra.mxu0 0
    %1101 = vmatprep.subr.bf16.mxu0 0
    %1102 = vmatpush1.bf16.msra.mxu0 0
    %1103 = vmatprep.subr.bf16.mxu0 0
    %1104 = vmatpush1.bf16.msra.mxu0 0
    %1105 = vmatprep.subr.bf16.mxu0 0
    %1106 = vmatpush1.bf16.msra.mxu0 0
    %1107 = vmatprep.subr.bf16.mxu0 0
    %1108 = vmatpush1.bf16.msra.mxu0 0
    %1109 = vmatprep.subr.bf16.mxu0 0
    %1110 = vmatpush1.bf16.msra.mxu0 0
    %1111 = vmatprep.subr.bf16.mxu0 0
    %1112 = vmatpush1.bf16.msra.mxu0 0
    %1113 = vmatprep.subr.bf16.mxu0 0
    %1114 = vmatpush1.bf16.msra.mxu0 0
    %1115 = vmatprep.subr.bf16.mxu0 0
    %1116 = vmatpush1.bf16.msra.mxu0 0
    %1117 = vmatprep.subr.bf16.mxu0 0
    %1118 = vmatpush1.bf16.msra.mxu0 0
    %1119 = vmatprep.mubr.bf16.mxu0 0
    %1120 = vmatmul.mubr.bf16.gmra.mrb[0].mxu0 %v1082
    %v1121 = vpop.f32.mrb[0].mxu0
    %v1122 = vadd.f32 0.0, %v1121
    %v1123 = vpop.f32.mrb[0].mxu0
    %v1124 = vpop.f32.mrb[0].mxu0
    %v1125 = vpop.f32.mrb[0].mxu0
    %1126 = vdwg.mxu0
    %v1128 = vsel %vm296, %v1080, 0
    %v1131 = vsel %vm300, %v956, 0
    %1133 = vmatprep.subr.bf16.mxu0 0
    %1134 = vmatpush1.bf16.msra.mxu0 %v1131
    %1135 = vmatprep.subr.bf16.mxu0 0
    %1136 = vmatpush1.bf16.msra.mxu0 0
    %1137 = vmatprep.subr.bf16.mxu0 0
    %1138 = vmatpush1.bf16.msra.mxu0 0
    %1139 = vmatprep.subr.bf16.mxu0 0
    %1140 = vmatpush1.bf16.msra.mxu0 0
    %1141 = vmatprep.subr.bf16.mxu0 0
    %1142 = vmatpush1.bf16.msra.mxu0 0
    %1143 = vmatprep.subr.bf16.mxu0 0
    %1144 = vmatpush1.bf16.msra.mxu0 0
    %1145 = vmatprep.subr.bf16.mxu0 0
    %1146 = vmatpush1.bf16.msra.mxu0 0
    %1147 = vmatprep.subr.bf16.mxu0 0
    %1148 = vmatpush1.bf16.msra.mxu0 0
    %1149 = vmatprep.subr.bf16.mxu0 0
    %1150 = vmatpush1.bf16.msra.mxu0 0
    %1151 = vmatprep.subr.bf16.mxu0 0
    %1152 = vmatpush1.bf16.msra.mxu0 0
    %1153 = vmatprep.subr.bf16.mxu0 0
    %1154 = vmatpush1.bf16.msra.mxu0 0
    %1155 = vmatprep.subr.bf16.mxu0 0
    %1156 = vmatpush1.bf16.msra.mxu0 0
    %1157 = vmatprep.subr.bf16.mxu0 0
    %1158 = vmatpush1.bf16.msra.mxu0 0
    %1159 = vmatprep.subr.bf16.mxu0 0
    %1160 = vmatpush1.bf16.msra.mxu0 0
    %1161 = vmatprep.subr.bf16.mxu0 0
    %1162 = vmatpush1.bf16.msra.mxu0 0
    %1163 = vmatprep.subr.bf16.mxu0 0
    %1164 = vmatpush1.bf16.msra.mxu0 0
    %1165 = vmatprep.mubr.bf16.mxu0 0
    %1166 = vmatmul.mubr.bf16.gmra.mrb[0].mxu0 %v1128
    %v1167 = vpop.f32.mrb[0].mxu0
    %v1168 = vadd.f32 0.0, %v1167
    %v1169 = vpop.f32.mrb[0].mxu0
    %v1170 = vpop.f32.mrb[0].mxu0
    %v1171 = vpop.f32.mrb[0].mxu0
    %1172 = vdwg.mxu0
    %v1173 = vmul.f32 %v845, %v845
    %v1174 = vmul.f32 %v952, %v952
    %vm1175 = vcmask 254976
    %v1176 = vsel %vm1175, %v1173, 0.0
    %v1177 = vrot.slane %v1176, 4
    %v1178 = vadd.f32 %v1176, %v1177
    %v1179 = vrot.slane %v1178, 2
    %v1180 = vadd.f32 %v1178, %v1179
    %v1181 = vrot.slane %v1180, 1
    %v1182 = vadd.f32 %v1180, %v1181
    %v1183 = vsel %vm1175, %v1174, 0.0
    %v1184 = vrot.slane %v1183, 4
    %v1185 = vadd.f32 %v1183, %v1184
    %v1186 = vrot.slane %v1185, 2
    %v1187 = vadd.f32 %v1185, %v1186
    %v1188 = vrot.slane %v1187, 1
    %v1189 = vadd.f32 %v1187, %v1188
    %v1190 = vrsqrt.pop %v1182
    %v1191 = vmul.f32 %v1182, %v1190
    %vm1192 = vcmp.eq.f32.partialorder %v1182, inf
    %v1193 = vsel %vm1192, %v1182, %v1191
    %vm1194 = vcmp.eq.f32.partialorder %v1182, 0.0
    %v1195 = vand.u32 %v1182, 2147483648
    %v1196 = vsel %vm1194, %v1195, %v1193
    %v1197 = vrsqrt.pop %v1189
    %v1198 = vmul.f32 %v1189, %v1197
    %vm1199 = vcmp.eq.f32.partialorder %v1189, inf
    %v1200 = vsel %vm1199, %v1189, %v1198
    %vm1201 = vcmp.eq.f32.partialorder %v1189, 0.0
    %v1202 = vand.u32 %v1189, 2147483648
    %v1203 = vsel %vm1201, %v1202, %v1200
    %v1204 = vmax.f32 %v1196, 1e-12
    %v1205 = vmax.f32 %v1203, 1e-12
    %v1206 = vrcp.pop %v1204
    %v1207 = vmul.f32 %v845, %v1206
    %v1208 = vrcp.pop %v1205
    %v1209 = vmul.f32 %v952, %v1208
    %vm1210 = vcmask 9216
    %v1211 = vsel %vm1210, %v1122, 0.0
    %v1212 = vsel %vm1210, %v1168, 0.0
    %v1213 = vadd.f32 %v1211, %v1212
    %1214 = vadd.xlane.f32.xlu0 %v1213
    %v1215 = vpop.xlane.xlu0 %1214
    %v1216 = vrot.slane %v1215, 4
    %v1217 = vadd.f32 %v1215, %v1216
    %v1218 = vrot.slane %v1217, 2
    %v1219 = vadd.f32 %v1217, %v1218
    %v1220 = vrot.slane %v1219, 1
    %v1221 = vadd.f32 %v1219, %v1220
    %s1222 = vtos %v1221
    %v1223 = vstv %s1222
    %v1224 = vrcp.pop %v1223
    %v1225 = vmul.f32 %v1122, %v1224
    %v1226 = vmul.f32 %v1168, %v1224
    %1227 = vst.msk [vmem:[%s9] sm:$0x3] %vm1175, %v1207
    %1228 = vst.msk [vmem:[%s9 + $0x2] sm:$0x3] %vm1175, %v1209
    %1229 = vst.msk [vmem:[%s10] sm:$0x3] %vm1210, %v1225
    %1230 = vst.msk [vmem:[%s10 + $0x2] sm:$0x3] %vm1210, %v1226
    // Predicated region
    $region58: #{_lambda_.10} parent=1 // pred_check
      _
    $region59: #{_lambda_.10} parent=1 // pred_check_branch
      %1232 = sbr.rel (0) target = $region61
    $region60: #{_lambda_.10} parent=1 // pred_region
      _
    $region61: #{_lambda_.10} parent=1 // pred_fallthru
      _
    // Predicated region
    $region62: #{_lambda_.10} parent=1 // pred_check
      _
    $region63: #{_lambda_.10} parent=1 // pred_check_branch
      %1234 = sbr.rel (0) target = $region65
    $region64: #{_lambda_.10} parent=1 // pred_region
      _
    $region65: #{_lambda_.10} parent=1 // pred_fallthru
      _
    // Predicated region
    $region66: #{_lambda_.10} parent=1 // pred_check
      _
    $region67: #{_lambda_.10} parent=1 // pred_check_branch
      %1236 = sbr.rel (0) target = $region69
    $region68: #{_lambda_.10} parent=1 // pred_region
      _
    $region69: #{_lambda_.10} parent=1 // pred_fallthru
      _
    // Predicated region
    $region70: #{_lambda_.10} parent=1 // pred_check
      _
    $region71: #{_lambda_.10} parent=1 // pred_check_branch
      %1238 = sbr.rel (0) target = $region73
    $region72: #{_lambda_.10} parent=1 // pred_region
      _
    $region73: #{_lambda_.10} parent=1 // pred_fallthru
      _
    %1239 = vsyncpa [#allocation3], 1
    %1240 = vsyncpa [#allocation5], 1
    %1241 = vsyncpa [#allocation8], 1

// kernel: _lambda_.11
$region0: #{_lambda_.11}
  #allocation0 [shape = 'u32[]', space=smem, size = 0x4, offset = 0x4, fixed_abs, tag = 'smem constant byte address 0x4 - core index']
  #allocation1 [shape = 'u32[144,128]{1,0:T(1,128)}', space=vmem, size = 0x12000, scoped, tag = 'internal scratch']
  %s0 = inlined_call_operand.vmem [shape: f32[2,2,2], index: 0, kind: input, shape index: {}]
  %s1 = inlined_call_operand.vmem [shape: f32[2,2,32], index: 1, kind: input, shape index: {}]
  %s2 = inlined_call_operand.vmem [shape: f32[2,2,32], index: 2, kind: input, shape index: {}]
  %s3 = inlined_call_operand.hbm [shape: f32[32,128], index: 3, kind: input, shape index: {}]
  %s4 = inlined_call_operand.hbm [shape: f32[1,128], index: 4, kind: input, shape index: {}]
  %s5 = inlined_call_operand.vmem [shape: f32[128,32], index: 5, kind: input, shape index: {}]
  %s6 = inlined_call_operand.hbm [shape: f32[1,32], index: 6, kind: input, shape index: {}]
  %s7 = inlined_call_operand.hbm [shape: f32[2,32,32], index: 7, kind: input, shape index: {}]
  %s8 = inlined_call_operand.vmem [shape: f32[3,32,256], index: 8, kind: input, shape index: {}]
  %s9 = inlined_call_operand.vmem [shape: f32[1,256], index: 9, kind: input, shape index: {}]
  %s10 = inlined_call_operand.vmem [shape: f32[128,32], index: 10, kind: input, shape index: {}]
  %s11 = inlined_call_operand.hbm [shape: f32[1,32], index: 11, kind: input, shape index: {}]
  %s12 = inlined_call_operand.vmem [shape: f32[128,32], index: 12, kind: input, shape index: {}]
  %s13 = inlined_call_operand.hbm [shape: f32[1,32], index: 13, kind: input, shape index: {}]
  %s14 = inlined_call_operand.vmem [shape: f32[4,96], index: 14, kind: output, shape index: {}]
  %s15 = sld [smem:[#allocation0]]
  $region90: #{_lambda_.11} parent=0
    _
  %s17 = ssub.s32 1, %s15
  %s18 = scalar_select 0, %s17, %s15
  $region1: #{_lambda_.11} parent=0
    #allocation2 [shape = 'u8[16384]{0}', space=vmem, size = 0x4000, scoped, tag = 'input window, operand 3, single buffered']
    #allocation3 [shape = 's32[1]{0}', space=sflag, size = 0x4, scoped, tag = 'scoped memory for _lambda_.11']
    #allocation4 [shape = 'u8[512]{0}', space=vmem, size = 0x400, scoped, tag = 'input window, operand 4, single buffered']
    #allocation5 [shape = 's32[1]{0}', space=sflag, size = 0x4, scoped, tag = 'scoped memory for _lambda_.11']
    #allocation6 [shape = 'u8[512]{0}', space=vmem, size = 0x400, scoped, tag = 'input window, operand 6, single buffered']
    #allocation7 [shape = 'u8[32768]{0}', space=vmem, size = 0x8000, scoped, tag = 'input window, operand 7, single buffered']
    #allocation8 [shape = 's32[1]{0}', space=sflag, size = 0x4, scoped, tag = 'scoped memory for _lambda_.11']
    #allocation9 [shape = 'u8[512]{0}', space=vmem, size = 0x400, scoped, tag = 'input window, operand 11, single buffered']
    #allocation10 [shape = 'u8[512]{0}', space=vmem, size = 0x400, scoped, tag = 'input window, operand 13, single buffered']
    #allocation11 [shape = 's32[1]{0}', space=sflag, size = 0x4, scoped, tag = 'scoped memory for _lambda_.11']
    %19 = vsyncpa [#allocation3], 0
    %20 = vsyncpa [#allocation5], 0
    %21 = vsyncpa [#allocation8], 0
    %22 = vsyncpa [#allocation11], 0
    // Predicated region
    $region2: #{_lambda_.11} parent=1 // pred_check
      _
    $region3: #{_lambda_.11} parent=1 // pred_check_branch
      %24 = sbr.rel (0) target = $region5
    $region4: #{_lambda_.11} parent=1 // pred_region
      _
    $region5: #{_lambda_.11} parent=1 // pred_fallthru
      _
    // Predicated region
    $region6: #{_lambda_.11} parent=1 // pred_check
      _
    $region7: #{_lambda_.11} parent=1 // pred_check_branch
      %26 = sbr.rel (0) target = $region9
    $region8: #{_lambda_.11} parent=1 // pred_region
      _
    $region9: #{_lambda_.11} parent=1 // pred_fallthru
      _
    // Predicated region
    $region10: #{_lambda_.11} parent=1 // pred_check
      _
    $region11: #{_lambda_.11} parent=1 // pred_check_branch
      %28 = sbr.rel (0) target = $region13
    $region12: #{_lambda_.11} parent=1 // pred_region
      _
    $region13: #{_lambda_.11} parent=1 // pred_fallthru
      _
    // Predicated region
    $region14: #{_lambda_.11} parent=1 // pred_check
      _
    $region15: #{_lambda_.11} parent=1 // pred_check_branch
      %30 = sbr.rel (0) target = $region17
    $region16: #{_lambda_.11} parent=1 // pred_region
      %s32 = ssub.s32 512, 512
      %33 = vsyncadd [#allocation3], %s32
      %s34 = sshll.u32 [#allocation2], 4
      %s35 = int_to_ptr.vmem [resolvable:$true] %s34
      %40 = dma.hbm_to_vmem [thread:$0]  %s3, 512, %s35, [#allocation3], 128, 128, 8
    $region17: #{_lambda_.11} parent=1 // pred_fallthru
      _
    // Predicated region
    $region18: #{_lambda_.11} parent=1 // pred_check
      _
    $region19: #{_lambda_.11} parent=1 // pred_check_branch
      %42 = sbr.rel (0) target = $region21
    $region20: #{_lambda_.11} parent=1 // pred_region
      %s44 = ssub.s32 16, 16
      %45 = vsyncadd [#allocation5], %s44
      %s47 = sshll.u32 [#allocation4], 4
      %s48 = int_to_ptr.vmem [resolvable:$true] %s47
      %50 = dma.hbm_to_vmem [thread:$0]  %s4, 16, %s48, [#allocation5]
    $region21: #{_lambda_.11} parent=1 // pred_fallthru
      _
    // Predicated region
    $region22: #{_lambda_.11} parent=1 // pred_check
      _
    $region23: #{_lambda_.11} parent=1 // pred_check_branch
      %52 = sbr.rel (0) target = $region25
    $region24: #{_lambda_.11} parent=1 // pred_region
      _
    $region25: #{_lambda_.11} parent=1 // pred_fallthru
      _
    // Predicated region
    $region26: #{_lambda_.11} parent=1 // pred_check
      _
    $region27: #{_lambda_.11} parent=1 // pred_check_branch
      %54 = sbr.rel (0) target = $region29
    $region28: #{_lambda_.11} parent=1 // pred_region
      %s56 = ssub.s32 16, 16
      %57 = vsyncadd [#allocation5], %s56
      %s59 = sshll.u32 [#allocation6], 4
      %s60 = int_to_ptr.vmem [resolvable:$true] %s59
      %62 = dma.hbm_to_vmem [thread:$0]  %s6, 16, %s60, [#allocation5]
    $region29: #{_lambda_.11} parent=1 // pred_fallthru
      _
    // Predicated region
    $region30: #{_lambda_.11} parent=1 // pred_check
      _
    $region31: #{_lambda_.11} parent=1 // pred_check_branch
      %64 = sbr.rel (0) target = $region33
    $region32: #{_lambda_.11} parent=1 // pred_region
      %s66 = ssub.s32 1024, 1024
      %67 = vsyncadd [#allocation8], %s66
      %s68 = sshll.u32 [#allocation7], 4
      %s69 = int_to_ptr.vmem [resolvable:$true] %s68
      %74 = dma.hbm_to_vmem [thread:$0]  %s7, 1024, %s69, [#allocation8], 128, 128, 8
    $region33: #{_lambda_.11} parent=1 // pred_fallthru
      _
    // Predicated region
    $region34: #{_lambda_.11} parent=1 // pred_check
      _
    $region35: #{_lambda_.11} parent=1 // pred_check_branch
      %76 = sbr.rel (0) target = $region37
    $region36: #{_lambda_.11} parent=1 // pred_region
      _
    $region37: #{_lambda_.11} parent=1 // pred_fallthru
      _
    // Predicated region
    $region38: #{_lambda_.11} parent=1 // pred_check
      _
    $region39: #{_lambda_.11} parent=1 // pred_check_branch
      %78 = sbr.rel (0) target = $region41
    $region40: #{_lambda_.11} parent=1 // pred_region
      _
    $region41: #{_lambda_.11} parent=1 // pred_fallthru
      _
    // Predicated region
    $region42: #{_lambda_.11} parent=1 // pred_check
      _
    $region43: #{_lambda_.11} parent=1 // pred_check_branch
      %80 = sbr.rel (0) target = $region45
    $region44: #{_lambda_.11} parent=1 // pred_region
      _
    $region45: #{_lambda_.11} parent=1 // pred_fallthru
      _
    // Predicated region
    $region46: #{_lambda_.11} parent=1 // pred_check
      _
    $region47: #{_lambda_.11} parent=1 // pred_check_branch
      %82 = sbr.rel (0) target = $region49
    $region48: #{_lambda_.11} parent=1 // pred_region
      %s84 = ssub.s32 16, 16
      %85 = vsyncadd [#allocation8], %s84
      %s87 = sshll.u32 [#allocation9], 4
      %s88 = int_to_ptr.vmem [resolvable:$true] %s87
      %90 = dma.hbm_to_vmem [thread:$0]  %s11, 16, %s88, [#allocation8]
    $region49: #{_lambda_.11} parent=1 // pred_fallthru
      _
    // Predicated region
    $region50: #{_lambda_.11} parent=1 // pred_check
      _
    $region51: #{_lambda_.11} parent=1 // pred_check_branch
      %92 = sbr.rel (0) target = $region53
    $region52: #{_lambda_.11} parent=1 // pred_region
      _
    $region53: #{_lambda_.11} parent=1 // pred_fallthru
      _
    // Predicated region
    $region54: #{_lambda_.11} parent=1 // pred_check
      _
    $region55: #{_lambda_.11} parent=1 // pred_check_branch
      %94 = sbr.rel (0) target = $region57
    $region56: #{_lambda_.11} parent=1 // pred_region
      %s96 = ssub.s32 16, 16
      %97 = vsyncadd [#allocation11], %s96
      %s99 = sshll.u32 [#allocation10], 4
      %s100 = int_to_ptr.vmem [resolvable:$true] %s99
      %102 = dma.hbm_to_vmem [thread:$0]  %s13, 16, %s100, [#allocation11]
    $region57: #{_lambda_.11} parent=1 // pred_fallthru
      _
    // Predicated region
    $region58: #{_lambda_.11} parent=1 // pred_check
      _
    $region59: #{_lambda_.11} parent=1 // pred_check_branch
      %104 = sbr.rel (0) target = $region61
    $region60: #{_lambda_.11} parent=1 // pred_region
      %105 = dma.done [#allocation3], 512
    $region61: #{_lambda_.11} parent=1 // pred_fallthru
      _
    // Predicated region
    $region62: #{_lambda_.11} parent=1 // pred_check
      _
    $region63: #{_lambda_.11} parent=1 // pred_check_branch
      %107 = sbr.rel (0) target = $region65
    $region64: #{_lambda_.11} parent=1 // pred_region
      %108 = dma.done [#allocation5], 16
    $region65: #{_lambda_.11} parent=1 // pred_fallthru
      _
    // Predicated region
    $region66: #{_lambda_.11} parent=1 // pred_check
      _
    $region67: #{_lambda_.11} parent=1 // pred_check_branch
      %110 = sbr.rel (0) target = $region69
    $region68: #{_lambda_.11} parent=1 // pred_region
      %111 = dma.done [#allocation5], 16
    $region69: #{_lambda_.11} parent=1 // pred_fallthru
      _
    // Predicated region
    $region70: #{_lambda_.11} parent=1 // pred_check
      _
    $region71: #{_lambda_.11} parent=1 // pred_check_branch
      %113 = sbr.rel (0) target = $region73
    $region72: #{_lambda_.11} parent=1 // pred_region
      %114 = dma.done [#allocation8], 1024
    $region73: #{_lambda_.11} parent=1 // pred_fallthru
      _
    // Predicated region
    $region74: #{_lambda_.11} parent=1 // pred_check
      _
    $region75: #{_lambda_.11} parent=1 // pred_check_branch
      %116 = sbr.rel (0) target = $region77
    $region76: #{_lambda_.11} parent=1 // pred_region
      %117 = dma.done [#allocation8], 16
    $region77: #{_lambda_.11} parent=1 // pred_fallthru
      _
    // Predicated region
    $region78: #{_lambda_.11} parent=1 // pred_check
      _
    $region79: #{_lambda_.11} parent=1 // pred_check_branch
      %119 = sbr.rel (0) target = $region81
    $region80: #{_lambda_.11} parent=1 // pred_region
      %120 = dma.done [#allocation11], 16
    $region81: #{_lambda_.11} parent=1 // pred_fallthru
      _
    %v122 = vld [vmem:[%s0] sm:$0x3]
    %v123 = vld [vmem:[%s0 + $0x2] sm:$0x3]
    %v124 = vpack.c.bf16 %v122, %v122
    %v125 = vpack.c.bf16 %v123, %v123
    %v126 = vld [vmem:[%s1] sm:$0x3]
    %v127 = vld [vmem:[%s1 + $0x2] sm:$0x3]
    %v130 = vcombine.low %v126, %v127
    %v132 = vunpack.c.l.s4 1983009808
    %v133 = vunpack.c.0.s8 %v132
    %v134 = vlaneseq
    %v135 = vshrl.u32 %v134, 7
    %v136 = vsub.s32 %v133, %v135
    %v137 = vrot.slane %v130, %v136
    %v139 = vpack.c.bf16 %v137, %v137
    %v140 = vld [vmem:[#allocation2] sm:$0xff]
    %v141 = vld [vmem:[#allocation2 + $0x8] sm:$0xff]
    %v142 = vld [vmem:[#allocation2 + $0x10] sm:$0xff]
    %v143 = vld [vmem:[#allocation2 + $0x18] sm:$0xff]
    %v144 = vpack.c.bf16 %v141, %v140
    %v145 = vpack.c.bf16 %v143, %v142
    %v146 = vld [vmem:[#allocation4] sm:$0x1]
    %v148 = vlaneseq
    %v149 = vshrl.u32 %v148, 7
    %v150 = vsub.s32 0, %v149
    %v151 = vrot.slane %v146, %v150
    %vm153 = vcmask 261120
    %v155 = vsel %vm153, %v139, 0
    %157 = vmatprep.subr.bf16.mxu0 0
    %158 = vmatpush1.bf16.msra.mxu0 %v144
    %159 = vmatprep.subr.bf16.mxu0 0
    %160 = vmatpush1.bf16.msra.mxu0 %v145
    %161 = vmatprep.subr.bf16.mxu0 0
    %162 = vmatpush1.bf16.msra.mxu0 0
    %163 = vmatprep.subr.bf16.mxu0 0
    %164 = vmatpush1.bf16.msra.mxu0 0
    %165 = vmatprep.subr.bf16.mxu0 0
    %166 = vmatpush1.bf16.msra.mxu0 0
    %167 = vmatprep.subr.bf16.mxu0 0
    %168 = vmatpush1.bf16.msra.mxu0 0
    %169 = vmatprep.subr.bf16.mxu0 0
    %170 = vmatpush1.bf16.msra.mxu0 0
    %171 = vmatprep.subr.bf16.mxu0 0
    %172 = vmatpush1.bf16.msra.mxu0 0
    %173 = vmatprep.subr.bf16.mxu0 0
    %174 = vmatpush1.bf16.msra.mxu0 0
    %175 = vmatprep.subr.bf16.mxu0 0
    %176 = vmatpush1.bf16.msra.mxu0 0
    %177 = vmatprep.subr.bf16.mxu0 0
    %178 = vmatpush1.bf16.msra.mxu0 0
    %179 = vmatprep.subr.bf16.mxu0 0
    %180 = vmatpush1.bf16.msra.mxu0 0
    %181 = vmatprep.subr.bf16.mxu0 0
    %182 = vmatpush1.bf16.msra.mxu0 0
    %183 = vmatprep.subr.bf16.mxu0 0
    %184 = vmatpush1.bf16.msra.mxu0 0
    %185 = vmatprep.subr.bf16.mxu0 0
    %186 = vmatpush1.bf16.msra.mxu0 0
    %187 = vmatprep.subr.bf16.mxu0 0
    %188 = vmatpush1.bf16.msra.mxu0 0
    %189 = vmatprep.mubr.bf16.mxu0 0
    %190 = vmatmul.mubr.bf16.gmra.mrb[0].mxu0 %v155
    %v191 = vpop.f32.mrb[0].mxu0
    %v192 = vadd.f32 %v151, %v191
    %v193 = vpop.f32.mrb[0].mxu0
    %v194 = vpop.f32.mrb[0].mxu0
    %v195 = vpop.f32.mrb[0].mxu0
    %196 = vdwg.mxu0
    %v197 = vtanh.pop %v192
    %v198 = vpack.c.bf16 %v197, %v197
    %v199 = vld [vmem:[%s5] sm:$0xff]
    %v200 = vld [vmem:[%s5 + $0x8] sm:$0xff]
    %v201 = vld [vmem:[%s5 + $0x10] sm:$0xff]
    %v202 = vld [vmem:[%s5 + $0x18] sm:$0xff]
    %v203 = vld [vmem:[%s5 + $0x20] sm:$0xff]
    %v204 = vld [vmem:[%s5 + $0x28] sm:$0xff]
    %v205 = vld [vmem:[%s5 + $0x30] sm:$0xff]
    %v206 = vld [vmem:[%s5 + $0x38] sm:$0xff]
    %v207 = vld [vmem:[%s5 + $0x40] sm:$0xff]
    %v208 = vld [vmem:[%s5 + $0x48] sm:$0xff]
    %v209 = vld [vmem:[%s5 + $0x50] sm:$0xff]
    %v210 = vld [vmem:[%s5 + $0x58] sm:$0xff]
    %v211 = vld [vmem:[%s5 + $0x60] sm:$0xff]
    %v212 = vld [vmem:[%s5 + $0x68] sm:$0xff]
    %v213 = vld [vmem:[%s5 + $0x70] sm:$0xff]
    %v214 = vld [vmem:[%s5 + $0x78] sm:$0xff]
    %v215 = vpack.c.bf16 %v200, %v199
    %v216 = vpack.c.bf16 %v202, %v201
    %v217 = vpack.c.bf16 %v204, %v203
    %v218 = vpack.c.bf16 %v206, %v205
    %v219 = vpack.c.bf16 %v208, %v207
    %v220 = vpack.c.bf16 %v210, %v209
    %v221 = vpack.c.bf16 %v212, %v211
    %v222 = vpack.c.bf16 %v214, %v213
    %v223 = vld [vmem:[#allocation6] sm:$0x1]
    %v225 = vlaneseq
    %v226 = vshrl.u32 %v225, 7
    %v227 = vsub.s32 0, %v226
    %v228 = vrot.slane %v223, %v227
    %230 = vmatprep.subr.bf16.mxu0 0
    %231 = vmatpush1.bf16.msra.mxu0 %v215
    %232 = vmatprep.subr.bf16.mxu0 0
    %233 = vmatpush1.bf16.msra.mxu0 %v216
    %234 = vmatprep.subr.bf16.mxu0 0
    %235 = vmatpush1.bf16.msra.mxu0 %v217
    %236 = vmatprep.subr.bf16.mxu0 0
    %237 = vmatpush1.bf16.msra.mxu0 %v218
    %238 = vmatprep.subr.bf16.mxu0 0
    %239 = vmatpush1.bf16.msra.mxu0 %v219
    %240 = vmatprep.subr.bf16.mxu0 0
    %241 = vmatpush1.bf16.msra.mxu0 %v220
    %242 = vmatprep.subr.bf16.mxu0 0
    %243 = vmatpush1.bf16.msra.mxu0 %v221
    %244 = vmatprep.subr.bf16.mxu0 0
    %245 = vmatpush1.bf16.msra.mxu0 %v222
    %246 = vmatprep.subr.bf16.mxu0 0
    %247 = vmatpush1.bf16.msra.mxu0 0
    %248 = vmatprep.subr.bf16.mxu0 0
    %249 = vmatpush1.bf16.msra.mxu0 0
    %250 = vmatprep.subr.bf16.mxu0 0
    %251 = vmatpush1.bf16.msra.mxu0 0
    %252 = vmatprep.subr.bf16.mxu0 0
    %253 = vmatpush1.bf16.msra.mxu0 0
    %254 = vmatprep.subr.bf16.mxu0 0
    %255 = vmatpush1.bf16.msra.mxu0 0
    %256 = vmatprep.subr.bf16.mxu0 0
    %257 = vmatpush1.bf16.msra.mxu0 0
    %258 = vmatprep.subr.bf16.mxu0 0
    %259 = vmatpush1.bf16.msra.mxu0 0
    %260 = vmatprep.subr.bf16.mxu0 0
    %261 = vmatpush1.bf16.msra.mxu0 0
    %262 = vmatprep.mubr.bf16.mxu0 0
    %263 = vmatmul.mubr.bf16.gmra.mrb[0].mxu0 %v198
    %v264 = vpop.f32.mrb[0].mxu0
    %v265 = vadd.f32 %v228, %v264
    %v266 = vpop.f32.mrb[0].mxu0
    %v267 = vpop.f32.mrb[0].mxu0
    %v268 = vpop.f32.mrb[0].mxu0
    %269 = vdwg.mxu0
    %v270 = vtanh.pop %v265
    %v271 = vpack.c.bf16 %v270, %v270
    %v272 = vld [vmem:[%s8] sm:$0xff]
    %v273 = vld [vmem:[%s8 + $0x8] sm:$0xff]
    %v274 = vld [vmem:[%s8 + $0x10] sm:$0xff]
    %v275 = vld [vmem:[%s8 + $0x18] sm:$0xff]
    %v276 = vld [vmem:[%s8 + $0x20] sm:$0xff]
    %v277 = vld [vmem:[%s8 + $0x28] sm:$0xff]
    %v278 = vld [vmem:[%s8 + $0x30] sm:$0xff]
    %v279 = vld [vmem:[%s8 + $0x38] sm:$0xff]
    %v280 = vpack.c.bf16 %v274, %v272
    %v281 = vpack.c.bf16 %v275, %v273
    %v282 = vpack.c.bf16 %v278, %v276
    %v283 = vpack.c.bf16 %v279, %v277
    %v284 = vld [vmem:[#allocation7] sm:$0xff]
    %v285 = vld [vmem:[#allocation7 + $0x8] sm:$0xff]
    %v286 = vld [vmem:[#allocation7 + $0x10] sm:$0xff]
    %v287 = vld [vmem:[#allocation7 + $0x18] sm:$0xff]
    %v288 = vpack.c.bf16 %v285, %v284
    %v289 = vpack.c.bf16 %v287, %v286
    %v291 = vsel %vm153, %v271, 0
    %293 = vmatprep.subr.bf16.mxu0 0
    %294 = vmatpush1.bf16.msra.mxu0 %v288
    %295 = vmatprep.subr.bf16.mxu0 0
    %296 = vmatpush1.bf16.msra.mxu0 %v289
    %297 = vmatprep.subr.bf16.mxu0 0
    %298 = vmatpush1.bf16.msra.mxu0 0
    %299 = vmatprep.subr.bf16.mxu0 0
    %300 = vmatpush1.bf16.msra.mxu0 0
    %301 = vmatprep.subr.bf16.mxu0 0
    %302 = vmatpush1.bf16.msra.mxu0 0
    %303 = vmatprep.subr.bf16.mxu0 0
    %304 = vmatpush1.bf16.msra.mxu0 0
    %305 = vmatprep.subr.bf16.mxu0 0
    %306 = vmatpush1.bf16.msra.mxu0 0
    %307 = vmatprep.subr.bf16.mxu0 0
    %308 = vmatpush1.bf16.msra.mxu0 0
    %309 = vmatprep.subr.bf16.mxu0 0
    %310 = vmatpush1.bf16.msra.mxu0 0
    %311 = vmatprep.subr.bf16.mxu0 0
    %312 = vmatpush1.bf16.msra.mxu0 0
    %313 = vmatprep.subr.bf16.mxu0 0
    %314 = vmatpush1.bf16.msra.mxu0 0
    %315 = vmatprep.subr.bf16.mxu0 0
    %316 = vmatpush1.bf16.msra.mxu0 0
    %317 = vmatprep.subr.bf16.mxu0 0
    %318 = vmatpush1.bf16.msra.mxu0 0
    %319 = vmatprep.subr.bf16.mxu0 0
    %320 = vmatpush1.bf16.msra.mxu0 0
    %321 = vmatprep.subr.bf16.mxu0 0
    %322 = vmatpush1.bf16.msra.mxu0 0
    %323 = vmatprep.subr.bf16.mxu0 0
    %324 = vmatpush1.bf16.msra.mxu0 0
    %325 = vmatprep.mubr.bf16.mxu0 0
    %326 = vmatmul.mubr.bf16.gmra.mrb[0].mxu0 %v291
    %v327 = vpop.f32.mrb[0].mxu0
    %v328 = vadd.f32 0.0, %v327
    %v329 = vpop.f32.mrb[0].mxu0
    %v330 = vpop.f32.mrb[0].mxu0
    %v331 = vpop.f32.mrb[0].mxu0
    %332 = vdwg.mxu0
    %v335 = vunpack.c.l.s4 1983009808
    %v336 = vunpack.c.0.s8 %v335
    %v337 = vlaneseq
    %v338 = vshrl.u32 %v337, 7
    %v339 = vsub.s32 %v336, %v338
    %v340 = vrot.slane %v328, %v339
    %v341 = vcombine.high %v340, %v340
    %v344 = vpack.c.bf16 %v340, %v340
    %v345 = vpack.c.bf16 %v341, %v341
    %vm346 = vcmask 15360
    %v348 = vsel %vm346, %v124, 0
    %vm350 = vcmask 1040384
    %v352 = vsel %vm350, %v344, 0
    %354 = vmatprep.subr.bf16.mxu0 0
    %355 = vmatpush1.bf16.msra.mxu0 %v352
    %356 = vmatprep.subr.bf16.mxu0 0
    %357 = vmatpush1.bf16.msra.mxu0 0
    %358 = vmatprep.subr.bf16.mxu0 0
    %359 = vmatpush1.bf16.msra.mxu0 0
    %360 = vmatprep.subr.bf16.mxu0 0
    %361 = vmatpush1.bf16.msra.mxu0 0
    %362 = vmatprep.subr.bf16.mxu0 0
    %363 = vmatpush1.bf16.msra.mxu0 0
    %364 = vmatprep.subr.bf16.mxu0 0
    %365 = vmatpush1.bf16.msra.mxu0 0
    %366 = vmatprep.subr.bf16.mxu0 0
    %367 = vmatpush1.bf16.msra.mxu0 0
    %368 = vmatprep.subr.bf16.mxu0 0
    %369 = vmatpush1.bf16.msra.mxu0 0
    %370 = vmatprep.subr.bf16.mxu0 0
    %371 = vmatpush1.bf16.msra.mxu0 0
    %372 = vmatprep.subr.bf16.mxu0 0
    %373 = vmatpush1.bf16.msra.mxu0 0
    %374 = vmatprep.subr.bf16.mxu0 0
    %375 = vmatpush1.bf16.msra.mxu0 0
    %376 = vmatprep.subr.bf16.mxu0 0
    %377 = vmatpush1.bf16.msra.mxu0 0
    %378 = vmatprep.subr.bf16.mxu0 0
    %379 = vmatpush1.bf16.msra.mxu0 0
    %380 = vmatprep.subr.bf16.mxu0 0
    %381 = vmatpush1.bf16.msra.mxu0 0
    %382 = vmatprep.subr.bf16.mxu0 0
    %383 = vmatpush1.bf16.msra.mxu0 0
    %384 = vmatprep.subr.bf16.mxu0 0
    %385 = vmatpush1.bf16.msra.mxu0 0
    %386 = vmatprep.mubr.bf16.mxu0 0
    %387 = vmatmul.mubr.bf16.gmra.mrb[0].mxu0 %v348
    %v388 = vpop.f32.mrb[0].mxu0
    %v389 = vadd.f32 0.0, %v388
    %v390 = vpop.f32.mrb[0].mxu0
    %v391 = vpop.f32.mrb[0].mxu0
    %v392 = vpop.f32.mrb[0].mxu0
    %393 = vdwg.mxu0
    %v395 = vsel %vm346, %v125, 0
    %v398 = vsel %vm350, %v345, 0
    %400 = vmatprep.subr.bf16.mxu0 0
    %401 = vmatpush1.bf16.msra.mxu0 %v398
    %402 = vmatprep.subr.bf16.mxu0 0
    %403 = vmatpush1.bf16.msra.mxu0 0
    %404 = vmatprep.subr.bf16.mxu0 0
    %405 = vmatpush1.bf16.msra.mxu0 0
    %406 = vmatprep.subr.bf16.mxu0 0
    %407 = vmatpush1.bf16.msra.mxu0 0
    %408 = vmatprep.subr.bf16.mxu0 0
    %409 = vmatpush1.bf16.msra.mxu0 0
    %410 = vmatprep.subr.bf16.mxu0 0
    %411 = vmatpush1.bf16.msra.mxu0 0
    %412 = vmatprep.subr.bf16.mxu0 0
    %413 = vmatpush1.bf16.msra.mxu0 0
    %414 = vmatprep.subr.bf16.mxu0 0
    %415 = vmatpush1.bf16.msra.mxu0 0
    %416 = vmatprep.subr.bf16.mxu0 0
    %417 = vmatpush1.bf16.msra.mxu0 0
    %418 = vmatprep.subr.bf16.mxu0 0
    %419 = vmatpush1.bf16.msra.mxu0 0
    %420 = vmatprep.subr.bf16.mxu0 0
    %421 = vmatpush1.bf16.msra.mxu0 0
    %422 = vmatprep.subr.bf16.mxu0 0
    %423 = vmatpush1.bf16.msra.mxu0 0
    %424 = vmatprep.subr.bf16.mxu0 0
    %425 = vmatpush1.bf16.msra.mxu0 0
    %426 = vmatprep.subr.bf16.mxu0 0
    %427 = vmatpush1.bf16.msra.mxu0 0
    %428 = vmatprep.subr.bf16.mxu0 0
    %429 = vmatpush1.bf16.msra.mxu0 0
    %430 = vmatprep.subr.bf16.mxu0 0
    %431 = vmatpush1.bf16.msra.mxu0 0
    %432 = vmatprep.mubr.bf16.mxu0 0
    %433 = vmatmul.mubr.bf16.gmra.mrb[0].mxu0 %v395
    %v434 = vpop.f32.mrb[0].mxu0
    %v435 = vadd.f32 0.0, %v434
    %v436 = vpop.f32.mrb[0].mxu0
    %v437 = vpop.f32.mrb[0].mxu0
    %v438 = vpop.f32.mrb[0].mxu0
    %439 = vdwg.mxu0
    %v440 = vtanh.pop %v389
    %v441 = vtanh.pop %v435
    %v444 = vcombine.low %v440, %v441
    %v446 = vunpack.c.l.s4 1983009808
    %v447 = vunpack.c.0.s8 %v446
    %v448 = vlaneseq
    %v449 = vshrl.u32 %v448, 7
    %v450 = vsub.s32 %v447, %v449
    %v451 = vrot.slane %v444, %v450
    %v453 = vpack.c.bf16 %v451, %v451
    %s454 = scalar_lea.vmem %s8, 64
    %v455 = vld [vmem:[%s454] sm:$0xff]
    %v456 = vld [vmem:[%s454 + $0x8] sm:$0xff]
    %v457 = vld [vmem:[%s454 + $0x10] sm:$0xff]
    %v458 = vld [vmem:[%s454 + $0x18] sm:$0xff]
    %v459 = vld [vmem:[%s454 + $0x20] sm:$0xff]
    %v460 = vld [vmem:[%s454 + $0x28] sm:$0xff]
    %v461 = vld [vmem:[%s454 + $0x30] sm:$0xff]
    %v462 = vld [vmem:[%s454 + $0x38] sm:$0xff]
    %v463 = vpack.c.bf16 %v457, %v455
    %v464 = vpack.c.bf16 %v458, %v456
    %v465 = vpack.c.bf16 %v461, %v459
    %v466 = vpack.c.bf16 %v462, %v460
    %v468 = vsel %vm153, %v453, 0
    %470 = vmatprep.subr.bf16.mxu0 %v464
    %471 = vmatpush1.bf16.msra.mxu0 %v463
    %472 = vmatprep.subr.bf16.mxu0 %v466
    %473 = vmatpush1.bf16.msra.mxu0 %v465
    %474 = vmatprep.subr.bf16.mxu0 0
    %475 = vmatpush1.bf16.msra.mxu0 0
    %476 = vmatprep.subr.bf16.mxu0 0
    %477 = vmatpush1.bf16.msra.mxu0 0
    %478 = vmatprep.subr.bf16.mxu0 0
    %479 = vmatpush1.bf16.msra.mxu0 0
    %480 = vmatprep.subr.bf16.mxu0 0
    %481 = vmatpush1.bf16.msra.mxu0 0
    %482 = vmatprep.subr.bf16.mxu0 0
    %483 = vmatpush1.bf16.msra.mxu0 0
    %484 = vmatprep.subr.bf16.mxu0 0
    %485 = vmatpush1.bf16.msra.mxu0 0
    %486 = vmatprep.subr.bf16.mxu0 0
    %487 = vmatpush1.bf16.msra.mxu0 0
    %488 = vmatprep.subr.bf16.mxu0 0
    %489 = vmatpush1.bf16.msra.mxu0 0
    %490 = vmatprep.subr.bf16.mxu0 0
    %491 = vmatpush1.bf16.msra.mxu0 0
    %492 = vmatprep.subr.bf16.mxu0 0
    %493 = vmatpush1.bf16.msra.mxu0 0
    %494 = vmatprep.subr.bf16.mxu0 0
    %495 = vmatpush1.bf16.msra.mxu0 0
    %496 = vmatprep.subr.bf16.mxu0 0
    %497 = vmatpush1.bf16.msra.mxu0 0
    %498 = vmatprep.subr.bf16.mxu0 0
    %499 = vmatpush1.bf16.msra.mxu0 0
    %500 = vmatprep.subr.bf16.mxu0 0
    %501 = vmatpush1.bf16.msra.mxu0 0
    %502 = vmatprep.mubr.bf16.mxu0 0
    %503 = vmatmul.mubr.bf16.gmra.mrb[0].mxu0 %v468
    %v504 = vpop.f32.mrb[0].mxu0
    %v505 = vadd.f32 0.0, %v504
    %v506 = vpop.f32.mrb[0].mxu0
    %v507 = vadd.f32 0.0, %v506
    %v508 = vpop.f32.mrb[0].mxu0
    %v509 = vpop.f32.mrb[0].mxu0
    %510 = vdwg.mxu0
    %511 = vmatprep.subr.bf16.mxu0 %v281
    %512 = vmatpush1.bf16.msra.mxu0 %v280
    %513 = vmatprep.subr.bf16.mxu0 %v283
    %514 = vmatpush1.bf16.msra.mxu0 %v282
    %515 = vmatprep.subr.bf16.mxu0 0
    %516 = vmatpush1.bf16.msra.mxu0 0
    %517 = vmatprep.subr.bf16.mxu0 0
    %518 = vmatpush1.bf16.msra.mxu0 0
    %519 = vmatprep.subr.bf16.mxu0 0
    %520 = vmatpush1.bf16.msra.mxu0 0
    %521 = vmatprep.subr.bf16.mxu0 0
    %522 = vmatpush1.bf16.msra.mxu0 0
    %523 = vmatprep.subr.bf16.mxu0 0
    %524 = vmatpush1.bf16.msra.mxu0 0
    %525 = vmatprep.subr.bf16.mxu0 0
    %526 = vmatpush1.bf16.msra.mxu0 0
    %527 = vmatprep.subr.bf16.mxu0 0
    %528 = vmatpush1.bf16.msra.mxu0 0
    %529 = vmatprep.subr.bf16.mxu0 0
    %530 = vmatpush1.bf16.msra.mxu0 0
    %531 = vmatprep.subr.bf16.mxu0 0
    %532 = vmatpush1.bf16.msra.mxu0 0
    %533 = vmatprep.subr.bf16.mxu0 0
    %534 = vmatpush1.bf16.msra.mxu0 0
    %535 = vmatprep.subr.bf16.mxu0 0
    %536 = vmatpush1.bf16.msra.mxu0 0
    %537 = vmatprep.subr.bf16.mxu0 0
    %538 = vmatpush1.bf16.msra.mxu0 0
    %539 = vmatprep.subr.bf16.mxu0 0
    %540 = vmatpush1.bf16.msra.mxu0 0
    %541 = vmatprep.subr.bf16.mxu0 0
    %542 = vmatpush1.bf16.msra.mxu0 0
    %543 = vmatprep.mubr.bf16.mxu0 0
    %544 = vmatmul.mubr.bf16.gmra.mrb[0].mxu0 %v291
    %v545 = vpop.f32.mrb[0].mxu0
    %v546 = vadd.f32 %v505, %v545
    %v547 = vpop.f32.mrb[0].mxu0
    %v548 = vadd.f32 %v507, %v547
    %v549 = vpop.f32.mrb[0].mxu0
    %v550 = vpop.f32.mrb[0].mxu0
    %551 = vdwg.mxu0
    %s552 = scalar_lea.vmem [#allocation7], 32
    %v553 = vld [vmem:[%s552] sm:$0xff]
    %v554 = vld [vmem:[%s552 + $0x8] sm:$0xff]
    %v555 = vld [vmem:[%s552 + $0x10] sm:$0xff]
    %v556 = vld [vmem:[%s552 + $0x18] sm:$0xff]
    %v557 = vpack.c.bf16 %v554, %v553
    %v558 = vpack.c.bf16 %v556, %v555
    %559 = vmatprep.subr.bf16.mxu0 0
    %560 = vmatpush1.bf16.msra.mxu0 %v557
    %561 = vmatprep.subr.bf16.mxu0 0
    %562 = vmatpush1.bf16.msra.mxu0 %v558
    %563 = vmatprep.subr.bf16.mxu0 0
    %564 = vmatpush1.bf16.msra.mxu0 0
    %565 = vmatprep.subr.bf16.mxu0 0
    %566 = vmatpush1.bf16.msra.mxu0 0
    %567 = vmatprep.subr.bf16.mxu0 0
    %568 = vmatpush1.bf16.msra.mxu0 0
    %569 = vmatprep.subr.bf16.mxu0 0
    %570 = vmatpush1.bf16.msra.mxu0 0
    %571 = vmatprep.subr.bf16.mxu0 0
    %572 = vmatpush1.bf16.msra.mxu0 0
    %573 = vmatprep.subr.bf16.mxu0 0
    %574 = vmatpush1.bf16.msra.mxu0 0
    %575 = vmatprep.subr.bf16.mxu0 0
    %576 = vmatpush1.bf16.msra.mxu0 0
    %577 = vmatprep.subr.bf16.mxu0 0
    %578 = vmatpush1.bf16.msra.mxu0 0
    %579 = vmatprep.subr.bf16.mxu0 0
    %580 = vmatpush1.bf16.msra.mxu0 0
    %581 = vmatprep.subr.bf16.mxu0 0
    %582 = vmatpush1.bf16.msra.mxu0 0
    %583 = vmatprep.subr.bf16.mxu0 0
    %584 = vmatpush1.bf16.msra.mxu0 0
    %585 = vmatprep.subr.bf16.mxu0 0
    %586 = vmatpush1.bf16.msra.mxu0 0
    %587 = vmatprep.subr.bf16.mxu0 0
    %588 = vmatpush1.bf16.msra.mxu0 0
    %589 = vmatprep.subr.bf16.mxu0 0
    %590 = vmatpush1.bf16.msra.mxu0 0
    %591 = vmatprep.mubr.bf16.mxu0 0
    %592 = vmatmul.mubr.bf16.gmra.mrb[0].mxu0 %v468
    %v593 = vpop.f32.mrb[0].mxu0
    %v594 = vadd.f32 0.0, %v593
    %v595 = vpop.f32.mrb[0].mxu0
    %v596 = vpop.f32.mrb[0].mxu0
    %v597 = vpop.f32.mrb[0].mxu0
    %598 = vdwg.mxu0
    %v601 = vunpack.c.l.s4 1983009808
    %v602 = vunpack.c.0.s8 %v601
    %v603 = vlaneseq
    %v604 = vshrl.u32 %v603, 7
    %v605 = vsub.s32 %v602, %v604
    %v606 = vrot.slane %v594, %v605
    %v607 = vcombine.high %v606, %v606
    %v610 = vpack.c.bf16 %v606, %v606
    %v611 = vpack.c.bf16 %v607, %v607
    %v613 = vsel %vm350, %v610, 0
    %615 = vmatprep.subr.bf16.mxu0 0
    %616 = vmatpush1.bf16.msra.mxu0 %v613
    %617 = vmatprep.subr.bf16.mxu0 0
    %618 = vmatpush1.bf16.msra.mxu0 0
    %619 = vmatprep.subr.bf16.mxu0 0
    %620 = vmatpush1.bf16.msra.mxu0 0
    %621 = vmatprep.subr.bf16.mxu0 0
    %622 = vmatpush1.bf16.msra.mxu0 0
    %623 = vmatprep.subr.bf16.mxu0 0
    %624 = vmatpush1.bf16.msra.mxu0 0
    %625 = vmatprep.subr.bf16.mxu0 0
    %626 = vmatpush1.bf16.msra.mxu0 0
    %627 = vmatprep.subr.bf16.mxu0 0
    %628 = vmatpush1.bf16.msra.mxu0 0
    %629 = vmatprep.subr.bf16.mxu0 0
    %630 = vmatpush1.bf16.msra.mxu0 0
    %631 = vmatprep.subr.bf16.mxu0 0
    %632 = vmatpush1.bf16.msra.mxu0 0
    %633 = vmatprep.subr.bf16.mxu0 0
    %634 = vmatpush1.bf16.msra.mxu0 0
    %635 = vmatprep.subr.bf16.mxu0 0
    %636 = vmatpush1.bf16.msra.mxu0 0
    %637 = vmatprep.subr.bf16.mxu0 0
    %638 = vmatpush1.bf16.msra.mxu0 0
    %639 = vmatprep.subr.bf16.mxu0 0
    %640 = vmatpush1.bf16.msra.mxu0 0
    %641 = vmatprep.subr.bf16.mxu0 0
    %642 = vmatpush1.bf16.msra.mxu0 0
    %643 = vmatprep.subr.bf16.mxu0 0
    %644 = vmatpush1.bf16.msra.mxu0 0
    %645 = vmatprep.subr.bf16.mxu0 0
    %646 = vmatpush1.bf16.msra.mxu0 0
    %647 = vmatprep.mubr.bf16.mxu0 0
    %648 = vmatmul.mubr.bf16.gmra.mrb[0].mxu0 %v348
    %v649 = vpop.f32.mrb[0].mxu0
    %v650 = vadd.f32 0.0, %v649
    %v651 = vpop.f32.mrb[0].mxu0
    %v652 = vpop.f32.mrb[0].mxu0
    %v653 = vpop.f32.mrb[0].mxu0
    %654 = vdwg.mxu0
    %v656 = vsel %vm350, %v611, 0
    %658 = vmatprep.subr.bf16.mxu0 0
    %659 = vmatpush1.bf16.msra.mxu0 %v656
    %660 = vmatprep.subr.bf16.mxu0 0
    %661 = vmatpush1.bf16.msra.mxu0 0
    %662 = vmatprep.subr.bf16.mxu0 0
    %663 = vmatpush1.bf16.msra.mxu0 0
    %664 = vmatprep.subr.bf16.mxu0 0
    %665 = vmatpush1.bf16.msra.mxu0 0
    %666 = vmatprep.subr.bf16.mxu0 0
    %667 = vmatpush1.bf16.msra.mxu0 0
    %668 = vmatprep.subr.bf16.mxu0 0
    %669 = vmatpush1.bf16.msra.mxu0 0
    %670 = vmatprep.subr.bf16.mxu0 0
    %671 = vmatpush1.bf16.msra.mxu0 0
    %672 = vmatprep.subr.bf16.mxu0 0
    %673 = vmatpush1.bf16.msra.mxu0 0
    %674 = vmatprep.subr.bf16.mxu0 0
    %675 = vmatpush1.bf16.msra.mxu0 0
    %676 = vmatprep.subr.bf16.mxu0 0
    %677 = vmatpush1.bf16.msra.mxu0 0
    %678 = vmatprep.subr.bf16.mxu0 0
    %679 = vmatpush1.bf16.msra.mxu0 0
    %680 = vmatprep.subr.bf16.mxu0 0
    %681 = vmatpush1.bf16.msra.mxu0 0
    %682 = vmatprep.subr.bf16.mxu0 0
    %683 = vmatpush1.bf16.msra.mxu0 0
    %684 = vmatprep.subr.bf16.mxu0 0
    %685 = vmatpush1.bf16.msra.mxu0 0
    %686 = vmatprep.subr.bf16.mxu0 0
    %687 = vmatpush1.bf16.msra.mxu0 0
    %688 = vmatprep.subr.bf16.mxu0 0
    %689 = vmatpush1.bf16.msra.mxu0 0
    %690 = vmatprep.mubr.bf16.mxu0 0
    %691 = vmatmul.mubr.bf16.gmra.mrb[0].mxu0 %v395
    %v692 = vpop.f32.mrb[0].mxu0
    %v693 = vadd.f32 0.0, %v692
    %v694 = vpop.f32.mrb[0].mxu0
    %v695 = vpop.f32.mrb[0].mxu0
    %v696 = vpop.f32.mrb[0].mxu0
    %697 = vdwg.mxu0
    %v698 = vtanh.pop %v650
    %v699 = vtanh.pop %v693
    %v702 = vcombine.low %v698, %v699
    %v704 = vunpack.c.l.s4 1983009808
    %v705 = vunpack.c.0.s8 %v704
    %v706 = vlaneseq
    %v707 = vshrl.u32 %v706, 7
    %v708 = vsub.s32 %v705, %v707
    %v709 = vrot.slane %v702, %v708
    %v711 = vpack.c.bf16 %v709, %v709
    %s712 = scalar_lea.vmem %s8, 128
    %v713 = vld [vmem:[%s712] sm:$0xff]
    %v714 = vld [vmem:[%s712 + $0x8] sm:$0xff]
    %v715 = vld [vmem:[%s712 + $0x10] sm:$0xff]
    %v716 = vld [vmem:[%s712 + $0x18] sm:$0xff]
    %v717 = vld [vmem:[%s712 + $0x20] sm:$0xff]
    %v718 = vld [vmem:[%s712 + $0x28] sm:$0xff]
    %v719 = vld [vmem:[%s712 + $0x30] sm:$0xff]
    %v720 = vld [vmem:[%s712 + $0x38] sm:$0xff]
    %v721 = vpack.c.bf16 %v715, %v713
    %v722 = vpack.c.bf16 %v716, %v714
    %v723 = vpack.c.bf16 %v719, %v717
    %v724 = vpack.c.bf16 %v720, %v718
    %v726 = vsel %vm153, %v711, 0
    %728 = vmatprep.subr.bf16.mxu0 %v722
    %729 = vmatpush1.bf16.msra.mxu0 %v721
    %730 = vmatprep.subr.bf16.mxu0 %v724
    %731 = vmatpush1.bf16.msra.mxu0 %v723
    %732 = vmatprep.subr.bf16.mxu0 0
    %733 = vmatpush1.bf16.msra.mxu0 0
    %734 = vmatprep.subr.bf16.mxu0 0
    %735 = vmatpush1.bf16.msra.mxu0 0
    %736 = vmatprep.subr.bf16.mxu0 0
    %737 = vmatpush1.bf16.msra.mxu0 0
    %738 = vmatprep.subr.bf16.mxu0 0
    %739 = vmatpush1.bf16.msra.mxu0 0
    %740 = vmatprep.subr.bf16.mxu0 0
    %741 = vmatpush1.bf16.msra.mxu0 0
    %742 = vmatprep.subr.bf16.mxu0 0
    %743 = vmatpush1.bf16.msra.mxu0 0
    %744 = vmatprep.subr.bf16.mxu0 0
    %745 = vmatpush1.bf16.msra.mxu0 0
    %746 = vmatprep.subr.bf16.mxu0 0
    %747 = vmatpush1.bf16.msra.mxu0 0
    %748 = vmatprep.subr.bf16.mxu0 0
    %749 = vmatpush1.bf16.msra.mxu0 0
    %750 = vmatprep.subr.bf16.mxu0 0
    %751 = vmatpush1.bf16.msra.mxu0 0
    %752 = vmatprep.subr.bf16.mxu0 0
    %753 = vmatpush1.bf16.msra.mxu0 0
    %754 = vmatprep.subr.bf16.mxu0 0
    %755 = vmatpush1.bf16.msra.mxu0 0
    %756 = vmatprep.subr.bf16.mxu0 0
    %757 = vmatpush1.bf16.msra.mxu0 0
    %758 = vmatprep.subr.bf16.mxu0 0
    %759 = vmatpush1.bf16.msra.mxu0 0
    %760 = vmatprep.mubr.bf16.mxu0 0
    %761 = vmatmul.mubr.bf16.gmra.mrb[0].mxu0 %v726
    %v762 = vpop.f32.mrb[0].mxu0
    %v763 = vadd.f32 0.0, %v762
    %v764 = vpop.f32.mrb[0].mxu0
    %v765 = vadd.f32 0.0, %v764
    %v766 = vpop.f32.mrb[0].mxu0
    %v767 = vpop.f32.mrb[0].mxu0
    %768 = vdwg.mxu0
    %v769 = vadd.f32 %v546, %v763
    %v770 = vadd.f32 %v548, %v765
    %v771 = vld [vmem:[%s9] sm:$0x3]
    %v773 = vlaneseq
    %v774 = vshrl.u32 %v773, 7
    %v775 = vsub.s32 0, %v774
    %v776 = vrot.slane %v771, %v775
    %v777 = vlaneseq
    %v778 = vshrl.u32 %v777, 7
    %v779 = vsub.s32 1, %v778
    %v780 = vrot.slane %v771, %v779
    %v783 = vadd.f32 %v769, %v776
    %v784 = vadd.f32 %v770, %v780
    %v785 = vtanh.pop %v783
    %v786 = vtanh.pop %v784
    %v787 = vpack.c.bf16 %v785, %v785
    %v788 = vld [vmem:[%s10] sm:$0xff]
    %v789 = vld [vmem:[%s10 + $0x8] sm:$0xff]
    %v790 = vld [vmem:[%s10 + $0x10] sm:$0xff]
    %v791 = vld [vmem:[%s10 + $0x18] sm:$0xff]
    %v792 = vld [vmem:[%s10 + $0x20] sm:$0xff]
    %v793 = vld [vmem:[%s10 + $0x28] sm:$0xff]
    %v794 = vld [vmem:[%s10 + $0x30] sm:$0xff]
    %v795 = vld [vmem:[%s10 + $0x38] sm:$0xff]
    %v796 = vld [vmem:[%s10 + $0x40] sm:$0xff]
    %v797 = vld [vmem:[%s10 + $0x48] sm:$0xff]
    %v798 = vld [vmem:[%s10 + $0x50] sm:$0xff]
    %v799 = vld [vmem:[%s10 + $0x58] sm:$0xff]
    %v800 = vld [vmem:[%s10 + $0x60] sm:$0xff]
    %v801 = vld [vmem:[%s10 + $0x68] sm:$0xff]
    %v802 = vld [vmem:[%s10 + $0x70] sm:$0xff]
    %v803 = vld [vmem:[%s10 + $0x78] sm:$0xff]
    %v804 = vpack.c.bf16 %v789, %v788
    %v805 = vpack.c.bf16 %v791, %v790
    %v806 = vpack.c.bf16 %v793, %v792
    %v807 = vpack.c.bf16 %v795, %v794
    %v808 = vpack.c.bf16 %v797, %v796
    %v809 = vpack.c.bf16 %v799, %v798
    %v810 = vpack.c.bf16 %v801, %v800
    %v811 = vpack.c.bf16 %v803, %v802
    %v812 = vld [vmem:[#allocation9] sm:$0x1]
    %v814 = vlaneseq
    %v815 = vshrl.u32 %v814, 7
    %v816 = vsub.s32 0, %v815
    %v817 = vrot.slane %v812, %v816
    %819 = vmatprep.subr.bf16.mxu0 0
    %820 = vmatpush1.bf16.msra.mxu0 %v804
    %821 = vmatprep.subr.bf16.mxu0 0
    %822 = vmatpush1.bf16.msra.mxu0 %v805
    %823 = vmatprep.subr.bf16.mxu0 0
    %824 = vmatpush1.bf16.msra.mxu0 %v806
    %825 = vmatprep.subr.bf16.mxu0 0
    %826 = vmatpush1.bf16.msra.mxu0 %v807
    %827 = vmatprep.subr.bf16.mxu0 0
    %828 = vmatpush1.bf16.msra.mxu0 %v808
    %829 = vmatprep.subr.bf16.mxu0 0
    %830 = vmatpush1.bf16.msra.mxu0 %v809
    %831 = vmatprep.subr.bf16.mxu0 0
    %832 = vmatpush1.bf16.msra.mxu0 %v810
    %833 = vmatprep.subr.bf16.mxu0 0
    %834 = vmatpush1.bf16.msra.mxu0 %v811
    %835 = vmatprep.subr.bf16.mxu0 0
    %836 = vmatpush1.bf16.msra.mxu0 0
    %837 = vmatprep.subr.bf16.mxu0 0
    %838 = vmatpush1.bf16.msra.mxu0 0
    %839 = vmatprep.subr.bf16.mxu0 0
    %840 = vmatpush1.bf16.msra.mxu0 0
    %841 = vmatprep.subr.bf16.mxu0 0
    %842 = vmatpush1.bf16.msra.mxu0 0
    %843 = vmatprep.subr.bf16.mxu0 0
    %844 = vmatpush1.bf16.msra.mxu0 0
    %845 = vmatprep.subr.bf16.mxu0 0
    %846 = vmatpush1.bf16.msra.mxu0 0
    %847 = vmatprep.subr.bf16.mxu0 0
    %848 = vmatpush1.bf16.msra.mxu0 0
    %849 = vmatprep.subr.bf16.mxu0 0
    %850 = vmatpush1.bf16.msra.mxu0 0
    %851 = vmatprep.mubr.bf16.mxu0 0
    %852 = vmatmul.mubr.bf16.gmra.mrb[0].mxu0 %v787
    %v853 = vpop.f32.mrb[0].mxu0
    %v854 = vadd.f32 %v817, %v853
    %v855 = vpop.f32.mrb[0].mxu0
    %v856 = vpop.f32.mrb[0].mxu0
    %v857 = vpop.f32.mrb[0].mxu0
    %858 = vdwg.mxu0
    %v859 = vpack.c.bf16 %v786, %v786
    %v860 = vld [vmem:[%s12] sm:$0xff]
    %v861 = vld [vmem:[%s12 + $0x8] sm:$0xff]
    %v862 = vld [vmem:[%s12 + $0x10] sm:$0xff]
    %v863 = vld [vmem:[%s12 + $0x18] sm:$0xff]
    %v864 = vld [vmem:[%s12 + $0x20] sm:$0xff]
    %v865 = vld [vmem:[%s12 + $0x28] sm:$0xff]
    %v866 = vld [vmem:[%s12 + $0x30] sm:$0xff]
    %v867 = vld [vmem:[%s12 + $0x38] sm:$0xff]
    %v868 = vld [vmem:[%s12 + $0x40] sm:$0xff]
    %v869 = vld [vmem:[%s12 + $0x48] sm:$0xff]
    %v870 = vld [vmem:[%s12 + $0x50] sm:$0xff]
    %v871 = vld [vmem:[%s12 + $0x58] sm:$0xff]
    %v872 = vld [vmem:[%s12 + $0x60] sm:$0xff]
    %v873 = vld [vmem:[%s12 + $0x68] sm:$0xff]
    %v874 = vld [vmem:[%s12 + $0x70] sm:$0xff]
    %v875 = vld [vmem:[%s12 + $0x78] sm:$0xff]
    %v876 = vpack.c.bf16 %v861, %v860
    %v877 = vpack.c.bf16 %v863, %v862
    %v878 = vpack.c.bf16 %v865, %v864
    %v879 = vpack.c.bf16 %v867, %v866
    %v880 = vpack.c.bf16 %v869, %v868
    %v881 = vpack.c.bf16 %v871, %v870
    %v882 = vpack.c.bf16 %v873, %v872
    %v883 = vpack.c.bf16 %v875, %v874
    %v884 = vld [vmem:[#allocation10] sm:$0x1]
    %v886 = vlaneseq
    %v887 = vshrl.u32 %v886, 7
    %v888 = vsub.s32 0, %v887
    %v889 = vrot.slane %v884, %v888
    %891 = vmatprep.subr.bf16.mxu0 0
    %892 = vmatpush1.bf16.msra.mxu0 %v876
    %893 = vmatprep.subr.bf16.mxu0 0
    %894 = vmatpush1.bf16.msra.mxu0 %v877
    %895 = vmatprep.subr.bf16.mxu0 0
    %896 = vmatpush1.bf16.msra.mxu0 %v878
    %897 = vmatprep.subr.bf16.mxu0 0
    %898 = vmatpush1.bf16.msra.mxu0 %v879
    %899 = vmatprep.subr.bf16.mxu0 0
    %900 = vmatpush1.bf16.msra.mxu0 %v880
    %901 = vmatprep.subr.bf16.mxu0 0
    %902 = vmatpush1.bf16.msra.mxu0 %v881
    %903 = vmatprep.subr.bf16.mxu0 0
    %904 = vmatpush1.bf16.msra.mxu0 %v882
    %905 = vmatprep.subr.bf16.mxu0 0
    %906 = vmatpush1.bf16.msra.mxu0 %v883
    %907 = vmatprep.subr.bf16.mxu0 0
    %908 = vmatpush1.bf16.msra.mxu0 0
    %909 = vmatprep.subr.bf16.mxu0 0
    %910 = vmatpush1.bf16.msra.mxu0 0
    %911 = vmatprep.subr.bf16.mxu0 0
    %912 = vmatpush1.bf16.msra.mxu0 0
    %913 = vmatprep.subr.bf16.mxu0 0
    %914 = vmatpush1.bf16.msra.mxu0 0
    %915 = vmatprep.subr.bf16.mxu0 0
    %916 = vmatpush1.bf16.msra.mxu0 0
    %917 = vmatprep.subr.bf16.mxu0 0
    %918 = vmatpush1.bf16.msra.mxu0 0
    %919 = vmatprep.subr.bf16.mxu0 0
    %920 = vmatpush1.bf16.msra.mxu0 0
    %921 = vmatprep.subr.bf16.mxu0 0
    %922 = vmatpush1.bf16.msra.mxu0 0
    %923 = vmatprep.mubr.bf16.mxu0 0
    %924 = vmatmul.mubr.bf16.gmra.mrb[0].mxu0 %v859
    %v925 = vpop.f32.mrb[0].mxu0
    %v926 = vadd.f32 %v889, %v925
    %v927 = vpop.f32.mrb[0].mxu0
    %v928 = vpop.f32.mrb[0].mxu0
    %v929 = vpop.f32.mrb[0].mxu0
    %930 = vdwg.mxu0
    %v931 = vld [vmem:[%s2] sm:$0x3]
    %v932 = vld [vmem:[%s2 + $0x2] sm:$0x3]
    %v933 = vmul.f32 %v926, 1.442695
    %v934 = vpow.pop %v933
    %v937 = vunpack.c.l.s4 1983009808
    %v938 = vunpack.c.0.s8 %v937
    %v939 = vlaneseq
    %v940 = vshrl.u32 %v939, 7
    %v941 = vsub.s32 %v938, %v940
    %v942 = vrot.slane %v934, %v941
    %v943 = vcombine.high %v942, %v942
    %v946 = vmul.f32 %v931, %v942
    %v947 = vmul.f32 %v932, %v943
    %v950 = vunpack.c.l.s4 1983009808
    %v951 = vunpack.c.0.s8 %v950
    %v952 = vlaneseq
    %v953 = vshrl.u32 %v952, 7
    %v954 = vsub.s32 %v951, %v953
    %v955 = vrot.slane %v854, %v954
    %v956 = vcombine.high %v955, %v955
    %v959 = vadd.f32 %v946, %v955
    %v960 = vadd.f32 %v947, %v956
    %v963 = vcombine.low %v959, %v960
    %v965 = vunpack.c.l.s4 1983009808
    %v966 = vunpack.c.0.s8 %v965
    %v967 = vlaneseq
    %v968 = vshrl.u32 %v967, 7
    %v969 = vsub.s32 %v966, %v968
    %v970 = vrot.slane %v963, %v969
    %972 = vrot.lane.b32.xlu0 %v854, 32
    %v973 = vpop.permute.xlu0 %972
    %976 = vrot.lane.b32.xlu0 %v926, 64
    %v977 = vpop.permute.xlu0 %976
    %v979 = vsel %vm153, %v970, %v973
    %vm980 = vcmask 523264
    %v981 = vsel %vm980, %v979, %v977
    %vm982 = vcmask 781312
    %983 = vst.msk [vmem:[%s14] sm:$0xf] %vm982, %v981
    // Predicated region
    $region82: #{_lambda_.11} parent=1 // pred_check
      _
    $region83: #{_lambda_.11} parent=1 // pred_check_branch
      %985 = sbr.rel (0) target = $region85
    $region84: #{_lambda_.11} parent=1 // pred_region
      _
    $region85: #{_lambda_.11} parent=1 // pred_fallthru
      _
    // Predicated region
    $region86: #{_lambda_.11} parent=1 // pred_check
      _
    $region87: #{_lambda_.11} parent=1 // pred_check_branch
      %987 = sbr.rel (0) target = $region89
    $region88: #{_lambda_.11} parent=1 // pred_region
      _
    $region89: #{_lambda_.11} parent=1 // pred_fallthru
      _
    %988 = vsyncpa [#allocation3], 1
    %989 = vsyncpa [#allocation5], 1
    %990 = vsyncpa [#allocation8], 1
    %991 = vsyncpa [#allocation11], 1

// kernel: _lambda_.7
$region0: #{_lambda_.7}
  #allocation0 [shape = 'u32[]', space=smem, size = 0x4, offset = 0x4, fixed_abs, tag = 'smem constant byte address 0x4 - core index']
  #allocation1 [shape = 'u32[144,128]{1,0:T(1,128)}', space=vmem, size = 0x12000, scoped, tag = 'internal scratch']
  %s0 = inlined_call_operand.vmem [shape: f32[2,16,32], index: 0, kind: input, shape index: {}]
  %s1 = inlined_call_operand.vmem [shape: f32[512,256], index: 1, kind: input, shape index: {}]
  %s2 = inlined_call_operand.vmem [shape: f32[1,256], index: 2, kind: input, shape index: {}]
  %s3 = inlined_call_operand.vmem [shape: f32[256,256], index: 3, kind: input, shape index: {}]
  %s4 = inlined_call_operand.vmem [shape: f32[1,256], index: 4, kind: input, shape index: {}]
  %s5 = inlined_call_operand.vmem [shape: f32[256,256], index: 5, kind: input, shape index: {}]
  %s6 = inlined_call_operand.vmem [shape: f32[1,256], index: 6, kind: input, shape index: {}]
  %s7 = inlined_call_operand.vmem [shape: f32[32,128], index: 7, kind: input, shape index: {}]
  %s8 = inlined_call_operand.vmem [shape: f32[1,128], index: 8, kind: input, shape index: {}]
  %s9 = inlined_call_operand.vmem [shape: f32[128,4], index: 9, kind: input, shape index: {}]
  %s10 = inlined_call_operand.hbm [shape: f32[1,4], index: 10, kind: input, shape index: {}]
  %s11 = inlined_call_operand.vmem [shape: f32[2,256], index: 11, kind: output, shape index: {0}]
  %s12 = inlined_call_operand.vmem [shape: f32[32,4], index: 12, kind: output, shape index: {1}]
  %13 = xla_tuple %s11, %s12
  %s14 = sld [smem:[#allocation0]]
  $region66: #{_lambda_.7} parent=0
    _
  %s16 = ssub.s32 1, %s14
  %s17 = scalar_select 0, %s16, %s14
  $region1: #{_lambda_.7} parent=0
    #allocation2 [shape = 'u8[512]{0}', space=vmem, size = 0x400, scoped, tag = 'input window, operand 10, single buffered']
    #allocation3 [shape = 's32[1]{0}', space=sflag, size = 0x4, scoped, tag = 'scoped memory for _lambda_.7']
    %18 = vsyncpa [#allocation3], 0
    // Predicated region
    $region2: #{_lambda_.7} parent=1 // pred_check
      _
    $region3: #{_lambda_.7} parent=1 // pred_check_branch
      %20 = sbr.rel (0) target = $region5
    $region4: #{_lambda_.7} parent=1 // pred_region
      _
    $region5: #{_lambda_.7} parent=1 // pred_fallthru
      _
    // Predicated region
    $region6: #{_lambda_.7} parent=1 // pred_check
      _
    $region7: #{_lambda_.7} parent=1 // pred_check_branch
      %22 = sbr.rel (0) target = $region9
    $region8: #{_lambda_.7} parent=1 // pred_region
      _
    $region9: #{_lambda_.7} parent=1 // pred_fallthru
      _
    // Predicated region
    $region10: #{_lambda_.7} parent=1 // pred_check
      _
    $region11: #{_lambda_.7} parent=1 // pred_check_branch
      %24 = sbr.rel (0) target = $region13
    $region12: #{_lambda_.7} parent=1 // pred_region
      _
    $region13: #{_lambda_.7} parent=1 // pred_fallthru
      _
    // Predicated region
    $region14: #{_lambda_.7} parent=1 // pred_check
      _
    $region15: #{_lambda_.7} parent=1 // pred_check_branch
      %26 = sbr.rel (0) target = $region17
    $region16: #{_lambda_.7} parent=1 // pred_region
      _
    $region17: #{_lambda_.7} parent=1 // pred_fallthru
      _
    // Predicated region
    $region18: #{_lambda_.7} parent=1 // pred_check
      _
    $region19: #{_lambda_.7} parent=1 // pred_check_branch
      %28 = sbr.rel (0) target = $region21
    $region20: #{_lambda_.7} parent=1 // pred_region
      _
    $region21: #{_lambda_.7} parent=1 // pred_fallthru
      _
    // Predicated region
    $region22: #{_lambda_.7} parent=1 // pred_check
      _
    $region23: #{_lambda_.7} parent=1 // pred_check_branch
      %30 = sbr.rel (0) target = $region25
    $region24: #{_lambda_.7} parent=1 // pred_region
      _
    $region25: #{_lambda_.7} parent=1 // pred_fallthru
      _
    // Predicated region
    $region26: #{_lambda_.7} parent=1 // pred_check
      _
    $region27: #{_lambda_.7} parent=1 // pred_check_branch
      %32 = sbr.rel (0) target = $region29
    $region28: #{_lambda_.7} parent=1 // pred_region
      _
    $region29: #{_lambda_.7} parent=1 // pred_fallthru
      _
    // Predicated region
    $region30: #{_lambda_.7} parent=1 // pred_check
      _
    $region31: #{_lambda_.7} parent=1 // pred_check_branch
      %34 = sbr.rel (0) target = $region33
    $region32: #{_lambda_.7} parent=1 // pred_region
      _
    $region33: #{_lambda_.7} parent=1 // pred_fallthru
      _
    // Predicated region
    $region34: #{_lambda_.7} parent=1 // pred_check
      _
    $region35: #{_lambda_.7} parent=1 // pred_check_branch
      %36 = sbr.rel (0) target = $region37
    $region36: #{_lambda_.7} parent=1 // pred_region
      _
    $region37: #{_lambda_.7} parent=1 // pred_fallthru
      _
    // Predicated region
    $region38: #{_lambda_.7} parent=1 // pred_check
      _
    $region39: #{_lambda_.7} parent=1 // pred_check_branch
      %38 = sbr.rel (0) target = $region41
    $region40: #{_lambda_.7} parent=1 // pred_region
      _
    $region41: #{_lambda_.7} parent=1 // pred_fallthru
      _
    // Predicated region
    $region42: #{_lambda_.7} parent=1 // pred_check
      _
    $region43: #{_lambda_.7} parent=1 // pred_check_branch
      %40 = sbr.rel (0) target = $region45
    $region44: #{_lambda_.7} parent=1 // pred_region
      %s42 = ssub.s32 16, 16
      %43 = vsyncadd [#allocation3], %s42
      %s45 = sshll.u32 [#allocation2], 4
      %s46 = int_to_ptr.vmem [resolvable:$true] %s45
      %48 = dma.hbm_to_vmem [thread:$0]  %s10, 16, %s46, [#allocation3]
    $region45: #{_lambda_.7} parent=1 // pred_fallthru
      _
    // Predicated region
    $region46: #{_lambda_.7} parent=1 // pred_check
      _
    $region47: #{_lambda_.7} parent=1 // pred_check_branch
      %50 = sbr.rel (0) target = $region49
    $region48: #{_lambda_.7} parent=1 // pred_region
      %51 = dma.done [#allocation3], 16
    $region49: #{_lambda_.7} parent=1 // pred_fallthru
      _
    %v53 = vld [vmem:[%s0] sm:$0xff]
    %v54 = vld [vmem:[%s0 + $0x8] sm:$0xff]
    %v55 = vld [vmem:[%s0 + $0x10] sm:$0xff]
    %v56 = vld [vmem:[%s0 + $0x18] sm:$0xff]
    %v57 = vcombine.high %v53, 0.0
    %v59 = vunpack.c.l.s4 1983009808
    %v60 = vunpack.c.0.s8 %v59
    %v61 = vlaneseq
    %v62 = vshrl.u32 %v61, 7
    %v63 = vsub.s32 %v60, %v62
    %v64 = vrot.slane %v53, %v63
    %v66 = vunpack.c.l.s4 1983009808
    %v67 = vunpack.c.0.s8 %v66
    %v68 = vlaneseq
    %v69 = vshrl.u32 %v68, 7
    %v70 = vsub.s32 %v67, %v69
    %v71 = vrot.slane %v57, %v70
    %v72 = vcombine.high %v55, 0.0
    %v74 = vunpack.c.l.s4 1983009808
    %v75 = vunpack.c.0.s8 %v74
    %v76 = vlaneseq
    %v77 = vshrl.u32 %v76, 7
    %v78 = vsub.s32 %v75, %v77
    %v79 = vrot.slane %v55, %v78
    %v81 = vunpack.c.l.s4 1983009808
    %v82 = vunpack.c.0.s8 %v81
    %v83 = vlaneseq
    %v84 = vshrl.u32 %v83, 7
    %v85 = vsub.s32 %v82, %v84
    %v86 = vrot.slane %v72, %v85
    %v87 = vcombine.low %v64, %v79
    %v88 = vcombine.high %v64, %v79
    %v90 = vunpack.c.l.s4 1934713408
    %v91 = vunpack.c.0.s8 %v90
    %v92 = vlaneseq
    %v93 = vshrl.u32 %v92, 7
    %v94 = vsub.s32 %v91, %v93
    %v95 = vrot.slane %v87, %v94
    %v97 = vunpack.c.l.s4 1934713408
    %v98 = vunpack.c.0.s8 %v97
    %v99 = vlaneseq
    %v100 = vshrl.u32 %v99, 7
    %v101 = vsub.s32 %v98, %v100
    %v102 = vrot.slane %v88, %v101
    %v103 = vcombine.low %v71, %v86
    %v104 = vcombine.high %v71, %v86
    %v106 = vunpack.c.l.s4 1934713408
    %v107 = vunpack.c.0.s8 %v106
    %v108 = vlaneseq
    %v109 = vshrl.u32 %v108, 7
    %v110 = vsub.s32 %v107, %v109
    %v111 = vrot.slane %v103, %v110
    %v113 = vunpack.c.l.s4 1934713408
    %v114 = vunpack.c.0.s8 %v113
    %v115 = vlaneseq
    %v116 = vshrl.u32 %v115, 7
    %v117 = vsub.s32 %v114, %v116
    %v118 = vrot.slane %v104, %v117
    %v119 = vcombine.high %v95, 0.0
    %v120 = vcombine.high %v102, 0.0
    %v121 = vcombine.high %v111, 0.0
    %v122 = vcombine.high %v118, 0.0
    %v123 = vcombine.high %v54, 0.0
    %v125 = vunpack.c.l.s4 1983009808
    %v126 = vunpack.c.0.s8 %v125
    %v127 = vlaneseq
    %v128 = vshrl.u32 %v127, 7
    %v129 = vsub.s32 %v126, %v128
    %v130 = vrot.slane %v54, %v129
    %v132 = vunpack.c.l.s4 1983009808
    %v133 = vunpack.c.0.s8 %v132
    %v134 = vlaneseq
    %v135 = vshrl.u32 %v134, 7
    %v136 = vsub.s32 %v133, %v135
    %v137 = vrot.slane %v123, %v136
    %v138 = vcombine.high %v56, 0.0
    %v140 = vunpack.c.l.s4 1983009808
    %v141 = vunpack.c.0.s8 %v140
    %v142 = vlaneseq
    %v143 = vshrl.u32 %v142, 7
    %v144 = vsub.s32 %v141, %v143
    %v145 = vrot.slane %v56, %v144
    %v147 = vunpack.c.l.s4 1983009808
    %v148 = vunpack.c.0.s8 %v147
    %v149 = vlaneseq
    %v150 = vshrl.u32 %v149, 7
    %v151 = vsub.s32 %v148, %v150
    %v152 = vrot.slane %v138, %v151
    %v153 = vcombine.low %v130, %v145
    %v154 = vcombine.high %v130, %v145
    %v156 = vunpack.c.l.s4 1934713408
    %v157 = vunpack.c.0.s8 %v156
    %v158 = vlaneseq
    %v159 = vshrl.u32 %v158, 7
    %v160 = vsub.s32 %v157, %v159
    %v161 = vrot.slane %v153, %v160
    %v163 = vunpack.c.l.s4 1934713408
    %v164 = vunpack.c.0.s8 %v163
    %v165 = vlaneseq
    %v166 = vshrl.u32 %v165, 7
    %v167 = vsub.s32 %v164, %v166
    %v168 = vrot.slane %v154, %v167
    %v169 = vcombine.low %v137, %v152
    %v170 = vcombine.high %v137, %v152
    %v172 = vunpack.c.l.s4 1934713408
    %v173 = vunpack.c.0.s8 %v172
    %v174 = vlaneseq
    %v175 = vshrl.u32 %v174, 7
    %v176 = vsub.s32 %v173, %v175
    %v177 = vrot.slane %v169, %v176
    %v179 = vunpack.c.l.s4 1934713408
    %v180 = vunpack.c.0.s8 %v179
    %v181 = vlaneseq
    %v182 = vshrl.u32 %v181, 7
    %v183 = vsub.s32 %v180, %v182
    %v184 = vrot.slane %v170, %v183
    %v185 = vcombine.high %v161, 0.0
    %v186 = vcombine.high %v168, 0.0
    %v187 = vcombine.high %v177, 0.0
    %v188 = vcombine.high %v184, 0.0
    %190 = vrot.lane.b32.xlu0 %v119, 32
    %v191 = vpop.permute.xlu0 %190
    %194 = vrot.lane.b32.xlu0 %v102, 64
    %v195 = vpop.permute.xlu0 %194
    %198 = vrot.lane.b32.xlu0 %v120, 96
    %v199 = vpop.permute.xlu0 %198
    %202 = vrot.lane.b32.xlu0 %v121, 32
    %v203 = vpop.permute.xlu0 %202
    %206 = vrot.lane.b32.xlu0 %v118, 64
    %v207 = vpop.permute.xlu0 %206
    %210 = vrot.lane.b32.xlu0 %v122, 96
    %v211 = vpop.permute.xlu0 %210
    %214 = vrot.lane.b32.xlu0 %v185, 32
    %v215 = vpop.permute.xlu0 %214
    %218 = vrot.lane.b32.xlu0 %v168, 64
    %v219 = vpop.permute.xlu0 %218
    %222 = vrot.lane.b32.xlu0 %v186, 96
    %v223 = vpop.permute.xlu0 %222
    %226 = vrot.lane.b32.xlu0 %v187, 32
    %v227 = vpop.permute.xlu0 %226
    %230 = vrot.lane.b32.xlu0 %v184, 64
    %v231 = vpop.permute.xlu0 %230
    %234 = vrot.lane.b32.xlu0 %v188, 96
    %v235 = vpop.permute.xlu0 %234
    %vm237 = vcmask 261120
    %v238 = vsel %vm237, %v95, %v191
    %vm239 = vcmask 523264
    %v240 = vsel %vm239, %v238, %v195
    %vm241 = vcmask 785408
    %v242 = vsel %vm241, %v240, %v199
    %v243 = vsel %vm237, %v111, %v203
    %v244 = vsel %vm239, %v243, %v207
    %v245 = vsel %vm241, %v244, %v211
    %v246 = vsel %vm237, %v161, %v215
    %v247 = vsel %vm239, %v246, %v219
    %v248 = vsel %vm241, %v247, %v223
    %v249 = vsel %vm237, %v177, %v227
    %v250 = vsel %vm239, %v249, %v231
    %v251 = vsel %vm241, %v250, %v235
    %v252 = vpack.c.bf16 %v242, %v242
    %v253 = vpack.c.bf16 %v245, %v245
    %v254 = vpack.c.bf16 %v248, %v248
    %v255 = vpack.c.bf16 %v251, %v251
    %v256 = vld [vmem:[%s1] sm:$0xff]
    %v257 = vld [vmem:[%s1 + $0x8] sm:$0xff]
    %v258 = vld [vmem:[%s1 + $0x10] sm:$0xff]
    %v259 = vld [vmem:[%s1 + $0x18] sm:$0xff]
    %v260 = vld [vmem:[%s1 + $0x20] sm:$0xff]
    %v261 = vld [vmem:[%s1 + $0x28] sm:$0xff]
    %v262 = vld [vmem:[%s1 + $0x30] sm:$0xff]
    %v263 = vld [vmem:[%s1 + $0x38] sm:$0xff]
    %v264 = vld [vmem:[%s1 + $0x40] sm:$0xff]
    %v265 = vld [vmem:[%s1 + $0x48] sm:$0xff]
    %v266 = vld [vmem:[%s1 + $0x50] sm:$0xff]
    %v267 = vld [vmem:[%s1 + $0x58] sm:$0xff]
    %v268 = vld [vmem:[%s1 + $0x60] sm:$0xff]
    %v269 = vld [vmem:[%s1 + $0x68] sm:$0xff]
    %v270 = vld [vmem:[%s1 + $0x70] sm:$0xff]
    %v271 = vld [vmem:[%s1 + $0x78] sm:$0xff]
    %v272 = vld [vmem:[%s1 + $0x80] sm:$0xff]
    %v273 = vld [vmem:[%s1 + $0x88] sm:$0xff]
    %v274 = vld [vmem:[%s1 + $0x90] sm:$0xff]
    %v275 = vld [vmem:[%s1 + $0x98] sm:$0xff]
    %v276 = vld [vmem:[%s1 + $0xa0] sm:$0xff]
    %v277 = vld [vmem:[%s1 + $0xa8] sm:$0xff]
    %v278 = vld [vmem:[%s1 + $0xb0] sm:$0xff]
    %v279 = vld [vmem:[%s1 + $0xb8] sm:$0xff]
    %v280 = vld [vmem:[%s1 + $0xc0] sm:$0xff]
    %v281 = vld [vmem:[%s1 + $0xc8] sm:$0xff]
    %v282 = vld [vmem:[%s1 + $0xd0] sm:$0xff]
    %v283 = vld [vmem:[%s1 + $0xd8] sm:$0xff]
    %v284 = vld [vmem:[%s1 + $0xe0] sm:$0xff]
    %v285 = vld [vmem:[%s1 + $0xe8] sm:$0xff]
    %v286 = vld [vmem:[%s1 + $0xf0] sm:$0xff]
    %v287 = vld [vmem:[%s1 + $0xf8] sm:$0xff]
    %v288 = vld [vmem:[%s1 + $0x100] sm:$0xff]
    %v289 = vld [vmem:[%s1 + $0x108] sm:$0xff]
    %v290 = vld [vmem:[%s1 + $0x110] sm:$0xff]
    %v291 = vld [vmem:[%s1 + $0x118] sm:$0xff]
    %v292 = vld [vmem:[%s1 + $0x120] sm:$0xff]
    %v293 = vld [vmem:[%s1 + $0x128] sm:$0xff]
    %v294 = vld [vmem:[%s1 + $0x130] sm:$0xff]
    %v295 = vld [vmem:[%s1 + $0x138] sm:$0xff]
    %v296 = vld [vmem:[%s1 + $0x140] sm:$0xff]
    %v297 = vld [vmem:[%s1 + $0x148] sm:$0xff]
    %v298 = vld [vmem:[%s1 + $0x150] sm:$0xff]
    %v299 = vld [vmem:[%s1 + $0x158] sm:$0xff]
    %v300 = vld [vmem:[%s1 + $0x160] sm:$0xff]
    %v301 = vld [vmem:[%s1 + $0x168] sm:$0xff]
    %v302 = vld [vmem:[%s1 + $0x170] sm:$0xff]
    %v303 = vld [vmem:[%s1 + $0x178] sm:$0xff]
    %v304 = vld [vmem:[%s1 + $0x180] sm:$0xff]
    %v305 = vld [vmem:[%s1 + $0x188] sm:$0xff]
    %v306 = vld [vmem:[%s1 + $0x190] sm:$0xff]
    %v307 = vld [vmem:[%s1 + $0x198] sm:$0xff]
    %v308 = vld [vmem:[%s1 + $0x1a0] sm:$0xff]
    %v309 = vld [vmem:[%s1 + $0x1a8] sm:$0xff]
    %v310 = vld [vmem:[%s1 + $0x1b0] sm:$0xff]
    %v311 = vld [vmem:[%s1 + $0x1b8] sm:$0xff]
    %v312 = vld [vmem:[%s1 + $0x1c0] sm:$0xff]
    %v313 = vld [vmem:[%s1 + $0x1c8] sm:$0xff]
    %v314 = vld [vmem:[%s1 + $0x1d0] sm:$0xff]
    %v315 = vld [vmem:[%s1 + $0x1d8] sm:$0xff]
    %v316 = vld [vmem:[%s1 + $0x1e0] sm:$0xff]
    %v317 = vld [vmem:[%s1 + $0x1e8] sm:$0xff]
    %v318 = vld [vmem:[%s1 + $0x1f0] sm:$0xff]
    %v319 = vld [vmem:[%s1 + $0x1f8] sm:$0xff]
    %v320 = vld [vmem:[%s1 + $0x200] sm:$0xff]
    %v321 = vld [vmem:[%s1 + $0x208] sm:$0xff]
    %v322 = vld [vmem:[%s1 + $0x210] sm:$0xff]
    %v323 = vld [vmem:[%s1 + $0x218] sm:$0xff]
    %v324 = vld [vmem:[%s1 + $0x220] sm:$0xff]
    %v325 = vld [vmem:[%s1 + $0x228] sm:$0xff]
    %v326 = vld [vmem:[%s1 + $0x230] sm:$0xff]
    %v327 = vld [vmem:[%s1 + $0x238] sm:$0xff]
    %v328 = vld [vmem:[%s1 + $0x240] sm:$0xff]
    %v329 = vld [vmem:[%s1 + $0x248] sm:$0xff]
    %v330 = vld [vmem:[%s1 + $0x250] sm:$0xff]
    %v331 = vld [vmem:[%s1 + $0x258] sm:$0xff]
    %v332 = vld [vmem:[%s1 + $0x260] sm:$0xff]
    %v333 = vld [vmem:[%s1 + $0x268] sm:$0xff]
    %v334 = vld [vmem:[%s1 + $0x270] sm:$0xff]
    %v335 = vld [vmem:[%s1 + $0x278] sm:$0xff]
    %v336 = vld [vmem:[%s1 + $0x280] sm:$0xff]
    %v337 = vld [vmem:[%s1 + $0x288] sm:$0xff]
    %v338 = vld [vmem:[%s1 + $0x290] sm:$0xff]
    %v339 = vld [vmem:[%s1 + $0x298] sm:$0xff]
    %v340 = vld [vmem:[%s1 + $0x2a0] sm:$0xff]
    %v341 = vld [vmem:[%s1 + $0x2a8] sm:$0xff]
    %v342 = vld [vmem:[%s1 + $0x2b0] sm:$0xff]
    %v343 = vld [vmem:[%s1 + $0x2b8] sm:$0xff]
    %v344 = vld [vmem:[%s1 + $0x2c0] sm:$0xff]
    %v345 = vld [vmem:[%s1 + $0x2c8] sm:$0xff]
    %v346 = vld [vmem:[%s1 + $0x2d0] sm:$0xff]
    %v347 = vld [vmem:[%s1 + $0x2d8] sm:$0xff]
    %v348 = vld [vmem:[%s1 + $0x2e0] sm:$0xff]
    %v349 = vld [vmem:[%s1 + $0x2e8] sm:$0xff]
    %v350 = vld [vmem:[%s1 + $0x2f0] sm:$0xff]
    %v351 = vld [vmem:[%s1 + $0x2f8] sm:$0xff]
    %v352 = vld [vmem:[%s1 + $0x300] sm:$0xff]
    %v353 = vld [vmem:[%s1 + $0x308] sm:$0xff]
    %v354 = vld [vmem:[%s1 + $0x310] sm:$0xff]
    %v355 = vld [vmem:[%s1 + $0x318] sm:$0xff]
    %v356 = vld [vmem:[%s1 + $0x320] sm:$0xff]
    %v357 = vld [vmem:[%s1 + $0x328] sm:$0xff]
    %v358 = vld [vmem:[%s1 + $0x330] sm:$0xff]
    %v359 = vld [vmem:[%s1 + $0x338] sm:$0xff]
    %v360 = vld [vmem:[%s1 + $0x340] sm:$0xff]
    %v361 = vld [vmem:[%s1 + $0x348] sm:$0xff]
    %v362 = vld [vmem:[%s1 + $0x350] sm:$0xff]
    %v363 = vld [vmem:[%s1 + $0x358] sm:$0xff]
    %v364 = vld [vmem:[%s1 + $0x360] sm:$0xff]
    %v365 = vld [vmem:[%s1 + $0x368] sm:$0xff]
    %v366 = vld [vmem:[%s1 + $0x370] sm:$0xff]
    %v367 = vld [vmem:[%s1 + $0x378] sm:$0xff]
    %v368 = vld [vmem:[%s1 + $0x380] sm:$0xff]
    %v369 = vld [vmem:[%s1 + $0x388] sm:$0xff]
    %v370 = vld [vmem:[%s1 + $0x390] sm:$0xff]
    %v371 = vld [vmem:[%s1 + $0x398] sm:$0xff]
    %v372 = vld [vmem:[%s1 + $0x3a0] sm:$0xff]
    %v373 = vld [vmem:[%s1 + $0x3a8] sm:$0xff]
    %v374 = vld [vmem:[%s1 + $0x3b0] sm:$0xff]
    %v375 = vld [vmem:[%s1 + $0x3b8] sm:$0xff]
    %v376 = vld [vmem:[%s1 + $0x3c0] sm:$0xff]
    %v377 = vld [vmem:[%s1 + $0x3c8] sm:$0xff]
    %v378 = vld [vmem:[%s1 + $0x3d0] sm:$0xff]
    %v379 = vld [vmem:[%s1 + $0x3d8] sm:$0xff]
    %v380 = vld [vmem:[%s1 + $0x3e0] sm:$0xff]
    %v381 = vld [vmem:[%s1 + $0x3e8] sm:$0xff]
    %v382 = vld [vmem:[%s1 + $0x3f0] sm:$0xff]
    %v383 = vld [vmem:[%s1 + $0x3f8] sm:$0xff]
    %v384 = vpack.c.bf16 %v258, %v256
    %v385 = vpack.c.bf16 %v259, %v257
    %v386 = vpack.c.bf16 %v262, %v260
    %v387 = vpack.c.bf16 %v263, %v261
    %v388 = vpack.c.bf16 %v266, %v264
    %v389 = vpack.c.bf16 %v267, %v265
    %v390 = vpack.c.bf16 %v270, %v268
    %v391 = vpack.c.bf16 %v271, %v269
    %v392 = vpack.c.bf16 %v274, %v272
    %v393 = vpack.c.bf16 %v275, %v273
    %v394 = vpack.c.bf16 %v278, %v276
    %v395 = vpack.c.bf16 %v279, %v277
    %v396 = vpack.c.bf16 %v282, %v280
    %v397 = vpack.c.bf16 %v283, %v281
    %v398 = vpack.c.bf16 %v286, %v284
    %v399 = vpack.c.bf16 %v287, %v285
    %v400 = vpack.c.bf16 %v290, %v288
    %v401 = vpack.c.bf16 %v291, %v289
    %v402 = vpack.c.bf16 %v294, %v292
    %v403 = vpack.c.bf16 %v295, %v293
    %v404 = vpack.c.bf16 %v298, %v296
    %v405 = vpack.c.bf16 %v299, %v297
    %v406 = vpack.c.bf16 %v302, %v300
    %v407 = vpack.c.bf16 %v303, %v301
    %v408 = vpack.c.bf16 %v306, %v304
    %v409 = vpack.c.bf16 %v307, %v305
    %v410 = vpack.c.bf16 %v310, %v308
    %v411 = vpack.c.bf16 %v311, %v309
    %v412 = vpack.c.bf16 %v314, %v312
    %v413 = vpack.c.bf16 %v315, %v313
    %v414 = vpack.c.bf16 %v318, %v316
    %v415 = vpack.c.bf16 %v319, %v317
    %v416 = vpack.c.bf16 %v322, %v320
    %v417 = vpack.c.bf16 %v323, %v321
    %v418 = vpack.c.bf16 %v326, %v324
    %v419 = vpack.c.bf16 %v327, %v325
    %v420 = vpack.c.bf16 %v330, %v328
    %v421 = vpack.c.bf16 %v331, %v329
    %v422 = vpack.c.bf16 %v334, %v332
    %v423 = vpack.c.bf16 %v335, %v333
    %v424 = vpack.c.bf16 %v338, %v336
    %v425 = vpack.c.bf16 %v339, %v337
    %v426 = vpack.c.bf16 %v342, %v340
    %v427 = vpack.c.bf16 %v343, %v341
    %v428 = vpack.c.bf16 %v346, %v344
    %v429 = vpack.c.bf16 %v347, %v345
    %v430 = vpack.c.bf16 %v350, %v348
    %v431 = vpack.c.bf16 %v351, %v349
    %v432 = vpack.c.bf16 %v354, %v352
    %v433 = vpack.c.bf16 %v355, %v353
    %v434 = vpack.c.bf16 %v358, %v356
    %v435 = vpack.c.bf16 %v359, %v357
    %v436 = vpack.c.bf16 %v362, %v360
    %v437 = vpack.c.bf16 %v363, %v361
    %v438 = vpack.c.bf16 %v366, %v364
    %v439 = vpack.c.bf16 %v367, %v365
    %v440 = vpack.c.bf16 %v370, %v368
    %v441 = vpack.c.bf16 %v371, %v369
    %v442 = vpack.c.bf16 %v374, %v372
    %v443 = vpack.c.bf16 %v375, %v373
    %v444 = vpack.c.bf16 %v378, %v376
    %v445 = vpack.c.bf16 %v379, %v377
    %v446 = vpack.c.bf16 %v382, %v380
    %v447 = vpack.c.bf16 %v383, %v381
    %v448 = vld [vmem:[%s2] sm:$0x3]
    %v450 = vlaneseq
    %v451 = vshrl.u32 %v450, 7
    %v452 = vsub.s32 0, %v451
    %v453 = vrot.slane %v448, %v452
    %v454 = vlaneseq
    %v455 = vshrl.u32 %v454, 7
    %v456 = vsub.s32 1, %v455
    %v457 = vrot.slane %v448, %v456
    %460 = vmatprep.subr.bf16.mxu0 %v385
    %461 = vmatpush1.bf16.msra.mxu0 %v384
    %462 = vmatprep.subr.bf16.mxu0 %v387
    %463 = vmatpush1.bf16.msra.mxu0 %v386
    %464 = vmatprep.subr.bf16.mxu0 %v389
    %465 = vmatpush1.bf16.msra.mxu0 %v388
    %466 = vmatprep.subr.bf16.mxu0 %v391
    %467 = vmatpush1.bf16.msra.mxu0 %v390
    %468 = vmatprep.subr.bf16.mxu0 %v393
    %469 = vmatpush1.bf16.msra.mxu0 %v392
    %470 = vmatprep.subr.bf16.mxu0 %v395
    %471 = vmatpush1.bf16.msra.mxu0 %v394
    %472 = vmatprep.subr.bf16.mxu0 %v397
    %473 = vmatpush1.bf16.msra.mxu0 %v396
    %474 = vmatprep.subr.bf16.mxu0 %v399
    %475 = vmatpush1.bf16.msra.mxu0 %v398
    %476 = vmatprep.subr.bf16.mxu0 %v401
    %477 = vmatpush1.bf16.msra.mxu0 %v400
    %478 = vmatprep.subr.bf16.mxu0 %v403
    %479 = vmatpush1.bf16.msra.mxu0 %v402
    %480 = vmatprep.subr.bf16.mxu0 %v405
    %481 = vmatpush1.bf16.msra.mxu0 %v404
    %482 = vmatprep.subr.bf16.mxu0 %v407
    %483 = vmatpush1.bf16.msra.mxu0 %v406
    %484 = vmatprep.subr.bf16.mxu0 %v409
    %485 = vmatpush1.bf16.msra.mxu0 %v408
    %486 = vmatprep.subr.bf16.mxu0 %v411
    %487 = vmatpush1.bf16.msra.mxu0 %v410
    %488 = vmatprep.subr.bf16.mxu0 %v413
    %489 = vmatpush1.bf16.msra.mxu0 %v412
    %490 = vmatprep.subr.bf16.mxu0 %v415
    %491 = vmatpush1.bf16.msra.mxu0 %v414
    %492 = vmatprep.mubr.bf16.mxu0 %v253
    %493 = vmatmul.mubr.bf16.gmra.mrb[0].mxu0 %v252
    %v494 = vpop.f32.mrb[0].mxu0
    %v495 = vadd.f32 %v453, %v494
    %v496 = vpop.f32.mrb[0].mxu0
    %v497 = vadd.f32 %v457, %v496
    %v498 = vpop.f32.mrb[0].mxu0
    %v499 = vpop.f32.mrb[0].mxu0
    %500 = vdwg.mxu0
    %501 = vmatprep.subr.bf16.mxu0 %v417
    %502 = vmatpush1.bf16.msra.mxu0 %v416
    %503 = vmatprep.subr.bf16.mxu0 %v419
    %504 = vmatpush1.bf16.msra.mxu0 %v418
    %505 = vmatprep.subr.bf16.mxu0 %v421
    %506 = vmatpush1.bf16.msra.mxu0 %v420
    %507 = vmatprep.subr.bf16.mxu0 %v423
    %508 = vmatpush1.bf16.msra.mxu0 %v422
    %509 = vmatprep.subr.bf16.mxu0 %v425
    %510 = vmatpush1.bf16.msra.mxu0 %v424
    %511 = vmatprep.subr.bf16.mxu0 %v427
    %512 = vmatpush1.bf16.msra.mxu0 %v426
    %513 = vmatprep.subr.bf16.mxu0 %v429
    %514 = vmatpush1.bf16.msra.mxu0 %v428
    %515 = vmatprep.subr.bf16.mxu0 %v431
    %516 = vmatpush1.bf16.msra.mxu0 %v430
    %517 = vmatprep.subr.bf16.mxu0 %v433
    %518 = vmatpush1.bf16.msra.mxu0 %v432
    %519 = vmatprep.subr.bf16.mxu0 %v435
    %520 = vmatpush1.bf16.msra.mxu0 %v434
    %521 = vmatprep.subr.bf16.mxu0 %v437
    %522 = vmatpush1.bf16.msra.mxu0 %v436
    %523 = vmatprep.subr.bf16.mxu0 %v439
    %524 = vmatpush1.bf16.msra.mxu0 %v438
    %525 = vmatprep.subr.bf16.mxu0 %v441
    %526 = vmatpush1.bf16.msra.mxu0 %v440
    %527 = vmatprep.subr.bf16.mxu0 %v443
    %528 = vmatpush1.bf16.msra.mxu0 %v442
    %529 = vmatprep.subr.bf16.mxu0 %v445
    %530 = vmatpush1.bf16.msra.mxu0 %v444
    %531 = vmatprep.subr.bf16.mxu0 %v447
    %532 = vmatpush1.bf16.msra.mxu0 %v446
    %533 = vmatprep.mubr.bf16.mxu0 %v255
    %534 = vmatmul.mubr.bf16.gmra.mrb[0].mxu0 %v254
    %v535 = vpop.f32.mrb[0].mxu0
    %v536 = vadd.f32 %v495, %v535
    %v537 = vpop.f32.mrb[0].mxu0
    %v538 = vadd.f32 %v497, %v537
    %v539 = vpop.f32.mrb[0].mxu0
    %v540 = vpop.f32.mrb[0].mxu0
    %541 = vdwg.mxu0
    %v542 = vxor.u32 %v536, 2147483648
    %v543 = vxor.u32 %v538, 2147483648
    %v544 = vmul.f32 %v542, 1.442695
    %v545 = vpow.pop %v544
    %v546 = vmul.f32 %v543, 1.442695
    %v547 = vpow.pop %v546
    %v548 = vadd.f32 %v545, 1.0
    %v549 = vadd.f32 %v547, 1.0
    %v550 = vrcp.pop %v548
    %v551 = vmul.f32 1.0, %v550
    %v552 = vrcp.pop %v549
    %v553 = vmul.f32 1.0, %v552
    %v554 = vpack.c.bf16 %v551, %v551
    %v555 = vpack.c.bf16 %v553, %v553
    %v556 = vld [vmem:[%s3] sm:$0xff]
    %v557 = vld [vmem:[%s3 + $0x8] sm:$0xff]
    %v558 = vld [vmem:[%s3 + $0x10] sm:$0xff]
    %v559 = vld [vmem:[%s3 + $0x18] sm:$0xff]
    %v560 = vld [vmem:[%s3 + $0x20] sm:$0xff]
    %v561 = vld [vmem:[%s3 + $0x28] sm:$0xff]
    %v562 = vld [vmem:[%s3 + $0x30] sm:$0xff]
    %v563 = vld [vmem:[%s3 + $0x38] sm:$0xff]
    %v564 = vld [vmem:[%s3 + $0x40] sm:$0xff]
    %v565 = vld [vmem:[%s3 + $0x48] sm:$0xff]
    %v566 = vld [vmem:[%s3 + $0x50] sm:$0xff]
    %v567 = vld [vmem:[%s3 + $0x58] sm:$0xff]
    %v568 = vld [vmem:[%s3 + $0x60] sm:$0xff]
    %v569 = vld [vmem:[%s3 + $0x68] sm:$0xff]
    %v570 = vld [vmem:[%s3 + $0x70] sm:$0xff]
    %v571 = vld [vmem:[%s3 + $0x78] sm:$0xff]
    %v572 = vld [vmem:[%s3 + $0x80] sm:$0xff]
    %v573 = vld [vmem:[%s3 + $0x88] sm:$0xff]
    %v574 = vld [vmem:[%s3 + $0x90] sm:$0xff]
    %v575 = vld [vmem:[%s3 + $0x98] sm:$0xff]
    %v576 = vld [vmem:[%s3 + $0xa0] sm:$0xff]
    %v577 = vld [vmem:[%s3 + $0xa8] sm:$0xff]
    %v578 = vld [vmem:[%s3 + $0xb0] sm:$0xff]
    %v579 = vld [vmem:[%s3 + $0xb8] sm:$0xff]
    %v580 = vld [vmem:[%s3 + $0xc0] sm:$0xff]
    %v581 = vld [vmem:[%s3 + $0xc8] sm:$0xff]
    %v582 = vld [vmem:[%s3 + $0xd0] sm:$0xff]
    %v583 = vld [vmem:[%s3 + $0xd8] sm:$0xff]
    %v584 = vld [vmem:[%s3 + $0xe0] sm:$0xff]
    %v585 = vld [vmem:[%s3 + $0xe8] sm:$0xff]
    %v586 = vld [vmem:[%s3 + $0xf0] sm:$0xff]
    %v587 = vld [vmem:[%s3 + $0xf8] sm:$0xff]
    %v588 = vld [vmem:[%s3 + $0x100] sm:$0xff]
    %v589 = vld [vmem:[%s3 + $0x108] sm:$0xff]
    %v590 = vld [vmem:[%s3 + $0x110] sm:$0xff]
    %v591 = vld [vmem:[%s3 + $0x118] sm:$0xff]
    %v592 = vld [vmem:[%s3 + $0x120] sm:$0xff]
    %v593 = vld [vmem:[%s3 + $0x128] sm:$0xff]
    %v594 = vld [vmem:[%s3 + $0x130] sm:$0xff]
    %v595 = vld [vmem:[%s3 + $0x138] sm:$0xff]
    %v596 = vld [vmem:[%s3 + $0x140] sm:$0xff]
    %v597 = vld [vmem:[%s3 + $0x148] sm:$0xff]
    %v598 = vld [vmem:[%s3 + $0x150] sm:$0xff]
    %v599 = vld [vmem:[%s3 + $0x158] sm:$0xff]
    %v600 = vld [vmem:[%s3 + $0x160] sm:$0xff]
    %v601 = vld [vmem:[%s3 + $0x168] sm:$0xff]
    %v602 = vld [vmem:[%s3 + $0x170] sm:$0xff]
    %v603 = vld [vmem:[%s3 + $0x178] sm:$0xff]
    %v604 = vld [vmem:[%s3 + $0x180] sm:$0xff]
    %v605 = vld [vmem:[%s3 + $0x188] sm:$0xff]
    %v606 = vld [vmem:[%s3 + $0x190] sm:$0xff]
    %v607 = vld [vmem:[%s3 + $0x198] sm:$0xff]
    %v608 = vld [vmem:[%s3 + $0x1a0] sm:$0xff]
    %v609 = vld [vmem:[%s3 + $0x1a8] sm:$0xff]
    %v610 = vld [vmem:[%s3 + $0x1b0] sm:$0xff]
    %v611 = vld [vmem:[%s3 + $0x1b8] sm:$0xff]
    %v612 = vld [vmem:[%s3 + $0x1c0] sm:$0xff]
    %v613 = vld [vmem:[%s3 + $0x1c8] sm:$0xff]
    %v614 = vld [vmem:[%s3 + $0x1d0] sm:$0xff]
    %v615 = vld [vmem:[%s3 + $0x1d8] sm:$0xff]
    %v616 = vld [vmem:[%s3 + $0x1e0] sm:$0xff]
    %v617 = vld [vmem:[%s3 + $0x1e8] sm:$0xff]
    %v618 = vld [vmem:[%s3 + $0x1f0] sm:$0xff]
    %v619 = vld [vmem:[%s3 + $0x1f8] sm:$0xff]
    %v620 = vpack.c.bf16 %v558, %v556
    %v621 = vpack.c.bf16 %v559, %v557
    %v622 = vpack.c.bf16 %v562, %v560
    %v623 = vpack.c.bf16 %v563, %v561
    %v624 = vpack.c.bf16 %v566, %v564
    %v625 = vpack.c.bf16 %v567, %v565
    %v626 = vpack.c.bf16 %v570, %v568
    %v627 = vpack.c.bf16 %v571, %v569
    %v628 = vpack.c.bf16 %v574, %v572
    %v629 = vpack.c.bf16 %v575, %v573
    %v630 = vpack.c.bf16 %v578, %v576
    %v631 = vpack.c.bf16 %v579, %v577
    %v632 = vpack.c.bf16 %v582, %v580
    %v633 = vpack.c.bf16 %v583, %v581
    %v634 = vpack.c.bf16 %v586, %v584
    %v635 = vpack.c.bf16 %v587, %v585
    %v636 = vpack.c.bf16 %v590, %v588
    %v637 = vpack.c.bf16 %v591, %v589
    %v638 = vpack.c.bf16 %v594, %v592
    %v639 = vpack.c.bf16 %v595, %v593
    %v640 = vpack.c.bf16 %v598, %v596
    %v641 = vpack.c.bf16 %v599, %v597
    %v642 = vpack.c.bf16 %v602, %v600
    %v643 = vpack.c.bf16 %v603, %v601
    %v644 = vpack.c.bf16 %v606, %v604
    %v645 = vpack.c.bf16 %v607, %v605
    %v646 = vpack.c.bf16 %v610, %v608
    %v647 = vpack.c.bf16 %v611, %v609
    %v648 = vpack.c.bf16 %v614, %v612
    %v649 = vpack.c.bf16 %v615, %v613
    %v650 = vpack.c.bf16 %v618, %v616
    %v651 = vpack.c.bf16 %v619, %v617
    %v652 = vld [vmem:[%s4] sm:$0x3]
    %v654 = vlaneseq
    %v655 = vshrl.u32 %v654, 7
    %v656 = vsub.s32 0, %v655
    %v657 = vrot.slane %v652, %v656
    %v658 = vlaneseq
    %v659 = vshrl.u32 %v658, 7
    %v660 = vsub.s32 1, %v659
    %v661 = vrot.slane %v652, %v660
    %664 = vmatprep.subr.bf16.mxu0 %v621
    %665 = vmatpush1.bf16.msra.mxu0 %v620
    %666 = vmatprep.subr.bf16.mxu0 %v623
    %667 = vmatpush1.bf16.msra.mxu0 %v622
    %668 = vmatprep.subr.bf16.mxu0 %v625
    %669 = vmatpush1.bf16.msra.mxu0 %v624
    %670 = vmatprep.subr.bf16.mxu0 %v627
    %671 = vmatpush1.bf16.msra.mxu0 %v626
    %672 = vmatprep.subr.bf16.mxu0 %v629
    %673 = vmatpush1.bf16.msra.mxu0 %v628
    %674 = vmatprep.subr.bf16.mxu0 %v631
    %675 = vmatpush1.bf16.msra.mxu0 %v630
    %676 = vmatprep.subr.bf16.mxu0 %v633
    %677 = vmatpush1.bf16.msra.mxu0 %v632
    %678 = vmatprep.subr.bf16.mxu0 %v635
    %679 = vmatpush1.bf16.msra.mxu0 %v634
    %680 = vmatprep.subr.bf16.mxu0 %v637
    %681 = vmatpush1.bf16.msra.mxu0 %v636
    %682 = vmatprep.subr.bf16.mxu0 %v639
    %683 = vmatpush1.bf16.msra.mxu0 %v638
    %684 = vmatprep.subr.bf16.mxu0 %v641
    %685 = vmatpush1.bf16.msra.mxu0 %v640
    %686 = vmatprep.subr.bf16.mxu0 %v643
    %687 = vmatpush1.bf16.msra.mxu0 %v642
    %688 = vmatprep.subr.bf16.mxu0 %v645
    %689 = vmatpush1.bf16.msra.mxu0 %v644
    %690 = vmatprep.subr.bf16.mxu0 %v647
    %691 = vmatpush1.bf16.msra.mxu0 %v646
    %692 = vmatprep.subr.bf16.mxu0 %v649
    %693 = vmatpush1.bf16.msra.mxu0 %v648
    %694 = vmatprep.subr.bf16.mxu0 %v651
    %695 = vmatpush1.bf16.msra.mxu0 %v650
    %696 = vmatprep.mubr.bf16.mxu0 %v555
    %697 = vmatmul.mubr.bf16.gmra.mrb[0].mxu0 %v554
    %v698 = vpop.f32.mrb[0].mxu0
    %v699 = vadd.f32 %v657, %v698
    %v700 = vpop.f32.mrb[0].mxu0
    %v701 = vadd.f32 %v661, %v700
    %v702 = vpop.f32.mrb[0].mxu0
    %v703 = vpop.f32.mrb[0].mxu0
    %704 = vdwg.mxu0
    %v705 = vxor.u32 %v699, 2147483648
    %v706 = vxor.u32 %v701, 2147483648
    %v707 = vmul.f32 %v705, 1.442695
    %v708 = vpow.pop %v707
    %v709 = vmul.f32 %v706, 1.442695
    %v710 = vpow.pop %v709
    %v711 = vadd.f32 %v708, 1.0
    %v712 = vadd.f32 %v710, 1.0
    %v713 = vrcp.pop %v711
    %v714 = vmul.f32 1.0, %v713
    %v715 = vrcp.pop %v712
    %v716 = vmul.f32 1.0, %v715
    %v717 = vpack.c.bf16 %v714, %v714
    %v718 = vpack.c.bf16 %v716, %v716
    %v719 = vld [vmem:[%s5] sm:$0xff]
    %v720 = vld [vmem:[%s5 + $0x8] sm:$0xff]
    %v721 = vld [vmem:[%s5 + $0x10] sm:$0xff]
    %v722 = vld [vmem:[%s5 + $0x18] sm:$0xff]
    %v723 = vld [vmem:[%s5 + $0x20] sm:$0xff]
    %v724 = vld [vmem:[%s5 + $0x28] sm:$0xff]
    %v725 = vld [vmem:[%s5 + $0x30] sm:$0xff]
    %v726 = vld [vmem:[%s5 + $0x38] sm:$0xff]
    %v727 = vld [vmem:[%s5 + $0x40] sm:$0xff]
    %v728 = vld [vmem:[%s5 + $0x48] sm:$0xff]
    %v729 = vld [vmem:[%s5 + $0x50] sm:$0xff]
    %v730 = vld [vmem:[%s5 + $0x58] sm:$0xff]
    %v731 = vld [vmem:[%s5 + $0x60] sm:$0xff]
    %v732 = vld [vmem:[%s5 + $0x68] sm:$0xff]
    %v733 = vld [vmem:[%s5 + $0x70] sm:$0xff]
    %v734 = vld [vmem:[%s5 + $0x78] sm:$0xff]
    %v735 = vld [vmem:[%s5 + $0x80] sm:$0xff]
    %v736 = vld [vmem:[%s5 + $0x88] sm:$0xff]
    %v737 = vld [vmem:[%s5 + $0x90] sm:$0xff]
    %v738 = vld [vmem:[%s5 + $0x98] sm:$0xff]
    %v739 = vld [vmem:[%s5 + $0xa0] sm:$0xff]
    %v740 = vld [vmem:[%s5 + $0xa8] sm:$0xff]
    %v741 = vld [vmem:[%s5 + $0xb0] sm:$0xff]
    %v742 = vld [vmem:[%s5 + $0xb8] sm:$0xff]
    %v743 = vld [vmem:[%s5 + $0xc0] sm:$0xff]
    %v744 = vld [vmem:[%s5 + $0xc8] sm:$0xff]
    %v745 = vld [vmem:[%s5 + $0xd0] sm:$0xff]
    %v746 = vld [vmem:[%s5 + $0xd8] sm:$0xff]
    %v747 = vld [vmem:[%s5 + $0xe0] sm:$0xff]
    %v748 = vld [vmem:[%s5 + $0xe8] sm:$0xff]
    %v749 = vld [vmem:[%s5 + $0xf0] sm:$0xff]
    %v750 = vld [vmem:[%s5 + $0xf8] sm:$0xff]
    %v751 = vld [vmem:[%s5 + $0x100] sm:$0xff]
    %v752 = vld [vmem:[%s5 + $0x108] sm:$0xff]
    %v753 = vld [vmem:[%s5 + $0x110] sm:$0xff]
    %v754 = vld [vmem:[%s5 + $0x118] sm:$0xff]
    %v755 = vld [vmem:[%s5 + $0x120] sm:$0xff]
    %v756 = vld [vmem:[%s5 + $0x128] sm:$0xff]
    %v757 = vld [vmem:[%s5 + $0x130] sm:$0xff]
    %v758 = vld [vmem:[%s5 + $0x138] sm:$0xff]
    %v759 = vld [vmem:[%s5 + $0x140] sm:$0xff]
    %v760 = vld [vmem:[%s5 + $0x148] sm:$0xff]
    %v761 = vld [vmem:[%s5 + $0x150] sm:$0xff]
    %v762 = vld [vmem:[%s5 + $0x158] sm:$0xff]
    %v763 = vld [vmem:[%s5 + $0x160] sm:$0xff]
    %v764 = vld [vmem:[%s5 + $0x168] sm:$0xff]
    %v765 = vld [vmem:[%s5 + $0x170] sm:$0xff]
    %v766 = vld [vmem:[%s5 + $0x178] sm:$0xff]
    %v767 = vld [vmem:[%s5 + $0x180] sm:$0xff]
    %v768 = vld [vmem:[%s5 + $0x188] sm:$0xff]
    %v769 = vld [vmem:[%s5 + $0x190] sm:$0xff]
    %v770 = vld [vmem:[%s5 + $0x198] sm:$0xff]
    %v771 = vld [vmem:[%s5 + $0x1a0] sm:$0xff]
    %v772 = vld [vmem:[%s5 + $0x1a8] sm:$0xff]
    %v773 = vld [vmem:[%s5 + $0x1b0] sm:$0xff]
    %v774 = vld [vmem:[%s5 + $0x1b8] sm:$0xff]
    %v775 = vld [vmem:[%s5 + $0x1c0] sm:$0xff]
    %v776 = vld [vmem:[%s5 + $0x1c8] sm:$0xff]
    %v777 = vld [vmem:[%s5 + $0x1d0] sm:$0xff]
    %v778 = vld [vmem:[%s5 + $0x1d8] sm:$0xff]
    %v779 = vld [vmem:[%s5 + $0x1e0] sm:$0xff]
    %v780 = vld [vmem:[%s5 + $0x1e8] sm:$0xff]
    %v781 = vld [vmem:[%s5 + $0x1f0] sm:$0xff]
    %v782 = vld [vmem:[%s5 + $0x1f8] sm:$0xff]
    %v783 = vpack.c.bf16 %v721, %v719
    %v784 = vpack.c.bf16 %v722, %v720
    %v785 = vpack.c.bf16 %v725, %v723
    %v786 = vpack.c.bf16 %v726, %v724
    %v787 = vpack.c.bf16 %v729, %v727
    %v788 = vpack.c.bf16 %v730, %v728
    %v789 = vpack.c.bf16 %v733, %v731
    %v790 = vpack.c.bf16 %v734, %v732
    %v791 = vpack.c.bf16 %v737, %v735
    %v792 = vpack.c.bf16 %v738, %v736
    %v793 = vpack.c.bf16 %v741, %v739
    %v794 = vpack.c.bf16 %v742, %v740
    %v795 = vpack.c.bf16 %v745, %v743
    %v796 = vpack.c.bf16 %v746, %v744
    %v797 = vpack.c.bf16 %v749, %v747
    %v798 = vpack.c.bf16 %v750, %v748
    %v799 = vpack.c.bf16 %v753, %v751
    %v800 = vpack.c.bf16 %v754, %v752
    %v801 = vpack.c.bf16 %v757, %v755
    %v802 = vpack.c.bf16 %v758, %v756
    %v803 = vpack.c.bf16 %v761, %v759
    %v804 = vpack.c.bf16 %v762, %v760
    %v805 = vpack.c.bf16 %v765, %v763
    %v806 = vpack.c.bf16 %v766, %v764
    %v807 = vpack.c.bf16 %v769, %v767
    %v808 = vpack.c.bf16 %v770, %v768
    %v809 = vpack.c.bf16 %v773, %v771
    %v810 = vpack.c.bf16 %v774, %v772
    %v811 = vpack.c.bf16 %v777, %v775
    %v812 = vpack.c.bf16 %v778, %v776
    %v813 = vpack.c.bf16 %v781, %v779
    %v814 = vpack.c.bf16 %v782, %v780
    %v815 = vld [vmem:[%s6] sm:$0x3]
    %v817 = vlaneseq
    %v818 = vshrl.u32 %v817, 7
    %v819 = vsub.s32 0, %v818
    %v820 = vrot.slane %v815, %v819
    %v821 = vlaneseq
    %v822 = vshrl.u32 %v821, 7
    %v823 = vsub.s32 1, %v822
    %v824 = vrot.slane %v815, %v823
    %827 = vmatprep.subr.bf16.mxu0 %v784
    %828 = vmatpush1.bf16.msra.mxu0 %v783
    %829 = vmatprep.subr.bf16.mxu0 %v786
    %830 = vmatpush1.bf16.msra.mxu0 %v785
    %831 = vmatprep.subr.bf16.mxu0 %v788
    %832 = vmatpush1.bf16.msra.mxu0 %v787
    %833 = vmatprep.subr.bf16.mxu0 %v790
    %834 = vmatpush1.bf16.msra.mxu0 %v789
    %835 = vmatprep.subr.bf16.mxu0 %v792
    %836 = vmatpush1.bf16.msra.mxu0 %v791
    %837 = vmatprep.subr.bf16.mxu0 %v794
    %838 = vmatpush1.bf16.msra.mxu0 %v793
    %839 = vmatprep.subr.bf16.mxu0 %v796
    %840 = vmatpush1.bf16.msra.mxu0 %v795
    %841 = vmatprep.subr.bf16.mxu0 %v798
    %842 = vmatpush1.bf16.msra.mxu0 %v797
    %843 = vmatprep.subr.bf16.mxu0 %v800
    %844 = vmatpush1.bf16.msra.mxu0 %v799
    %845 = vmatprep.subr.bf16.mxu0 %v802
    %846 = vmatpush1.bf16.msra.mxu0 %v801
    %847 = vmatprep.subr.bf16.mxu0 %v804
    %848 = vmatpush1.bf16.msra.mxu0 %v803
    %849 = vmatprep.subr.bf16.mxu0 %v806
    %850 = vmatpush1.bf16.msra.mxu0 %v805
    %851 = vmatprep.subr.bf16.mxu0 %v808
    %852 = vmatpush1.bf16.msra.mxu0 %v807
    %853 = vmatprep.subr.bf16.mxu0 %v810
    %854 = vmatpush1.bf16.msra.mxu0 %v809
    %855 = vmatprep.subr.bf16.mxu0 %v812
    %856 = vmatpush1.bf16.msra.mxu0 %v811
    %857 = vmatprep.subr.bf16.mxu0 %v814
    %858 = vmatpush1.bf16.msra.mxu0 %v813
    %859 = vmatprep.mubr.bf16.mxu0 %v718
    %860 = vmatmul.mubr.bf16.gmra.mrb[0].mxu0 %v717
    %v861 = vpop.f32.mrb[0].mxu0
    %v862 = vadd.f32 %v820, %v861
    %v863 = vpop.f32.mrb[0].mxu0
    %v864 = vadd.f32 %v824, %v863
    %v865 = vpop.f32.mrb[0].mxu0
    %v866 = vpop.f32.mrb[0].mxu0
    %867 = vdwg.mxu0
    %v868 = vxor.u32 %v862, 2147483648
    %v869 = vxor.u32 %v864, 2147483648
    %v870 = vmul.f32 %v868, 1.442695
    %v871 = vpow.pop %v870
    %v872 = vmul.f32 %v869, 1.442695
    %v873 = vpow.pop %v872
    %v874 = vadd.f32 %v871, 1.0
    %v875 = vadd.f32 %v873, 1.0
    %v876 = vrcp.pop %v874
    %v877 = vmul.f32 1.0, %v876
    %v878 = vrcp.pop %v875
    %v879 = vmul.f32 1.0, %v878
    %v882 = vcombine.low %v877, %v879
    %v884 = vunpack.c.l.s4 1983009808
    %v885 = vunpack.c.0.s8 %v884
    %v886 = vlaneseq
    %v887 = vshrl.u32 %v886, 7
    %v888 = vsub.s32 %v885, %v887
    %v889 = vrot.slane %v882, %v888
    %891 = vst [vmem:[%s11] sm:$0xf] %v889
    %v892 = vpack.c.bf16 %v54, %v53
    %v893 = vpack.c.bf16 %v56, %v55
    %v894 = vld [vmem:[%s7] sm:$0xff]
    %v895 = vld [vmem:[%s7 + $0x8] sm:$0xff]
    %v896 = vld [vmem:[%s7 + $0x10] sm:$0xff]
    %v897 = vld [vmem:[%s7 + $0x18] sm:$0xff]
    %v898 = vpack.c.bf16 %v895, %v894
    %v899 = vpack.c.bf16 %v897, %v896
    %v900 = vld [vmem:[%s8] sm:$0x1]
    %v902 = vlaneseq
    %v903 = vshrl.u32 %v902, 7
    %v904 = vsub.s32 0, %v903
    %v905 = vrot.slane %v900, %v904
    %v908 = vsel %vm237, %v892, 0
    %v911 = vsel %vm237, %v893, 0
    %913 = vmatprep.subr.bf16.mxu0 0
    %914 = vmatpush1.bf16.msra.mxu0 %v898
    %915 = vmatprep.subr.bf16.mxu0 0
    %916 = vmatpush1.bf16.msra.mxu0 %v899
    %917 = vmatprep.subr.bf16.mxu0 0
    %918 = vmatpush1.bf16.msra.mxu0 0
    %919 = vmatprep.subr.bf16.mxu0 0
    %920 = vmatpush1.bf16.msra.mxu0 0
    %921 = vmatprep.subr.bf16.mxu0 0
    %922 = vmatpush1.bf16.msra.mxu0 0
    %923 = vmatprep.subr.bf16.mxu0 0
    %924 = vmatpush1.bf16.msra.mxu0 0
    %925 = vmatprep.subr.bf16.mxu0 0
    %926 = vmatpush1.bf16.msra.mxu0 0
    %927 = vmatprep.subr.bf16.mxu0 0
    %928 = vmatpush1.bf16.msra.mxu0 0
    %929 = vmatprep.subr.bf16.mxu0 0
    %930 = vmatpush1.bf16.msra.mxu0 0
    %931 = vmatprep.subr.bf16.mxu0 0
    %932 = vmatpush1.bf16.msra.mxu0 0
    %933 = vmatprep.subr.bf16.mxu0 0
    %934 = vmatpush1.bf16.msra.mxu0 0
    %935 = vmatprep.subr.bf16.mxu0 0
    %936 = vmatpush1.bf16.msra.mxu0 0
    %937 = vmatprep.subr.bf16.mxu0 0
    %938 = vmatpush1.bf16.msra.mxu0 0
    %939 = vmatprep.subr.bf16.mxu0 0
    %940 = vmatpush1.bf16.msra.mxu0 0
    %941 = vmatprep.subr.bf16.mxu0 0
    %942 = vmatpush1.bf16.msra.mxu0 0
    %943 = vmatprep.subr.bf16.mxu0 0
    %944 = vmatpush1.bf16.msra.mxu0 0
    %945 = vmatprep.mubr.bf16.mxu0 0
    %946 = vmatmul.mubr.bf16.gmra.mrb[0].mxu0 %v908
    %v947 = vpop.f32.mrb[0].mxu0
    %v948 = vadd.f32 %v905, %v947
    %v949 = vpop.f32.mrb[0].mxu0
    %v950 = vpop.f32.mrb[0].mxu0
    %v951 = vadd.f32 %v905, %v950
    %v952 = vpop.f32.mrb[0].mxu0
    %953 = vmatprep.mubr.bf16.mxu0 0
    %954 = vmatmul.mubr.bf16.gmra.mrb[0].mxu0 %v911
    %v955 = vpop.f32.mrb[0].mxu0
    %v956 = vadd.f32 %v905, %v955
    %v957 = vpop.f32.mrb[0].mxu0
    %v958 = vpop.f32.mrb[0].mxu0
    %v959 = vadd.f32 %v905, %v958
    %v960 = vpop.f32.mrb[0].mxu0
    %961 = vdwg.mxu0
    %v962 = vtanh.pop %v948
    %v963 = vtanh.pop %v951
    %v964 = vtanh.pop %v956
    %v965 = vtanh.pop %v959
    %v966 = vpack.c.bf16 %v963, %v962
    %v967 = vpack.c.bf16 %v965, %v964
    %v968 = vld [vmem:[%s9] sm:$0xff]
    %v969 = vld [vmem:[%s9 + $0x8] sm:$0xff]
    %v970 = vld [vmem:[%s9 + $0x10] sm:$0xff]
    %v971 = vld [vmem:[%s9 + $0x18] sm:$0xff]
    %v972 = vld [vmem:[%s9 + $0x20] sm:$0xff]
    %v973 = vld [vmem:[%s9 + $0x28] sm:$0xff]
    %v974 = vld [vmem:[%s9 + $0x30] sm:$0xff]
    %v975 = vld [vmem:[%s9 + $0x38] sm:$0xff]
    %v976 = vld [vmem:[%s9 + $0x40] sm:$0xff]
    %v977 = vld [vmem:[%s9 + $0x48] sm:$0xff]
    %v978 = vld [vmem:[%s9 + $0x50] sm:$0xff]
    %v979 = vld [vmem:[%s9 + $0x58] sm:$0xff]
    %v980 = vld [vmem:[%s9 + $0x60] sm:$0xff]
    %v981 = vld [vmem:[%s9 + $0x68] sm:$0xff]
    %v982 = vld [vmem:[%s9 + $0x70] sm:$0xff]
    %v983 = vld [vmem:[%s9 + $0x78] sm:$0xff]
    %v984 = vpack.c.bf16 %v969, %v968
    %v985 = vpack.c.bf16 %v971, %v970
    %v986 = vpack.c.bf16 %v973, %v972
    %v987 = vpack.c.bf16 %v975, %v974
    %v988 = vpack.c.bf16 %v977, %v976
    %v989 = vpack.c.bf16 %v979, %v978
    %v990 = vpack.c.bf16 %v981, %v980
    %v991 = vpack.c.bf16 %v983, %v982
    %v992 = vld [vmem:[#allocation2] sm:$0x1]
    %v994 = vlaneseq
    %v995 = vshrl.u32 %v994, 7
    %v996 = vsub.s32 0, %v995
    %v997 = vrot.slane %v992, %v996
    %999 = vmatprep.subr.bf16.mxu0 0
    %1000 = vmatpush1.bf16.msra.mxu0 %v984
    %1001 = vmatprep.subr.bf16.mxu0 0
    %1002 = vmatpush1.bf16.msra.mxu0 %v985
    %1003 = vmatprep.subr.bf16.mxu0 0
    %1004 = vmatpush1.bf16.msra.mxu0 %v986
    %1005 = vmatprep.subr.bf16.mxu0 0
    %1006 = vmatpush1.bf16.msra.mxu0 %v987
    %1007 = vmatprep.subr.bf16.mxu0 0
    %1008 = vmatpush1.bf16.msra.mxu0 %v988
    %1009 = vmatprep.subr.bf16.mxu0 0
    %1010 = vmatpush1.bf16.msra.mxu0 %v989
    %1011 = vmatprep.subr.bf16.mxu0 0
    %1012 = vmatpush1.bf16.msra.mxu0 %v990
    %1013 = vmatprep.subr.bf16.mxu0 0
    %1014 = vmatpush1.bf16.msra.mxu0 %v991
    %1015 = vmatprep.subr.bf16.mxu0 0
    %1016 = vmatpush1.bf16.msra.mxu0 0
    %1017 = vmatprep.subr.bf16.mxu0 0
    %1018 = vmatpush1.bf16.msra.mxu0 0
    %1019 = vmatprep.subr.bf16.mxu0 0
    %1020 = vmatpush1.bf16.msra.mxu0 0
    %1021 = vmatprep.subr.bf16.mxu0 0
    %1022 = vmatpush1.bf16.msra.mxu0 0
    %1023 = vmatprep.subr.bf16.mxu0 0
    %1024 = vmatpush1.bf16.msra.mxu0 0
    %1025 = vmatprep.subr.bf16.mxu0 0
    %1026 = vmatpush1.bf16.msra.mxu0 0
    %1027 = vmatprep.subr.bf16.mxu0 0
    %1028 = vmatpush1.bf16.msra.mxu0 0
    %1029 = vmatprep.subr.bf16.mxu0 0
    %1030 = vmatpush1.bf16.msra.mxu0 0
    %1031 = vmatprep.mubr.bf16.mxu0 0
    %1032 = vmatmul.mubr.bf16.gmra.mrb[0].mxu0 %v966
    %v1033 = vpop.f32.mrb[0].mxu0
    %v1034 = vadd.f32 %v997, %v1033
    %v1035 = vpop.f32.mrb[0].mxu0
    %v1036 = vpop.f32.mrb[0].mxu0
    %v1037 = vadd.f32 %v997, %v1036
    %v1038 = vpop.f32.mrb[0].mxu0
    %1039 = vmatprep.mubr.bf16.mxu0 0
    %1040 = vmatmul.mubr.bf16.gmra.mrb[0].mxu0 %v967
    %v1041 = vpop.f32.mrb[0].mxu0
    %v1042 = vadd.f32 %v997, %v1041
    %v1043 = vpop.f32.mrb[0].mxu0
    %v1044 = vpop.f32.mrb[0].mxu0
    %v1045 = vadd.f32 %v997, %v1044
    %v1046 = vpop.f32.mrb[0].mxu0
    %1047 = vdwg.mxu0
    %vm1048 = vcmask 31744
    %1049 = vst.msk [vmem:[%s12] sm:$0xff] %vm1048, %v1034
    %1050 = vst.msk [vmem:[%s12 + $0x8] sm:$0xff] %vm1048, %v1037
    %1051 = vst.msk [vmem:[%s12 + $0x10] sm:$0xff] %vm1048, %v1042
    %1052 = vst.msk [vmem:[%s12 + $0x18] sm:$0xff] %vm1048, %v1045
    // Predicated region
    $region50: #{_lambda_.7} parent=1 // pred_check
      _
    $region51: #{_lambda_.7} parent=1 // pred_check_branch
      %1054 = sbr.rel (0) target = $region53
    $region52: #{_lambda_.7} parent=1 // pred_region
      _
    $region53: #{_lambda_.7} parent=1 // pred_fallthru
      _
    // Predicated region
    $region54: #{_lambda_.7} parent=1 // pred_check
      _
    $region55: #{_lambda_.7} parent=1 // pred_check_branch
      %1056 = sbr.rel (0) target = $region57
    $region56: #{_lambda_.7} parent=1 // pred_region
      _
    $region57: #{_lambda_.7} parent=1 // pred_fallthru
      _
    // Predicated region
    $region58: #{_lambda_.7} parent=1 // pred_check
      _
    $region59: #{_lambda_.7} parent=1 // pred_check_branch
      %1058 = sbr.rel (0) target = $region61
    $region60: #{_lambda_.7} parent=1 // pred_region
      _
    $region61: #{_lambda_.7} parent=1 // pred_fallthru
      _
    // Predicated region
    $region62: #{_lambda_.7} parent=1 // pred_check
      _
    $region63: #{_lambda_.7} parent=1 // pred_check_branch
      %1060 = sbr.rel (0) target = $region65
    $region64: #{_lambda_.7} parent=1 // pred_region
      _
    $region65: #{_lambda_.7} parent=1 // pred_fallthru
      _
    %1061 = vsyncpa [#allocation3], 1

</llo_original>
